<compile_context>
chip_gen: v7x
topology: tpu7x:2x2x1
jax: 0.10.0
libtpu: 0.0.40
codegen_flags: <defaults>
</compile_context>

<pallas_src>
import functools

import jax
import jax.numpy as jnp
from jax.experimental import pallas as pl
from jax.experimental.pallas import tpu as pltpu

LANE = 128
LEAKY_SLOPE = 0.01
BN_EPS = 1e-5


def _round_up(x, m):
    return (x + m - 1) // m * m


# ---------------------------------------------------------------------------
# Kernels
# ---------------------------------------------------------------------------
def _conv_im2col_kernel(x_ref, scale_ref, shift_ref, w_ref,
                        conv_ref, stats_ref, xpad, im2col, *, apply_act):
    """(prev-layer BN affine + LeakyReLU) -> 3x3 same-conv -> partial BN stats.

    x_ref:     (1, H, W, Cinp)   raw conv output of the previous layer
                                 (or the block input when apply_act=False)
    scale_ref: (1, Cinp)         folded BN scale of the previous layer
    shift_ref: (1, Cinp)         folded BN shift of the previous layer
    w_ref:     (9*Cinp, Coutp)   im2col-packed 3x3 weights (tap-major)
    conv_ref:  (1, H, W, Coutp)  raw conv output of this layer
    stats_ref: (1, 2, Coutp)     per-image channel [sum, sum-of-squares]
    xpad:      (H+2, W+2, Cinp)  VMEM scratch: zero-haloed input tile
    im2col:    (H*W, 9*Cinp)     VMEM scratch: im2col patch matrix
    """
    Hp2, Wp2, Cinp = xpad.shape
    H, W = Hp2 - 2, Wp2 - 2
    Coutp = conv_ref.shape[-1]

    xb = x_ref[0]                                       # (H, W, Cinp)
    if apply_act:
        # Previous layer's BatchNorm (folded to scale/shift) + LeakyReLU,
        # fused into this layer's input load.
        xb = xb * scale_ref[...] + shift_ref[...]
        xb = jnp.where(xb > 0, xb, LEAKY_SLOPE * xb)

    # In-kernel zero halo (replaces a per-layer jnp.pad copy in HBM).
    xpad[...] = jnp.zeros(xpad.shape, xpad.dtype)
    xpad[1:H + 1, 1:W + 1, :] = xb

    # im2col patch matrix: one wide-K matmul instead of 9 narrow-K matmuls.
    for t in range(9):
        dy, dx = t // 3, t % 3
        patch = xpad[dy:dy + H, dx:dx + W, :]           # (H, W, Cinp)
        im2col[:, t * Cinp:(t + 1) * Cinp] = patch.reshape(H * W, Cinp)

    acc = jnp.dot(im2col[...], w_ref[...],
                  preferred_element_type=jnp.float32)   # (H*W, Coutp), f32

    conv_ref[0] = acc.reshape(H, W, Coutp).astype(conv_ref.dtype)

    # One-pass partial BatchNorm statistics; the global reduction over N
    # happens outside so the batch grid axis stays "parallel" for megacore.
    s = jnp.sum(acc, axis=0, keepdims=True)             # (1, Coutp)
    ss = jnp.sum(acc * acc, axis=0, keepdims=True)      # (1, Coutp)
    stats_ref[0] = jnp.concatenate([s, ss], axis=0)     # (2, Coutp)


def _affine_act_kernel(y_ref, scale_ref, shift_ref, o_ref):
    """Final folded BatchNorm affine + LeakyReLU (element-wise, lane-dense)."""
    y = y_ref[0] * scale_ref[...] + shift_ref[...]
    o_ref[0] = jnp.where(y > 0, y, LEAKY_SLOPE * y).astype(o_ref.dtype)


# ---------------------------------------------------------------------------
# pallas_call wrappers
# ---------------------------------------------------------------------------
def _conv_layer(x, scale, shift, w_packed, apply_act):
    N, H, W, Cinp = x.shape
    Coutp = w_packed.shape[-1]
    kernel = functools.partial(_conv_im2col_kernel, apply_act=apply_act)
    conv_out, stats = pl.pallas_call(
        kernel,
        out_shape=(
            jax.ShapeDtypeStruct((N, H, W, Coutp), jnp.float32),
            jax.ShapeDtypeStruct((N, 2, Coutp), jnp.float32),
        ),
        grid_spec=pltpu.PrefetchScalarGridSpec(
            num_scalar_prefetch=0,
            grid=(N,),
            in_specs=[
                pl.BlockSpec((1, H, W, Cinp), lambda n: (n, 0, 0, 0)),
                pl.BlockSpec((1, Cinp), lambda n: (0, 0)),
                pl.BlockSpec((1, Cinp), lambda n: (0, 0)),
                pl.BlockSpec((9 * Cinp, Coutp), lambda n: (0, 0)),
            ],
            out_specs=[
                pl.BlockSpec((1, H, W, Coutp), lambda n: (n, 0, 0, 0)),
                pl.BlockSpec((1, 2, Coutp), lambda n: (n, 0, 0)),
            ],
            scratch_shapes=[
                pltpu.VMEM((H + 2, W + 2, Cinp), jnp.float32),
                pltpu.VMEM((H * W, 9 * Cinp), jnp.float32),
            ],
        ),
        compiler_params=pltpu.CompilerParams(
            dimension_semantics=("parallel",),
            vmem_limit_bytes=32 * 1024 * 1024,
        ),
    )(x, scale, shift, w_packed)
    return conv_out, stats


def _affine_act(y, scale, shift):
    N, H, W, C = y.shape
    return pl.pallas_call(
        _affine_act_kernel,
        out_shape=jax.ShapeDtypeStruct((N, H, W, C), jnp.float32),
        grid_spec=pltpu.PrefetchScalarGridSpec(
            num_scalar_prefetch=0,
            grid=(N,),
            in_specs=[
                pl.BlockSpec((1, H, W, C), lambda n: (n, 0, 0, 0)),
                pl.BlockSpec((1, C), lambda n: (0, 0)),
                pl.BlockSpec((1, C), lambda n: (0, 0)),
            ],
            out_specs=pl.BlockSpec((1, H, W, C), lambda n: (n, 0, 0, 0)),
        ),
        compiler_params=pltpu.CompilerParams(
            dimension_semantics=("parallel",),
            vmem_limit_bytes=32 * 1024 * 1024,
        ),
    )(y, scale, shift)


# ---------------------------------------------------------------------------
# Parameter prep / BN folding (tiny, plain JAX)
# ---------------------------------------------------------------------------
def _pack_layer(w_hwio, gamma, beta):
    """Pack a layer: channel-pad to 128 lanes, im2col-fold the 3x3 taps."""
    _, _, cin, cout = w_hwio.shape
    cinp, coutp = _round_up(cin, LANE), _round_up(cout, LANE)
    w9 = jnp.zeros((9, cinp, coutp), jnp.float32)
    w9 = w9.at[:, :cin, :cout].set(w_hwio.reshape(9, cin, cout).astype(jnp.float32))
    wp = w9.reshape(9 * cinp, coutp)
    gp = jnp.zeros((coutp,), jnp.float32).at[:cout].set(gamma)
    bp = jnp.zeros((coutp,), jnp.float32).at[:cout].set(beta)
    return wp, gp, bp


def _fold_bn(stats, gamma_p, beta_p, count):
    """Global training-mode BN (biased variance) folded into scale/shift."""
    s = jnp.sum(stats[:, 0, :], axis=0)
    ss = jnp.sum(stats[:, 1, :], axis=0)
    mean = s / count
    var = jnp.maximum(ss / count - mean * mean, 0.0)
    scale = gamma_p * jax.lax.rsqrt(var + BN_EPS)
    shift = beta_p - mean * scale
    return scale.reshape(1, -1), shift.reshape(1, -1)


def init_conv_params(key, cin, cout):
    """Deterministic synthetic params (roughly PyTorch-default scale)."""
    kw, kb = jax.random.split(key)
    fan_in = cin * 9
    bound = 1.0 / (fan_in ** 0.5)
    w = jax.random.uniform(kw, (3, 3, cin, cout), jnp.float32, -bound, bound)
    b = jax.random.uniform(kb, (cout,), jnp.float32, -bound, bound)
    gamma = jnp.ones((cout,), jnp.float32)   # BN weight default
    beta = jnp.zeros((cout,), jnp.float32)   # BN bias default
    return w, b, gamma, beta


def make_seg_unet_conv_block_params(key, in_channels, out_channels):
    mid = in_channels // 2
    k1, k2, k3 = jax.random.split(key, 3)
    return {
        "first": init_conv_params(k1, in_channels, mid),
        "mid": init_conv_params(k2, mid, mid),   # shared across num_layers reps
        "last": init_conv_params(k3, mid, out_channels),
    }


# ---------------------------------------------------------------------------
# Full block forward
# ---------------------------------------------------------------------------
@functools.partial(jax.jit, static_argnames=("num_layers",))
def seg_unet_conv_block(x_nchw, params, num_layers):
    N, Cin, H, W = x_nchw.shape
    out_channels = params["last"][0].shape[-1]

    # NCHW (PyTorch) -> lane-dense NHWC; channel pad done once for the block.
    x = jnp.transpose(x_nchw, (0, 2, 3, 1)).astype(jnp.float32)
    cinp = _round_up(Cin, LANE)
    x = jnp.pad(x, ((0, 0), (0, 0), (0, 0), (0, cinp - Cin)))

    # Conv bias intentionally dropped: cancelled exactly by BN mean subtraction.
    layer_params = ([params["first"]] + [params["mid"]] * num_layers
                    + [params["last"]])
    packed = [_pack_layer(w, gamma, beta) for (w, _b, gamma, beta) in layer_params]

    count = float(N * H * W)
    cur = x
    scale = jnp.ones((1, cinp), jnp.float32)    # unused by the first layer
    shift = jnp.zeros((1, cinp), jnp.float32)
    for li, (wp, gp, bp) in enumerate(packed):
        conv, stats = _conv_layer(cur, scale, shift, wp, apply_act=(li > 0))
        scale, shift = _fold_bn(stats, gp, bp, count)
        cur = conv

    out = _affine_act(cur, scale, shift)        # final BN affine + LeakyReLU
    out = out[:, :, :, :out_channels]
    return jnp.transpose(out, (0, 3, 1, 2))     # back to NCHW


# --- pure-JAX reference (keeps the conv bias; verifies the cancellation) ----
def _ref_layer(x_nhwc, w, b, gamma, beta):
    y = jax.lax.conv_general_dilated(
        x_nhwc, w, window_strides=(1, 1), padding="SAME",
        dimension_numbers=("NHWC", "HWIO", "NHWC"),
        precision=jax.lax.Precision.HIGHEST,
    ) + b
    mean = jnp.mean(y, axis=(0, 1, 2), keepdims=True)
    var = jnp.mean((y - mean) ** 2, axis=(0, 1, 2), keepdims=True)
    y = (y - mean) * jax.lax.rsqrt(var + BN_EPS) * gamma + beta
    return jnp.where(y > 0, y, LEAKY_SLOPE * y)


def seg_unet_conv_block_ref(x_nchw, params, num_layers):
    x = jnp.transpose(x_nchw, (0, 2, 3, 1)).astype(jnp.float32)
    x = _ref_layer(x, *params["first"])
    for _ in range(num_layers):
        x = _ref_layer(x, *params["mid"])
    x = _ref_layer(x, *params["last"])
    return jnp.transpose(x, (0, 3, 1, 2))


if __name__ == "__main__":
    key = jax.random.PRNGKey(0)
    kx, kp = jax.random.split(key)

    in_channels, out_channels, num_layers = 4, 8, 2
    N, H, W = 2, 16, 16

    x = jax.random.normal(kx, (N, in_channels, H, W), jnp.float32)
    params = make_seg_unet_conv_block_params(kp, in_channels, out_channels)

    out = jax.block_until_ready(seg_unet_conv_block(x, params, num_layers))
    assert out.shape == (N, out_channels, H, W), out.shape

    ref = jax.block_until_ready(seg_unet_conv_block_ref(x, params, num_layers))
    assert jnp.allclose(out, ref, rtol=1e-2, atol=1e-2), \
        float(jnp.max(jnp.abs(out - ref)))

    print("KERNEL_OK")
</pallas_src>

<mosaic_0001>
module attributes {stable_mosaic.version = 11 : i64} {
  func.func @_conv_im2col_kernel(%arg0: i32, %arg1: memref<1x16x16x128xf32, #tpu.memory_space<vmem>>, %arg2: memref<1x128xf32, #tpu.memory_space<vmem>>, %arg3: memref<1x128xf32, #tpu.memory_space<vmem>>, %arg4: memref<1152x128xf32, #tpu.memory_space<vmem>>, %arg5: memref<1x16x16x128xf32, #tpu.memory_space<vmem>>, %arg6: memref<1x2x128xf32, #tpu.memory_space<vmem>>, %arg7: memref<18x18x128xf32, #tpu.memory_space<vmem>>, %arg8: memref<256x1152xf32, #tpu.memory_space<vmem>>) attributes {dimension_semantics = [#tpu.dimension_semantics<parallel>], iteration_bounds = array<i64: 2>, scalar_prefetch = 0 : i64, scratch_operands = 2 : i64, tpu.core_type = #tpu.core_type<tc>, window_params = [{transform_indices = @transform_0, window_bounds = array<i64: 1, 16, 16, 128>}, {pipeline_mode = #tpu.pipeline_mode<synchronous>, transform_indices = @transform_1, window_bounds = array<i64: 1, 128>}, {pipeline_mode = #tpu.pipeline_mode<synchronous>, transform_indices = @transform_2, window_bounds = array<i64: 1, 128>}, {pipeline_mode = #tpu.pipeline_mode<synchronous>, transform_indices = @transform_3, window_bounds = array<i64: 1152, 128>}, {transform_indices = @transform_4, window_bounds = array<i64: 1, 16, 16, 128>}, {transform_indices = @transform_5, window_bounds = array<i64: 1, 2, 128>}]} {
    %c0 = arith.constant 0 : index
    %c0_0 = arith.constant 0 : index
    %c0_1 = arith.constant 0 : index
    %c0_2 = arith.constant 0 : index
    %0 = vector.load %arg1[%c0, %c0_0, %c0_1, %c0_2] : memref<1x16x16x128xf32, #tpu.memory_space<vmem>>, vector<1x16x16x128xf32>
    %1 = vector.shape_cast %0 : vector<1x16x16x128xf32> to vector<16x16x128xf32>
    %c0_3 = arith.constant 0 : index
    %c0_4 = arith.constant 0 : index
    %2 = vector.load %arg2[%c0_3, %c0_4] : memref<1x128xf32, #tpu.memory_space<vmem>>, vector<1x128xf32>
    %3 = vector.shape_cast %2 : vector<1x128xf32> to vector<1x1x128xf32>
    %4 = vector.broadcast %3 : vector<1x1x128xf32> to vector<16x16x128xf32>
    %5 = arith.mulf %1, %4 : vector<16x16x128xf32>
    %c0_5 = arith.constant 0 : index
    %c0_6 = arith.constant 0 : index
    %6 = vector.load %arg3[%c0_5, %c0_6] : memref<1x128xf32, #tpu.memory_space<vmem>>, vector<1x128xf32>
    %7 = vector.shape_cast %6 : vector<1x128xf32> to vector<1x1x128xf32>
    %8 = vector.broadcast %7 : vector<1x1x128xf32> to vector<16x16x128xf32>
    %9 = arith.addf %5, %8 : vector<16x16x128xf32>
    %cst = arith.constant 0.000000e+00 : f32
    %10 = vector.broadcast %cst : f32 to vector<16x16x128xf32>
    %11 = arith.cmpf ogt, %9, %10 : vector<16x16x128xf32>
    %cst_7 = arith.constant 0.00999999977 : f32
    %12 = vector.broadcast %cst_7 : f32 to vector<16x16x128xf32>
    %13 = arith.mulf %12, %9 : vector<16x16x128xf32>
    %14 = arith.select %11, %9, %13 : vector<16x16x128xi1>, vector<16x16x128xf32>
    %cst_8 = arith.constant 0.000000e+00 : f32
    %15 = vector.broadcast %cst_8 : f32 to vector<18x18x128xf32>
    %c0_9 = arith.constant 0 : index
    %c0_10 = arith.constant 0 : index
    %c0_11 = arith.constant 0 : index
    %16 = vector.load %arg7[%c0_9, %c0_10, %c0_11] : memref<18x18x128xf32, #tpu.memory_space<vmem>>, vector<18x18x128xf32>
    tpu.vector_store %arg7[%c0_9, %c0_10, %c0_11], %15 {strides = array<i32>} : memref<18x18x128xf32, #tpu.memory_space<vmem>>, vector<18x18x128xf32>,
    %c1 = arith.constant 1 : index
    %c1_12 = arith.constant 1 : index
    %c0_13 = arith.constant 0 : index
    %17 = vector.load %arg7[%c1, %c1_12, %c0_13] : memref<18x18x128xf32, #tpu.memory_space<vmem>>, vector<16x16x128xf32>
    tpu.vector_store %arg7[%c1, %c1_12, %c0_13], %14 {strides = array<i32>} : memref<18x18x128xf32, #tpu.memory_space<vmem>>, vector<16x16x128xf32>,
    %c0_14 = arith.constant 0 : index
    %c0_15 = arith.constant 0 : index
    %c0_16 = arith.constant 0 : index
    %18 = vector.load %arg7[%c0_14, %c0_15, %c0_16] : memref<18x18x128xf32, #tpu.memory_space<vmem>>, vector<16x16x128xf32>
    %19 = vector.shape_cast %18 : vector<16x16x128xf32> to vector<256x128xf32>
    %c0_17 = arith.constant 0 : index
    %c0_18 = arith.constant 0 : index
    %20 = vector.load %arg8[%c0_17, %c0_18] : memref<256x1152xf32, #tpu.memory_space<vmem>>, vector<256x128xf32>
    tpu.vector_store %arg8[%c0_17, %c0_18], %19 {strides = array<i32>} : memref<256x1152xf32, #tpu.memory_space<vmem>>, vector<256x128xf32>,
    %c0_19 = arith.constant 0 : index
    %c1_20 = arith.constant 1 : index
    %c0_21 = arith.constant 0 : index
    %21 = vector.load %arg7[%c0_19, %c1_20, %c0_21] : memref<18x18x128xf32, #tpu.memory_space<vmem>>, vector<16x16x128xf32>
    %22 = vector.shape_cast %21 : vector<16x16x128xf32> to vector<256x128xf32>
    %c0_22 = arith.constant 0 : index
    %c128 = arith.constant 128 : index
    %23 = vector.load %arg8[%c0_22, %c128] : memref<256x1152xf32, #tpu.memory_space<vmem>>, vector<256x128xf32>
    tpu.vector_store %arg8[%c0_22, %c128], %22 {strides = array<i32>} : memref<256x1152xf32, #tpu.memory_space<vmem>>, vector<256x128xf32>,
    %c0_23 = arith.constant 0 : index
    %c2 = arith.constant 2 : index
    %c0_24 = arith.constant 0 : index
    %24 = vector.load %arg7[%c0_23, %c2, %c0_24] : memref<18x18x128xf32, #tpu.memory_space<vmem>>, vector<16x16x128xf32>
    %25 = vector.shape_cast %24 : vector<16x16x128xf32> to vector<256x128xf32>
    %c0_25 = arith.constant 0 : index
    %c256 = arith.constant 256 : index
    %26 = vector.load %arg8[%c0_25, %c256] : memref<256x1152xf32, #tpu.memory_space<vmem>>, vector<256x128xf32>
    tpu.vector_store %arg8[%c0_25, %c256], %25 {strides = array<i32>} : memref<256x1152xf32, #tpu.memory_space<vmem>>, vector<256x128xf32>,
    %c1_26 = arith.constant 1 : index
    %c0_27 = arith.constant 0 : index
    %c0_28 = arith.constant 0 : index
    %27 = vector.load %arg7[%c1_26, %c0_27, %c0_28] : memref<18x18x128xf32, #tpu.memory_space<vmem>>, vector<16x16x128xf32>
    %28 = vector.shape_cast %27 : vector<16x16x128xf32> to vector<256x128xf32>
    %c0_29 = arith.constant 0 : index
    %c384 = arith.constant 384 : index
    %29 = vector.load %arg8[%c0_29, %c384] : memref<256x1152xf32, #tpu.memory_space<vmem>>, vector<256x128xf32>
    tpu.vector_store %arg8[%c0_29, %c384], %28 {strides = array<i32>} : memref<256x1152xf32, #tpu.memory_space<vmem>>, vector<256x128xf32>,
    %c1_30 = arith.constant 1 : index
    %c1_31 = arith.constant 1 : index
    %c0_32 = arith.constant 0 : index
    %30 = vector.load %arg7[%c1_30, %c1_31, %c0_32] : memref<18x18x128xf32, #tpu.memory_space<vmem>>, vector<16x16x128xf32>
    %31 = vector.shape_cast %30 : vector<16x16x128xf32> to vector<256x128xf32>
    %c0_33 = arith.constant 0 : index
    %c512 = arith.constant 512 : index
    %32 = vector.load %arg8[%c0_33, %c512] : memref<256x1152xf32, #tpu.memory_space<vmem>>, vector<256x128xf32>
    tpu.vector_store %arg8[%c0_33, %c512], %31 {strides = array<i32>} : memref<256x1152xf32, #tpu.memory_space<vmem>>, vector<256x128xf32>,
    %c1_34 = arith.constant 1 : index
    %c2_35 = arith.constant 2 : index
    %c0_36 = arith.constant 0 : index
    %33 = vector.load %arg7[%c1_34, %c2_35, %c0_36] : memref<18x18x128xf32, #tpu.memory_space<vmem>>, vector<16x16x128xf32>
    %34 = vector.shape_cast %33 : vector<16x16x128xf32> to vector<256x128xf32>
    %c0_37 = arith.constant 0 : index
    %c640 = arith.constant 640 : index
    %35 = vector.load %arg8[%c0_37, %c640] : memref<256x1152xf32, #tpu.memory_space<vmem>>, vector<256x128xf32>
    tpu.vector_store %arg8[%c0_37, %c640], %34 {strides = array<i32>} : memref<256x1152xf32, #tpu.memory_space<vmem>>, vector<256x128xf32>,
    %c2_38 = arith.constant 2 : index
    %c0_39 = arith.constant 0 : index
    %c0_40 = arith.constant 0 : index
    %36 = vector.load %arg7[%c2_38, %c0_39, %c0_40] : memref<18x18x128xf32, #tpu.memory_space<vmem>>, vector<16x16x128xf32>
    %37 = vector.shape_cast %36 : vector<16x16x128xf32> to vector<256x128xf32>
    %c0_41 = arith.constant 0 : index
    %c768 = arith.constant 768 : index
    %38 = vector.load %arg8[%c0_41, %c768] : memref<256x1152xf32, #tpu.memory_space<vmem>>, vector<256x128xf32>
    tpu.vector_store %arg8[%c0_41, %c768], %37 {strides = array<i32>} : memref<256x1152xf32, #tpu.memory_space<vmem>>, vector<256x128xf32>,
    %c2_42 = arith.constant 2 : index
    %c1_43 = arith.constant 1 : index
    %c0_44 = arith.constant 0 : index
    %39 = vector.load %arg7[%c2_42, %c1_43, %c0_44] : memref<18x18x128xf32, #tpu.memory_space<vmem>>, vector<16x16x128xf32>
    %40 = vector.shape_cast %39 : vector<16x16x128xf32> to vector<256x128xf32>
    %c0_45 = arith.constant 0 : index
    %c896 = arith.constant 896 : index
    %41 = vector.load %arg8[%c0_45, %c896] : memref<256x1152xf32, #tpu.memory_space<vmem>>, vector<256x128xf32>
    tpu.vector_store %arg8[%c0_45, %c896], %40 {strides = array<i32>} : memref<256x1152xf32, #tpu.memory_space<vmem>>, vector<256x128xf32>,
    %c2_46 = arith.constant 2 : index
    %c2_47 = arith.constant 2 : index
    %c0_48 = arith.constant 0 : index
    %42 = vector.load %arg7[%c2_46, %c2_47, %c0_48] : memref<18x18x128xf32, #tpu.memory_space<vmem>>, vector<16x16x128xf32>
    %43 = vector.shape_cast %42 : vector<16x16x128xf32> to vector<256x128xf32>
    %c0_49 = arith.constant 0 : index
    %c1024 = arith.constant 1024 : index
    %44 = vector.load %arg8[%c0_49, %c1024] : memref<256x1152xf32, #tpu.memory_space<vmem>>, vector<256x128xf32>
    tpu.vector_store %arg8[%c0_49, %c1024], %43 {strides = array<i32>} : memref<256x1152xf32, #tpu.memory_space<vmem>>, vector<256x128xf32>,
    %c0_50 = arith.constant 0 : index
    %c0_51 = arith.constant 0 : index
    %45 = vector.load %arg8[%c0_50, %c0_51] : memref<256x1152xf32, #tpu.memory_space<vmem>>, vector<256x1152xf32>
    %c0_52 = arith.constant 0 : index
    %c0_53 = arith.constant 0 : index
    %46 = vector.load %arg4[%c0_52, %c0_53] : memref<1152x128xf32, #tpu.memory_space<vmem>>, vector<1152x128xf32>
    %cst_54 = arith.constant dense<0.000000e+00> : vector<256x128xf32>
    %47 = tpu.matmul %45, %46, %cst_54 {dimension_numbers = #tpu.dot_dimension_numbers<[1], [0], [0], [1], [0, 0, 1, 1], [], []>} : vector<256x1152xf32>, vector<1152x128xf32>, vector<256x128xf32> -> vector<256x128xf32>
    %48 = vector.shape_cast %47 : vector<256x128xf32> to vector<16x16x128xf32>
    %c0_55 = arith.constant 0 : index
    %c0_56 = arith.constant 0 : index
    %c0_57 = arith.constant 0 : index
    %c0_58 = arith.constant 0 : index
    %49 = vector.load %arg5[%c0_55, %c0_56, %c0_57, %c0_58] : memref<1x16x16x128xf32, #tpu.memory_space<vmem>>, vector<1x16x16x128xf32>
    %50 = vector.shape_cast %49 : vector<1x16x16x128xf32> to vector<16x16x128xf32>
    %51 = vector.shape_cast %48 : vector<16x16x128xf32> to vector<1x16x16x128xf32>
    tpu.vector_store %arg5[%c0_55, %c0_56, %c0_57, %c0_58], %51 {strides = array<i32>} : memref<1x16x16x128xf32, #tpu.memory_space<vmem>>, vector<1x16x16x128xf32>,
    %cst_59 = arith.constant dense<0.000000e+00> : vector<128xf32>
    %52 = vector.multi_reduction <add>, %47, %cst_59 [0] : vector<256x128xf32> to vector<128xf32>
    %53 = vector.shape_cast %52 : vector<128xf32> to vector<1x128xf32>
    %54 = arith.mulf %47, %47 : vector<256x128xf32>
    %cst_60 = arith.constant dense<0.000000e+00> : vector<128xf32>
    %55 = vector.multi_reduction <add>, %54, %cst_60 [0] : vector<256x128xf32> to vector<128xf32>
    %56 = vector.shape_cast %55 : vector<128xf32> to vector<1x128xf32>
    %57 = tpu.concatenate %53, %56 in 0 : vector<1x128xf32>, vector<1x128xf32> -> vector<2x128xf32>
    %c0_61 = arith.constant 0 : index
    %c0_62 = arith.constant 0 : index
    %c0_63 = arith.constant 0 : index
    %58 = vector.load %arg6[%c0_61, %c0_62, %c0_63] : memref<1x2x128xf32, #tpu.memory_space<vmem>>, vector<1x2x128xf32>
    %59 = vector.shape_cast %58 : vector<1x2x128xf32> to vector<2x128xf32>
    %60 = vector.shape_cast %57 : vector<2x128xf32> to vector<1x2x128xf32>
    tpu.vector_store %arg6[%c0_61, %c0_62, %c0_63], %60 {strides = array<i32>} : memref<1x2x128xf32, #tpu.memory_space<vmem>>, vector<1x2x128xf32>,
    return
  }
  func.func @transform_0(%arg0: i32) -> (i32, i32, i32, i32) {
    %c0_i32 = arith.constant 0 : i32
    %c0_i32_0 = arith.constant 0 : i32
    %c0_i32_1 = arith.constant 0 : i32
    %c0_i32_2 = arith.constant 0 : i32
    return %arg0, %c0_i32, %c0_i32_0, %c0_i32_1 : i32, i32, i32, i32
  }
  func.func @transform_1(%arg0: i32) -> (i32, i32) {
    %c0_i32 = arith.constant 0 : i32
    %c0_i32_0 = arith.constant 0 : i32
    %c0_i32_1 = arith.constant 0 : i32
    return %c0_i32, %c0_i32_0 : i32, i32
  }
  func.func @transform_2(%arg0: i32) -> (i32, i32) {
    %c0_i32 = arith.constant 0 : i32
    %c0_i32_0 = arith.constant 0 : i32
    %c0_i32_1 = arith.constant 0 : i32
    return %c0_i32, %c0_i32_0 : i32, i32
  }
  func.func @transform_3(%arg0: i32) -> (i32, i32) {
    %c0_i32 = arith.constant 0 : i32
    %c0_i32_0 = arith.constant 0 : i32
    %c0_i32_1 = arith.constant 0 : i32
    return %c0_i32, %c0_i32_0 : i32, i32
  }
  func.func @transform_4(%arg0: i32) -> (i32, i32, i32, i32) {
    %c0_i32 = arith.constant 0 : i32
    %c0_i32_0 = arith.constant 0 : i32
    %c0_i32_1 = arith.constant 0 : i32
    %c0_i32_2 = arith.constant 0 : i32
    return %arg0, %c0_i32, %c0_i32_0, %c0_i32_1 : i32, i32, i32, i32
  }
  func.func @transform_5(%arg0: i32) -> (i32, i32, i32) {
    %c0_i32 = arith.constant 0 : i32
    %c0_i32_0 = arith.constant 0 : i32
    %c0_i32_1 = arith.constant 0 : i32
    return %arg0, %c0_i32, %c0_i32_0 : i32, i32, i32
  }
}

module attributes {stable_mosaic.version = 11 : i64} {
  func.func @_conv_im2col_kernel(%arg0: i32, %arg1: memref<1x16x16x128xf32, #tpu.memory_space<vmem>>, %arg2: memref<1x128xf32, #tpu.memory_space<vmem>>, %arg3: memref<1x128xf32, #tpu.memory_space<vmem>>, %arg4: memref<1152x128xf32, #tpu.memory_space<vmem>>, %arg5: memref<1x16x16x128xf32, #tpu.memory_space<vmem>>, %arg6: memref<1x2x128xf32, #tpu.memory_space<vmem>>, %arg7: memref<18x18x128xf32, #tpu.memory_space<vmem>>, %arg8: memref<256x1152xf32, #tpu.memory_space<vmem>>) attributes {dimension_semantics = [#tpu.dimension_semantics<parallel>], iteration_bounds = array<i64: 2>, scalar_prefetch = 0 : i64, scratch_operands = 2 : i64, tpu.core_type = #tpu.core_type<tc>, window_params = [{transform_indices = @transform_0, window_bounds = array<i64: 1, 16, 16, 128>}, {pipeline_mode = #tpu.pipeline_mode<synchronous>, transform_indices = @transform_1, window_bounds = array<i64: 1, 128>}, {pipeline_mode = #tpu.pipeline_mode<synchronous>, transform_indices = @transform_2, window_bounds = array<i64: 1, 128>}, {pipeline_mode = #tpu.pipeline_mode<synchronous>, transform_indices = @transform_3, window_bounds = array<i64: 1152, 128>}, {transform_indices = @transform_4, window_bounds = array<i64: 1, 16, 16, 128>}, {transform_indices = @transform_5, window_bounds = array<i64: 1, 2, 128>}]} {
    %c0 = arith.constant 0 : index
    %c0_0 = arith.constant 0 : index
    %c0_1 = arith.constant 0 : index
    %c0_2 = arith.constant 0 : index
    %0 = vector.load %arg1[%c0, %c0_0, %c0_1, %c0_2] : memref<1x16x16x128xf32, #tpu.memory_space<vmem>>, vector<1x16x16x128xf32>
    %1 = vector.shape_cast %0 : vector<1x16x16x128xf32> to vector<16x16x128xf32>
    %cst = arith.constant 0.000000e+00 : f32
    %2 = vector.broadcast %cst : f32 to vector<18x18x128xf32>
    %c0_3 = arith.constant 0 : index
    %c0_4 = arith.constant 0 : index
    %c0_5 = arith.constant 0 : index
    %3 = vector.load %arg7[%c0_3, %c0_4, %c0_5] : memref<18x18x128xf32, #tpu.memory_space<vmem>>, vector<18x18x128xf32>
    tpu.vector_store %arg7[%c0_3, %c0_4, %c0_5], %2 {strides = array<i32>} : memref<18x18x128xf32, #tpu.memory_space<vmem>>, vector<18x18x128xf32>,
    %c1 = arith.constant 1 : index
    %c1_6 = arith.constant 1 : index
    %c0_7 = arith.constant 0 : index
    %4 = vector.load %arg7[%c1, %c1_6, %c0_7] : memref<18x18x128xf32, #tpu.memory_space<vmem>>, vector<16x16x128xf32>
    tpu.vector_store %arg7[%c1, %c1_6, %c0_7], %1 {strides = array<i32>} : memref<18x18x128xf32, #tpu.memory_space<vmem>>, vector<16x16x128xf32>,
    %c0_8 = arith.constant 0 : index
    %c0_9 = arith.constant 0 : index
    %c0_10 = arith.constant 0 : index
    %5 = vector.load %arg7[%c0_8, %c0_9, %c0_10] : memref<18x18x128xf32, #tpu.memory_space<vmem>>, vector<16x16x128xf32>
    %6 = vector.shape_cast %5 : vector<16x16x128xf32> to vector<256x128xf32>
    %c0_11 = arith.constant 0 : index
    %c0_12 = arith.constant 0 : index
    %7 = vector.load %arg8[%c0_11, %c0_12] : memref<256x1152xf32, #tpu.memory_space<vmem>>, vector<256x128xf32>
    tpu.vector_store %arg8[%c0_11, %c0_12], %6 {strides = array<i32>} : memref<256x1152xf32, #tpu.memory_space<vmem>>, vector<256x128xf32>,
    %c0_13 = arith.constant 0 : index
    %c1_14 = arith.constant 1 : index
    %c0_15 = arith.constant 0 : index
    %8 = vector.load %arg7[%c0_13, %c1_14, %c0_15] : memref<18x18x128xf32, #tpu.memory_space<vmem>>, vector<16x16x128xf32>
    %9 = vector.shape_cast %8 : vector<16x16x128xf32> to vector<256x128xf32>
    %c0_16 = arith.constant 0 : index
    %c128 = arith.constant 128 : index
    %10 = vector.load %arg8[%c0_16, %c128] : memref<256x1152xf32, #tpu.memory_space<vmem>>, vector<256x128xf32>
    tpu.vector_store %arg8[%c0_16, %c128], %9 {strides = array<i32>} : memref<256x1152xf32, #tpu.memory_space<vmem>>, vector<256x128xf32>,
    %c0_17 = arith.constant 0 : index
    %c2 = arith.constant 2 : index
    %c0_18 = arith.constant 0 : index
    %11 = vector.load %arg7[%c0_17, %c2, %c0_18] : memref<18x18x128xf32, #tpu.memory_space<vmem>>, vector<16x16x128xf32>
    %12 = vector.shape_cast %11 : vector<16x16x128xf32> to vector<256x128xf32>
    %c0_19 = arith.constant 0 : index
    %c256 = arith.constant 256 : index
    %13 = vector.load %arg8[%c0_19, %c256] : memref<256x1152xf32, #tpu.memory_space<vmem>>, vector<256x128xf32>
    tpu.vector_store %arg8[%c0_19, %c256], %12 {strides = array<i32>} : memref<256x1152xf32, #tpu.memory_space<vmem>>, vector<256x128xf32>,
    %c1_20 = arith.constant 1 : index
    %c0_21 = arith.constant 0 : index
    %c0_22 = arith.constant 0 : index
    %14 = vector.load %arg7[%c1_20, %c0_21, %c0_22] : memref<18x18x128xf32, #tpu.memory_space<vmem>>, vector<16x16x128xf32>
    %15 = vector.shape_cast %14 : vector<16x16x128xf32> to vector<256x128xf32>
    %c0_23 = arith.constant 0 : index
    %c384 = arith.constant 384 : index
    %16 = vector.load %arg8[%c0_23, %c384] : memref<256x1152xf32, #tpu.memory_space<vmem>>, vector<256x128xf32>
    tpu.vector_store %arg8[%c0_23, %c384], %15 {strides = array<i32>} : memref<256x1152xf32, #tpu.memory_space<vmem>>, vector<256x128xf32>,
    %c1_24 = arith.constant 1 : index
    %c1_25 = arith.constant 1 : index
    %c0_26 = arith.constant 0 : index
    %17 = vector.load %arg7[%c1_24, %c1_25, %c0_26] : memref<18x18x128xf32, #tpu.memory_space<vmem>>, vector<16x16x128xf32>
    %18 = vector.shape_cast %17 : vector<16x16x128xf32> to vector<256x128xf32>
    %c0_27 = arith.constant 0 : index
    %c512 = arith.constant 512 : index
    %19 = vector.load %arg8[%c0_27, %c512] : memref<256x1152xf32, #tpu.memory_space<vmem>>, vector<256x128xf32>
    tpu.vector_store %arg8[%c0_27, %c512], %18 {strides = array<i32>} : memref<256x1152xf32, #tpu.memory_space<vmem>>, vector<256x128xf32>,
    %c1_28 = arith.constant 1 : index
    %c2_29 = arith.constant 2 : index
    %c0_30 = arith.constant 0 : index
    %20 = vector.load %arg7[%c1_28, %c2_29, %c0_30] : memref<18x18x128xf32, #tpu.memory_space<vmem>>, vector<16x16x128xf32>
    %21 = vector.shape_cast %20 : vector<16x16x128xf32> to vector<256x128xf32>
    %c0_31 = arith.constant 0 : index
    %c640 = arith.constant 640 : index
    %22 = vector.load %arg8[%c0_31, %c640] : memref<256x1152xf32, #tpu.memory_space<vmem>>, vector<256x128xf32>
    tpu.vector_store %arg8[%c0_31, %c640], %21 {strides = array<i32>} : memref<256x1152xf32, #tpu.memory_space<vmem>>, vector<256x128xf32>,
    %c2_32 = arith.constant 2 : index
    %c0_33 = arith.constant 0 : index
    %c0_34 = arith.constant 0 : index
    %23 = vector.load %arg7[%c2_32, %c0_33, %c0_34] : memref<18x18x128xf32, #tpu.memory_space<vmem>>, vector<16x16x128xf32>
    %24 = vector.shape_cast %23 : vector<16x16x128xf32> to vector<256x128xf32>
    %c0_35 = arith.constant 0 : index
    %c768 = arith.constant 768 : index
    %25 = vector.load %arg8[%c0_35, %c768] : memref<256x1152xf32, #tpu.memory_space<vmem>>, vector<256x128xf32>
    tpu.vector_store %arg8[%c0_35, %c768], %24 {strides = array<i32>} : memref<256x1152xf32, #tpu.memory_space<vmem>>, vector<256x128xf32>,
    %c2_36 = arith.constant 2 : index
    %c1_37 = arith.constant 1 : index
    %c0_38 = arith.constant 0 : index
    %26 = vector.load %arg7[%c2_36, %c1_37, %c0_38] : memref<18x18x128xf32, #tpu.memory_space<vmem>>, vector<16x16x128xf32>
    %27 = vector.shape_cast %26 : vector<16x16x128xf32> to vector<256x128xf32>
    %c0_39 = arith.constant 0 : index
    %c896 = arith.constant 896 : index
    %28 = vector.load %arg8[%c0_39, %c896] : memref<256x1152xf32, #tpu.memory_space<vmem>>, vector<256x128xf32>
    tpu.vector_store %arg8[%c0_39, %c896], %27 {strides = array<i32>} : memref<256x1152xf32, #tpu.memory_space<vmem>>, vector<256x128xf32>,
    %c2_40 = arith.constant 2 : index
    %c2_41 = arith.constant 2 : index
    %c0_42 = arith.constant 0 : index
    %29 = vector.load %arg7[%c2_40, %c2_41, %c0_42] : memref<18x18x128xf32, #tpu.memory_space<vmem>>, vector<16x16x128xf32>
    %30 = vector.shape_cast %29 : vector<16x16x128xf32> to vector<256x128xf32>
    %c0_43 = arith.constant 0 : index
    %c1024 = arith.constant 1024 : index
    %31 = vector.load %arg8[%c0_43, %c1024] : memref<256x1152xf32, #tpu.memory_space<vmem>>, vector<256x128xf32>
    tpu.vector_store %arg8[%c0_43, %c1024], %30 {strides = array<i32>} : memref<256x1152xf32, #tpu.memory_space<vmem>>, vector<256x128xf32>,
    %c0_44 = arith.constant 0 : index
    %c0_45 = arith.constant 0 : index
    %32 = vector.load %arg8[%c0_44, %c0_45] : memref<256x1152xf32, #tpu.memory_space<vmem>>, vector<256x1152xf32>
    %c0_46 = arith.constant 0 : index
    %c0_47 = arith.constant 0 : index
    %33 = vector.load %arg4[%c0_46, %c0_47] : memref<1152x128xf32, #tpu.memory_space<vmem>>, vector<1152x128xf32>
    %cst_48 = arith.constant dense<0.000000e+00> : vector<256x128xf32>
    %34 = tpu.matmul %32, %33, %cst_48 {dimension_numbers = #tpu.dot_dimension_numbers<[1], [0], [0], [1], [0, 0, 1, 1], [], []>} : vector<256x1152xf32>, vector<1152x128xf32>, vector<256x128xf32> -> vector<256x128xf32>
    %35 = vector.shape_cast %34 : vector<256x128xf32> to vector<16x16x128xf32>
    %c0_49 = arith.constant 0 : index
    %c0_50 = arith.constant 0 : index
    %c0_51 = arith.constant 0 : index
    %c0_52 = arith.constant 0 : index
    %36 = vector.load %arg5[%c0_49, %c0_50, %c0_51, %c0_52] : memref<1x16x16x128xf32, #tpu.memory_space<vmem>>, vector<1x16x16x128xf32>
    %37 = vector.shape_cast %36 : vector<1x16x16x128xf32> to vector<16x16x128xf32>
    %38 = vector.shape_cast %35 : vector<16x16x128xf32> to vector<1x16x16x128xf32>
    tpu.vector_store %arg5[%c0_49, %c0_50, %c0_51, %c0_52], %38 {strides = array<i32>} : memref<1x16x16x128xf32, #tpu.memory_space<vmem>>, vector<1x16x16x128xf32>,
    %cst_53 = arith.constant dense<0.000000e+00> : vector<128xf32>
    %39 = vector.multi_reduction <add>, %34, %cst_53 [0] : vector<256x128xf32> to vector<128xf32>
    %40 = vector.shape_cast %39 : vector<128xf32> to vector<1x128xf32>
    %41 = arith.mulf %34, %34 : vector<256x128xf32>
    %cst_54 = arith.constant dense<0.000000e+00> : vector<128xf32>
    %42 = vector.multi_reduction <add>, %41, %cst_54 [0] : vector<256x128xf32> to vector<128xf32>
    %43 = vector.shape_cast %42 : vector<128xf32> to vector<1x128xf32>
    %44 = tpu.concatenate %40, %43 in 0 : vector<1x128xf32>, vector<1x128xf32> -> vector<2x128xf32>
    %c0_55 = arith.constant 0 : index
    %c0_56 = arith.constant 0 : index
    %c0_57 = arith.constant 0 : index
    %45 = vector.load %arg6[%c0_55, %c0_56, %c0_57] : memref<1x2x128xf32, #tpu.memory_space<vmem>>, vector<1x2x128xf32>
    %46 = vector.shape_cast %45 : vector<1x2x128xf32> to vector<2x128xf32>
    %47 = vector.shape_cast %44 : vector<2x128xf32> to vector<1x2x128xf32>
    tpu.vector_store %arg6[%c0_55, %c0_56, %c0_57], %47 {strides = array<i32>} : memref<1x2x128xf32, #tpu.memory_space<vmem>>, vector<1x2x128xf32>,
    return
  }
  func.func @transform_0(%arg0: i32) -> (i32, i32, i32, i32) {
    %c0_i32 = arith.constant 0 : i32
    %c0_i32_0 = arith.constant 0 : i32
    %c0_i32_1 = arith.constant 0 : i32
    %c0_i32_2 = arith.constant 0 : i32
    return %arg0, %c0_i32, %c0_i32_0, %c0_i32_1 : i32, i32, i32, i32
  }
  func.func @transform_1(%arg0: i32) -> (i32, i32) {
    %c0_i32 = arith.constant 0 : i32
    %c0_i32_0 = arith.constant 0 : i32
    %c0_i32_1 = arith.constant 0 : i32
    return %c0_i32, %c0_i32_0 : i32, i32
  }
  func.func @transform_2(%arg0: i32) -> (i32, i32) {
    %c0_i32 = arith.constant 0 : i32
    %c0_i32_0 = arith.constant 0 : i32
    %c0_i32_1 = arith.constant 0 : i32
    return %c0_i32, %c0_i32_0 : i32, i32
  }
  func.func @transform_3(%arg0: i32) -> (i32, i32) {
    %c0_i32 = arith.constant 0 : i32
    %c0_i32_0 = arith.constant 0 : i32
    %c0_i32_1 = arith.constant 0 : i32
    return %c0_i32, %c0_i32_0 : i32, i32
  }
  func.func @transform_4(%arg0: i32) -> (i32, i32, i32, i32) {
    %c0_i32 = arith.constant 0 : i32
    %c0_i32_0 = arith.constant 0 : i32
    %c0_i32_1 = arith.constant 0 : i32
    %c0_i32_2 = arith.constant 0 : i32
    return %arg0, %c0_i32, %c0_i32_0, %c0_i32_1 : i32, i32, i32, i32
  }
  func.func @transform_5(%arg0: i32) -> (i32, i32, i32) {
    %c0_i32 = arith.constant 0 : i32
    %c0_i32_0 = arith.constant 0 : i32
    %c0_i32_1 = arith.constant 0 : i32
    return %arg0, %c0_i32, %c0_i32_0 : i32, i32, i32
  }
}

module attributes {stable_mosaic.version = 11 : i64} {
  func.func @_affine_act_kernel(%arg0: i32, %arg1: memref<1x16x16x128xf32, #tpu.memory_space<vmem>>, %arg2: memref<1x128xf32, #tpu.memory_space<vmem>>, %arg3: memref<1x128xf32, #tpu.memory_space<vmem>>, %arg4: memref<1x16x16x128xf32, #tpu.memory_space<vmem>>) attributes {dimension_semantics = [#tpu.dimension_semantics<parallel>], iteration_bounds = array<i64: 2>, scalar_prefetch = 0 : i64, scratch_operands = 0 : i64, tpu.core_type = #tpu.core_type<tc>, window_params = [{transform_indices = @transform_0, window_bounds = array<i64: 1, 16, 16, 128>}, {pipeline_mode = #tpu.pipeline_mode<synchronous>, transform_indices = @transform_1, window_bounds = array<i64: 1, 128>}, {pipeline_mode = #tpu.pipeline_mode<synchronous>, transform_indices = @transform_2, window_bounds = array<i64: 1, 128>}, {transform_indices = @transform_3, window_bounds = array<i64: 1, 16, 16, 128>}]} {
    %c0 = arith.constant 0 : index
    %c0_0 = arith.constant 0 : index
    %c0_1 = arith.constant 0 : index
    %c0_2 = arith.constant 0 : index
    %0 = vector.load %arg1[%c0, %c0_0, %c0_1, %c0_2] : memref<1x16x16x128xf32, #tpu.memory_space<vmem>>, vector<1x16x16x128xf32>
    %1 = vector.shape_cast %0 : vector<1x16x16x128xf32> to vector<16x16x128xf32>
    %c0_3 = arith.constant 0 : index
    %c0_4 = arith.constant 0 : index
    %2 = vector.load %arg2[%c0_3, %c0_4] : memref<1x128xf32, #tpu.memory_space<vmem>>, vector<1x128xf32>
    %3 = vector.shape_cast %2 : vector<1x128xf32> to vector<1x1x128xf32>
    %4 = vector.broadcast %3 : vector<1x1x128xf32> to vector<16x16x128xf32>
    %5 = arith.mulf %1, %4 : vector<16x16x128xf32>
    %c0_5 = arith.constant 0 : index
    %c0_6 = arith.constant 0 : index
    %6 = vector.load %arg3[%c0_5, %c0_6] : memref<1x128xf32, #tpu.memory_space<vmem>>, vector<1x128xf32>
    %7 = vector.shape_cast %6 : vector<1x128xf32> to vector<1x1x128xf32>
    %8 = vector.broadcast %7 : vector<1x1x128xf32> to vector<16x16x128xf32>
    %9 = arith.addf %5, %8 : vector<16x16x128xf32>
    %cst = arith.constant 0.000000e+00 : f32
    %10 = vector.broadcast %cst : f32 to vector<16x16x128xf32>
    %11 = arith.cmpf ogt, %9, %10 : vector<16x16x128xf32>
    %cst_7 = arith.constant 0.00999999977 : f32
    %12 = vector.broadcast %cst_7 : f32 to vector<16x16x128xf32>
    %13 = arith.mulf %12, %9 : vector<16x16x128xf32>
    %14 = arith.select %11, %9, %13 : vector<16x16x128xi1>, vector<16x16x128xf32>
    %c0_8 = arith.constant 0 : index
    %c0_9 = arith.constant 0 : index
    %c0_10 = arith.constant 0 : index
    %c0_11 = arith.constant 0 : index
    %15 = vector.load %arg4[%c0_8, %c0_9, %c0_10, %c0_11] : memref<1x16x16x128xf32, #tpu.memory_space<vmem>>, vector<1x16x16x128xf32>
    %16 = vector.shape_cast %15 : vector<1x16x16x128xf32> to vector<16x16x128xf32>
    %17 = vector.shape_cast %14 : vector<16x16x128xf32> to vector<1x16x16x128xf32>
    tpu.vector_store %arg4[%c0_8, %c0_9, %c0_10, %c0_11], %17 {strides = array<i32>} : memref<1x16x16x128xf32, #tpu.memory_space<vmem>>, vector<1x16x16x128xf32>,
    return
  }
  func.func @transform_0(%arg0: i32) -> (i32, i32, i32, i32) {
    %c0_i32 = arith.constant 0 : i32
    %c0_i32_0 = arith.constant 0 : i32
    %c0_i32_1 = arith.constant 0 : i32
    %c0_i32_2 = arith.constant 0 : i32
    return %arg0, %c0_i32, %c0_i32_0, %c0_i32_1 : i32, i32, i32, i32
  }
  func.func @transform_1(%arg0: i32) -> (i32, i32) {
    %c0_i32 = arith.constant 0 : i32
    %c0_i32_0 = arith.constant 0 : i32
    %c0_i32_1 = arith.constant 0 : i32
    return %c0_i32, %c0_i32_0 : i32, i32
  }
  func.func @transform_2(%arg0: i32) -> (i32, i32) {
    %c0_i32 = arith.constant 0 : i32
    %c0_i32_0 = arith.constant 0 : i32
    %c0_i32_1 = arith.constant 0 : i32
    return %c0_i32, %c0_i32_0 : i32, i32
  }
  func.func @transform_3(%arg0: i32) -> (i32, i32, i32, i32) {
    %c0_i32 = arith.constant 0 : i32
    %c0_i32_0 = arith.constant 0 : i32
    %c0_i32_1 = arith.constant 0 : i32
    %c0_i32_2 = arith.constant 0 : i32
    return %arg0, %c0_i32, %c0_i32_0, %c0_i32_1 : i32, i32, i32, i32
  }
}

</mosaic_0001>

<llo_original>
// kernel: seg_unet_conv_block.9
$region0: #{seg_unet_conv_block.9}
  #allocation0 [shape = 'u32[]', space=smem, size = 0x4, offset = 0x4, fixed_abs, tag = 'smem constant byte address 0x4 - core index']
  #allocation1 [shape = 'u32[144,128]{1,0:T(1,128)}', space=vmem, size = 0x12000, scoped, tag = 'internal scratch']
  %s0 = inlined_call_operand.vmem [shape: f32[2,16,16,128], index: 0, kind: input, shape index: {}]
  %s1 = inlined_call_operand.vmem [shape: f32[1,128], index: 1, kind: input, shape index: {}]
  %s2 = inlined_call_operand.vmem [shape: f32[1,128], index: 2, kind: input, shape index: {}]
  %s3 = inlined_call_operand.vmem [shape: f32[2,16,16,128], index: 3, kind: output, shape index: {}]
  %s4 = sld [smem:[#allocation0]]
  $region45: #{seg_unet_conv_block.9} parent=0
    _
  %s6 = ssub.s32 1, %s4
  %s7 = scalar_select 0, %s6, %s4
  loop: start=0, step=1, limit=4
  $region2: #{seg_unet_conv_block.9} parent=0 // loop_pre_header
    _
  $region3: #{seg_unet_conv_block.9} parent=0 // loop_header
    %s9 = sphi 0, %s13
    %p10 = scmp.ge.s32.totalorder %s9, 4
    %s19 = sphi 0, %s21
    %s22 = sphi 0, %s19
    %s23 = sphi 0, %s22
    %s39 = sphi 0, %s23
    %s43 = sphi 0, %s43
    %s45 = sphi 0, %s43
    %s46 = sphi 0, %s45
    %s60 = sphi 0, %s46
    %s64 = sphi 0, %s64
    %s66 = sphi 0, %s64
    %s67 = sphi 0, %s66
    %s81 = sphi 0, %s67
    %s87 = sphi 0, %s89
    %s90 = sphi 0, %s87
    %s91 = sphi 0, %s90
    %s107 = sphi 0, %s91
  $region4: #{seg_unet_conv_block.9} parent=0 // loop_header_branch
    %12 = sbr.rel (%p10) target = $region8
  $region5: #{seg_unet_conv_block.9} parent=0 // loop_body
    %s14 = ssub.s32 %s9, 1
    %s15 = ssub.s32 %s9, 2
    %s16 = sadd.s32 %s9, 1
    %s17 = ssub.s32 %s9, %s16
    %p18 = scmp.eq.s32.totalorder %s17, 0
    %s20 = sadd.s32 %s19, 1
    %s21 = scalar_select %p18, %s19, %s20
    %p24 = pneg %p18
    %p25 = scmp.eq.s32.totalorder %s9, 1
    %p26 = por %p24, %p25
    %p27 = scmp.ne.s32.totalorder %s19, %s22
    %p28 = scmp.eq.s32.totalorder %s9, 0
    %p29 = por %p27, %p28
    %p30 = scmp.ne.s32.totalorder %s19, %s22
    %p31 = scmp.eq.s32.totalorder %s14, 1
    %p32 = por %p30, %p31
    %p33 = scmp.ne.s32.totalorder %s22, %s23
    %p34 = scmp.eq.s32.totalorder %s14, 0
    %p35 = por %p33, %p34
    %p36 = scmp.ne.s32.totalorder %s22, %s23
    %p37 = scmp.eq.s32.totalorder %s15, 1
    %p38 = por %p36, %p37
    %p40 = scmp.ne.s32.totalorder %s23, %s39
    %p41 = scmp.eq.s32.totalorder %s15, 0
    %p42 = por %p40, %p41
    %s44 = sadd.s32 %s43, 1
    %p47 = scmp.eq.s32.totalorder %s9, 1
    %p48 = scmp.ne.s32.totalorder %s43, %s45
    %p49 = scmp.eq.s32.totalorder %s9, 0
    %p50 = por %p48, %p49
    %p51 = scmp.ne.s32.totalorder %s43, %s45
    %p52 = scmp.eq.s32.totalorder %s14, 1
    %p53 = por %p51, %p52
    %p54 = scmp.ne.s32.totalorder %s45, %s46
    %p55 = scmp.eq.s32.totalorder %s14, 0
    %p56 = por %p54, %p55
    %p57 = scmp.ne.s32.totalorder %s45, %s46
    %p58 = scmp.eq.s32.totalorder %s15, 1
    %p59 = por %p57, %p58
    %p61 = scmp.ne.s32.totalorder %s46, %s60
    %p62 = scmp.eq.s32.totalorder %s15, 0
    %p63 = por %p61, %p62
    %s65 = sadd.s32 %s64, 1
    %p68 = scmp.eq.s32.totalorder %s9, 1
    %p69 = scmp.ne.s32.totalorder %s64, %s66
    %p70 = scmp.eq.s32.totalorder %s9, 0
    %p71 = por %p69, %p70
    %p72 = scmp.ne.s32.totalorder %s64, %s66
    %p73 = scmp.eq.s32.totalorder %s14, 1
    %p74 = por %p72, %p73
    %p75 = scmp.ne.s32.totalorder %s66, %s67
    %p76 = scmp.eq.s32.totalorder %s14, 0
    %p77 = por %p75, %p76
    %p78 = scmp.ne.s32.totalorder %s66, %s67
    %p79 = scmp.eq.s32.totalorder %s15, 1
    %p80 = por %p78, %p79
    %p82 = scmp.ne.s32.totalorder %s67, %s81
    %p83 = scmp.eq.s32.totalorder %s15, 0
    %p84 = por %p82, %p83
    %s85 = ssub.s32 %s9, %s16
    %p86 = scmp.eq.s32.totalorder %s85, 0
    %s88 = sadd.s32 %s87, 1
    %s89 = scalar_select %p86, %s87, %s88
    %p92 = pneg %p86
    %p93 = scmp.eq.s32.totalorder %s9, 1
    %p94 = por %p92, %p93
    %p95 = scmp.ne.s32.totalorder %s87, %s90
    %p96 = scmp.eq.s32.totalorder %s9, 0
    %p97 = por %p95, %p96
    %p98 = scmp.ne.s32.totalorder %s87, %s90
    %p99 = scmp.eq.s32.totalorder %s14, 1
    %p100 = por %p98, %p99
    %p101 = scmp.ne.s32.totalorder %s90, %s91
    %p102 = scmp.eq.s32.totalorder %s14, 0
    %p103 = por %p101, %p102
    %p104 = scmp.ne.s32.totalorder %s90, %s91
    %p105 = scmp.eq.s32.totalorder %s15, 1
    %p106 = por %p104, %p105
    %p108 = scmp.ne.s32.totalorder %s91, %s107
    %p109 = scmp.eq.s32.totalorder %s15, 0
    %p110 = por %p108, %p109
    %p111 = scmp.le.s32.totalorder 1, %s9
    %p112 = scmp.lt.s32.totalorder %s9, 3
    %p113 = pnand %p111, %p112
    %p114 = pneg %p113
    // Predicated region
    $region9: #{seg_unet_conv_block.9} parent=5 // pred_check
      _
    $region10: #{seg_unet_conv_block.9} parent=5 // pred_check_branch
      %116 = sbr.rel (%p113) target = $region12
    $region11: #{seg_unet_conv_block.9} parent=5 // pred_region
      %s117 = ssub.s32 %s9, 1
      // Predicated region
      $region13: #{seg_unet_conv_block.9} parent=11 // pred_check
        %p118 = pneg %p56
      $region14: #{seg_unet_conv_block.9} parent=11 // pred_check_branch
        %120 = sbr.rel (%p118) target = $region16
      $region15: #{seg_unet_conv_block.9} parent=11 // pred_region
        _
      $region16: #{seg_unet_conv_block.9} parent=11 // pred_fallthru
        _
      // Predicated region
      $region17: #{seg_unet_conv_block.9} parent=11 // pred_check
        %p121 = pneg %p77
      $region18: #{seg_unet_conv_block.9} parent=11 // pred_check_branch
        %123 = sbr.rel (%p121) target = $region20
      $region19: #{seg_unet_conv_block.9} parent=11 // pred_region
        _
      $region20: #{seg_unet_conv_block.9} parent=11 // pred_fallthru
        _
    $region12: #{seg_unet_conv_block.9} parent=5 // pred_fallthru
      _
    %p124 = scmp.lt.s32.totalorder %s9, 2
    // Predicated region
    $region21: #{seg_unet_conv_block.9} parent=5 // pred_check
      %p125 = pneg %p124
    $region22: #{seg_unet_conv_block.9} parent=5 // pred_check_branch
      %127 = sbr.rel (%p125) target = $region24
    $region23: #{seg_unet_conv_block.9} parent=5 // pred_region
      // Predicated region
      $region25: #{seg_unet_conv_block.9} parent=23 // pred_check
        %p128 = pneg %p29
      $region26: #{seg_unet_conv_block.9} parent=23 // pred_check_branch
        %130 = sbr.rel (%p128) target = $region28
      $region27: #{seg_unet_conv_block.9} parent=23 // pred_region
        %p131 = scmp.lt.s32.totalorder %s9, 1
        %s132 = scalar_select %p131, %s9, 1
        %s133 = smul.addr %s132, 32
        %s134 = smul.addr %s133, 8
        %s135 = scalar_lea.vmem %s0, %s134
      $region28: #{seg_unet_conv_block.9} parent=23 // pred_fallthru
        _
    $region24: #{seg_unet_conv_block.9} parent=5 // pred_fallthru
      _
    %p136 = scmp.le.s32.totalorder 1, %s9
    %p137 = scmp.lt.s32.totalorder %s9, 3
    %p138 = pnand %p136, %p137
    %p139 = pneg %p138
    // Predicated region
    $region29: #{seg_unet_conv_block.9} parent=5 // pred_check
      _
    $region30: #{seg_unet_conv_block.9} parent=5 // pred_check_branch
      %141 = sbr.rel (%p138) target = $region32
    $region31: #{seg_unet_conv_block.9} parent=5 // pred_region
      %s142 = ssub.s32 %s9, 1
      %p143 = scmp.lt.s32.totalorder %s14, 1
      %s144 = scalar_select %p143, %s14, 1
      %s145 = smul.addr %s144, 32
      %s146 = smul.addr %s145, 8
      %s147 = scalar_lea.vmem %s0, %s146
      %p148 = pneg %p35
      %p149 = pneg %p32
      %p150 = pneg %p56
      %p151 = pneg %p53
      %p152 = pneg %p77
      %p153 = pneg %p74
      %p154 = pneg %p103
      %p155 = pneg %p100
      %p156 = scmp.lt.s32.totalorder %s14, 1
      %s157 = scalar_select %p156, %s14, 1
      %s158 = smul.addr %s157, 32
      %s159 = smul.addr %s158, 8
      %s160 = scalar_lea.vmem %s3, %s159
      %p161 = scmp.lt.s32.totalorder %s14, 1
      %s162 = scalar_select %p161, %s14, 1
      %s163 = smul.addr %s162, 32
      %s164 = smul.addr %s163, 8
      %s165 = scalar_lea.vmem %s0, %s164
      %p166 = scmp.lt.s32.totalorder %s14, 1
      %s167 = scalar_select %p166, %s14, 1
      %s168 = smul.addr %s167, 32
      %s169 = smul.addr %s168, 8
      %s170 = scalar_lea.vmem %s3, %s169
      %v171 = vld [vmem:[%s165] sm:$0xff]
      %v172 = vld [vmem:[%s165 + $0x8] sm:$0xff]
      %v173 = vld [vmem:[%s165 + $0x10] sm:$0xff]
      %v174 = vld [vmem:[%s165 + $0x18] sm:$0xff]
      %v175 = vld [vmem:[%s165 + $0x20] sm:$0xff]
      %v176 = vld [vmem:[%s165 + $0x28] sm:$0xff]
      %v177 = vld [vmem:[%s165 + $0x30] sm:$0xff]
      %v178 = vld [vmem:[%s165 + $0x38] sm:$0xff]
      %v179 = vld [vmem:[%s165 + $0x40] sm:$0xff]
      %v180 = vld [vmem:[%s165 + $0x48] sm:$0xff]
      %v181 = vld [vmem:[%s165 + $0x50] sm:$0xff]
      %v182 = vld [vmem:[%s165 + $0x58] sm:$0xff]
      %v183 = vld [vmem:[%s165 + $0x60] sm:$0xff]
      %v184 = vld [vmem:[%s165 + $0x68] sm:$0xff]
      %v185 = vld [vmem:[%s165 + $0x70] sm:$0xff]
      %v186 = vld [vmem:[%s165 + $0x78] sm:$0xff]
      %v187 = vld [vmem:[%s165 + $0x80] sm:$0xff]
      %v188 = vld [vmem:[%s165 + $0x88] sm:$0xff]
      %v189 = vld [vmem:[%s165 + $0x90] sm:$0xff]
      %v190 = vld [vmem:[%s165 + $0x98] sm:$0xff]
      %v191 = vld [vmem:[%s165 + $0xa0] sm:$0xff]
      %v192 = vld [vmem:[%s165 + $0xa8] sm:$0xff]
      %v193 = vld [vmem:[%s165 + $0xb0] sm:$0xff]
      %v194 = vld [vmem:[%s165 + $0xb8] sm:$0xff]
      %v195 = vld [vmem:[%s165 + $0xc0] sm:$0xff]
      %v196 = vld [vmem:[%s165 + $0xc8] sm:$0xff]
      %v197 = vld [vmem:[%s165 + $0xd0] sm:$0xff]
      %v198 = vld [vmem:[%s165 + $0xd8] sm:$0xff]
      %v199 = vld [vmem:[%s165 + $0xe0] sm:$0xff]
      %v200 = vld [vmem:[%s165 + $0xe8] sm:$0xff]
      %v201 = vld [vmem:[%s165 + $0xf0] sm:$0xff]
      %v202 = vld [vmem:[%s165 + $0xf8] sm:$0xff]
      %v203 = vld [vmem:[%s1] sm:$0x1]
      %v205 = vlaneseq
      %v206 = vshrl.u32 %v205, 7
      %v207 = vsub.s32 0, %v206
      %v208 = vrot.slane %v203, %v207
      %v210 = vmul.f32 %v171, %v208
      %v211 = vmul.f32 %v172, %v208
      %v212 = vmul.f32 %v173, %v208
      %v213 = vmul.f32 %v174, %v208
      %v214 = vmul.f32 %v175, %v208
      %v215 = vmul.f32 %v176, %v208
      %v216 = vmul.f32 %v177, %v208
      %v217 = vmul.f32 %v178, %v208
      %v218 = vmul.f32 %v179, %v208
      %v219 = vmul.f32 %v180, %v208
      %v220 = vmul.f32 %v181, %v208
      %v221 = vmul.f32 %v182, %v208
      %v222 = vmul.f32 %v183, %v208
      %v223 = vmul.f32 %v184, %v208
      %v224 = vmul.f32 %v185, %v208
      %v225 = vmul.f32 %v186, %v208
      %v226 = vmul.f32 %v187, %v208
      %v227 = vmul.f32 %v188, %v208
      %v228 = vmul.f32 %v189, %v208
      %v229 = vmul.f32 %v190, %v208
      %v230 = vmul.f32 %v191, %v208
      %v231 = vmul.f32 %v192, %v208
      %v232 = vmul.f32 %v193, %v208
      %v233 = vmul.f32 %v194, %v208
      %v234 = vmul.f32 %v195, %v208
      %v235 = vmul.f32 %v196, %v208
      %v236 = vmul.f32 %v197, %v208
      %v237 = vmul.f32 %v198, %v208
      %v238 = vmul.f32 %v199, %v208
      %v239 = vmul.f32 %v200, %v208
      %v240 = vmul.f32 %v201, %v208
      %v241 = vmul.f32 %v202, %v208
      %v242 = vld [vmem:[%s2] sm:$0x1]
      %v244 = vlaneseq
      %v245 = vshrl.u32 %v244, 7
      %v246 = vsub.s32 0, %v245
      %v247 = vrot.slane %v242, %v246
      %v249 = vadd.f32 %v210, %v247
      %v250 = vadd.f32 %v211, %v247
      %v251 = vadd.f32 %v212, %v247
      %v252 = vadd.f32 %v213, %v247
      %v253 = vadd.f32 %v214, %v247
      %v254 = vadd.f32 %v215, %v247
      %v255 = vadd.f32 %v216, %v247
      %v256 = vadd.f32 %v217, %v247
      %v257 = vadd.f32 %v218, %v247
      %v258 = vadd.f32 %v219, %v247
      %v259 = vadd.f32 %v220, %v247
      %v260 = vadd.f32 %v221, %v247
      %v261 = vadd.f32 %v222, %v247
      %v262 = vadd.f32 %v223, %v247
      %v263 = vadd.f32 %v224, %v247
      %v264 = vadd.f32 %v225, %v247
      %v265 = vadd.f32 %v226, %v247
      %v266 = vadd.f32 %v227, %v247
      %v267 = vadd.f32 %v228, %v247
      %v268 = vadd.f32 %v229, %v247
      %v269 = vadd.f32 %v230, %v247
      %v270 = vadd.f32 %v231, %v247
      %v271 = vadd.f32 %v232, %v247
      %v272 = vadd.f32 %v233, %v247
      %v273 = vadd.f32 %v234, %v247
      %v274 = vadd.f32 %v235, %v247
      %v275 = vadd.f32 %v236, %v247
      %v276 = vadd.f32 %v237, %v247
      %v277 = vadd.f32 %v238, %v247
      %v278 = vadd.f32 %v239, %v247
      %v279 = vadd.f32 %v240, %v247
      %v280 = vadd.f32 %v241, %v247
      %vm281 = vcmp.gt.f32.partialorder %v249, 0.0
      %vm282 = vcmp.gt.f32.partialorder %v250, 0.0
      %vm283 = vcmp.gt.f32.partialorder %v251, 0.0
      %vm284 = vcmp.gt.f32.partialorder %v252, 0.0
      %vm285 = vcmp.gt.f32.partialorder %v253, 0.0
      %vm286 = vcmp.gt.f32.partialorder %v254, 0.0
      %vm287 = vcmp.gt.f32.partialorder %v255, 0.0
      %vm288 = vcmp.gt.f32.partialorder %v256, 0.0
      %vm289 = vcmp.gt.f32.partialorder %v257, 0.0
      %vm290 = vcmp.gt.f32.partialorder %v258, 0.0
      %vm291 = vcmp.gt.f32.partialorder %v259, 0.0
      %vm292 = vcmp.gt.f32.partialorder %v260, 0.0
      %vm293 = vcmp.gt.f32.partialorder %v261, 0.0
      %vm294 = vcmp.gt.f32.partialorder %v262, 0.0
      %vm295 = vcmp.gt.f32.partialorder %v263, 0.0
      %vm296 = vcmp.gt.f32.partialorder %v264, 0.0
      %vm297 = vcmp.gt.f32.partialorder %v265, 0.0
      %vm298 = vcmp.gt.f32.partialorder %v266, 0.0
      %vm299 = vcmp.gt.f32.partialorder %v267, 0.0
      %vm300 = vcmp.gt.f32.partialorder %v268, 0.0
      %vm301 = vcmp.gt.f32.partialorder %v269, 0.0
      %vm302 = vcmp.gt.f32.partialorder %v270, 0.0
      %vm303 = vcmp.gt.f32.partialorder %v271, 0.0
      %vm304 = vcmp.gt.f32.partialorder %v272, 0.0
      %vm305 = vcmp.gt.f32.partialorder %v273, 0.0
      %vm306 = vcmp.gt.f32.partialorder %v274, 0.0
      %vm307 = vcmp.gt.f32.partialorder %v275, 0.0
      %vm308 = vcmp.gt.f32.partialorder %v276, 0.0
      %vm309 = vcmp.gt.f32.partialorder %v277, 0.0
      %vm310 = vcmp.gt.f32.partialorder %v278, 0.0
      %vm311 = vcmp.gt.f32.partialorder %v279, 0.0
      %vm312 = vcmp.gt.f32.partialorder %v280, 0.0
      %v313 = vmul.f32 %v249, 0.01
      %v314 = vmul.f32 %v250, 0.01
      %v315 = vmul.f32 %v251, 0.01
      %v316 = vmul.f32 %v252, 0.01
      %v317 = vmul.f32 %v253, 0.01
      %v318 = vmul.f32 %v254, 0.01
      %v319 = vmul.f32 %v255, 0.01
      %v320 = vmul.f32 %v256, 0.01
      %v321 = vmul.f32 %v257, 0.01
      %v322 = vmul.f32 %v258, 0.01
      %v323 = vmul.f32 %v259, 0.01
      %v324 = vmul.f32 %v260, 0.01
      %v325 = vmul.f32 %v261, 0.01
      %v326 = vmul.f32 %v262, 0.01
      %v327 = vmul.f32 %v263, 0.01
      %v328 = vmul.f32 %v264, 0.01
      %v329 = vmul.f32 %v265, 0.01
      %v330 = vmul.f32 %v266, 0.01
      %v331 = vmul.f32 %v267, 0.01
      %v332 = vmul.f32 %v268, 0.01
      %v333 = vmul.f32 %v269, 0.01
      %v334 = vmul.f32 %v270, 0.01
      %v335 = vmul.f32 %v271, 0.01
      %v336 = vmul.f32 %v272, 0.01
      %v337 = vmul.f32 %v273, 0.01
      %v338 = vmul.f32 %v274, 0.01
      %v339 = vmul.f32 %v275, 0.01
      %v340 = vmul.f32 %v276, 0.01
      %v341 = vmul.f32 %v277, 0.01
      %v342 = vmul.f32 %v278, 0.01
      %v343 = vmul.f32 %v279, 0.01
      %v344 = vmul.f32 %v280, 0.01
      %v345 = vsel %vm281, %v249, %v313
      %v346 = vsel %vm282, %v250, %v314
      %v347 = vsel %vm283, %v251, %v315
      %v348 = vsel %vm284, %v252, %v316
      %v349 = vsel %vm285, %v253, %v317
      %v350 = vsel %vm286, %v254, %v318
      %v351 = vsel %vm287, %v255, %v319
      %v352 = vsel %vm288, %v256, %v320
      %v353 = vsel %vm289, %v257, %v321
      %v354 = vsel %vm290, %v258, %v322
      %v355 = vsel %vm291, %v259, %v323
      %v356 = vsel %vm292, %v260, %v324
      %v357 = vsel %vm293, %v261, %v325
      %v358 = vsel %vm294, %v262, %v326
      %v359 = vsel %vm295, %v263, %v327
      %v360 = vsel %vm296, %v264, %v328
      %v361 = vsel %vm297, %v265, %v329
      %v362 = vsel %vm298, %v266, %v330
      %v363 = vsel %vm299, %v267, %v331
      %v364 = vsel %vm300, %v268, %v332
      %v365 = vsel %vm301, %v269, %v333
      %v366 = vsel %vm302, %v270, %v334
      %v367 = vsel %vm303, %v271, %v335
      %v368 = vsel %vm304, %v272, %v336
      %v369 = vsel %vm305, %v273, %v337
      %v370 = vsel %vm306, %v274, %v338
      %v371 = vsel %vm307, %v275, %v339
      %v372 = vsel %vm308, %v276, %v340
      %v373 = vsel %vm309, %v277, %v341
      %v374 = vsel %vm310, %v278, %v342
      %v375 = vsel %vm311, %v279, %v343
      %v376 = vsel %vm312, %v280, %v344
      %377 = vst [vmem:[%s170] sm:$0xff] %v345
      %378 = vst [vmem:[%s170 + $0x8] sm:$0xff] %v346
      %379 = vst [vmem:[%s170 + $0x10] sm:$0xff] %v347
      %380 = vst [vmem:[%s170 + $0x18] sm:$0xff] %v348
      %381 = vst [vmem:[%s170 + $0x20] sm:$0xff] %v349
      %382 = vst [vmem:[%s170 + $0x28] sm:$0xff] %v350
      %383 = vst [vmem:[%s170 + $0x30] sm:$0xff] %v351
      %384 = vst [vmem:[%s170 + $0x38] sm:$0xff] %v352
      %385 = vst [vmem:[%s170 + $0x40] sm:$0xff] %v353
      %386 = vst [vmem:[%s170 + $0x48] sm:$0xff] %v354
      %387 = vst [vmem:[%s170 + $0x50] sm:$0xff] %v355
      %388 = vst [vmem:[%s170 + $0x58] sm:$0xff] %v356
      %389 = vst [vmem:[%s170 + $0x60] sm:$0xff] %v357
      %390 = vst [vmem:[%s170 + $0x68] sm:$0xff] %v358
      %391 = vst [vmem:[%s170 + $0x70] sm:$0xff] %v359
      %392 = vst [vmem:[%s170 + $0x78] sm:$0xff] %v360
      %393 = vst [vmem:[%s170 + $0x80] sm:$0xff] %v361
      %394 = vst [vmem:[%s170 + $0x88] sm:$0xff] %v362
      %395 = vst [vmem:[%s170 + $0x90] sm:$0xff] %v363
      %396 = vst [vmem:[%s170 + $0x98] sm:$0xff] %v364
      %397 = vst [vmem:[%s170 + $0xa0] sm:$0xff] %v365
      %398 = vst [vmem:[%s170 + $0xa8] sm:$0xff] %v366
      %399 = vst [vmem:[%s170 + $0xb0] sm:$0xff] %v367
      %400 = vst [vmem:[%s170 + $0xb8] sm:$0xff] %v368
      %401 = vst [vmem:[%s170 + $0xc0] sm:$0xff] %v369
      %402 = vst [vmem:[%s170 + $0xc8] sm:$0xff] %v370
      %403 = vst [vmem:[%s170 + $0xd0] sm:$0xff] %v371
      %404 = vst [vmem:[%s170 + $0xd8] sm:$0xff] %v372
      %405 = vst [vmem:[%s170 + $0xe0] sm:$0xff] %v373
      %406 = vst [vmem:[%s170 + $0xe8] sm:$0xff] %v374
      %407 = vst [vmem:[%s170 + $0xf0] sm:$0xff] %v375
      %408 = vst [vmem:[%s170 + $0xf8] sm:$0xff] %v376
      %p409 = scmp.lt.s32.totalorder %s14, 1
      %s410 = scalar_select %p409, %s14, 1
      %s411 = smul.addr %s410, 32
      %s412 = smul.addr %s411, 8
      %s413 = scalar_lea.vmem %s3, %s412
      // Predicated region
      $region33: #{seg_unet_conv_block.9} parent=31 // pred_check
        %p414 = pneg %p100
      $region34: #{seg_unet_conv_block.9} parent=31 // pred_check_branch
        %416 = sbr.rel (%p414) target = $region36
      $region35: #{seg_unet_conv_block.9} parent=31 // pred_region
        _
      $region36: #{seg_unet_conv_block.9} parent=31 // pred_fallthru
        _
    $region32: #{seg_unet_conv_block.9} parent=5 // pred_fallthru
      _
    %p417 = scmp.le.s32.totalorder 2, %s9
    // Predicated region
    $region37: #{seg_unet_conv_block.9} parent=5 // pred_check
      %p418 = pneg %p417
    $region38: #{seg_unet_conv_block.9} parent=5 // pred_check_branch
      %420 = sbr.rel (%p418) target = $region40
    $region39: #{seg_unet_conv_block.9} parent=5 // pred_region
      %s421 = ssub.s32 %s9, 2
      // Predicated region
      $region41: #{seg_unet_conv_block.9} parent=39 // pred_check
        %p422 = pneg %p106
      $region42: #{seg_unet_conv_block.9} parent=39 // pred_check_branch
        %424 = sbr.rel (%p422) target = $region44
      $region43: #{seg_unet_conv_block.9} parent=39 // pred_region
        %p425 = scmp.lt.s32.totalorder %s15, 1
        %s426 = scalar_select %p425, %s15, 1
        %s427 = smul.addr %s426, 32
        %s428 = smul.addr %s427, 8
        %s429 = scalar_lea.vmem %s3, %s428
      $region44: #{seg_unet_conv_block.9} parent=39 // pred_fallthru
        _
    $region40: #{seg_unet_conv_block.9} parent=5 // pred_fallthru
      _
  $region6: #{seg_unet_conv_block.9} parent=0 // loop_footer
    %s13 = sadd.s32 1, %s9
  $region7: #{seg_unet_conv_block.9} parent=0 // loop_footer_branch
    %8 = sbr.rel target = $region3
  $region8: #{seg_unet_conv_block.9} parent=0 // loop_exit
    _

// kernel: seg_unet_conv_block.6
$region0: #{seg_unet_conv_block.6}
  #allocation0 [shape = 'u32[]', space=smem, size = 0x4, offset = 0x4, fixed_abs, tag = 'smem constant byte address 0x4 - core index']
  #allocation1 [shape = 'u32[144,128]{1,0:T(1,128)}', space=vmem, size = 0x12000, scoped, tag = 'internal scratch']
  #allocation2 [shape = 'f32[18,18,128]{2,1,0:T(8,128)}', space=vmem, size = 0x36000, scoped, tag = 'scratch operand']
  #allocation3 [shape = 'f32[256,1152]{1,0:T(8,128)}', space=vmem, size = 0x120000, scoped, tag = 'scratch operand']
  %s0 = inlined_call_operand.vmem [shape: f32[2,16,16,128], index: 0, kind: input, shape index: {}]
  %s1 = inlined_call_operand.vmem [shape: f32[1,128], index: 1, kind: input, shape index: {}]
  %s2 = inlined_call_operand.vmem [shape: f32[1,128], index: 2, kind: input, shape index: {}]
  %s3 = inlined_call_operand.vmem [shape: f32[1152,128], index: 3, kind: input, shape index: {}]
  %s4 = inlined_call_operand.vmem [shape: f32[2,16,16,128], index: 4, kind: output, shape index: {0}]
  %s5 = inlined_call_operand.vmem [shape: f32[2,2,128], index: 5, kind: output, shape index: {1}]
  %6 = xla_tuple %s4, %s5
  %s7 = sld [smem:[#allocation0]]
  $region57: #{seg_unet_conv_block.6} parent=0
    _
  %s9 = ssub.s32 1, %s7
  %s10 = scalar_select 0, %s9, %s7
  loop: start=0, step=1, limit=4
  $region2: #{seg_unet_conv_block.6} parent=0 // loop_pre_header
    _
  $region3: #{seg_unet_conv_block.6} parent=0 // loop_header
    %s12 = sphi 0, %s16
    %p13 = scmp.ge.s32.totalorder %s12, 4
    %s22 = sphi 0, %s24
    %s25 = sphi 0, %s22
    %s26 = sphi 0, %s25
    %s42 = sphi 0, %s26
    %s46 = sphi 0, %s46
    %s48 = sphi 0, %s46
    %s49 = sphi 0, %s48
    %s63 = sphi 0, %s49
    %s67 = sphi 0, %s67
    %s69 = sphi 0, %s67
    %s70 = sphi 0, %s69
    %s84 = sphi 0, %s70
    %s88 = sphi 0, %s88
    %s90 = sphi 0, %s88
    %s91 = sphi 0, %s90
    %s105 = sphi 0, %s91
    %s111 = sphi 0, %s113
    %s114 = sphi 0, %s111
    %s115 = sphi 0, %s114
    %s131 = sphi 0, %s115
    %s137 = sphi 0, %s139
    %s140 = sphi 0, %s137
    %s141 = sphi 0, %s140
    %s157 = sphi 0, %s141
  $region4: #{seg_unet_conv_block.6} parent=0 // loop_header_branch
    %15 = sbr.rel (%p13) target = $region8
  $region5: #{seg_unet_conv_block.6} parent=0 // loop_body
    %s17 = ssub.s32 %s12, 1
    %s18 = ssub.s32 %s12, 2
    %s19 = sadd.s32 %s12, 1
    %s20 = ssub.s32 %s12, %s19
    %p21 = scmp.eq.s32.totalorder %s20, 0
    %s23 = sadd.s32 %s22, 1
    %s24 = scalar_select %p21, %s22, %s23
    %p27 = pneg %p21
    %p28 = scmp.eq.s32.totalorder %s12, 1
    %p29 = por %p27, %p28
    %p30 = scmp.ne.s32.totalorder %s22, %s25
    %p31 = scmp.eq.s32.totalorder %s12, 0
    %p32 = por %p30, %p31
    %p33 = scmp.ne.s32.totalorder %s22, %s25
    %p34 = scmp.eq.s32.totalorder %s17, 1
    %p35 = por %p33, %p34
    %p36 = scmp.ne.s32.totalorder %s25, %s26
    %p37 = scmp.eq.s32.totalorder %s17, 0
    %p38 = por %p36, %p37
    %p39 = scmp.ne.s32.totalorder %s25, %s26
    %p40 = scmp.eq.s32.totalorder %s18, 1
    %p41 = por %p39, %p40
    %p43 = scmp.ne.s32.totalorder %s26, %s42
    %p44 = scmp.eq.s32.totalorder %s18, 0
    %p45 = por %p43, %p44
    %s47 = sadd.s32 %s46, 1
    %p50 = scmp.eq.s32.totalorder %s12, 1
    %p51 = scmp.ne.s32.totalorder %s46, %s48
    %p52 = scmp.eq.s32.totalorder %s12, 0
    %p53 = por %p51, %p52
    %p54 = scmp.ne.s32.totalorder %s46, %s48
    %p55 = scmp.eq.s32.totalorder %s17, 1
    %p56 = por %p54, %p55
    %p57 = scmp.ne.s32.totalorder %s48, %s49
    %p58 = scmp.eq.s32.totalorder %s17, 0
    %p59 = por %p57, %p58
    %p60 = scmp.ne.s32.totalorder %s48, %s49
    %p61 = scmp.eq.s32.totalorder %s18, 1
    %p62 = por %p60, %p61
    %p64 = scmp.ne.s32.totalorder %s49, %s63
    %p65 = scmp.eq.s32.totalorder %s18, 0
    %p66 = por %p64, %p65
    %s68 = sadd.s32 %s67, 1
    %p71 = scmp.eq.s32.totalorder %s12, 1
    %p72 = scmp.ne.s32.totalorder %s67, %s69
    %p73 = scmp.eq.s32.totalorder %s12, 0
    %p74 = por %p72, %p73
    %p75 = scmp.ne.s32.totalorder %s67, %s69
    %p76 = scmp.eq.s32.totalorder %s17, 1
    %p77 = por %p75, %p76
    %p78 = scmp.ne.s32.totalorder %s69, %s70
    %p79 = scmp.eq.s32.totalorder %s17, 0
    %p80 = por %p78, %p79
    %p81 = scmp.ne.s32.totalorder %s69, %s70
    %p82 = scmp.eq.s32.totalorder %s18, 1
    %p83 = por %p81, %p82
    %p85 = scmp.ne.s32.totalorder %s70, %s84
    %p86 = scmp.eq.s32.totalorder %s18, 0
    %p87 = por %p85, %p86
    %s89 = sadd.s32 %s88, 1
    %p92 = scmp.eq.s32.totalorder %s12, 1
    %p93 = scmp.ne.s32.totalorder %s88, %s90
    %p94 = scmp.eq.s32.totalorder %s12, 0
    %p95 = por %p93, %p94
    %p96 = scmp.ne.s32.totalorder %s88, %s90
    %p97 = scmp.eq.s32.totalorder %s17, 1
    %p98 = por %p96, %p97
    %p99 = scmp.ne.s32.totalorder %s90, %s91
    %p100 = scmp.eq.s32.totalorder %s17, 0
    %p101 = por %p99, %p100
    %p102 = scmp.ne.s32.totalorder %s90, %s91
    %p103 = scmp.eq.s32.totalorder %s18, 1
    %p104 = por %p102, %p103
    %p106 = scmp.ne.s32.totalorder %s91, %s105
    %p107 = scmp.eq.s32.totalorder %s18, 0
    %p108 = por %p106, %p107
    %s109 = ssub.s32 %s12, %s19
    %p110 = scmp.eq.s32.totalorder %s109, 0
    %s112 = sadd.s32 %s111, 1
    %s113 = scalar_select %p110, %s111, %s112
    %p116 = pneg %p110
    %p117 = scmp.eq.s32.totalorder %s12, 1
    %p118 = por %p116, %p117
    %p119 = scmp.ne.s32.totalorder %s111, %s114
    %p120 = scmp.eq.s32.totalorder %s12, 0
    %p121 = por %p119, %p120
    %p122 = scmp.ne.s32.totalorder %s111, %s114
    %p123 = scmp.eq.s32.totalorder %s17, 1
    %p124 = por %p122, %p123
    %p125 = scmp.ne.s32.totalorder %s114, %s115
    %p126 = scmp.eq.s32.totalorder %s17, 0
    %p127 = por %p125, %p126
    %p128 = scmp.ne.s32.totalorder %s114, %s115
    %p129 = scmp.eq.s32.totalorder %s18, 1
    %p130 = por %p128, %p129
    %p132 = scmp.ne.s32.totalorder %s115, %s131
    %p133 = scmp.eq.s32.totalorder %s18, 0
    %p134 = por %p132, %p133
    %s135 = ssub.s32 %s12, %s19
    %p136 = scmp.eq.s32.totalorder %s135, 0
    %s138 = sadd.s32 %s137, 1
    %s139 = scalar_select %p136, %s137, %s138
    %p142 = pneg %p136
    %p143 = scmp.eq.s32.totalorder %s12, 1
    %p144 = por %p142, %p143
    %p145 = scmp.ne.s32.totalorder %s137, %s140
    %p146 = scmp.eq.s32.totalorder %s12, 0
    %p147 = por %p145, %p146
    %p148 = scmp.ne.s32.totalorder %s137, %s140
    %p149 = scmp.eq.s32.totalorder %s17, 1
    %p150 = por %p148, %p149
    %p151 = scmp.ne.s32.totalorder %s140, %s141
    %p152 = scmp.eq.s32.totalorder %s17, 0
    %p153 = por %p151, %p152
    %p154 = scmp.ne.s32.totalorder %s140, %s141
    %p155 = scmp.eq.s32.totalorder %s18, 1
    %p156 = por %p154, %p155
    %p158 = scmp.ne.s32.totalorder %s141, %s157
    %p159 = scmp.eq.s32.totalorder %s18, 0
    %p160 = por %p158, %p159
    %p161 = scmp.le.s32.totalorder 1, %s12
    %p162 = scmp.lt.s32.totalorder %s12, 3
    %p163 = pnand %p161, %p162
    %p164 = pneg %p163
    // Predicated region
    $region9: #{seg_unet_conv_block.6} parent=5 // pred_check
      _
    $region10: #{seg_unet_conv_block.6} parent=5 // pred_check_branch
      %166 = sbr.rel (%p163) target = $region12
    $region11: #{seg_unet_conv_block.6} parent=5 // pred_region
      %s167 = ssub.s32 %s12, 1
      // Predicated region
      $region13: #{seg_unet_conv_block.6} parent=11 // pred_check
        %p168 = pneg %p59
      $region14: #{seg_unet_conv_block.6} parent=11 // pred_check_branch
        %170 = sbr.rel (%p168) target = $region16
      $region15: #{seg_unet_conv_block.6} parent=11 // pred_region
        _
      $region16: #{seg_unet_conv_block.6} parent=11 // pred_fallthru
        _
      // Predicated region
      $region17: #{seg_unet_conv_block.6} parent=11 // pred_check
        %p171 = pneg %p80
      $region18: #{seg_unet_conv_block.6} parent=11 // pred_check_branch
        %173 = sbr.rel (%p171) target = $region20
      $region19: #{seg_unet_conv_block.6} parent=11 // pred_region
        _
      $region20: #{seg_unet_conv_block.6} parent=11 // pred_fallthru
        _
      // Predicated region
      $region21: #{seg_unet_conv_block.6} parent=11 // pred_check
        %p174 = pneg %p101
      $region22: #{seg_unet_conv_block.6} parent=11 // pred_check_branch
        %176 = sbr.rel (%p174) target = $region24
      $region23: #{seg_unet_conv_block.6} parent=11 // pred_region
        _
      $region24: #{seg_unet_conv_block.6} parent=11 // pred_fallthru
        _
    $region12: #{seg_unet_conv_block.6} parent=5 // pred_fallthru
      _
    %p177 = scmp.lt.s32.totalorder %s12, 2
    // Predicated region
    $region25: #{seg_unet_conv_block.6} parent=5 // pred_check
      %p178 = pneg %p177
    $region26: #{seg_unet_conv_block.6} parent=5 // pred_check_branch
      %180 = sbr.rel (%p178) target = $region28
    $region27: #{seg_unet_conv_block.6} parent=5 // pred_region
      // Predicated region
      $region29: #{seg_unet_conv_block.6} parent=27 // pred_check
        %p181 = pneg %p32
      $region30: #{seg_unet_conv_block.6} parent=27 // pred_check_branch
        %183 = sbr.rel (%p181) target = $region32
      $region31: #{seg_unet_conv_block.6} parent=27 // pred_region
        %p184 = scmp.lt.s32.totalorder %s12, 1
        %s185 = scalar_select %p184, %s12, 1
        %s186 = smul.addr %s185, 32
        %s187 = smul.addr %s186, 8
        %s188 = scalar_lea.vmem %s0, %s187
      $region32: #{seg_unet_conv_block.6} parent=27 // pred_fallthru
        _
    $region28: #{seg_unet_conv_block.6} parent=5 // pred_fallthru
      _
    %p189 = scmp.le.s32.totalorder 1, %s12
    %p190 = scmp.lt.s32.totalorder %s12, 3
    %p191 = pnand %p189, %p190
    %p192 = pneg %p191
    // Predicated region
    $region33: #{seg_unet_conv_block.6} parent=5 // pred_check
      _
    $region34: #{seg_unet_conv_block.6} parent=5 // pred_check_branch
      %194 = sbr.rel (%p191) target = $region36
    $region35: #{seg_unet_conv_block.6} parent=5 // pred_region
      %s195 = ssub.s32 %s12, 1
      %p196 = scmp.lt.s32.totalorder %s17, 1
      %s197 = scalar_select %p196, %s17, 1
      %s198 = smul.addr %s197, 32
      %s199 = smul.addr %s198, 8
      %s200 = scalar_lea.vmem %s0, %s199
      %p201 = pneg %p38
      %p202 = pneg %p35
      %p203 = pneg %p59
      %p204 = pneg %p56
      %p205 = pneg %p80
      %p206 = pneg %p77
      %p207 = pneg %p101
      %p208 = pneg %p98
      %p209 = pneg %p127
      %p210 = pneg %p124
      %p211 = scmp.lt.s32.totalorder %s17, 1
      %s212 = scalar_select %p211, %s17, 1
      %s213 = smul.addr %s212, 32
      %s214 = smul.addr %s213, 8
      %s215 = scalar_lea.vmem %s4, %s214
      %p216 = pneg %p153
      %p217 = pneg %p150
      %p218 = scmp.lt.s32.totalorder %s17, 1
      %s219 = scalar_select %p218, %s17, 1
      %s220 = smul.addr %s219, 2
      %s221 = scalar_lea.vmem %s5, %s220
      %p222 = scmp.lt.s32.totalorder %s17, 1
      %s223 = scalar_select %p222, %s17, 1
      %s224 = smul.addr %s223, 32
      %s225 = smul.addr %s224, 8
      %s226 = scalar_lea.vmem %s0, %s225
      %p227 = scmp.lt.s32.totalorder %s17, 1
      %s228 = scalar_select %p227, %s17, 1
      %s229 = smul.addr %s228, 32
      %s230 = smul.addr %s229, 8
      %s231 = scalar_lea.vmem %s4, %s230
      %p232 = scmp.lt.s32.totalorder %s17, 1
      %s233 = scalar_select %p232, %s17, 1
      %s234 = smul.addr %s233, 2
      %s235 = scalar_lea.vmem %s5, %s234
      %v236 = vld [vmem:[%s226] sm:$0xff]
      %v237 = vld [vmem:[%s226 + $0x8] sm:$0xff]
      %v238 = vld [vmem:[%s226 + $0x10] sm:$0xff]
      %v239 = vld [vmem:[%s226 + $0x18] sm:$0xff]
      %v240 = vld [vmem:[%s226 + $0x20] sm:$0xff]
      %v241 = vld [vmem:[%s226 + $0x28] sm:$0xff]
      %v242 = vld [vmem:[%s226 + $0x30] sm:$0xff]
      %v243 = vld [vmem:[%s226 + $0x38] sm:$0xff]
      %v244 = vld [vmem:[%s226 + $0x40] sm:$0xff]
      %v245 = vld [vmem:[%s226 + $0x48] sm:$0xff]
      %v246 = vld [vmem:[%s226 + $0x50] sm:$0xff]
      %v247 = vld [vmem:[%s226 + $0x58] sm:$0xff]
      %v248 = vld [vmem:[%s226 + $0x60] sm:$0xff]
      %v249 = vld [vmem:[%s226 + $0x68] sm:$0xff]
      %v250 = vld [vmem:[%s226 + $0x70] sm:$0xff]
      %v251 = vld [vmem:[%s226 + $0x78] sm:$0xff]
      %v252 = vld [vmem:[%s226 + $0x80] sm:$0xff]
      %v253 = vld [vmem:[%s226 + $0x88] sm:$0xff]
      %v254 = vld [vmem:[%s226 + $0x90] sm:$0xff]
      %v255 = vld [vmem:[%s226 + $0x98] sm:$0xff]
      %v256 = vld [vmem:[%s226 + $0xa0] sm:$0xff]
      %v257 = vld [vmem:[%s226 + $0xa8] sm:$0xff]
      %v258 = vld [vmem:[%s226 + $0xb0] sm:$0xff]
      %v259 = vld [vmem:[%s226 + $0xb8] sm:$0xff]
      %v260 = vld [vmem:[%s226 + $0xc0] sm:$0xff]
      %v261 = vld [vmem:[%s226 + $0xc8] sm:$0xff]
      %v262 = vld [vmem:[%s226 + $0xd0] sm:$0xff]
      %v263 = vld [vmem:[%s226 + $0xd8] sm:$0xff]
      %v264 = vld [vmem:[%s226 + $0xe0] sm:$0xff]
      %v265 = vld [vmem:[%s226 + $0xe8] sm:$0xff]
      %v266 = vld [vmem:[%s226 + $0xf0] sm:$0xff]
      %v267 = vld [vmem:[%s226 + $0xf8] sm:$0xff]
      %v268 = vld [vmem:[%s1] sm:$0x1]
      %v270 = vlaneseq
      %v271 = vshrl.u32 %v270, 7
      %v272 = vsub.s32 0, %v271
      %v273 = vrot.slane %v268, %v272
      %v275 = vmul.f32 %v236, %v273
      %v276 = vmul.f32 %v237, %v273
      %v277 = vmul.f32 %v238, %v273
      %v278 = vmul.f32 %v239, %v273
      %v279 = vmul.f32 %v240, %v273
      %v280 = vmul.f32 %v241, %v273
      %v281 = vmul.f32 %v242, %v273
      %v282 = vmul.f32 %v243, %v273
      %v283 = vmul.f32 %v244, %v273
      %v284 = vmul.f32 %v245, %v273
      %v285 = vmul.f32 %v246, %v273
      %v286 = vmul.f32 %v247, %v273
      %v287 = vmul.f32 %v248, %v273
      %v288 = vmul.f32 %v249, %v273
      %v289 = vmul.f32 %v250, %v273
      %v290 = vmul.f32 %v251, %v273
      %v291 = vmul.f32 %v252, %v273
      %v292 = vmul.f32 %v253, %v273
      %v293 = vmul.f32 %v254, %v273
      %v294 = vmul.f32 %v255, %v273
      %v295 = vmul.f32 %v256, %v273
      %v296 = vmul.f32 %v257, %v273
      %v297 = vmul.f32 %v258, %v273
      %v298 = vmul.f32 %v259, %v273
      %v299 = vmul.f32 %v260, %v273
      %v300 = vmul.f32 %v261, %v273
      %v301 = vmul.f32 %v262, %v273
      %v302 = vmul.f32 %v263, %v273
      %v303 = vmul.f32 %v264, %v273
      %v304 = vmul.f32 %v265, %v273
      %v305 = vmul.f32 %v266, %v273
      %v306 = vmul.f32 %v267, %v273
      %v307 = vld [vmem:[%s2] sm:$0x1]
      %v309 = vlaneseq
      %v310 = vshrl.u32 %v309, 7
      %v311 = vsub.s32 0, %v310
      %v312 = vrot.slane %v307, %v311
      %v314 = vadd.f32 %v275, %v312
      %v315 = vadd.f32 %v276, %v312
      %v316 = vadd.f32 %v277, %v312
      %v317 = vadd.f32 %v278, %v312
      %v318 = vadd.f32 %v279, %v312
      %v319 = vadd.f32 %v280, %v312
      %v320 = vadd.f32 %v281, %v312
      %v321 = vadd.f32 %v282, %v312
      %v322 = vadd.f32 %v283, %v312
      %v323 = vadd.f32 %v284, %v312
      %v324 = vadd.f32 %v285, %v312
      %v325 = vadd.f32 %v286, %v312
      %v326 = vadd.f32 %v287, %v312
      %v327 = vadd.f32 %v288, %v312
      %v328 = vadd.f32 %v289, %v312
      %v329 = vadd.f32 %v290, %v312
      %v330 = vadd.f32 %v291, %v312
      %v331 = vadd.f32 %v292, %v312
      %v332 = vadd.f32 %v293, %v312
      %v333 = vadd.f32 %v294, %v312
      %v334 = vadd.f32 %v295, %v312
      %v335 = vadd.f32 %v296, %v312
      %v336 = vadd.f32 %v297, %v312
      %v337 = vadd.f32 %v298, %v312
      %v338 = vadd.f32 %v299, %v312
      %v339 = vadd.f32 %v300, %v312
      %v340 = vadd.f32 %v301, %v312
      %v341 = vadd.f32 %v302, %v312
      %v342 = vadd.f32 %v303, %v312
      %v343 = vadd.f32 %v304, %v312
      %v344 = vadd.f32 %v305, %v312
      %v345 = vadd.f32 %v306, %v312
      %vm346 = vcmp.gt.f32.partialorder %v314, 0.0
      %vm347 = vcmp.gt.f32.partialorder %v315, 0.0
      %vm348 = vcmp.gt.f32.partialorder %v316, 0.0
      %vm349 = vcmp.gt.f32.partialorder %v317, 0.0
      %vm350 = vcmp.gt.f32.partialorder %v318, 0.0
      %vm351 = vcmp.gt.f32.partialorder %v319, 0.0
      %vm352 = vcmp.gt.f32.partialorder %v320, 0.0
      %vm353 = vcmp.gt.f32.partialorder %v321, 0.0
      %vm354 = vcmp.gt.f32.partialorder %v322, 0.0
      %vm355 = vcmp.gt.f32.partialorder %v323, 0.0
      %vm356 = vcmp.gt.f32.partialorder %v324, 0.0
      %vm357 = vcmp.gt.f32.partialorder %v325, 0.0
      %vm358 = vcmp.gt.f32.partialorder %v326, 0.0
      %vm359 = vcmp.gt.f32.partialorder %v327, 0.0
      %vm360 = vcmp.gt.f32.partialorder %v328, 0.0
      %vm361 = vcmp.gt.f32.partialorder %v329, 0.0
      %vm362 = vcmp.gt.f32.partialorder %v330, 0.0
      %vm363 = vcmp.gt.f32.partialorder %v331, 0.0
      %vm364 = vcmp.gt.f32.partialorder %v332, 0.0
      %vm365 = vcmp.gt.f32.partialorder %v333, 0.0
      %vm366 = vcmp.gt.f32.partialorder %v334, 0.0
      %vm367 = vcmp.gt.f32.partialorder %v335, 0.0
      %vm368 = vcmp.gt.f32.partialorder %v336, 0.0
      %vm369 = vcmp.gt.f32.partialorder %v337, 0.0
      %vm370 = vcmp.gt.f32.partialorder %v338, 0.0
      %vm371 = vcmp.gt.f32.partialorder %v339, 0.0
      %vm372 = vcmp.gt.f32.partialorder %v340, 0.0
      %vm373 = vcmp.gt.f32.partialorder %v341, 0.0
      %vm374 = vcmp.gt.f32.partialorder %v342, 0.0
      %vm375 = vcmp.gt.f32.partialorder %v343, 0.0
      %vm376 = vcmp.gt.f32.partialorder %v344, 0.0
      %vm377 = vcmp.gt.f32.partialorder %v345, 0.0
      %v378 = vmul.f32 %v314, 0.01
      %v379 = vmul.f32 %v315, 0.01
      %v380 = vmul.f32 %v316, 0.01
      %v381 = vmul.f32 %v317, 0.01
      %v382 = vmul.f32 %v318, 0.01
      %v383 = vmul.f32 %v319, 0.01
      %v384 = vmul.f32 %v320, 0.01
      %v385 = vmul.f32 %v321, 0.01
      %v386 = vmul.f32 %v322, 0.01
      %v387 = vmul.f32 %v323, 0.01
      %v388 = vmul.f32 %v324, 0.01
      %v389 = vmul.f32 %v325, 0.01
      %v390 = vmul.f32 %v326, 0.01
      %v391 = vmul.f32 %v327, 0.01
      %v392 = vmul.f32 %v328, 0.01
      %v393 = vmul.f32 %v329, 0.01
      %v394 = vmul.f32 %v330, 0.01
      %v395 = vmul.f32 %v331, 0.01
      %v396 = vmul.f32 %v332, 0.01
      %v397 = vmul.f32 %v333, 0.01
      %v398 = vmul.f32 %v334, 0.01
      %v399 = vmul.f32 %v335, 0.01
      %v400 = vmul.f32 %v336, 0.01
      %v401 = vmul.f32 %v337, 0.01
      %v402 = vmul.f32 %v338, 0.01
      %v403 = vmul.f32 %v339, 0.01
      %v404 = vmul.f32 %v340, 0.01
      %v405 = vmul.f32 %v341, 0.01
      %v406 = vmul.f32 %v342, 0.01
      %v407 = vmul.f32 %v343, 0.01
      %v408 = vmul.f32 %v344, 0.01
      %v409 = vmul.f32 %v345, 0.01
      %v410 = vsel %vm346, %v314, %v378
      %v411 = vsel %vm347, %v315, %v379
      %v412 = vsel %vm348, %v316, %v380
      %v413 = vsel %vm349, %v317, %v381
      %v414 = vsel %vm350, %v318, %v382
      %v415 = vsel %vm351, %v319, %v383
      %v416 = vsel %vm352, %v320, %v384
      %v417 = vsel %vm353, %v321, %v385
      %v418 = vsel %vm354, %v322, %v386
      %v419 = vsel %vm355, %v323, %v387
      %v420 = vsel %vm356, %v324, %v388
      %v421 = vsel %vm357, %v325, %v389
      %v422 = vsel %vm358, %v326, %v390
      %v423 = vsel %vm359, %v327, %v391
      %v424 = vsel %vm360, %v328, %v392
      %v425 = vsel %vm361, %v329, %v393
      %v426 = vsel %vm362, %v330, %v394
      %v427 = vsel %vm363, %v331, %v395
      %v428 = vsel %vm364, %v332, %v396
      %v429 = vsel %vm365, %v333, %v397
      %v430 = vsel %vm366, %v334, %v398
      %v431 = vsel %vm367, %v335, %v399
      %v432 = vsel %vm368, %v336, %v400
      %v433 = vsel %vm369, %v337, %v401
      %v434 = vsel %vm370, %v338, %v402
      %v435 = vsel %vm371, %v339, %v403
      %v436 = vsel %vm372, %v340, %v404
      %v437 = vsel %vm373, %v341, %v405
      %v438 = vsel %vm374, %v342, %v406
      %v439 = vsel %vm375, %v343, %v407
      %v440 = vsel %vm376, %v344, %v408
      %v441 = vsel %vm377, %v345, %v409
      %442 = vst [vmem:[#allocation2] sm:$0xff] 0.0
      %443 = vst [vmem:[#allocation2 + $0x8] sm:$0xff] 0.0
      %444 = vst [vmem:[#allocation2 + $0x10] sm:$0x3] 0.0
      %445 = vst [vmem:[#allocation2 + $0x18] sm:$0xff] 0.0
      %446 = vst [vmem:[#allocation2 + $0x20] sm:$0xff] 0.0
      %447 = vst [vmem:[#allocation2 + $0x28] sm:$0x3] 0.0
      %448 = vst [vmem:[#allocation2 + $0x30] sm:$0xff] 0.0
      %449 = vst [vmem:[#allocation2 + $0x38] sm:$0xff] 0.0
      %450 = vst [vmem:[#allocation2 + $0x40] sm:$0x3] 0.0
      %451 = vst [vmem:[#allocation2 + $0x48] sm:$0xff] 0.0
      %452 = vst [vmem:[#allocation2 + $0x50] sm:$0xff] 0.0
      %453 = vst [vmem:[#allocation2 + $0x58] sm:$0x3] 0.0
      %454 = vst [vmem:[#allocation2 + $0x60] sm:$0xff] 0.0
      %455 = vst [vmem:[#allocation2 + $0x68] sm:$0xff] 0.0
      %456 = vst [vmem:[#allocation2 + $0x70] sm:$0x3] 0.0
      %457 = vst [vmem:[#allocation2 + $0x78] sm:$0xff] 0.0
      %458 = vst [vmem:[#allocation2 + $0x80] sm:$0xff] 0.0
      %459 = vst [vmem:[#allocation2 + $0x88] sm:$0x3] 0.0
      %460 = vst [vmem:[#allocation2 + $0x90] sm:$0xff] 0.0
      %461 = vst [vmem:[#allocation2 + $0x98] sm:$0xff] 0.0
      %462 = vst [vmem:[#allocation2 + $0xa0] sm:$0x3] 0.0
      %463 = vst [vmem:[#allocation2 + $0xa8] sm:$0xff] 0.0
      %464 = vst [vmem:[#allocation2 + $0xb0] sm:$0xff] 0.0
      %465 = vst [vmem:[#allocation2 + $0xb8] sm:$0x3] 0.0
      %466 = vst [vmem:[#allocation2 + $0xc0] sm:$0xff] 0.0
      %467 = vst [vmem:[#allocation2 + $0xc8] sm:$0xff] 0.0
      %468 = vst [vmem:[#allocation2 + $0xd0] sm:$0x3] 0.0
      %469 = vst [vmem:[#allocation2 + $0xd8] sm:$0xff] 0.0
      %470 = vst [vmem:[#allocation2 + $0xe0] sm:$0xff] 0.0
      %471 = vst [vmem:[#allocation2 + $0xe8] sm:$0x3] 0.0
      %472 = vst [vmem:[#allocation2 + $0xf0] sm:$0xff] 0.0
      %473 = vst [vmem:[#allocation2 + $0xf8] sm:$0xff] 0.0
      %474 = vst [vmem:[#allocation2 + $0x100] sm:$0x3] 0.0
      %475 = vst [vmem:[#allocation2 + $0x108] sm:$0xff] 0.0
      %476 = vst [vmem:[#allocation2 + $0x110] sm:$0xff] 0.0
      %477 = vst [vmem:[#allocation2 + $0x118] sm:$0x3] 0.0
      %478 = vst [vmem:[#allocation2 + $0x120] sm:$0xff] 0.0
      %479 = vst [vmem:[#allocation2 + $0x128] sm:$0xff] 0.0
      %480 = vst [vmem:[#allocation2 + $0x130] sm:$0x3] 0.0
      %481 = vst [vmem:[#allocation2 + $0x138] sm:$0xff] 0.0
      %482 = vst [vmem:[#allocation2 + $0x140] sm:$0xff] 0.0
      %483 = vst [vmem:[#allocation2 + $0x148] sm:$0x3] 0.0
      %484 = vst [vmem:[#allocation2 + $0x150] sm:$0xff] 0.0
      %485 = vst [vmem:[#allocation2 + $0x158] sm:$0xff] 0.0
      %486 = vst [vmem:[#allocation2 + $0x160] sm:$0x3] 0.0
      %487 = vst [vmem:[#allocation2 + $0x168] sm:$0xff] 0.0
      %488 = vst [vmem:[#allocation2 + $0x170] sm:$0xff] 0.0
      %489 = vst [vmem:[#allocation2 + $0x178] sm:$0x3] 0.0
      %490 = vst [vmem:[#allocation2 + $0x180] sm:$0xff] 0.0
      %491 = vst [vmem:[#allocation2 + $0x188] sm:$0xff] 0.0
      %492 = vst [vmem:[#allocation2 + $0x190] sm:$0x3] 0.0
      %493 = vst [vmem:[#allocation2 + $0x198] sm:$0xff] 0.0
      %494 = vst [vmem:[#allocation2 + $0x1a0] sm:$0xff] 0.0
      %495 = vst [vmem:[#allocation2 + $0x1a8] sm:$0x3] 0.0
      %s496 = scalar_lea.vmem [#allocation2], 24
      %497 = vst [vmem:[%s496 + $0x1] sm:$0xff] %v410
      %498 = vst [vmem:[%s496 + $0x9] sm:$0xff] %v411
      %499 = vst [vmem:[%s496 + $0x19] sm:$0xff] %v412
      %500 = vst [vmem:[%s496 + $0x21] sm:$0xff] %v413
      %501 = vst [vmem:[%s496 + $0x31] sm:$0xff] %v414
      %502 = vst [vmem:[%s496 + $0x39] sm:$0xff] %v415
      %503 = vst [vmem:[%s496 + $0x49] sm:$0xff] %v416
      %504 = vst [vmem:[%s496 + $0x51] sm:$0xff] %v417
      %505 = vst [vmem:[%s496 + $0x61] sm:$0xff] %v418
      %506 = vst [vmem:[%s496 + $0x69] sm:$0xff] %v419
      %507 = vst [vmem:[%s496 + $0x79] sm:$0xff] %v420
      %508 = vst [vmem:[%s496 + $0x81] sm:$0xff] %v421
      %509 = vst [vmem:[%s496 + $0x91] sm:$0xff] %v422
      %510 = vst [vmem:[%s496 + $0x99] sm:$0xff] %v423
      %511 = vst [vmem:[%s496 + $0xa9] sm:$0xff] %v424
      %512 = vst [vmem:[%s496 + $0xb1] sm:$0xff] %v425
      %513 = vst [vmem:[%s496 + $0xc1] sm:$0xff] %v426
      %514 = vst [vmem:[%s496 + $0xc9] sm:$0xff] %v427
      %515 = vst [vmem:[%s496 + $0xd9] sm:$0xff] %v428
      %516 = vst [vmem:[%s496 + $0xe1] sm:$0xff] %v429
      %517 = vst [vmem:[%s496 + $0xf1] sm:$0xff] %v430
      %518 = vst [vmem:[%s496 + $0xf9] sm:$0xff] %v431
      %519 = vst [vmem:[%s496 + $0x109] sm:$0xff] %v432
      %520 = vst [vmem:[%s496 + $0x111] sm:$0xff] %v433
      %521 = vst [vmem:[%s496 + $0x121] sm:$0xff] %v434
      %522 = vst [vmem:[%s496 + $0x129] sm:$0xff] %v435
      %523 = vst [vmem:[%s496 + $0x139] sm:$0xff] %v436
      %524 = vst [vmem:[%s496 + $0x141] sm:$0xff] %v437
      %525 = vst [vmem:[%s496 + $0x151] sm:$0xff] %v438
      %526 = vst [vmem:[%s496 + $0x159] sm:$0xff] %v439
      %527 = vst [vmem:[%s496 + $0x169] sm:$0xff] %v440
      %528 = vst [vmem:[%s496 + $0x171] sm:$0xff] %v441
      %v529 = vld [vmem:[#allocation2] sm:$0xff]
      %v530 = vld [vmem:[#allocation2 + $0x8] sm:$0xff]
      %v531 = vld [vmem:[#allocation2 + $0x18] sm:$0xff]
      %v532 = vld [vmem:[#allocation2 + $0x20] sm:$0xff]
      %v533 = vld [vmem:[#allocation2 + $0x30] sm:$0xff]
      %v534 = vld [vmem:[#allocation2 + $0x38] sm:$0xff]
      %v535 = vld [vmem:[#allocation2 + $0x48] sm:$0xff]
      %v536 = vld [vmem:[#allocation2 + $0x50] sm:$0xff]
      %v537 = vld [vmem:[#allocation2 + $0x60] sm:$0xff]
      %v538 = vld [vmem:[#allocation2 + $0x68] sm:$0xff]
      %v539 = vld [vmem:[#allocation2 + $0x78] sm:$0xff]
      %v540 = vld [vmem:[#allocation2 + $0x80] sm:$0xff]
      %v541 = vld [vmem:[#allocation2 + $0x90] sm:$0xff]
      %v542 = vld [vmem:[#allocation2 + $0x98] sm:$0xff]
      %v543 = vld [vmem:[#allocation2 + $0xa8] sm:$0xff]
      %v544 = vld [vmem:[#allocation2 + $0xb0] sm:$0xff]
      %v545 = vld [vmem:[#allocation2 + $0xc0] sm:$0xff]
      %v546 = vld [vmem:[#allocation2 + $0xc8] sm:$0xff]
      %v547 = vld [vmem:[#allocation2 + $0xd8] sm:$0xff]
      %v548 = vld [vmem:[#allocation2 + $0xe0] sm:$0xff]
      %v549 = vld [vmem:[#allocation2 + $0xf0] sm:$0xff]
      %v550 = vld [vmem:[#allocation2 + $0xf8] sm:$0xff]
      %v551 = vld [vmem:[#allocation2 + $0x108] sm:$0xff]
      %v552 = vld [vmem:[#allocation2 + $0x110] sm:$0xff]
      %v553 = vld [vmem:[#allocation2 + $0x120] sm:$0xff]
      %v554 = vld [vmem:[#allocation2 + $0x128] sm:$0xff]
      %v555 = vld [vmem:[#allocation2 + $0x138] sm:$0xff]
      %v556 = vld [vmem:[#allocation2 + $0x140] sm:$0xff]
      %v557 = vld [vmem:[#allocation2 + $0x150] sm:$0xff]
      %v558 = vld [vmem:[#allocation2 + $0x158] sm:$0xff]
      %v559 = vld [vmem:[#allocation2 + $0x168] sm:$0xff]
      %v560 = vld [vmem:[#allocation2 + $0x170] sm:$0xff]
      %561 = vst [vmem:[#allocation3] sm:$0xff] %v529
      %562 = vst [vmem:[#allocation3 + $0x48] sm:$0xff] %v530
      %563 = vst [vmem:[#allocation3 + $0x90] sm:$0xff] %v531
      %564 = vst [vmem:[#allocation3 + $0xd8] sm:$0xff] %v532
      %565 = vst [vmem:[#allocation3 + $0x120] sm:$0xff] %v533
      %566 = vst [vmem:[#allocation3 + $0x168] sm:$0xff] %v534
      %567 = vst [vmem:[#allocation3 + $0x1b0] sm:$0xff] %v535
      %568 = vst [vmem:[#allocation3 + $0x1f8] sm:$0xff] %v536
      %569 = vst [vmem:[#allocation3 + $0x240] sm:$0xff] %v537
      %570 = vst [vmem:[#allocation3 + $0x288] sm:$0xff] %v538
      %571 = vst [vmem:[#allocation3 + $0x2d0] sm:$0xff] %v539
      %572 = vst [vmem:[#allocation3 + $0x318] sm:$0xff] %v540
      %573 = vst [vmem:[#allocation3 + $0x360] sm:$0xff] %v541
      %574 = vst [vmem:[#allocation3 + $0x3a8] sm:$0xff] %v542
      %575 = vst [vmem:[#allocation3 + $0x3f0] sm:$0xff] %v543
      %576 = vst [vmem:[#allocation3 + $0x438] sm:$0xff] %v544
      %577 = vst [vmem:[#allocation3 + $0x480] sm:$0xff] %v545
      %578 = vst [vmem:[#allocation3 + $0x4c8] sm:$0xff] %v546
      %579 = vst [vmem:[#allocation3 + $0x510] sm:$0xff] %v547
      %580 = vst [vmem:[#allocation3 + $0x558] sm:$0xff] %v548
      %581 = vst [vmem:[#allocation3 + $0x5a0] sm:$0xff] %v549
      %582 = vst [vmem:[#allocation3 + $0x5e8] sm:$0xff] %v550
      %583 = vst [vmem:[#allocation3 + $0x630] sm:$0xff] %v551
      %584 = vst [vmem:[#allocation3 + $0x678] sm:$0xff] %v552
      %585 = vst [vmem:[#allocation3 + $0x6c0] sm:$0xff] %v553
      %586 = vst [vmem:[#allocation3 + $0x708] sm:$0xff] %v554
      %587 = vst [vmem:[#allocation3 + $0x750] sm:$0xff] %v555
      %588 = vst [vmem:[#allocation3 + $0x798] sm:$0xff] %v556
      %589 = vst [vmem:[#allocation3 + $0x7e0] sm:$0xff] %v557
      %590 = vst [vmem:[#allocation3 + $0x828] sm:$0xff] %v558
      %591 = vst [vmem:[#allocation3 + $0x870] sm:$0xff] %v559
      %592 = vst [vmem:[#allocation3 + $0x8b8] sm:$0xff] %v560
      %v593 = vld [vmem:[#allocation2 + $0x1] sm:$0xff]
      %v594 = vld [vmem:[#allocation2 + $0x9] sm:$0xff]
      %v595 = vld [vmem:[#allocation2 + $0x19] sm:$0xff]
      %v596 = vld [vmem:[#allocation2 + $0x21] sm:$0xff]
      %v597 = vld [vmem:[#allocation2 + $0x31] sm:$0xff]
      %v598 = vld [vmem:[#allocation2 + $0x39] sm:$0xff]
      %v599 = vld [vmem:[#allocation2 + $0x49] sm:$0xff]
      %v600 = vld [vmem:[#allocation2 + $0x51] sm:$0xff]
      %v601 = vld [vmem:[#allocation2 + $0x61] sm:$0xff]
      %v602 = vld [vmem:[#allocation2 + $0x69] sm:$0xff]
      %v603 = vld [vmem:[#allocation2 + $0x79] sm:$0xff]
      %v604 = vld [vmem:[#allocation2 + $0x81] sm:$0xff]
      %v605 = vld [vmem:[#allocation2 + $0x91] sm:$0xff]
      %v606 = vld [vmem:[#allocation2 + $0x99] sm:$0xff]
      %v607 = vld [vmem:[#allocation2 + $0xa9] sm:$0xff]
      %v608 = vld [vmem:[#allocation2 + $0xb1] sm:$0xff]
      %v609 = vld [vmem:[#allocation2 + $0xc1] sm:$0xff]
      %v610 = vld [vmem:[#allocation2 + $0xc9] sm:$0xff]
      %v611 = vld [vmem:[#allocation2 + $0xd9] sm:$0xff]
      %v612 = vld [vmem:[#allocation2 + $0xe1] sm:$0xff]
      %v613 = vld [vmem:[#allocation2 + $0xf1] sm:$0xff]
      %v614 = vld [vmem:[#allocation2 + $0xf9] sm:$0xff]
      %v615 = vld [vmem:[#allocation2 + $0x109] sm:$0xff]
      %v616 = vld [vmem:[#allocation2 + $0x111] sm:$0xff]
      %v617 = vld [vmem:[#allocation2 + $0x121] sm:$0xff]
      %v618 = vld [vmem:[#allocation2 + $0x129] sm:$0xff]
      %v619 = vld [vmem:[#allocation2 + $0x139] sm:$0xff]
      %v620 = vld [vmem:[#allocation2 + $0x141] sm:$0xff]
      %v621 = vld [vmem:[#allocation2 + $0x151] sm:$0xff]
      %v622 = vld [vmem:[#allocation2 + $0x159] sm:$0xff]
      %v623 = vld [vmem:[#allocation2 + $0x169] sm:$0xff]
      %v624 = vld [vmem:[#allocation2 + $0x171] sm:$0xff]
      %625 = vst [vmem:[#allocation3 + $0x8] sm:$0xff] %v593
      %626 = vst [vmem:[#allocation3 + $0x50] sm:$0xff] %v594
      %627 = vst [vmem:[#allocation3 + $0x98] sm:$0xff] %v595
      %628 = vst [vmem:[#allocation3 + $0xe0] sm:$0xff] %v596
      %629 = vst [vmem:[#allocation3 + $0x128] sm:$0xff] %v597
      %630 = vst [vmem:[#allocation3 + $0x170] sm:$0xff] %v598
      %631 = vst [vmem:[#allocation3 + $0x1b8] sm:$0xff] %v599
      %632 = vst [vmem:[#allocation3 + $0x200] sm:$0xff] %v600
      %633 = vst [vmem:[#allocation3 + $0x248] sm:$0xff] %v601
      %634 = vst [vmem:[#allocation3 + $0x290] sm:$0xff] %v602
      %635 = vst [vmem:[#allocation3 + $0x2d8] sm:$0xff] %v603
      %636 = vst [vmem:[#allocation3 + $0x320] sm:$0xff] %v604
      %637 = vst [vmem:[#allocation3 + $0x368] sm:$0xff] %v605
      %638 = vst [vmem:[#allocation3 + $0x3b0] sm:$0xff] %v606
      %639 = vst [vmem:[#allocation3 + $0x3f8] sm:$0xff] %v607
      %640 = vst [vmem:[#allocation3 + $0x440] sm:$0xff] %v608
      %641 = vst [vmem:[#allocation3 + $0x488] sm:$0xff] %v609
      %642 = vst [vmem:[#allocation3 + $0x4d0] sm:$0xff] %v610
      %643 = vst [vmem:[#allocation3 + $0x518] sm:$0xff] %v611
      %644 = vst [vmem:[#allocation3 + $0x560] sm:$0xff] %v612
      %645 = vst [vmem:[#allocation3 + $0x5a8] sm:$0xff] %v613
      %646 = vst [vmem:[#allocation3 + $0x5f0] sm:$0xff] %v614
      %647 = vst [vmem:[#allocation3 + $0x638] sm:$0xff] %v615
      %648 = vst [vmem:[#allocation3 + $0x680] sm:$0xff] %v616
      %649 = vst [vmem:[#allocation3 + $0x6c8] sm:$0xff] %v617
      %650 = vst [vmem:[#allocation3 + $0x710] sm:$0xff] %v618
      %651 = vst [vmem:[#allocation3 + $0x758] sm:$0xff] %v619
      %652 = vst [vmem:[#allocation3 + $0x7a0] sm:$0xff] %v620
      %653 = vst [vmem:[#allocation3 + $0x7e8] sm:$0xff] %v621
      %654 = vst [vmem:[#allocation3 + $0x830] sm:$0xff] %v622
      %655 = vst [vmem:[#allocation3 + $0x878] sm:$0xff] %v623
      %656 = vst [vmem:[#allocation3 + $0x8c0] sm:$0xff] %v624
      %v657 = vld [vmem:[#allocation2 + $0x2] sm:$0xff]
      %v658 = vld [vmem:[#allocation2 + $0xa] sm:$0xff]
      %v659 = vld [vmem:[#allocation2 + $0x1a] sm:$0xff]
      %v660 = vld [vmem:[#allocation2 + $0x22] sm:$0xff]
      %v661 = vld [vmem:[#allocation2 + $0x32] sm:$0xff]
      %v662 = vld [vmem:[#allocation2 + $0x3a] sm:$0xff]
      %v663 = vld [vmem:[#allocation2 + $0x4a] sm:$0xff]
      %v664 = vld [vmem:[#allocation2 + $0x52] sm:$0xff]
      %v665 = vld [vmem:[#allocation2 + $0x62] sm:$0xff]
      %v666 = vld [vmem:[#allocation2 + $0x6a] sm:$0xff]
      %v667 = vld [vmem:[#allocation2 + $0x7a] sm:$0xff]
      %v668 = vld [vmem:[#allocation2 + $0x82] sm:$0xff]
      %v669 = vld [vmem:[#allocation2 + $0x92] sm:$0xff]
      %v670 = vld [vmem:[#allocation2 + $0x9a] sm:$0xff]
      %v671 = vld [vmem:[#allocation2 + $0xaa] sm:$0xff]
      %v672 = vld [vmem:[#allocation2 + $0xb2] sm:$0xff]
      %v673 = vld [vmem:[#allocation2 + $0xc2] sm:$0xff]
      %v674 = vld [vmem:[#allocation2 + $0xca] sm:$0xff]
      %v675 = vld [vmem:[#allocation2 + $0xda] sm:$0xff]
      %v676 = vld [vmem:[#allocation2 + $0xe2] sm:$0xff]
      %v677 = vld [vmem:[#allocation2 + $0xf2] sm:$0xff]
      %v678 = vld [vmem:[#allocation2 + $0xfa] sm:$0xff]
      %v679 = vld [vmem:[#allocation2 + $0x10a] sm:$0xff]
      %v680 = vld [vmem:[#allocation2 + $0x112] sm:$0xff]
      %v681 = vld [vmem:[#allocation2 + $0x122] sm:$0xff]
      %v682 = vld [vmem:[#allocation2 + $0x12a] sm:$0xff]
      %v683 = vld [vmem:[#allocation2 + $0x13a] sm:$0xff]
      %v684 = vld [vmem:[#allocation2 + $0x142] sm:$0xff]
      %v685 = vld [vmem:[#allocation2 + $0x152] sm:$0xff]
      %v686 = vld [vmem:[#allocation2 + $0x15a] sm:$0xff]
      %v687 = vld [vmem:[#allocation2 + $0x16a] sm:$0xff]
      %v688 = vld [vmem:[#allocation2 + $0x172] sm:$0xff]
      %689 = vst [vmem:[#allocation3 + $0x10] sm:$0xff] %v657
      %690 = vst [vmem:[#allocation3 + $0x58] sm:$0xff] %v658
      %691 = vst [vmem:[#allocation3 + $0xa0] sm:$0xff] %v659
      %692 = vst [vmem:[#allocation3 + $0xe8] sm:$0xff] %v660
      %693 = vst [vmem:[#allocation3 + $0x130] sm:$0xff] %v661
      %694 = vst [vmem:[#allocation3 + $0x178] sm:$0xff] %v662
      %695 = vst [vmem:[#allocation3 + $0x1c0] sm:$0xff] %v663
      %696 = vst [vmem:[#allocation3 + $0x208] sm:$0xff] %v664
      %697 = vst [vmem:[#allocation3 + $0x250] sm:$0xff] %v665
      %698 = vst [vmem:[#allocation3 + $0x298] sm:$0xff] %v666
      %699 = vst [vmem:[#allocation3 + $0x2e0] sm:$0xff] %v667
      %700 = vst [vmem:[#allocation3 + $0x328] sm:$0xff] %v668
      %701 = vst [vmem:[#allocation3 + $0x370] sm:$0xff] %v669
      %702 = vst [vmem:[#allocation3 + $0x3b8] sm:$0xff] %v670
      %703 = vst [vmem:[#allocation3 + $0x400] sm:$0xff] %v671
      %704 = vst [vmem:[#allocation3 + $0x448] sm:$0xff] %v672
      %705 = vst [vmem:[#allocation3 + $0x490] sm:$0xff] %v673
      %706 = vst [vmem:[#allocation3 + $0x4d8] sm:$0xff] %v674
      %707 = vst [vmem:[#allocation3 + $0x520] sm:$0xff] %v675
      %708 = vst [vmem:[#allocation3 + $0x568] sm:$0xff] %v676
      %709 = vst [vmem:[#allocation3 + $0x5b0] sm:$0xff] %v677
      %710 = vst [vmem:[#allocation3 + $0x5f8] sm:$0xff] %v678
      %711 = vst [vmem:[#allocation3 + $0x640] sm:$0xff] %v679
      %712 = vst [vmem:[#allocation3 + $0x688] sm:$0xff] %v680
      %713 = vst [vmem:[#allocation3 + $0x6d0] sm:$0xff] %v681
      %714 = vst [vmem:[#allocation3 + $0x718] sm:$0xff] %v682
      %715 = vst [vmem:[#allocation3 + $0x760] sm:$0xff] %v683
      %716 = vst [vmem:[#allocation3 + $0x7a8] sm:$0xff] %v684
      %717 = vst [vmem:[#allocation3 + $0x7f0] sm:$0xff] %v685
      %718 = vst [vmem:[#allocation3 + $0x838] sm:$0xff] %v686
      %719 = vst [vmem:[#allocation3 + $0x880] sm:$0xff] %v687
      %720 = vst [vmem:[#allocation3 + $0x8c8] sm:$0xff] %v688
      %v721 = vld [vmem:[%s496] sm:$0xff]
      %v722 = vld [vmem:[%s496 + $0x8] sm:$0xff]
      %v723 = vld [vmem:[%s496 + $0x18] sm:$0xff]
      %v724 = vld [vmem:[%s496 + $0x20] sm:$0xff]
      %v725 = vld [vmem:[%s496 + $0x30] sm:$0xff]
      %v726 = vld [vmem:[%s496 + $0x38] sm:$0xff]
      %v727 = vld [vmem:[%s496 + $0x48] sm:$0xff]
      %v728 = vld [vmem:[%s496 + $0x50] sm:$0xff]
      %v729 = vld [vmem:[%s496 + $0x60] sm:$0xff]
      %v730 = vld [vmem:[%s496 + $0x68] sm:$0xff]
      %v731 = vld [vmem:[%s496 + $0x78] sm:$0xff]
      %v732 = vld [vmem:[%s496 + $0x80] sm:$0xff]
      %v733 = vld [vmem:[%s496 + $0x90] sm:$0xff]
      %v734 = vld [vmem:[%s496 + $0x98] sm:$0xff]
      %v735 = vld [vmem:[%s496 + $0xa8] sm:$0xff]
      %v736 = vld [vmem:[%s496 + $0xb0] sm:$0xff]
      %v737 = vld [vmem:[%s496 + $0xc0] sm:$0xff]
      %v738 = vld [vmem:[%s496 + $0xc8] sm:$0xff]
      %v739 = vld [vmem:[%s496 + $0xd8] sm:$0xff]
      %v740 = vld [vmem:[%s496 + $0xe0] sm:$0xff]
      %v741 = vld [vmem:[%s496 + $0xf0] sm:$0xff]
      %v742 = vld [vmem:[%s496 + $0xf8] sm:$0xff]
      %v743 = vld [vmem:[%s496 + $0x108] sm:$0xff]
      %v744 = vld [vmem:[%s496 + $0x110] sm:$0xff]
      %v745 = vld [vmem:[%s496 + $0x120] sm:$0xff]
      %v746 = vld [vmem:[%s496 + $0x128] sm:$0xff]
      %v747 = vld [vmem:[%s496 + $0x138] sm:$0xff]
      %v748 = vld [vmem:[%s496 + $0x140] sm:$0xff]
      %v749 = vld [vmem:[%s496 + $0x150] sm:$0xff]
      %v750 = vld [vmem:[%s496 + $0x158] sm:$0xff]
      %v751 = vld [vmem:[%s496 + $0x168] sm:$0xff]
      %v752 = vld [vmem:[%s496 + $0x170] sm:$0xff]
      %753 = vst [vmem:[#allocation3 + $0x18] sm:$0xff] %v721
      %754 = vst [vmem:[#allocation3 + $0x60] sm:$0xff] %v722
      %755 = vst [vmem:[#allocation3 + $0xa8] sm:$0xff] %v723
      %756 = vst [vmem:[#allocation3 + $0xf0] sm:$0xff] %v724
      %757 = vst [vmem:[#allocation3 + $0x138] sm:$0xff] %v725
      %758 = vst [vmem:[#allocation3 + $0x180] sm:$0xff] %v726
      %759 = vst [vmem:[#allocation3 + $0x1c8] sm:$0xff] %v727
      %760 = vst [vmem:[#allocation3 + $0x210] sm:$0xff] %v728
      %761 = vst [vmem:[#allocation3 + $0x258] sm:$0xff] %v729
      %762 = vst [vmem:[#allocation3 + $0x2a0] sm:$0xff] %v730
      %763 = vst [vmem:[#allocation3 + $0x2e8] sm:$0xff] %v731
      %764 = vst [vmem:[#allocation3 + $0x330] sm:$0xff] %v732
      %765 = vst [vmem:[#allocation3 + $0x378] sm:$0xff] %v733
      %766 = vst [vmem:[#allocation3 + $0x3c0] sm:$0xff] %v734
      %767 = vst [vmem:[#allocation3 + $0x408] sm:$0xff] %v735
      %768 = vst [vmem:[#allocation3 + $0x450] sm:$0xff] %v736
      %769 = vst [vmem:[#allocation3 + $0x498] sm:$0xff] %v737
      %770 = vst [vmem:[#allocation3 + $0x4e0] sm:$0xff] %v738
      %771 = vst [vmem:[#allocation3 + $0x528] sm:$0xff] %v739
      %772 = vst [vmem:[#allocation3 + $0x570] sm:$0xff] %v740
      %773 = vst [vmem:[#allocation3 + $0x5b8] sm:$0xff] %v741
      %774 = vst [vmem:[#allocation3 + $0x600] sm:$0xff] %v742
      %775 = vst [vmem:[#allocation3 + $0x648] sm:$0xff] %v743
      %776 = vst [vmem:[#allocation3 + $0x690] sm:$0xff] %v744
      %777 = vst [vmem:[#allocation3 + $0x6d8] sm:$0xff] %v745
      %778 = vst [vmem:[#allocation3 + $0x720] sm:$0xff] %v746
      %779 = vst [vmem:[#allocation3 + $0x768] sm:$0xff] %v747
      %780 = vst [vmem:[#allocation3 + $0x7b0] sm:$0xff] %v748
      %781 = vst [vmem:[#allocation3 + $0x7f8] sm:$0xff] %v749
      %782 = vst [vmem:[#allocation3 + $0x840] sm:$0xff] %v750
      %783 = vst [vmem:[#allocation3 + $0x888] sm:$0xff] %v751
      %784 = vst [vmem:[#allocation3 + $0x8d0] sm:$0xff] %v752
      %v785 = vld [vmem:[%s496 + $0x1] sm:$0xff]
      %v786 = vld [vmem:[%s496 + $0x9] sm:$0xff]
      %v787 = vld [vmem:[%s496 + $0x19] sm:$0xff]
      %v788 = vld [vmem:[%s496 + $0x21] sm:$0xff]
      %v789 = vld [vmem:[%s496 + $0x31] sm:$0xff]
      %v790 = vld [vmem:[%s496 + $0x39] sm:$0xff]
      %v791 = vld [vmem:[%s496 + $0x49] sm:$0xff]
      %v792 = vld [vmem:[%s496 + $0x51] sm:$0xff]
      %v793 = vld [vmem:[%s496 + $0x61] sm:$0xff]
      %v794 = vld [vmem:[%s496 + $0x69] sm:$0xff]
      %v795 = vld [vmem:[%s496 + $0x79] sm:$0xff]
      %v796 = vld [vmem:[%s496 + $0x81] sm:$0xff]
      %v797 = vld [vmem:[%s496 + $0x91] sm:$0xff]
      %v798 = vld [vmem:[%s496 + $0x99] sm:$0xff]
      %v799 = vld [vmem:[%s496 + $0xa9] sm:$0xff]
      %v800 = vld [vmem:[%s496 + $0xb1] sm:$0xff]
      %v801 = vld [vmem:[%s496 + $0xc1] sm:$0xff]
      %v802 = vld [vmem:[%s496 + $0xc9] sm:$0xff]
      %v803 = vld [vmem:[%s496 + $0xd9] sm:$0xff]
      %v804 = vld [vmem:[%s496 + $0xe1] sm:$0xff]
      %v805 = vld [vmem:[%s496 + $0xf1] sm:$0xff]
      %v806 = vld [vmem:[%s496 + $0xf9] sm:$0xff]
      %v807 = vld [vmem:[%s496 + $0x109] sm:$0xff]
      %v808 = vld [vmem:[%s496 + $0x111] sm:$0xff]
      %v809 = vld [vmem:[%s496 + $0x121] sm:$0xff]
      %v810 = vld [vmem:[%s496 + $0x129] sm:$0xff]
      %v811 = vld [vmem:[%s496 + $0x139] sm:$0xff]
      %v812 = vld [vmem:[%s496 + $0x141] sm:$0xff]
      %v813 = vld [vmem:[%s496 + $0x151] sm:$0xff]
      %v814 = vld [vmem:[%s496 + $0x159] sm:$0xff]
      %v815 = vld [vmem:[%s496 + $0x169] sm:$0xff]
      %v816 = vld [vmem:[%s496 + $0x171] sm:$0xff]
      %817 = vst [vmem:[#allocation3 + $0x20] sm:$0xff] %v785
      %818 = vst [vmem:[#allocation3 + $0x68] sm:$0xff] %v786
      %819 = vst [vmem:[#allocation3 + $0xb0] sm:$0xff] %v787
      %820 = vst [vmem:[#allocation3 + $0xf8] sm:$0xff] %v788
      %821 = vst [vmem:[#allocation3 + $0x140] sm:$0xff] %v789
      %822 = vst [vmem:[#allocation3 + $0x188] sm:$0xff] %v790
      %823 = vst [vmem:[#allocation3 + $0x1d0] sm:$0xff] %v791
      %824 = vst [vmem:[#allocation3 + $0x218] sm:$0xff] %v792
      %825 = vst [vmem:[#allocation3 + $0x260] sm:$0xff] %v793
      %826 = vst [vmem:[#allocation3 + $0x2a8] sm:$0xff] %v794
      %827 = vst [vmem:[#allocation3 + $0x2f0] sm:$0xff] %v795
      %828 = vst [vmem:[#allocation3 + $0x338] sm:$0xff] %v796
      %829 = vst [vmem:[#allocation3 + $0x380] sm:$0xff] %v797
      %830 = vst [vmem:[#allocation3 + $0x3c8] sm:$0xff] %v798
      %831 = vst [vmem:[#allocation3 + $0x410] sm:$0xff] %v799
      %832 = vst [vmem:[#allocation3 + $0x458] sm:$0xff] %v800
      %833 = vst [vmem:[#allocation3 + $0x4a0] sm:$0xff] %v801
      %834 = vst [vmem:[#allocation3 + $0x4e8] sm:$0xff] %v802
      %835 = vst [vmem:[#allocation3 + $0x530] sm:$0xff] %v803
      %836 = vst [vmem:[#allocation3 + $0x578] sm:$0xff] %v804
      %837 = vst [vmem:[#allocation3 + $0x5c0] sm:$0xff] %v805
      %838 = vst [vmem:[#allocation3 + $0x608] sm:$0xff] %v806
      %839 = vst [vmem:[#allocation3 + $0x650] sm:$0xff] %v807
      %840 = vst [vmem:[#allocation3 + $0x698] sm:$0xff] %v808
      %841 = vst [vmem:[#allocation3 + $0x6e0] sm:$0xff] %v809
      %842 = vst [vmem:[#allocation3 + $0x728] sm:$0xff] %v810
      %843 = vst [vmem:[#allocation3 + $0x770] sm:$0xff] %v811
      %844 = vst [vmem:[#allocation3 + $0x7b8] sm:$0xff] %v812
      %845 = vst [vmem:[#allocation3 + $0x800] sm:$0xff] %v813
      %846 = vst [vmem:[#allocation3 + $0x848] sm:$0xff] %v814
      %847 = vst [vmem:[#allocation3 + $0x890] sm:$0xff] %v815
      %848 = vst [vmem:[#allocation3 + $0x8d8] sm:$0xff] %v816
      %v849 = vld [vmem:[%s496 + $0x2] sm:$0xff]
      %v850 = vld [vmem:[%s496 + $0xa] sm:$0xff]
      %v851 = vld [vmem:[%s496 + $0x1a] sm:$0xff]
      %v852 = vld [vmem:[%s496 + $0x22] sm:$0xff]
      %v853 = vld [vmem:[%s496 + $0x32] sm:$0xff]
      %v854 = vld [vmem:[%s496 + $0x3a] sm:$0xff]
      %v855 = vld [vmem:[%s496 + $0x4a] sm:$0xff]
      %v856 = vld [vmem:[%s496 + $0x52] sm:$0xff]
      %v857 = vld [vmem:[%s496 + $0x62] sm:$0xff]
      %v858 = vld [vmem:[%s496 + $0x6a] sm:$0xff]
      %v859 = vld [vmem:[%s496 + $0x7a] sm:$0xff]
      %v860 = vld [vmem:[%s496 + $0x82] sm:$0xff]
      %v861 = vld [vmem:[%s496 + $0x92] sm:$0xff]
      %v862 = vld [vmem:[%s496 + $0x9a] sm:$0xff]
      %v863 = vld [vmem:[%s496 + $0xaa] sm:$0xff]
      %v864 = vld [vmem:[%s496 + $0xb2] sm:$0xff]
      %v865 = vld [vmem:[%s496 + $0xc2] sm:$0xff]
      %v866 = vld [vmem:[%s496 + $0xca] sm:$0xff]
      %v867 = vld [vmem:[%s496 + $0xda] sm:$0xff]
      %v868 = vld [vmem:[%s496 + $0xe2] sm:$0xff]
      %v869 = vld [vmem:[%s496 + $0xf2] sm:$0xff]
      %v870 = vld [vmem:[%s496 + $0xfa] sm:$0xff]
      %v871 = vld [vmem:[%s496 + $0x10a] sm:$0xff]
      %v872 = vld [vmem:[%s496 + $0x112] sm:$0xff]
      %v873 = vld [vmem:[%s496 + $0x122] sm:$0xff]
      %v874 = vld [vmem:[%s496 + $0x12a] sm:$0xff]
      %v875 = vld [vmem:[%s496 + $0x13a] sm:$0xff]
      %v876 = vld [vmem:[%s496 + $0x142] sm:$0xff]
      %v877 = vld [vmem:[%s496 + $0x152] sm:$0xff]
      %v878 = vld [vmem:[%s496 + $0x15a] sm:$0xff]
      %v879 = vld [vmem:[%s496 + $0x16a] sm:$0xff]
      %v880 = vld [vmem:[%s496 + $0x172] sm:$0xff]
      %881 = vst [vmem:[#allocation3 + $0x28] sm:$0xff] %v849
      %882 = vst [vmem:[#allocation3 + $0x70] sm:$0xff] %v850
      %883 = vst [vmem:[#allocation3 + $0xb8] sm:$0xff] %v851
      %884 = vst [vmem:[#allocation3 + $0x100] sm:$0xff] %v852
      %885 = vst [vmem:[#allocation3 + $0x148] sm:$0xff] %v853
      %886 = vst [vmem:[#allocation3 + $0x190] sm:$0xff] %v854
      %887 = vst [vmem:[#allocation3 + $0x1d8] sm:$0xff] %v855
      %888 = vst [vmem:[#allocation3 + $0x220] sm:$0xff] %v856
      %889 = vst [vmem:[#allocation3 + $0x268] sm:$0xff] %v857
      %890 = vst [vmem:[#allocation3 + $0x2b0] sm:$0xff] %v858
      %891 = vst [vmem:[#allocation3 + $0x2f8] sm:$0xff] %v859
      %892 = vst [vmem:[#allocation3 + $0x340] sm:$0xff] %v860
      %893 = vst [vmem:[#allocation3 + $0x388] sm:$0xff] %v861
      %894 = vst [vmem:[#allocation3 + $0x3d0] sm:$0xff] %v862
      %895 = vst [vmem:[#allocation3 + $0x418] sm:$0xff] %v863
      %896 = vst [vmem:[#allocation3 + $0x460] sm:$0xff] %v864
      %897 = vst [vmem:[#allocation3 + $0x4a8] sm:$0xff] %v865
      %898 = vst [vmem:[#allocation3 + $0x4f0] sm:$0xff] %v866
      %899 = vst [vmem:[#allocation3 + $0x538] sm:$0xff] %v867
      %900 = vst [vmem:[#allocation3 + $0x580] sm:$0xff] %v868
      %901 = vst [vmem:[#allocation3 + $0x5c8] sm:$0xff] %v869
      %902 = vst [vmem:[#allocation3 + $0x610] sm:$0xff] %v870
      %903 = vst [vmem:[#allocation3 + $0x658] sm:$0xff] %v871
      %904 = vst [vmem:[#allocation3 + $0x6a0] sm:$0xff] %v872
      %905 = vst [vmem:[#allocation3 + $0x6e8] sm:$0xff] %v873
      %906 = vst [vmem:[#allocation3 + $0x730] sm:$0xff] %v874
      %907 = vst [vmem:[#allocation3 + $0x778] sm:$0xff] %v875
      %908 = vst [vmem:[#allocation3 + $0x7c0] sm:$0xff] %v876
      %909 = vst [vmem:[#allocation3 + $0x808] sm:$0xff] %v877
      %910 = vst [vmem:[#allocation3 + $0x850] sm:$0xff] %v878
      %911 = vst [vmem:[#allocation3 + $0x898] sm:$0xff] %v879
      %912 = vst [vmem:[#allocation3 + $0x8e0] sm:$0xff] %v880
      %s913 = scalar_lea.vmem [#allocation2], 48
      %v914 = vld [vmem:[%s913] sm:$0xff]
      %v915 = vld [vmem:[%s913 + $0x8] sm:$0xff]
      %v916 = vld [vmem:[%s913 + $0x18] sm:$0xff]
      %v917 = vld [vmem:[%s913 + $0x20] sm:$0xff]
      %v918 = vld [vmem:[%s913 + $0x30] sm:$0xff]
      %v919 = vld [vmem:[%s913 + $0x38] sm:$0xff]
      %v920 = vld [vmem:[%s913 + $0x48] sm:$0xff]
      %v921 = vld [vmem:[%s913 + $0x50] sm:$0xff]
      %v922 = vld [vmem:[%s913 + $0x60] sm:$0xff]
      %v923 = vld [vmem:[%s913 + $0x68] sm:$0xff]
      %v924 = vld [vmem:[%s913 + $0x78] sm:$0xff]
      %v925 = vld [vmem:[%s913 + $0x80] sm:$0xff]
      %v926 = vld [vmem:[%s913 + $0x90] sm:$0xff]
      %v927 = vld [vmem:[%s913 + $0x98] sm:$0xff]
      %v928 = vld [vmem:[%s913 + $0xa8] sm:$0xff]
      %v929 = vld [vmem:[%s913 + $0xb0] sm:$0xff]
      %v930 = vld [vmem:[%s913 + $0xc0] sm:$0xff]
      %v931 = vld [vmem:[%s913 + $0xc8] sm:$0xff]
      %v932 = vld [vmem:[%s913 + $0xd8] sm:$0xff]
      %v933 = vld [vmem:[%s913 + $0xe0] sm:$0xff]
      %v934 = vld [vmem:[%s913 + $0xf0] sm:$0xff]
      %v935 = vld [vmem:[%s913 + $0xf8] sm:$0xff]
      %v936 = vld [vmem:[%s913 + $0x108] sm:$0xff]
      %v937 = vld [vmem:[%s913 + $0x110] sm:$0xff]
      %v938 = vld [vmem:[%s913 + $0x120] sm:$0xff]
      %v939 = vld [vmem:[%s913 + $0x128] sm:$0xff]
      %v940 = vld [vmem:[%s913 + $0x138] sm:$0xff]
      %v941 = vld [vmem:[%s913 + $0x140] sm:$0xff]
      %v942 = vld [vmem:[%s913 + $0x150] sm:$0xff]
      %v943 = vld [vmem:[%s913 + $0x158] sm:$0xff]
      %v944 = vld [vmem:[%s913 + $0x168] sm:$0xff]
      %v945 = vld [vmem:[%s913 + $0x170] sm:$0xff]
      %946 = vst [vmem:[#allocation3 + $0x30] sm:$0xff] %v914
      %947 = vst [vmem:[#allocation3 + $0x78] sm:$0xff] %v915
      %948 = vst [vmem:[#allocation3 + $0xc0] sm:$0xff] %v916
      %949 = vst [vmem:[#allocation3 + $0x108] sm:$0xff] %v917
      %950 = vst [vmem:[#allocation3 + $0x150] sm:$0xff] %v918
      %951 = vst [vmem:[#allocation3 + $0x198] sm:$0xff] %v919
      %952 = vst [vmem:[#allocation3 + $0x1e0] sm:$0xff] %v920
      %953 = vst [vmem:[#allocation3 + $0x228] sm:$0xff] %v921
      %954 = vst [vmem:[#allocation3 + $0x270] sm:$0xff] %v922
      %955 = vst [vmem:[#allocation3 + $0x2b8] sm:$0xff] %v923
      %956 = vst [vmem:[#allocation3 + $0x300] sm:$0xff] %v924
      %957 = vst [vmem:[#allocation3 + $0x348] sm:$0xff] %v925
      %958 = vst [vmem:[#allocation3 + $0x390] sm:$0xff] %v926
      %959 = vst [vmem:[#allocation3 + $0x3d8] sm:$0xff] %v927
      %960 = vst [vmem:[#allocation3 + $0x420] sm:$0xff] %v928
      %961 = vst [vmem:[#allocation3 + $0x468] sm:$0xff] %v929
      %962 = vst [vmem:[#allocation3 + $0x4b0] sm:$0xff] %v930
      %963 = vst [vmem:[#allocation3 + $0x4f8] sm:$0xff] %v931
      %964 = vst [vmem:[#allocation3 + $0x540] sm:$0xff] %v932
      %965 = vst [vmem:[#allocation3 + $0x588] sm:$0xff] %v933
      %966 = vst [vmem:[#allocation3 + $0x5d0] sm:$0xff] %v934
      %967 = vst [vmem:[#allocation3 + $0x618] sm:$0xff] %v935
      %968 = vst [vmem:[#allocation3 + $0x660] sm:$0xff] %v936
      %969 = vst [vmem:[#allocation3 + $0x6a8] sm:$0xff] %v937
      %970 = vst [vmem:[#allocation3 + $0x6f0] sm:$0xff] %v938
      %971 = vst [vmem:[#allocation3 + $0x738] sm:$0xff] %v939
      %972 = vst [vmem:[#allocation3 + $0x780] sm:$0xff] %v940
      %973 = vst [vmem:[#allocation3 + $0x7c8] sm:$0xff] %v941
      %974 = vst [vmem:[#allocation3 + $0x810] sm:$0xff] %v942
      %975 = vst [vmem:[#allocation3 + $0x858] sm:$0xff] %v943
      %976 = vst [vmem:[#allocation3 + $0x8a0] sm:$0xff] %v944
      %977 = vst [vmem:[#allocation3 + $0x8e8] sm:$0xff] %v945
      %v978 = vld [vmem:[%s913 + $0x1] sm:$0xff]
      %v979 = vld [vmem:[%s913 + $0x9] sm:$0xff]
      %v980 = vld [vmem:[%s913 + $0x19] sm:$0xff]
      %v981 = vld [vmem:[%s913 + $0x21] sm:$0xff]
      %v982 = vld [vmem:[%s913 + $0x31] sm:$0xff]
      %v983 = vld [vmem:[%s913 + $0x39] sm:$0xff]
      %v984 = vld [vmem:[%s913 + $0x49] sm:$0xff]
      %v985 = vld [vmem:[%s913 + $0x51] sm:$0xff]
      %v986 = vld [vmem:[%s913 + $0x61] sm:$0xff]
      %v987 = vld [vmem:[%s913 + $0x69] sm:$0xff]
      %v988 = vld [vmem:[%s913 + $0x79] sm:$0xff]
      %v989 = vld [vmem:[%s913 + $0x81] sm:$0xff]
      %v990 = vld [vmem:[%s913 + $0x91] sm:$0xff]
      %v991 = vld [vmem:[%s913 + $0x99] sm:$0xff]
      %v992 = vld [vmem:[%s913 + $0xa9] sm:$0xff]
      %v993 = vld [vmem:[%s913 + $0xb1] sm:$0xff]
      %v994 = vld [vmem:[%s913 + $0xc1] sm:$0xff]
      %v995 = vld [vmem:[%s913 + $0xc9] sm:$0xff]
      %v996 = vld [vmem:[%s913 + $0xd9] sm:$0xff]
      %v997 = vld [vmem:[%s913 + $0xe1] sm:$0xff]
      %v998 = vld [vmem:[%s913 + $0xf1] sm:$0xff]
      %v999 = vld [vmem:[%s913 + $0xf9] sm:$0xff]
      %v1000 = vld [vmem:[%s913 + $0x109] sm:$0xff]
      %v1001 = vld [vmem:[%s913 + $0x111] sm:$0xff]
      %v1002 = vld [vmem:[%s913 + $0x121] sm:$0xff]
      %v1003 = vld [vmem:[%s913 + $0x129] sm:$0xff]
      %v1004 = vld [vmem:[%s913 + $0x139] sm:$0xff]
      %v1005 = vld [vmem:[%s913 + $0x141] sm:$0xff]
      %v1006 = vld [vmem:[%s913 + $0x151] sm:$0xff]
      %v1007 = vld [vmem:[%s913 + $0x159] sm:$0xff]
      %v1008 = vld [vmem:[%s913 + $0x169] sm:$0xff]
      %v1009 = vld [vmem:[%s913 + $0x171] sm:$0xff]
      %1010 = vst [vmem:[#allocation3 + $0x38] sm:$0xff] %v978
      %1011 = vst [vmem:[#allocation3 + $0x80] sm:$0xff] %v979
      %1012 = vst [vmem:[#allocation3 + $0xc8] sm:$0xff] %v980
      %1013 = vst [vmem:[#allocation3 + $0x110] sm:$0xff] %v981
      %1014 = vst [vmem:[#allocation3 + $0x158] sm:$0xff] %v982
      %1015 = vst [vmem:[#allocation3 + $0x1a0] sm:$0xff] %v983
      %1016 = vst [vmem:[#allocation3 + $0x1e8] sm:$0xff] %v984
      %1017 = vst [vmem:[#allocation3 + $0x230] sm:$0xff] %v985
      %1018 = vst [vmem:[#allocation3 + $0x278] sm:$0xff] %v986
      %1019 = vst [vmem:[#allocation3 + $0x2c0] sm:$0xff] %v987
      %1020 = vst [vmem:[#allocation3 + $0x308] sm:$0xff] %v988
      %1021 = vst [vmem:[#allocation3 + $0x350] sm:$0xff] %v989
      %1022 = vst [vmem:[#allocation3 + $0x398] sm:$0xff] %v990
      %1023 = vst [vmem:[#allocation3 + $0x3e0] sm:$0xff] %v991
      %1024 = vst [vmem:[#allocation3 + $0x428] sm:$0xff] %v992
      %1025 = vst [vmem:[#allocation3 + $0x470] sm:$0xff] %v993
      %1026 = vst [vmem:[#allocation3 + $0x4b8] sm:$0xff] %v994
      %1027 = vst [vmem:[#allocation3 + $0x500] sm:$0xff] %v995
      %1028 = vst [vmem:[#allocation3 + $0x548] sm:$0xff] %v996
      %1029 = vst [vmem:[#allocation3 + $0x590] sm:$0xff] %v997
      %1030 = vst [vmem:[#allocation3 + $0x5d8] sm:$0xff] %v998
      %1031 = vst [vmem:[#allocation3 + $0x620] sm:$0xff] %v999
      %1032 = vst [vmem:[#allocation3 + $0x668] sm:$0xff] %v1000
      %1033 = vst [vmem:[#allocation3 + $0x6b0] sm:$0xff] %v1001
      %1034 = vst [vmem:[#allocation3 + $0x6f8] sm:$0xff] %v1002
      %1035 = vst [vmem:[#allocation3 + $0x740] sm:$0xff] %v1003
      %1036 = vst [vmem:[#allocation3 + $0x788] sm:$0xff] %v1004
      %1037 = vst [vmem:[#allocation3 + $0x7d0] sm:$0xff] %v1005
      %1038 = vst [vmem:[#allocation3 + $0x818] sm:$0xff] %v1006
      %1039 = vst [vmem:[#allocation3 + $0x860] sm:$0xff] %v1007
      %1040 = vst [vmem:[#allocation3 + $0x8a8] sm:$0xff] %v1008
      %1041 = vst [vmem:[#allocation3 + $0x8f0] sm:$0xff] %v1009
      %v1042 = vld [vmem:[%s913 + $0x2] sm:$0xff]
      %v1043 = vld [vmem:[%s913 + $0xa] sm:$0xff]
      %v1044 = vld [vmem:[%s913 + $0x1a] sm:$0xff]
      %v1045 = vld [vmem:[%s913 + $0x22] sm:$0xff]
      %v1046 = vld [vmem:[%s913 + $0x32] sm:$0xff]
      %v1047 = vld [vmem:[%s913 + $0x3a] sm:$0xff]
      %v1048 = vld [vmem:[%s913 + $0x4a] sm:$0xff]
      %v1049 = vld [vmem:[%s913 + $0x52] sm:$0xff]
      %v1050 = vld [vmem:[%s913 + $0x62] sm:$0xff]
      %v1051 = vld [vmem:[%s913 + $0x6a] sm:$0xff]
      %v1052 = vld [vmem:[%s913 + $0x7a] sm:$0xff]
      %v1053 = vld [vmem:[%s913 + $0x82] sm:$0xff]
      %v1054 = vld [vmem:[%s913 + $0x92] sm:$0xff]
      %v1055 = vld [vmem:[%s913 + $0x9a] sm:$0xff]
      %v1056 = vld [vmem:[%s913 + $0xaa] sm:$0xff]
      %v1057 = vld [vmem:[%s913 + $0xb2] sm:$0xff]
      %v1058 = vld [vmem:[%s913 + $0xc2] sm:$0xff]
      %v1059 = vld [vmem:[%s913 + $0xca] sm:$0xff]
      %v1060 = vld [vmem:[%s913 + $0xda] sm:$0xff]
      %v1061 = vld [vmem:[%s913 + $0xe2] sm:$0xff]
      %v1062 = vld [vmem:[%s913 + $0xf2] sm:$0xff]
      %v1063 = vld [vmem:[%s913 + $0xfa] sm:$0xff]
      %v1064 = vld [vmem:[%s913 + $0x10a] sm:$0xff]
      %v1065 = vld [vmem:[%s913 + $0x112] sm:$0xff]
      %v1066 = vld [vmem:[%s913 + $0x122] sm:$0xff]
      %v1067 = vld [vmem:[%s913 + $0x12a] sm:$0xff]
      %v1068 = vld [vmem:[%s913 + $0x13a] sm:$0xff]
      %v1069 = vld [vmem:[%s913 + $0x142] sm:$0xff]
      %v1070 = vld [vmem:[%s913 + $0x152] sm:$0xff]
      %v1071 = vld [vmem:[%s913 + $0x15a] sm:$0xff]
      %v1072 = vld [vmem:[%s913 + $0x16a] sm:$0xff]
      %v1073 = vld [vmem:[%s913 + $0x172] sm:$0xff]
      %1074 = vst [vmem:[#allocation3 + $0x40] sm:$0xff] %v1042
      %1075 = vst [vmem:[#allocation3 + $0x88] sm:$0xff] %v1043
      %1076 = vst [vmem:[#allocation3 + $0xd0] sm:$0xff] %v1044
      %1077 = vst [vmem:[#allocation3 + $0x118] sm:$0xff] %v1045
      %1078 = vst [vmem:[#allocation3 + $0x160] sm:$0xff] %v1046
      %1079 = vst [vmem:[#allocation3 + $0x1a8] sm:$0xff] %v1047
      %1080 = vst [vmem:[#allocation3 + $0x1f0] sm:$0xff] %v1048
      %1081 = vst [vmem:[#allocation3 + $0x238] sm:$0xff] %v1049
      %1082 = vst [vmem:[#allocation3 + $0x280] sm:$0xff] %v1050
      %1083 = vst [vmem:[#allocation3 + $0x2c8] sm:$0xff] %v1051
      %1084 = vst [vmem:[#allocation3 + $0x310] sm:$0xff] %v1052
      %1085 = vst [vmem:[#allocation3 + $0x358] sm:$0xff] %v1053
      %1086 = vst [vmem:[#allocation3 + $0x3a0] sm:$0xff] %v1054
      %1087 = vst [vmem:[#allocation3 + $0x3e8] sm:$0xff] %v1055
      %1088 = vst [vmem:[#allocation3 + $0x430] sm:$0xff] %v1056
      %1089 = vst [vmem:[#allocation3 + $0x478] sm:$0xff] %v1057
      %1090 = vst [vmem:[#allocation3 + $0x4c0] sm:$0xff] %v1058
      %1091 = vst [vmem:[#allocation3 + $0x508] sm:$0xff] %v1059
      %1092 = vst [vmem:[#allocation3 + $0x550] sm:$0xff] %v1060
      %1093 = vst [vmem:[#allocation3 + $0x598] sm:$0xff] %v1061
      %1094 = vst [vmem:[#allocation3 + $0x5e0] sm:$0xff] %v1062
      %1095 = vst [vmem:[#allocation3 + $0x628] sm:$0xff] %v1063
      %1096 = vst [vmem:[#allocation3 + $0x670] sm:$0xff] %v1064
      %1097 = vst [vmem:[#allocation3 + $0x6b8] sm:$0xff] %v1065
      %1098 = vst [vmem:[#allocation3 + $0x700] sm:$0xff] %v1066
      %1099 = vst [vmem:[#allocation3 + $0x748] sm:$0xff] %v1067
      %1100 = vst [vmem:[#allocation3 + $0x790] sm:$0xff] %v1068
      %1101 = vst [vmem:[#allocation3 + $0x7d8] sm:$0xff] %v1069
      %1102 = vst [vmem:[#allocation3 + $0x820] sm:$0xff] %v1070
      %1103 = vst [vmem:[#allocation3 + $0x868] sm:$0xff] %v1071
      %1104 = vst [vmem:[#allocation3 + $0x8b0] sm:$0xff] %v1072
      %1105 = vst [vmem:[#allocation3 + $0x8f8] sm:$0xff] %v1073
      %v1106 = vld [vmem:[#allocation3] sm:$0xff]
      %v1107 = vld [vmem:[#allocation3 + $0x8] sm:$0xff]
      %v1108 = vld [vmem:[#allocation3 + $0x10] sm:$0xff]
      %v1109 = vld [vmem:[#allocation3 + $0x18] sm:$0xff]
      %v1110 = vld [vmem:[#allocation3 + $0x20] sm:$0xff]
      %v1111 = vld [vmem:[#allocation3 + $0x28] sm:$0xff]
      %v1112 = vld [vmem:[#allocation3 + $0x30] sm:$0xff]
      %v1113 = vld [vmem:[#allocation3 + $0x38] sm:$0xff]
      %v1114 = vld [vmem:[#allocation3 + $0x40] sm:$0xff]
      %v1115 = vld [vmem:[#allocation3 + $0x48] sm:$0xff]
      %v1116 = vld [vmem:[#allocation3 + $0x50] sm:$0xff]
      %v1117 = vld [vmem:[#allocation3 + $0x58] sm:$0xff]
      %v1118 = vld [vmem:[#allocation3 + $0x60] sm:$0xff]
      %v1119 = vld [vmem:[#allocation3 + $0x68] sm:$0xff]
      %v1120 = vld [vmem:[#allocation3 + $0x70] sm:$0xff]
      %v1121 = vld [vmem:[#allocation3 + $0x78] sm:$0xff]
      %v1122 = vld [vmem:[#allocation3 + $0x80] sm:$0xff]
      %v1123 = vld [vmem:[#allocation3 + $0x88] sm:$0xff]
      %v1124 = vld [vmem:[#allocation3 + $0x90] sm:$0xff]
      %v1125 = vld [vmem:[#allocation3 + $0x98] sm:$0xff]
      %v1126 = vld [vmem:[#allocation3 + $0xa0] sm:$0xff]
      %v1127 = vld [vmem:[#allocation3 + $0xa8] sm:$0xff]
      %v1128 = vld [vmem:[#allocation3 + $0xb0] sm:$0xff]
      %v1129 = vld [vmem:[#allocation3 + $0xb8] sm:$0xff]
      %v1130 = vld [vmem:[#allocation3 + $0xc0] sm:$0xff]
      %v1131 = vld [vmem:[#allocation3 + $0xc8] sm:$0xff]
      %v1132 = vld [vmem:[#allocation3 + $0xd0] sm:$0xff]
      %v1133 = vld [vmem:[#allocation3 + $0xd8] sm:$0xff]
      %v1134 = vld [vmem:[#allocation3 + $0xe0] sm:$0xff]
      %v1135 = vld [vmem:[#allocation3 + $0xe8] sm:$0xff]
      %v1136 = vld [vmem:[#allocation3 + $0xf0] sm:$0xff]
      %v1137 = vld [vmem:[#allocation3 + $0xf8] sm:$0xff]
      %v1138 = vld [vmem:[#allocation3 + $0x100] sm:$0xff]
      %v1139 = vld [vmem:[#allocation3 + $0x108] sm:$0xff]
      %v1140 = vld [vmem:[#allocation3 + $0x110] sm:$0xff]
      %v1141 = vld [vmem:[#allocation3 + $0x118] sm:$0xff]
      %v1142 = vld [vmem:[#allocation3 + $0x120] sm:$0xff]
      %v1143 = vld [vmem:[#allocation3 + $0x128] sm:$0xff]
      %v1144 = vld [vmem:[#allocation3 + $0x130] sm:$0xff]
      %v1145 = vld [vmem:[#allocation3 + $0x138] sm:$0xff]
      %v1146 = vld [vmem:[#allocation3 + $0x140] sm:$0xff]
      %v1147 = vld [vmem:[#allocation3 + $0x148] sm:$0xff]
      %v1148 = vld [vmem:[#allocation3 + $0x150] sm:$0xff]
      %v1149 = vld [vmem:[#allocation3 + $0x158] sm:$0xff]
      %v1150 = vld [vmem:[#allocation3 + $0x160] sm:$0xff]
      %v1151 = vld [vmem:[#allocation3 + $0x168] sm:$0xff]
      %v1152 = vld [vmem:[#allocation3 + $0x170] sm:$0xff]
      %v1153 = vld [vmem:[#allocation3 + $0x178] sm:$0xff]
      %v1154 = vld [vmem:[#allocation3 + $0x180] sm:$0xff]
      %v1155 = vld [vmem:[#allocation3 + $0x188] sm:$0xff]
      %v1156 = vld [vmem:[#allocation3 + $0x190] sm:$0xff]
      %v1157 = vld [vmem:[#allocation3 + $0x198] sm:$0xff]
      %v1158 = vld [vmem:[#allocation3 + $0x1a0] sm:$0xff]
      %v1159 = vld [vmem:[#allocation3 + $0x1a8] sm:$0xff]
      %v1160 = vld [vmem:[#allocation3 + $0x1b0] sm:$0xff]
      %v1161 = vld [vmem:[#allocation3 + $0x1b8] sm:$0xff]
      %v1162 = vld [vmem:[#allocation3 + $0x1c0] sm:$0xff]
      %v1163 = vld [vmem:[#allocation3 + $0x1c8] sm:$0xff]
      %v1164 = vld [vmem:[#allocation3 + $0x1d0] sm:$0xff]
      %v1165 = vld [vmem:[#allocation3 + $0x1d8] sm:$0xff]
      %v1166 = vld [vmem:[#allocation3 + $0x1e0] sm:$0xff]
      %v1167 = vld [vmem:[#allocation3 + $0x1e8] sm:$0xff]
      %v1168 = vld [vmem:[#allocation3 + $0x1f0] sm:$0xff]
      %v1169 = vld [vmem:[#allocation3 + $0x1f8] sm:$0xff]
      %v1170 = vld [vmem:[#allocation3 + $0x200] sm:$0xff]
      %v1171 = vld [vmem:[#allocation3 + $0x208] sm:$0xff]
      %v1172 = vld [vmem:[#allocation3 + $0x210] sm:$0xff]
      %v1173 = vld [vmem:[#allocation3 + $0x218] sm:$0xff]
      %v1174 = vld [vmem:[#allocation3 + $0x220] sm:$0xff]
      %v1175 = vld [vmem:[#allocation3 + $0x228] sm:$0xff]
      %v1176 = vld [vmem:[#allocation3 + $0x230] sm:$0xff]
      %v1177 = vld [vmem:[#allocation3 + $0x238] sm:$0xff]
      %v1178 = vld [vmem:[#allocation3 + $0x240] sm:$0xff]
      %v1179 = vld [vmem:[#allocation3 + $0x248] sm:$0xff]
      %v1180 = vld [vmem:[#allocation3 + $0x250] sm:$0xff]
      %v1181 = vld [vmem:[#allocation3 + $0x258] sm:$0xff]
      %v1182 = vld [vmem:[#allocation3 + $0x260] sm:$0xff]
      %v1183 = vld [vmem:[#allocation3 + $0x268] sm:$0xff]
      %v1184 = vld [vmem:[#allocation3 + $0x270] sm:$0xff]
      %v1185 = vld [vmem:[#allocation3 + $0x278] sm:$0xff]
      %v1186 = vld [vmem:[#allocation3 + $0x280] sm:$0xff]
      %v1187 = vld [vmem:[#allocation3 + $0x288] sm:$0xff]
      %v1188 = vld [vmem:[#allocation3 + $0x290] sm:$0xff]
      %v1189 = vld [vmem:[#allocation3 + $0x298] sm:$0xff]
      %v1190 = vld [vmem:[#allocation3 + $0x2a0] sm:$0xff]
      %v1191 = vld [vmem:[#allocation3 + $0x2a8] sm:$0xff]
      %v1192 = vld [vmem:[#allocation3 + $0x2b0] sm:$0xff]
      %v1193 = vld [vmem:[#allocation3 + $0x2b8] sm:$0xff]
      %v1194 = vld [vmem:[#allocation3 + $0x2c0] sm:$0xff]
      %v1195 = vld [vmem:[#allocation3 + $0x2c8] sm:$0xff]
      %v1196 = vld [vmem:[#allocation3 + $0x2d0] sm:$0xff]
      %v1197 = vld [vmem:[#allocation3 + $0x2d8] sm:$0xff]
      %v1198 = vld [vmem:[#allocation3 + $0x2e0] sm:$0xff]
      %v1199 = vld [vmem:[#allocation3 + $0x2e8] sm:$0xff]
      %v1200 = vld [vmem:[#allocation3 + $0x2f0] sm:$0xff]
      %v1201 = vld [vmem:[#allocation3 + $0x2f8] sm:$0xff]
      %v1202 = vld [vmem:[#allocation3 + $0x300] sm:$0xff]
      %v1203 = vld [vmem:[#allocation3 + $0x308] sm:$0xff]
      %v1204 = vld [vmem:[#allocation3 + $0x310] sm:$0xff]
      %v1205 = vld [vmem:[#allocation3 + $0x318] sm:$0xff]
      %v1206 = vld [vmem:[#allocation3 + $0x320] sm:$0xff]
      %v1207 = vld [vmem:[#allocation3 + $0x328] sm:$0xff]
      %v1208 = vld [vmem:[#allocation3 + $0x330] sm:$0xff]
      %v1209 = vld [vmem:[#allocation3 + $0x338] sm:$0xff]
      %v1210 = vld [vmem:[#allocation3 + $0x340] sm:$0xff]
      %v1211 = vld [vmem:[#allocation3 + $0x348] sm:$0xff]
      %v1212 = vld [vmem:[#allocation3 + $0x350] sm:$0xff]
      %v1213 = vld [vmem:[#allocation3 + $0x358] sm:$0xff]
      %v1214 = vld [vmem:[#allocation3 + $0x360] sm:$0xff]
      %v1215 = vld [vmem:[#allocation3 + $0x368] sm:$0xff]
      %v1216 = vld [vmem:[#allocation3 + $0x370] sm:$0xff]
      %v1217 = vld [vmem:[#allocation3 + $0x378] sm:$0xff]
      %v1218 = vld [vmem:[#allocation3 + $0x380] sm:$0xff]
      %v1219 = vld [vmem:[#allocation3 + $0x388] sm:$0xff]
      %v1220 = vld [vmem:[#allocation3 + $0x390] sm:$0xff]
      %v1221 = vld [vmem:[#allocation3 + $0x398] sm:$0xff]
      %v1222 = vld [vmem:[#allocation3 + $0x3a0] sm:$0xff]
      %v1223 = vld [vmem:[#allocation3 + $0x3a8] sm:$0xff]
      %v1224 = vld [vmem:[#allocation3 + $0x3b0] sm:$0xff]
      %v1225 = vld [vmem:[#allocation3 + $0x3b8] sm:$0xff]
      %v1226 = vld [vmem:[#allocation3 + $0x3c0] sm:$0xff]
      %v1227 = vld [vmem:[#allocation3 + $0x3c8] sm:$0xff]
      %v1228 = vld [vmem:[#allocation3 + $0x3d0] sm:$0xff]
      %v1229 = vld [vmem:[#allocation3 + $0x3d8] sm:$0xff]
      %v1230 = vld [vmem:[#allocation3 + $0x3e0] sm:$0xff]
      %v1231 = vld [vmem:[#allocation3 + $0x3e8] sm:$0xff]
      %v1232 = vld [vmem:[#allocation3 + $0x3f0] sm:$0xff]
      %v1233 = vld [vmem:[#allocation3 + $0x3f8] sm:$0xff]
      %v1234 = vld [vmem:[#allocation3 + $0x400] sm:$0xff]
      %v1235 = vld [vmem:[#allocation3 + $0x408] sm:$0xff]
      %v1236 = vld [vmem:[#allocation3 + $0x410] sm:$0xff]
      %v1237 = vld [vmem:[#allocation3 + $0x418] sm:$0xff]
      %v1238 = vld [vmem:[#allocation3 + $0x420] sm:$0xff]
      %v1239 = vld [vmem:[#allocation3 + $0x428] sm:$0xff]
      %v1240 = vld [vmem:[#allocation3 + $0x430] sm:$0xff]
      %v1241 = vld [vmem:[#allocation3 + $0x438] sm:$0xff]
      %v1242 = vld [vmem:[#allocation3 + $0x440] sm:$0xff]
      %v1243 = vld [vmem:[#allocation3 + $0x448] sm:$0xff]
      %v1244 = vld [vmem:[#allocation3 + $0x450] sm:$0xff]
      %v1245 = vld [vmem:[#allocation3 + $0x458] sm:$0xff]
      %v1246 = vld [vmem:[#allocation3 + $0x460] sm:$0xff]
      %v1247 = vld [vmem:[#allocation3 + $0x468] sm:$0xff]
      %v1248 = vld [vmem:[#allocation3 + $0x470] sm:$0xff]
      %v1249 = vld [vmem:[#allocation3 + $0x478] sm:$0xff]
      %v1250 = vld [vmem:[#allocation3 + $0x480] sm:$0xff]
      %v1251 = vld [vmem:[#allocation3 + $0x488] sm:$0xff]
      %v1252 = vld [vmem:[#allocation3 + $0x490] sm:$0xff]
      %v1253 = vld [vmem:[#allocation3 + $0x498] sm:$0xff]
      %v1254 = vld [vmem:[#allocation3 + $0x4a0] sm:$0xff]
      %v1255 = vld [vmem:[#allocation3 + $0x4a8] sm:$0xff]
      %v1256 = vld [vmem:[#allocation3 + $0x4b0] sm:$0xff]
      %v1257 = vld [vmem:[#allocation3 + $0x4b8] sm:$0xff]
      %v1258 = vld [vmem:[#allocation3 + $0x4c0] sm:$0xff]
      %v1259 = vld [vmem:[#allocation3 + $0x4c8] sm:$0xff]
      %v1260 = vld [vmem:[#allocation3 + $0x4d0] sm:$0xff]
      %v1261 = vld [vmem:[#allocation3 + $0x4d8] sm:$0xff]
      %v1262 = vld [vmem:[#allocation3 + $0x4e0] sm:$0xff]
      %v1263 = vld [vmem:[#allocation3 + $0x4e8] sm:$0xff]
      %v1264 = vld [vmem:[#allocation3 + $0x4f0] sm:$0xff]
      %v1265 = vld [vmem:[#allocation3 + $0x4f8] sm:$0xff]
      %v1266 = vld [vmem:[#allocation3 + $0x500] sm:$0xff]
      %v1267 = vld [vmem:[#allocation3 + $0x508] sm:$0xff]
      %v1268 = vld [vmem:[#allocation3 + $0x510] sm:$0xff]
      %v1269 = vld [vmem:[#allocation3 + $0x518] sm:$0xff]
      %v1270 = vld [vmem:[#allocation3 + $0x520] sm:$0xff]
      %v1271 = vld [vmem:[#allocation3 + $0x528] sm:$0xff]
      %v1272 = vld [vmem:[#allocation3 + $0x530] sm:$0xff]
      %v1273 = vld [vmem:[#allocation3 + $0x538] sm:$0xff]
      %v1274 = vld [vmem:[#allocation3 + $0x540] sm:$0xff]
      %v1275 = vld [vmem:[#allocation3 + $0x548] sm:$0xff]
      %v1276 = vld [vmem:[#allocation3 + $0x550] sm:$0xff]
      %v1277 = vld [vmem:[#allocation3 + $0x558] sm:$0xff]
      %v1278 = vld [vmem:[#allocation3 + $0x560] sm:$0xff]
      %v1279 = vld [vmem:[#allocation3 + $0x568] sm:$0xff]
      %v1280 = vld [vmem:[#allocation3 + $0x570] sm:$0xff]
      %v1281 = vld [vmem:[#allocation3 + $0x578] sm:$0xff]
      %v1282 = vld [vmem:[#allocation3 + $0x580] sm:$0xff]
      %v1283 = vld [vmem:[#allocation3 + $0x588] sm:$0xff]
      %v1284 = vld [vmem:[#allocation3 + $0x590] sm:$0xff]
      %v1285 = vld [vmem:[#allocation3 + $0x598] sm:$0xff]
      %v1286 = vld [vmem:[#allocation3 + $0x5a0] sm:$0xff]
      %v1287 = vld [vmem:[#allocation3 + $0x5a8] sm:$0xff]
      %v1288 = vld [vmem:[#allocation3 + $0x5b0] sm:$0xff]
      %v1289 = vld [vmem:[#allocation3 + $0x5b8] sm:$0xff]
      %v1290 = vld [vmem:[#allocation3 + $0x5c0] sm:$0xff]
      %v1291 = vld [vmem:[#allocation3 + $0x5c8] sm:$0xff]
      %v1292 = vld [vmem:[#allocation3 + $0x5d0] sm:$0xff]
      %v1293 = vld [vmem:[#allocation3 + $0x5d8] sm:$0xff]
      %v1294 = vld [vmem:[#allocation3 + $0x5e0] sm:$0xff]
      %v1295 = vld [vmem:[#allocation3 + $0x5e8] sm:$0xff]
      %v1296 = vld [vmem:[#allocation3 + $0x5f0] sm:$0xff]
      %v1297 = vld [vmem:[#allocation3 + $0x5f8] sm:$0xff]
      %v1298 = vld [vmem:[#allocation3 + $0x600] sm:$0xff]
      %v1299 = vld [vmem:[#allocation3 + $0x608] sm:$0xff]
      %v1300 = vld [vmem:[#allocation3 + $0x610] sm:$0xff]
      %v1301 = vld [vmem:[#allocation3 + $0x618] sm:$0xff]
      %v1302 = vld [vmem:[#allocation3 + $0x620] sm:$0xff]
      %v1303 = vld [vmem:[#allocation3 + $0x628] sm:$0xff]
      %v1304 = vld [vmem:[#allocation3 + $0x630] sm:$0xff]
      %v1305 = vld [vmem:[#allocation3 + $0x638] sm:$0xff]
      %v1306 = vld [vmem:[#allocation3 + $0x640] sm:$0xff]
      %v1307 = vld [vmem:[#allocation3 + $0x648] sm:$0xff]
      %v1308 = vld [vmem:[#allocation3 + $0x650] sm:$0xff]
      %v1309 = vld [vmem:[#allocation3 + $0x658] sm:$0xff]
      %v1310 = vld [vmem:[#allocation3 + $0x660] sm:$0xff]
      %v1311 = vld [vmem:[#allocation3 + $0x668] sm:$0xff]
      %v1312 = vld [vmem:[#allocation3 + $0x670] sm:$0xff]
      %v1313 = vld [vmem:[#allocation3 + $0x678] sm:$0xff]
      %v1314 = vld [vmem:[#allocation3 + $0x680] sm:$0xff]
      %v1315 = vld [vmem:[#allocation3 + $0x688] sm:$0xff]
      %v1316 = vld [vmem:[#allocation3 + $0x690] sm:$0xff]
      %v1317 = vld [vmem:[#allocation3 + $0x698] sm:$0xff]
      %v1318 = vld [vmem:[#allocation3 + $0x6a0] sm:$0xff]
      %v1319 = vld [vmem:[#allocation3 + $0x6a8] sm:$0xff]
      %v1320 = vld [vmem:[#allocation3 + $0x6b0] sm:$0xff]
      %v1321 = vld [vmem:[#allocation3 + $0x6b8] sm:$0xff]
      %v1322 = vld [vmem:[#allocation3 + $0x6c0] sm:$0xff]
      %v1323 = vld [vmem:[#allocation3 + $0x6c8] sm:$0xff]
      %v1324 = vld [vmem:[#allocation3 + $0x6d0] sm:$0xff]
      %v1325 = vld [vmem:[#allocation3 + $0x6d8] sm:$0xff]
      %v1326 = vld [vmem:[#allocation3 + $0x6e0] sm:$0xff]
      %v1327 = vld [vmem:[#allocation3 + $0x6e8] sm:$0xff]
      %v1328 = vld [vmem:[#allocation3 + $0x6f0] sm:$0xff]
      %v1329 = vld [vmem:[#allocation3 + $0x6f8] sm:$0xff]
      %v1330 = vld [vmem:[#allocation3 + $0x700] sm:$0xff]
      %v1331 = vld [vmem:[#allocation3 + $0x708] sm:$0xff]
      %v1332 = vld [vmem:[#allocation3 + $0x710] sm:$0xff]
      %v1333 = vld [vmem:[#allocation3 + $0x718] sm:$0xff]
      %v1334 = vld [vmem:[#allocation3 + $0x720] sm:$0xff]
      %v1335 = vld [vmem:[#allocation3 + $0x728] sm:$0xff]
      %v1336 = vld [vmem:[#allocation3 + $0x730] sm:$0xff]
      %v1337 = vld [vmem:[#allocation3 + $0x738] sm:$0xff]
      %v1338 = vld [vmem:[#allocation3 + $0x740] sm:$0xff]
      %v1339 = vld [vmem:[#allocation3 + $0x748] sm:$0xff]
      %v1340 = vld [vmem:[#allocation3 + $0x750] sm:$0xff]
      %v1341 = vld [vmem:[#allocation3 + $0x758] sm:$0xff]
      %v1342 = vld [vmem:[#allocation3 + $0x760] sm:$0xff]
      %v1343 = vld [vmem:[#allocation3 + $0x768] sm:$0xff]
      %v1344 = vld [vmem:[#allocation3 + $0x770] sm:$0xff]
      %v1345 = vld [vmem:[#allocation3 + $0x778] sm:$0xff]
      %v1346 = vld [vmem:[#allocation3 + $0x780] sm:$0xff]
      %v1347 = vld [vmem:[#allocation3 + $0x788] sm:$0xff]
      %v1348 = vld [vmem:[#allocation3 + $0x790] sm:$0xff]
      %v1349 = vld [vmem:[#allocation3 + $0x798] sm:$0xff]
      %v1350 = vld [vmem:[#allocation3 + $0x7a0] sm:$0xff]
      %v1351 = vld [vmem:[#allocation3 + $0x7a8] sm:$0xff]
      %v1352 = vld [vmem:[#allocation3 + $0x7b0] sm:$0xff]
      %v1353 = vld [vmem:[#allocation3 + $0x7b8] sm:$0xff]
      %v1354 = vld [vmem:[#allocation3 + $0x7c0] sm:$0xff]
      %v1355 = vld [vmem:[#allocation3 + $0x7c8] sm:$0xff]
      %v1356 = vld [vmem:[#allocation3 + $0x7d0] sm:$0xff]
      %v1357 = vld [vmem:[#allocation3 + $0x7d8] sm:$0xff]
      %v1358 = vld [vmem:[#allocation3 + $0x7e0] sm:$0xff]
      %v1359 = vld [vmem:[#allocation3 + $0x7e8] sm:$0xff]
      %v1360 = vld [vmem:[#allocation3 + $0x7f0] sm:$0xff]
      %v1361 = vld [vmem:[#allocation3 + $0x7f8] sm:$0xff]
      %v1362 = vld [vmem:[#allocation3 + $0x800] sm:$0xff]
      %v1363 = vld [vmem:[#allocation3 + $0x808] sm:$0xff]
      %v1364 = vld [vmem:[#allocation3 + $0x810] sm:$0xff]
      %v1365 = vld [vmem:[#allocation3 + $0x818] sm:$0xff]
      %v1366 = vld [vmem:[#allocation3 + $0x820] sm:$0xff]
      %v1367 = vld [vmem:[#allocation3 + $0x828] sm:$0xff]
      %v1368 = vld [vmem:[#allocation3 + $0x830] sm:$0xff]
      %v1369 = vld [vmem:[#allocation3 + $0x838] sm:$0xff]
      %v1370 = vld [vmem:[#allocation3 + $0x840] sm:$0xff]
      %v1371 = vld [vmem:[#allocation3 + $0x848] sm:$0xff]
      %v1372 = vld [vmem:[#allocation3 + $0x850] sm:$0xff]
      %v1373 = vld [vmem:[#allocation3 + $0x858] sm:$0xff]
      %v1374 = vld [vmem:[#allocation3 + $0x860] sm:$0xff]
      %v1375 = vld [vmem:[#allocation3 + $0x868] sm:$0xff]
      %v1376 = vld [vmem:[#allocation3 + $0x870] sm:$0xff]
      %v1377 = vld [vmem:[#allocation3 + $0x878] sm:$0xff]
      %v1378 = vld [vmem:[#allocation3 + $0x880] sm:$0xff]
      %v1379 = vld [vmem:[#allocation3 + $0x888] sm:$0xff]
      %v1380 = vld [vmem:[#allocation3 + $0x890] sm:$0xff]
      %v1381 = vld [vmem:[#allocation3 + $0x898] sm:$0xff]
      %v1382 = vld [vmem:[#allocation3 + $0x8a0] sm:$0xff]
      %v1383 = vld [vmem:[#allocation3 + $0x8a8] sm:$0xff]
      %v1384 = vld [vmem:[#allocation3 + $0x8b0] sm:$0xff]
      %v1385 = vld [vmem:[#allocation3 + $0x8b8] sm:$0xff]
      %v1386 = vld [vmem:[#allocation3 + $0x8c0] sm:$0xff]
      %v1387 = vld [vmem:[#allocation3 + $0x8c8] sm:$0xff]
      %v1388 = vld [vmem:[#allocation3 + $0x8d0] sm:$0xff]
      %v1389 = vld [vmem:[#allocation3 + $0x8d8] sm:$0xff]
      %v1390 = vld [vmem:[#allocation3 + $0x8e0] sm:$0xff]
      %v1391 = vld [vmem:[#allocation3 + $0x8e8] sm:$0xff]
      %v1392 = vld [vmem:[#allocation3 + $0x8f0] sm:$0xff]
      %v1393 = vld [vmem:[#allocation3 + $0x8f8] sm:$0xff]
      %v1394 = vld [vmem:[%s3] sm:$0xff]
      %v1395 = vld [vmem:[%s3 + $0x8] sm:$0xff]
      %v1396 = vld [vmem:[%s3 + $0x10] sm:$0xff]
      %v1397 = vld [vmem:[%s3 + $0x18] sm:$0xff]
      %v1398 = vld [vmem:[%s3 + $0x20] sm:$0xff]
      %v1399 = vld [vmem:[%s3 + $0x28] sm:$0xff]
      %v1400 = vld [vmem:[%s3 + $0x30] sm:$0xff]
      %v1401 = vld [vmem:[%s3 + $0x38] sm:$0xff]
      %v1402 = vld [vmem:[%s3 + $0x40] sm:$0xff]
      %v1403 = vld [vmem:[%s3 + $0x48] sm:$0xff]
      %v1404 = vld [vmem:[%s3 + $0x50] sm:$0xff]
      %v1405 = vld [vmem:[%s3 + $0x58] sm:$0xff]
      %v1406 = vld [vmem:[%s3 + $0x60] sm:$0xff]
      %v1407 = vld [vmem:[%s3 + $0x68] sm:$0xff]
      %v1408 = vld [vmem:[%s3 + $0x70] sm:$0xff]
      %v1409 = vld [vmem:[%s3 + $0x78] sm:$0xff]
      %v1410 = vld [vmem:[%s3 + $0x80] sm:$0xff]
      %v1411 = vld [vmem:[%s3 + $0x88] sm:$0xff]
      %v1412 = vld [vmem:[%s3 + $0x90] sm:$0xff]
      %v1413 = vld [vmem:[%s3 + $0x98] sm:$0xff]
      %v1414 = vld [vmem:[%s3 + $0xa0] sm:$0xff]
      %v1415 = vld [vmem:[%s3 + $0xa8] sm:$0xff]
      %v1416 = vld [vmem:[%s3 + $0xb0] sm:$0xff]
      %v1417 = vld [vmem:[%s3 + $0xb8] sm:$0xff]
      %v1418 = vld [vmem:[%s3 + $0xc0] sm:$0xff]
      %v1419 = vld [vmem:[%s3 + $0xc8] sm:$0xff]
      %v1420 = vld [vmem:[%s3 + $0xd0] sm:$0xff]
      %v1421 = vld [vmem:[%s3 + $0xd8] sm:$0xff]
      %v1422 = vld [vmem:[%s3 + $0xe0] sm:$0xff]
      %v1423 = vld [vmem:[%s3 + $0xe8] sm:$0xff]
      %v1424 = vld [vmem:[%s3 + $0xf0] sm:$0xff]
      %v1425 = vld [vmem:[%s3 + $0xf8] sm:$0xff]
      %v1426 = vld [vmem:[%s3 + $0x100] sm:$0xff]
      %v1427 = vld [vmem:[%s3 + $0x108] sm:$0xff]
      %v1428 = vld [vmem:[%s3 + $0x110] sm:$0xff]
      %v1429 = vld [vmem:[%s3 + $0x118] sm:$0xff]
      %v1430 = vld [vmem:[%s3 + $0x120] sm:$0xff]
      %v1431 = vld [vmem:[%s3 + $0x128] sm:$0xff]
      %v1432 = vld [vmem:[%s3 + $0x130] sm:$0xff]
      %v1433 = vld [vmem:[%s3 + $0x138] sm:$0xff]
      %v1434 = vld [vmem:[%s3 + $0x140] sm:$0xff]
      %v1435 = vld [vmem:[%s3 + $0x148] sm:$0xff]
      %v1436 = vld [vmem:[%s3 + $0x150] sm:$0xff]
      %v1437 = vld [vmem:[%s3 + $0x158] sm:$0xff]
      %v1438 = vld [vmem:[%s3 + $0x160] sm:$0xff]
      %v1439 = vld [vmem:[%s3 + $0x168] sm:$0xff]
      %v1440 = vld [vmem:[%s3 + $0x170] sm:$0xff]
      %v1441 = vld [vmem:[%s3 + $0x178] sm:$0xff]
      %v1442 = vld [vmem:[%s3 + $0x180] sm:$0xff]
      %v1443 = vld [vmem:[%s3 + $0x188] sm:$0xff]
      %v1444 = vld [vmem:[%s3 + $0x190] sm:$0xff]
      %v1445 = vld [vmem:[%s3 + $0x198] sm:$0xff]
      %v1446 = vld [vmem:[%s3 + $0x1a0] sm:$0xff]
      %v1447 = vld [vmem:[%s3 + $0x1a8] sm:$0xff]
      %v1448 = vld [vmem:[%s3 + $0x1b0] sm:$0xff]
      %v1449 = vld [vmem:[%s3 + $0x1b8] sm:$0xff]
      %v1450 = vld [vmem:[%s3 + $0x1c0] sm:$0xff]
      %v1451 = vld [vmem:[%s3 + $0x1c8] sm:$0xff]
      %v1452 = vld [vmem:[%s3 + $0x1d0] sm:$0xff]
      %v1453 = vld [vmem:[%s3 + $0x1d8] sm:$0xff]
      %v1454 = vld [vmem:[%s3 + $0x1e0] sm:$0xff]
      %v1455 = vld [vmem:[%s3 + $0x1e8] sm:$0xff]
      %v1456 = vld [vmem:[%s3 + $0x1f0] sm:$0xff]
      %v1457 = vld [vmem:[%s3 + $0x1f8] sm:$0xff]
      %v1458 = vld [vmem:[%s3 + $0x200] sm:$0xff]
      %v1459 = vld [vmem:[%s3 + $0x208] sm:$0xff]
      %v1460 = vld [vmem:[%s3 + $0x210] sm:$0xff]
      %v1461 = vld [vmem:[%s3 + $0x218] sm:$0xff]
      %v1462 = vld [vmem:[%s3 + $0x220] sm:$0xff]
      %v1463 = vld [vmem:[%s3 + $0x228] sm:$0xff]
      %v1464 = vld [vmem:[%s3 + $0x230] sm:$0xff]
      %v1465 = vld [vmem:[%s3 + $0x238] sm:$0xff]
      %v1466 = vld [vmem:[%s3 + $0x240] sm:$0xff]
      %v1467 = vld [vmem:[%s3 + $0x248] sm:$0xff]
      %v1468 = vld [vmem:[%s3 + $0x250] sm:$0xff]
      %v1469 = vld [vmem:[%s3 + $0x258] sm:$0xff]
      %v1470 = vld [vmem:[%s3 + $0x260] sm:$0xff]
      %v1471 = vld [vmem:[%s3 + $0x268] sm:$0xff]
      %v1472 = vld [vmem:[%s3 + $0x270] sm:$0xff]
      %v1473 = vld [vmem:[%s3 + $0x278] sm:$0xff]
      %v1474 = vld [vmem:[%s3 + $0x280] sm:$0xff]
      %v1475 = vld [vmem:[%s3 + $0x288] sm:$0xff]
      %v1476 = vld [vmem:[%s3 + $0x290] sm:$0xff]
      %v1477 = vld [vmem:[%s3 + $0x298] sm:$0xff]
      %v1478 = vld [vmem:[%s3 + $0x2a0] sm:$0xff]
      %v1479 = vld [vmem:[%s3 + $0x2a8] sm:$0xff]
      %v1480 = vld [vmem:[%s3 + $0x2b0] sm:$0xff]
      %v1481 = vld [vmem:[%s3 + $0x2b8] sm:$0xff]
      %v1482 = vld [vmem:[%s3 + $0x2c0] sm:$0xff]
      %v1483 = vld [vmem:[%s3 + $0x2c8] sm:$0xff]
      %v1484 = vld [vmem:[%s3 + $0x2d0] sm:$0xff]
      %v1485 = vld [vmem:[%s3 + $0x2d8] sm:$0xff]
      %v1486 = vld [vmem:[%s3 + $0x2e0] sm:$0xff]
      %v1487 = vld [vmem:[%s3 + $0x2e8] sm:$0xff]
      %v1488 = vld [vmem:[%s3 + $0x2f0] sm:$0xff]
      %v1489 = vld [vmem:[%s3 + $0x2f8] sm:$0xff]
      %v1490 = vld [vmem:[%s3 + $0x300] sm:$0xff]
      %v1491 = vld [vmem:[%s3 + $0x308] sm:$0xff]
      %v1492 = vld [vmem:[%s3 + $0x310] sm:$0xff]
      %v1493 = vld [vmem:[%s3 + $0x318] sm:$0xff]
      %v1494 = vld [vmem:[%s3 + $0x320] sm:$0xff]
      %v1495 = vld [vmem:[%s3 + $0x328] sm:$0xff]
      %v1496 = vld [vmem:[%s3 + $0x330] sm:$0xff]
      %v1497 = vld [vmem:[%s3 + $0x338] sm:$0xff]
      %v1498 = vld [vmem:[%s3 + $0x340] sm:$0xff]
      %v1499 = vld [vmem:[%s3 + $0x348] sm:$0xff]
      %v1500 = vld [vmem:[%s3 + $0x350] sm:$0xff]
      %v1501 = vld [vmem:[%s3 + $0x358] sm:$0xff]
      %v1502 = vld [vmem:[%s3 + $0x360] sm:$0xff]
      %v1503 = vld [vmem:[%s3 + $0x368] sm:$0xff]
      %v1504 = vld [vmem:[%s3 + $0x370] sm:$0xff]
      %v1505 = vld [vmem:[%s3 + $0x378] sm:$0xff]
      %v1506 = vld [vmem:[%s3 + $0x380] sm:$0xff]
      %v1507 = vld [vmem:[%s3 + $0x388] sm:$0xff]
      %v1508 = vld [vmem:[%s3 + $0x390] sm:$0xff]
      %v1509 = vld [vmem:[%s3 + $0x398] sm:$0xff]
      %v1510 = vld [vmem:[%s3 + $0x3a0] sm:$0xff]
      %v1511 = vld [vmem:[%s3 + $0x3a8] sm:$0xff]
      %v1512 = vld [vmem:[%s3 + $0x3b0] sm:$0xff]
      %v1513 = vld [vmem:[%s3 + $0x3b8] sm:$0xff]
      %v1514 = vld [vmem:[%s3 + $0x3c0] sm:$0xff]
      %v1515 = vld [vmem:[%s3 + $0x3c8] sm:$0xff]
      %v1516 = vld [vmem:[%s3 + $0x3d0] sm:$0xff]
      %v1517 = vld [vmem:[%s3 + $0x3d8] sm:$0xff]
      %v1518 = vld [vmem:[%s3 + $0x3e0] sm:$0xff]
      %v1519 = vld [vmem:[%s3 + $0x3e8] sm:$0xff]
      %v1520 = vld [vmem:[%s3 + $0x3f0] sm:$0xff]
      %v1521 = vld [vmem:[%s3 + $0x3f8] sm:$0xff]
      %v1522 = vld [vmem:[%s3 + $0x400] sm:$0xff]
      %v1523 = vld [vmem:[%s3 + $0x408] sm:$0xff]
      %v1524 = vld [vmem:[%s3 + $0x410] sm:$0xff]
      %v1525 = vld [vmem:[%s3 + $0x418] sm:$0xff]
      %v1526 = vld [vmem:[%s3 + $0x420] sm:$0xff]
      %v1527 = vld [vmem:[%s3 + $0x428] sm:$0xff]
      %v1528 = vld [vmem:[%s3 + $0x430] sm:$0xff]
      %v1529 = vld [vmem:[%s3 + $0x438] sm:$0xff]
      %v1530 = vld [vmem:[%s3 + $0x440] sm:$0xff]
      %v1531 = vld [vmem:[%s3 + $0x448] sm:$0xff]
      %v1532 = vld [vmem:[%s3 + $0x450] sm:$0xff]
      %v1533 = vld [vmem:[%s3 + $0x458] sm:$0xff]
      %v1534 = vld [vmem:[%s3 + $0x460] sm:$0xff]
      %v1535 = vld [vmem:[%s3 + $0x468] sm:$0xff]
      %v1536 = vld [vmem:[%s3 + $0x470] sm:$0xff]
      %v1537 = vld [vmem:[%s3 + $0x478] sm:$0xff]
      %1538 = vmatprep.subr.mxu0 0.0
      %1539 = vmatpush1.msra.mxu0 %v1394
      %1540 = vmatprep.subr.mxu0 0.0
      %1541 = vmatpush1.msra.mxu0 %v1395
      %1542 = vmatprep.subr.mxu0 0.0
      %1543 = vmatpush1.msra.mxu0 %v1396
      %1544 = vmatprep.subr.mxu0 0.0
      %1545 = vmatpush1.msra.mxu0 %v1397
      %1546 = vmatprep.subr.mxu0 0.0
      %1547 = vmatpush1.msra.mxu0 %v1398
      %1548 = vmatprep.subr.mxu0 0.0
      %1549 = vmatpush1.msra.mxu0 %v1399
      %1550 = vmatprep.subr.mxu0 0.0
      %1551 = vmatpush1.msra.mxu0 %v1400
      %1552 = vmatprep.subr.mxu0 0.0
      %1553 = vmatpush1.msra.mxu0 %v1401
      %1554 = vmatprep.subr.mxu0 0.0
      %1555 = vmatpush1.msra.mxu0 %v1402
      %1556 = vmatprep.subr.mxu0 0.0
      %1557 = vmatpush1.msra.mxu0 %v1403
      %1558 = vmatprep.subr.mxu0 0.0
      %1559 = vmatpush1.msra.mxu0 %v1404
      %1560 = vmatprep.subr.mxu0 0.0
      %1561 = vmatpush1.msra.mxu0 %v1405
      %1562 = vmatprep.subr.mxu0 0.0
      %1563 = vmatpush1.msra.mxu0 %v1406
      %1564 = vmatprep.subr.mxu0 0.0
      %1565 = vmatpush1.msra.mxu0 %v1407
      %1566 = vmatprep.subr.mxu0 0.0
      %1567 = vmatpush1.msra.mxu0 %v1408
      %1568 = vmatprep.subr.mxu0 0.0
      %1569 = vmatpush1.msra.mxu0 %v1409
      %1570 = vmatprep.subr.mxu0 0.0
      %1571 = vmatpush1.msra.mxu0 %v1410
      %1572 = vmatprep.subr.mxu0 0.0
      %1573 = vmatpush1.msra.mxu0 %v1411
      %1574 = vmatprep.subr.mxu0 0.0
      %1575 = vmatpush1.msra.mxu0 %v1412
      %1576 = vmatprep.subr.mxu0 0.0
      %1577 = vmatpush1.msra.mxu0 %v1413
      %1578 = vmatprep.subr.mxu0 0.0
      %1579 = vmatpush1.msra.mxu0 %v1414
      %1580 = vmatprep.subr.mxu0 0.0
      %1581 = vmatpush1.msra.mxu0 %v1415
      %1582 = vmatprep.subr.mxu0 0.0
      %1583 = vmatpush1.msra.mxu0 %v1416
      %1584 = vmatprep.subr.mxu0 0.0
      %1585 = vmatpush1.msra.mxu0 %v1417
      %1586 = vmatprep.subr.mxu0 0.0
      %1587 = vmatpush1.msra.mxu0 %v1418
      %1588 = vmatprep.subr.mxu0 0.0
      %1589 = vmatpush1.msra.mxu0 %v1419
      %1590 = vmatprep.subr.mxu0 0.0
      %1591 = vmatpush1.msra.mxu0 %v1420
      %1592 = vmatprep.subr.mxu0 0.0
      %1593 = vmatpush1.msra.mxu0 %v1421
      %1594 = vmatprep.subr.mxu0 0.0
      %1595 = vmatpush1.msra.mxu0 %v1422
      %1596 = vmatprep.subr.mxu0 0.0
      %1597 = vmatpush1.msra.mxu0 %v1423
      %1598 = vmatprep.subr.mxu0 0.0
      %1599 = vmatpush1.msra.mxu0 %v1424
      %1600 = vmatprep.subr.mxu0 0.0
      %1601 = vmatpush1.msra.mxu0 %v1425
      %1602 = vmatprep.mubr.f32.mxu0 %v1107
      %1603 = vmatmul.mubr.f32.gmra.mrb[0].mxu0 %v1106
      %v1604 = vpop.f32.mrb[0].mxu0
      %v1605 = vadd.f32 0.0, %v1604
      %v1606 = vpop.f32.mrb[0].mxu0
      %1607 = vmatprep.mubr.f32.mxu0 %v1116
      %1608 = vmatmul.mubr.f32.gmra.mrb[0].mxu0 %v1115
      %v1609 = vpop.f32.mrb[0].mxu0
      %v1610 = vadd.f32 0.0, %v1609
      %v1611 = vpop.f32.mrb[0].mxu0
      %1612 = vmatprep.mubr.f32.mxu0 %v1125
      %1613 = vmatmul.mubr.f32.gmra.mrb[0].mxu0 %v1124
      %v1614 = vpop.f32.mrb[0].mxu0
      %v1615 = vadd.f32 0.0, %v1614
      %v1616 = vpop.f32.mrb[0].mxu0
      %1617 = vmatprep.mubr.f32.mxu0 %v1134
      %1618 = vmatmul.mubr.f32.gmra.mrb[0].mxu0 %v1133
      %v1619 = vpop.f32.mrb[0].mxu0
      %v1620 = vadd.f32 0.0, %v1619
      %v1621 = vpop.f32.mrb[0].mxu0
      %1622 = vmatprep.mubr.f32.mxu0 %v1143
      %1623 = vmatmul.mubr.f32.gmra.mrb[0].mxu0 %v1142
      %v1624 = vpop.f32.mrb[0].mxu0
      %v1625 = vadd.f32 0.0, %v1624
      %v1626 = vpop.f32.mrb[0].mxu0
      %1627 = vmatprep.mubr.f32.mxu0 %v1152
      %1628 = vmatmul.mubr.f32.gmra.mrb[0].mxu0 %v1151
      %v1629 = vpop.f32.mrb[0].mxu0
      %v1630 = vadd.f32 0.0, %v1629
      %v1631 = vpop.f32.mrb[0].mxu0
      %1632 = vmatprep.mubr.f32.mxu0 %v1161
      %1633 = vmatmul.mubr.f32.gmra.mrb[0].mxu0 %v1160
      %v1634 = vpop.f32.mrb[0].mxu0
      %v1635 = vadd.f32 0.0, %v1634
      %v1636 = vpop.f32.mrb[0].mxu0
      %1637 = vmatprep.mubr.f32.mxu0 %v1170
      %1638 = vmatmul.mubr.f32.gmra.mrb[0].mxu0 %v1169
      %v1639 = vpop.f32.mrb[0].mxu0
      %v1640 = vadd.f32 0.0, %v1639
      %v1641 = vpop.f32.mrb[0].mxu0
      %1642 = vmatprep.mubr.f32.mxu0 %v1179
      %1643 = vmatmul.mubr.f32.gmra.mrb[0].mxu0 %v1178
      %v1644 = vpop.f32.mrb[0].mxu0
      %v1645 = vadd.f32 0.0, %v1644
      %v1646 = vpop.f32.mrb[0].mxu0
      %1647 = vmatprep.mubr.f32.mxu0 %v1188
      %1648 = vmatmul.mubr.f32.gmra.mrb[0].mxu0 %v1187
      %v1649 = vpop.f32.mrb[0].mxu0
      %v1650 = vadd.f32 0.0, %v1649
      %v1651 = vpop.f32.mrb[0].mxu0
      %1652 = vmatprep.mubr.f32.mxu0 %v1197
      %1653 = vmatmul.mubr.f32.gmra.mrb[0].mxu0 %v1196
      %v1654 = vpop.f32.mrb[0].mxu0
      %v1655 = vadd.f32 0.0, %v1654
      %v1656 = vpop.f32.mrb[0].mxu0
      %1657 = vmatprep.mubr.f32.mxu0 %v1206
      %1658 = vmatmul.mubr.f32.gmra.mrb[0].mxu0 %v1205
      %v1659 = vpop.f32.mrb[0].mxu0
      %v1660 = vadd.f32 0.0, %v1659
      %v1661 = vpop.f32.mrb[0].mxu0
      %1662 = vmatprep.mubr.f32.mxu0 %v1215
      %1663 = vmatmul.mubr.f32.gmra.mrb[0].mxu0 %v1214
      %v1664 = vpop.f32.mrb[0].mxu0
      %v1665 = vadd.f32 0.0, %v1664
      %v1666 = vpop.f32.mrb[0].mxu0
      %1667 = vmatprep.mubr.f32.mxu0 %v1224
      %1668 = vmatmul.mubr.f32.gmra.mrb[0].mxu0 %v1223
      %v1669 = vpop.f32.mrb[0].mxu0
      %v1670 = vadd.f32 0.0, %v1669
      %v1671 = vpop.f32.mrb[0].mxu0
      %1672 = vmatprep.mubr.f32.mxu0 %v1233
      %1673 = vmatmul.mubr.f32.gmra.mrb[0].mxu0 %v1232
      %v1674 = vpop.f32.mrb[0].mxu0
      %v1675 = vadd.f32 0.0, %v1674
      %v1676 = vpop.f32.mrb[0].mxu0
      %1677 = vmatprep.mubr.f32.mxu0 %v1242
      %1678 = vmatmul.mubr.f32.gmra.mrb[0].mxu0 %v1241
      %v1679 = vpop.f32.mrb[0].mxu0
      %v1680 = vadd.f32 0.0, %v1679
      %v1681 = vpop.f32.mrb[0].mxu0
      %1682 = vmatprep.mubr.f32.mxu0 %v1251
      %1683 = vmatmul.mubr.f32.gmra.mrb[0].mxu0 %v1250
      %v1684 = vpop.f32.mrb[0].mxu0
      %v1685 = vadd.f32 0.0, %v1684
      %v1686 = vpop.f32.mrb[0].mxu0
      %1687 = vmatprep.mubr.f32.mxu0 %v1260
      %1688 = vmatmul.mubr.f32.gmra.mrb[0].mxu0 %v1259
      %v1689 = vpop.f32.mrb[0].mxu0
      %v1690 = vadd.f32 0.0, %v1689
      %v1691 = vpop.f32.mrb[0].mxu0
      %1692 = vmatprep.mubr.f32.mxu0 %v1269
      %1693 = vmatmul.mubr.f32.gmra.mrb[0].mxu0 %v1268
      %v1694 = vpop.f32.mrb[0].mxu0
      %v1695 = vadd.f32 0.0, %v1694
      %v1696 = vpop.f32.mrb[0].mxu0
      %1697 = vmatprep.mubr.f32.mxu0 %v1278
      %1698 = vmatmul.mubr.f32.gmra.mrb[0].mxu0 %v1277
      %v1699 = vpop.f32.mrb[0].mxu0
      %v1700 = vadd.f32 0.0, %v1699
      %v1701 = vpop.f32.mrb[0].mxu0
      %1702 = vmatprep.mubr.f32.mxu0 %v1287
      %1703 = vmatmul.mubr.f32.gmra.mrb[0].mxu0 %v1286
      %v1704 = vpop.f32.mrb[0].mxu0
      %v1705 = vadd.f32 0.0, %v1704
      %v1706 = vpop.f32.mrb[0].mxu0
      %1707 = vmatprep.mubr.f32.mxu0 %v1296
      %1708 = vmatmul.mubr.f32.gmra.mrb[0].mxu0 %v1295
      %v1709 = vpop.f32.mrb[0].mxu0
      %v1710 = vadd.f32 0.0, %v1709
      %v1711 = vpop.f32.mrb[0].mxu0
      %1712 = vmatprep.mubr.f32.mxu0 %v1305
      %1713 = vmatmul.mubr.f32.gmra.mrb[0].mxu0 %v1304
      %v1714 = vpop.f32.mrb[0].mxu0
      %v1715 = vadd.f32 0.0, %v1714
      %v1716 = vpop.f32.mrb[0].mxu0
      %1717 = vmatprep.mubr.f32.mxu0 %v1314
      %1718 = vmatmul.mubr.f32.gmra.mrb[0].mxu0 %v1313
      %v1719 = vpop.f32.mrb[0].mxu0
      %v1720 = vadd.f32 0.0, %v1719
      %v1721 = vpop.f32.mrb[0].mxu0
      %1722 = vmatprep.mubr.f32.mxu0 %v1323
      %1723 = vmatmul.mubr.f32.gmra.mrb[0].mxu0 %v1322
      %v1724 = vpop.f32.mrb[0].mxu0
      %v1725 = vadd.f32 0.0, %v1724
      %v1726 = vpop.f32.mrb[0].mxu0
      %1727 = vmatprep.mubr.f32.mxu0 %v1332
      %1728 = vmatmul.mubr.f32.gmra.mrb[0].mxu0 %v1331
      %v1729 = vpop.f32.mrb[0].mxu0
      %v1730 = vadd.f32 0.0, %v1729
      %v1731 = vpop.f32.mrb[0].mxu0
      %1732 = vmatprep.mubr.f32.mxu0 %v1341
      %1733 = vmatmul.mubr.f32.gmra.mrb[0].mxu0 %v1340
      %v1734 = vpop.f32.mrb[0].mxu0
      %v1735 = vadd.f32 0.0, %v1734
      %v1736 = vpop.f32.mrb[0].mxu0
      %1737 = vmatprep.mubr.f32.mxu0 %v1350
      %1738 = vmatmul.mubr.f32.gmra.mrb[0].mxu0 %v1349
      %v1739 = vpop.f32.mrb[0].mxu0
      %v1740 = vadd.f32 0.0, %v1739
      %v1741 = vpop.f32.mrb[0].mxu0
      %1742 = vmatprep.mubr.f32.mxu0 %v1359
      %1743 = vmatmul.mubr.f32.gmra.mrb[0].mxu0 %v1358
      %v1744 = vpop.f32.mrb[0].mxu0
      %v1745 = vadd.f32 0.0, %v1744
      %v1746 = vpop.f32.mrb[0].mxu0
      %1747 = vmatprep.mubr.f32.mxu0 %v1368
      %1748 = vmatmul.mubr.f32.gmra.mrb[0].mxu0 %v1367
      %v1749 = vpop.f32.mrb[0].mxu0
      %v1750 = vadd.f32 0.0, %v1749
      %v1751 = vpop.f32.mrb[0].mxu0
      %1752 = vmatprep.mubr.f32.mxu0 %v1377
      %1753 = vmatmul.mubr.f32.gmra.mrb[0].mxu0 %v1376
      %v1754 = vpop.f32.mrb[0].mxu0
      %v1755 = vadd.f32 0.0, %v1754
      %v1756 = vpop.f32.mrb[0].mxu0
      %1757 = vmatprep.mubr.f32.mxu0 %v1386
      %1758 = vmatmul.mubr.f32.gmra.mrb[0].mxu0 %v1385
      %v1759 = vpop.f32.mrb[0].mxu0
      %v1760 = vadd.f32 0.0, %v1759
      %v1761 = vpop.f32.mrb[0].mxu0
      %1762 = vdwg.mxu0
      %1763 = vmatprep.subr.mxu0 0.0
      %1764 = vmatpush1.msra.mxu0 %v1426
      %1765 = vmatprep.subr.mxu0 0.0
      %1766 = vmatpush1.msra.mxu0 %v1427
      %1767 = vmatprep.subr.mxu0 0.0
      %1768 = vmatpush1.msra.mxu0 %v1428
      %1769 = vmatprep.subr.mxu0 0.0
      %1770 = vmatpush1.msra.mxu0 %v1429
      %1771 = vmatprep.subr.mxu0 0.0
      %1772 = vmatpush1.msra.mxu0 %v1430
      %1773 = vmatprep.subr.mxu0 0.0
      %1774 = vmatpush1.msra.mxu0 %v1431
      %1775 = vmatprep.subr.mxu0 0.0
      %1776 = vmatpush1.msra.mxu0 %v1432
      %1777 = vmatprep.subr.mxu0 0.0
      %1778 = vmatpush1.msra.mxu0 %v1433
      %1779 = vmatprep.subr.mxu0 0.0
      %1780 = vmatpush1.msra.mxu0 %v1434
      %1781 = vmatprep.subr.mxu0 0.0
      %1782 = vmatpush1.msra.mxu0 %v1435
      %1783 = vmatprep.subr.mxu0 0.0
      %1784 = vmatpush1.msra.mxu0 %v1436
      %1785 = vmatprep.subr.mxu0 0.0
      %1786 = vmatpush1.msra.mxu0 %v1437
      %1787 = vmatprep.subr.mxu0 0.0
      %1788 = vmatpush1.msra.mxu0 %v1438
      %1789 = vmatprep.subr.mxu0 0.0
      %1790 = vmatpush1.msra.mxu0 %v1439
      %1791 = vmatprep.subr.mxu0 0.0
      %1792 = vmatpush1.msra.mxu0 %v1440
      %1793 = vmatprep.subr.mxu0 0.0
      %1794 = vmatpush1.msra.mxu0 %v1441
      %1795 = vmatprep.subr.mxu0 0.0
      %1796 = vmatpush1.msra.mxu0 %v1442
      %1797 = vmatprep.subr.mxu0 0.0
      %1798 = vmatpush1.msra.mxu0 %v1443
      %1799 = vmatprep.subr.mxu0 0.0
      %1800 = vmatpush1.msra.mxu0 %v1444
      %1801 = vmatprep.subr.mxu0 0.0
      %1802 = vmatpush1.msra.mxu0 %v1445
      %1803 = vmatprep.subr.mxu0 0.0
      %1804 = vmatpush1.msra.mxu0 %v1446
      %1805 = vmatprep.subr.mxu0 0.0
      %1806 = vmatpush1.msra.mxu0 %v1447
      %1807 = vmatprep.subr.mxu0 0.0
      %1808 = vmatpush1.msra.mxu0 %v1448
      %1809 = vmatprep.subr.mxu0 0.0
      %1810 = vmatpush1.msra.mxu0 %v1449
      %1811 = vmatprep.subr.mxu0 0.0
      %1812 = vmatpush1.msra.mxu0 %v1450
      %1813 = vmatprep.subr.mxu0 0.0
      %1814 = vmatpush1.msra.mxu0 %v1451
      %1815 = vmatprep.subr.mxu0 0.0
      %1816 = vmatpush1.msra.mxu0 %v1452
      %1817 = vmatprep.subr.mxu0 0.0
      %1818 = vmatpush1.msra.mxu0 %v1453
      %1819 = vmatprep.subr.mxu0 0.0
      %1820 = vmatpush1.msra.mxu0 %v1454
      %1821 = vmatprep.subr.mxu0 0.0
      %1822 = vmatpush1.msra.mxu0 %v1455
      %1823 = vmatprep.subr.mxu0 0.0
      %1824 = vmatpush1.msra.mxu0 %v1456
      %1825 = vmatprep.subr.mxu0 0.0
      %1826 = vmatpush1.msra.mxu0 %v1457
      %1827 = vmatprep.mubr.f32.mxu0 %v1109
      %1828 = vmatmul.mubr.f32.gmra.mrb[0].mxu0 %v1108
      %v1829 = vpop.f32.mrb[0].mxu0
      %v1830 = vadd.f32 %v1605, %v1829
      %v1831 = vpop.f32.mrb[0].mxu0
      %1832 = vmatprep.mubr.f32.mxu0 %v1118
      %1833 = vmatmul.mubr.f32.gmra.mrb[0].mxu0 %v1117
      %v1834 = vpop.f32.mrb[0].mxu0
      %v1835 = vadd.f32 %v1610, %v1834
      %v1836 = vpop.f32.mrb[0].mxu0
      %1837 = vmatprep.mubr.f32.mxu0 %v1127
      %1838 = vmatmul.mubr.f32.gmra.mrb[0].mxu0 %v1126
      %v1839 = vpop.f32.mrb[0].mxu0
      %v1840 = vadd.f32 %v1615, %v1839
      %v1841 = vpop.f32.mrb[0].mxu0
      %1842 = vmatprep.mubr.f32.mxu0 %v1136
      %1843 = vmatmul.mubr.f32.gmra.mrb[0].mxu0 %v1135
      %v1844 = vpop.f32.mrb[0].mxu0
      %v1845 = vadd.f32 %v1620, %v1844
      %v1846 = vpop.f32.mrb[0].mxu0
      %1847 = vmatprep.mubr.f32.mxu0 %v1145
      %1848 = vmatmul.mubr.f32.gmra.mrb[0].mxu0 %v1144
      %v1849 = vpop.f32.mrb[0].mxu0
      %v1850 = vadd.f32 %v1625, %v1849
      %v1851 = vpop.f32.mrb[0].mxu0
      %1852 = vmatprep.mubr.f32.mxu0 %v1154
      %1853 = vmatmul.mubr.f32.gmra.mrb[0].mxu0 %v1153
      %v1854 = vpop.f32.mrb[0].mxu0
      %v1855 = vadd.f32 %v1630, %v1854
      %v1856 = vpop.f32.mrb[0].mxu0
      %1857 = vmatprep.mubr.f32.mxu0 %v1163
      %1858 = vmatmul.mubr.f32.gmra.mrb[0].mxu0 %v1162
      %v1859 = vpop.f32.mrb[0].mxu0
      %v1860 = vadd.f32 %v1635, %v1859
      %v1861 = vpop.f32.mrb[0].mxu0
      %1862 = vmatprep.mubr.f32.mxu0 %v1172
      %1863 = vmatmul.mubr.f32.gmra.mrb[0].mxu0 %v1171
      %v1864 = vpop.f32.mrb[0].mxu0
      %v1865 = vadd.f32 %v1640, %v1864
      %v1866 = vpop.f32.mrb[0].mxu0
      %1867 = vmatprep.mubr.f32.mxu0 %v1181
      %1868 = vmatmul.mubr.f32.gmra.mrb[0].mxu0 %v1180
      %v1869 = vpop.f32.mrb[0].mxu0
      %v1870 = vadd.f32 %v1645, %v1869
      %v1871 = vpop.f32.mrb[0].mxu0
      %1872 = vmatprep.mubr.f32.mxu0 %v1190
      %1873 = vmatmul.mubr.f32.gmra.mrb[0].mxu0 %v1189
      %v1874 = vpop.f32.mrb[0].mxu0
      %v1875 = vadd.f32 %v1650, %v1874
      %v1876 = vpop.f32.mrb[0].mxu0
      %1877 = vmatprep.mubr.f32.mxu0 %v1199
      %1878 = vmatmul.mubr.f32.gmra.mrb[0].mxu0 %v1198
      %v1879 = vpop.f32.mrb[0].mxu0
      %v1880 = vadd.f32 %v1655, %v1879
      %v1881 = vpop.f32.mrb[0].mxu0
      %1882 = vmatprep.mubr.f32.mxu0 %v1208
      %1883 = vmatmul.mubr.f32.gmra.mrb[0].mxu0 %v1207
      %v1884 = vpop.f32.mrb[0].mxu0
      %v1885 = vadd.f32 %v1660, %v1884
      %v1886 = vpop.f32.mrb[0].mxu0
      %1887 = vmatprep.mubr.f32.mxu0 %v1217
      %1888 = vmatmul.mubr.f32.gmra.mrb[0].mxu0 %v1216
      %v1889 = vpop.f32.mrb[0].mxu0
      %v1890 = vadd.f32 %v1665, %v1889
      %v1891 = vpop.f32.mrb[0].mxu0
      %1892 = vmatprep.mubr.f32.mxu0 %v1226
      %1893 = vmatmul.mubr.f32.gmra.mrb[0].mxu0 %v1225
      %v1894 = vpop.f32.mrb[0].mxu0
      %v1895 = vadd.f32 %v1670, %v1894
      %v1896 = vpop.f32.mrb[0].mxu0
      %1897 = vmatprep.mubr.f32.mxu0 %v1235
      %1898 = vmatmul.mubr.f32.gmra.mrb[0].mxu0 %v1234
      %v1899 = vpop.f32.mrb[0].mxu0
      %v1900 = vadd.f32 %v1675, %v1899
      %v1901 = vpop.f32.mrb[0].mxu0
      %1902 = vmatprep.mubr.f32.mxu0 %v1244
      %1903 = vmatmul.mubr.f32.gmra.mrb[0].mxu0 %v1243
      %v1904 = vpop.f32.mrb[0].mxu0
      %v1905 = vadd.f32 %v1680, %v1904
      %v1906 = vpop.f32.mrb[0].mxu0
      %1907 = vmatprep.mubr.f32.mxu0 %v1253
      %1908 = vmatmul.mubr.f32.gmra.mrb[0].mxu0 %v1252
      %v1909 = vpop.f32.mrb[0].mxu0
      %v1910 = vadd.f32 %v1685, %v1909
      %v1911 = vpop.f32.mrb[0].mxu0
      %1912 = vmatprep.mubr.f32.mxu0 %v1262
      %1913 = vmatmul.mubr.f32.gmra.mrb[0].mxu0 %v1261
      %v1914 = vpop.f32.mrb[0].mxu0
      %v1915 = vadd.f32 %v1690, %v1914
      %v1916 = vpop.f32.mrb[0].mxu0
      %1917 = vmatprep.mubr.f32.mxu0 %v1271
      %1918 = vmatmul.mubr.f32.gmra.mrb[0].mxu0 %v1270
      %v1919 = vpop.f32.mrb[0].mxu0
      %v1920 = vadd.f32 %v1695, %v1919
      %v1921 = vpop.f32.mrb[0].mxu0
      %1922 = vmatprep.mubr.f32.mxu0 %v1280
      %1923 = vmatmul.mubr.f32.gmra.mrb[0].mxu0 %v1279
      %v1924 = vpop.f32.mrb[0].mxu0
      %v1925 = vadd.f32 %v1700, %v1924
      %v1926 = vpop.f32.mrb[0].mxu0
      %1927 = vmatprep.mubr.f32.mxu0 %v1289
      %1928 = vmatmul.mubr.f32.gmra.mrb[0].mxu0 %v1288
      %v1929 = vpop.f32.mrb[0].mxu0
      %v1930 = vadd.f32 %v1705, %v1929
      %v1931 = vpop.f32.mrb[0].mxu0
      %1932 = vmatprep.mubr.f32.mxu0 %v1298
      %1933 = vmatmul.mubr.f32.gmra.mrb[0].mxu0 %v1297
      %v1934 = vpop.f32.mrb[0].mxu0
      %v1935 = vadd.f32 %v1710, %v1934
      %v1936 = vpop.f32.mrb[0].mxu0
      %1937 = vmatprep.mubr.f32.mxu0 %v1307
      %1938 = vmatmul.mubr.f32.gmra.mrb[0].mxu0 %v1306
      %v1939 = vpop.f32.mrb[0].mxu0
      %v1940 = vadd.f32 %v1715, %v1939
      %v1941 = vpop.f32.mrb[0].mxu0
      %1942 = vmatprep.mubr.f32.mxu0 %v1316
      %1943 = vmatmul.mubr.f32.gmra.mrb[0].mxu0 %v1315
      %v1944 = vpop.f32.mrb[0].mxu0
      %v1945 = vadd.f32 %v1720, %v1944
      %v1946 = vpop.f32.mrb[0].mxu0
      %1947 = vmatprep.mubr.f32.mxu0 %v1325
      %1948 = vmatmul.mubr.f32.gmra.mrb[0].mxu0 %v1324
      %v1949 = vpop.f32.mrb[0].mxu0
      %v1950 = vadd.f32 %v1725, %v1949
      %v1951 = vpop.f32.mrb[0].mxu0
      %1952 = vmatprep.mubr.f32.mxu0 %v1334
      %1953 = vmatmul.mubr.f32.gmra.mrb[0].mxu0 %v1333
      %v1954 = vpop.f32.mrb[0].mxu0
      %v1955 = vadd.f32 %v1730, %v1954
      %v1956 = vpop.f32.mrb[0].mxu0
      %1957 = vmatprep.mubr.f32.mxu0 %v1343
      %1958 = vmatmul.mubr.f32.gmra.mrb[0].mxu0 %v1342
      %v1959 = vpop.f32.mrb[0].mxu0
      %v1960 = vadd.f32 %v1735, %v1959
      %v1961 = vpop.f32.mrb[0].mxu0
      %1962 = vmatprep.mubr.f32.mxu0 %v1352
      %1963 = vmatmul.mubr.f32.gmra.mrb[0].mxu0 %v1351
      %v1964 = vpop.f32.mrb[0].mxu0
      %v1965 = vadd.f32 %v1740, %v1964
      %v1966 = vpop.f32.mrb[0].mxu0
      %1967 = vmatprep.mubr.f32.mxu0 %v1361
      %1968 = vmatmul.mubr.f32.gmra.mrb[0].mxu0 %v1360
      %v1969 = vpop.f32.mrb[0].mxu0
      %v1970 = vadd.f32 %v1745, %v1969
      %v1971 = vpop.f32.mrb[0].mxu0
      %1972 = vmatprep.mubr.f32.mxu0 %v1370
      %1973 = vmatmul.mubr.f32.gmra.mrb[0].mxu0 %v1369
      %v1974 = vpop.f32.mrb[0].mxu0
      %v1975 = vadd.f32 %v1750, %v1974
      %v1976 = vpop.f32.mrb[0].mxu0
      %1977 = vmatprep.mubr.f32.mxu0 %v1379
      %1978 = vmatmul.mubr.f32.gmra.mrb[0].mxu0 %v1378
      %v1979 = vpop.f32.mrb[0].mxu0
      %v1980 = vadd.f32 %v1755, %v1979
      %v1981 = vpop.f32.mrb[0].mxu0
      %1982 = vmatprep.mubr.f32.mxu0 %v1388
      %1983 = vmatmul.mubr.f32.gmra.mrb[0].mxu0 %v1387
      %v1984 = vpop.f32.mrb[0].mxu0
      %v1985 = vadd.f32 %v1760, %v1984
      %v1986 = vpop.f32.mrb[0].mxu0
      %1987 = vdwg.mxu0
      %1988 = vmatprep.subr.mxu0 0.0
      %1989 = vmatpush1.msra.mxu0 %v1458
      %1990 = vmatprep.subr.mxu0 0.0
      %1991 = vmatpush1.msra.mxu0 %v1459
      %1992 = vmatprep.subr.mxu0 0.0
      %1993 = vmatpush1.msra.mxu0 %v1460
      %1994 = vmatprep.subr.mxu0 0.0
      %1995 = vmatpush1.msra.mxu0 %v1461
      %1996 = vmatprep.subr.mxu0 0.0
      %1997 = vmatpush1.msra.mxu0 %v1462
      %1998 = vmatprep.subr.mxu0 0.0
      %1999 = vmatpush1.msra.mxu0 %v1463
      %2000 = vmatprep.subr.mxu0 0.0
      %2001 = vmatpush1.msra.mxu0 %v1464
      %2002 = vmatprep.subr.mxu0 0.0
      %2003 = vmatpush1.msra.mxu0 %v1465
      %2004 = vmatprep.subr.mxu0 0.0
      %2005 = vmatpush1.msra.mxu0 %v1466
      %2006 = vmatprep.subr.mxu0 0.0
      %2007 = vmatpush1.msra.mxu0 %v1467
      %2008 = vmatprep.subr.mxu0 0.0
      %2009 = vmatpush1.msra.mxu0 %v1468
      %2010 = vmatprep.subr.mxu0 0.0
      %2011 = vmatpush1.msra.mxu0 %v1469
      %2012 = vmatprep.subr.mxu0 0.0
      %2013 = vmatpush1.msra.mxu0 %v1470
      %2014 = vmatprep.subr.mxu0 0.0
      %2015 = vmatpush1.msra.mxu0 %v1471
      %2016 = vmatprep.subr.mxu0 0.0
      %2017 = vmatpush1.msra.mxu0 %v1472
      %2018 = vmatprep.subr.mxu0 0.0
      %2019 = vmatpush1.msra.mxu0 %v1473
      %2020 = vmatprep.subr.mxu0 0.0
      %2021 = vmatpush1.msra.mxu0 %v1474
      %2022 = vmatprep.subr.mxu0 0.0
      %2023 = vmatpush1.msra.mxu0 %v1475
      %2024 = vmatprep.subr.mxu0 0.0
      %2025 = vmatpush1.msra.mxu0 %v1476
      %2026 = vmatprep.subr.mxu0 0.0
      %2027 = vmatpush1.msra.mxu0 %v1477
      %2028 = vmatprep.subr.mxu0 0.0
      %2029 = vmatpush1.msra.mxu0 %v1478
      %2030 = vmatprep.subr.mxu0 0.0
      %2031 = vmatpush1.msra.mxu0 %v1479
      %2032 = vmatprep.subr.mxu0 0.0
      %2033 = vmatpush1.msra.mxu0 %v1480
      %2034 = vmatprep.subr.mxu0 0.0
      %2035 = vmatpush1.msra.mxu0 %v1481
      %2036 = vmatprep.subr.mxu0 0.0
      %2037 = vmatpush1.msra.mxu0 %v1482
      %2038 = vmatprep.subr.mxu0 0.0
      %2039 = vmatpush1.msra.mxu0 %v1483
      %2040 = vmatprep.subr.mxu0 0.0
      %2041 = vmatpush1.msra.mxu0 %v1484
      %2042 = vmatprep.subr.mxu0 0.0
      %2043 = vmatpush1.msra.mxu0 %v1485
      %2044 = vmatprep.subr.mxu0 0.0
      %2045 = vmatpush1.msra.mxu0 %v1486
      %2046 = vmatprep.subr.mxu0 0.0
      %2047 = vmatpush1.msra.mxu0 %v1487
      %2048 = vmatprep.subr.mxu0 0.0
      %2049 = vmatpush1.msra.mxu0 %v1488
      %2050 = vmatprep.subr.mxu0 0.0
      %2051 = vmatpush1.msra.mxu0 %v1489
      %2052 = vmatprep.mubr.f32.mxu0 %v1111
      %2053 = vmatmul.mubr.f32.gmra.mrb[0].mxu0 %v1110
      %v2054 = vpop.f32.mrb[0].mxu0
      %v2055 = vadd.f32 %v1830, %v2054
      %v2056 = vpop.f32.mrb[0].mxu0
      %2057 = vmatprep.mubr.f32.mxu0 %v1120
      %2058 = vmatmul.mubr.f32.gmra.mrb[0].mxu0 %v1119
      %v2059 = vpop.f32.mrb[0].mxu0
      %v2060 = vadd.f32 %v1835, %v2059
      %v2061 = vpop.f32.mrb[0].mxu0
      %2062 = vmatprep.mubr.f32.mxu0 %v1129
      %2063 = vmatmul.mubr.f32.gmra.mrb[0].mxu0 %v1128
      %v2064 = vpop.f32.mrb[0].mxu0
      %v2065 = vadd.f32 %v1840, %v2064
      %v2066 = vpop.f32.mrb[0].mxu0
      %2067 = vmatprep.mubr.f32.mxu0 %v1138
      %2068 = vmatmul.mubr.f32.gmra.mrb[0].mxu0 %v1137
      %v2069 = vpop.f32.mrb[0].mxu0
      %v2070 = vadd.f32 %v1845, %v2069
      %v2071 = vpop.f32.mrb[0].mxu0
      %2072 = vmatprep.mubr.f32.mxu0 %v1147
      %2073 = vmatmul.mubr.f32.gmra.mrb[0].mxu0 %v1146
      %v2074 = vpop.f32.mrb[0].mxu0
      %v2075 = vadd.f32 %v1850, %v2074
      %v2076 = vpop.f32.mrb[0].mxu0
      %2077 = vmatprep.mubr.f32.mxu0 %v1156
      %2078 = vmatmul.mubr.f32.gmra.mrb[0].mxu0 %v1155
      %v2079 = vpop.f32.mrb[0].mxu0
      %v2080 = vadd.f32 %v1855, %v2079
      %v2081 = vpop.f32.mrb[0].mxu0
      %2082 = vmatprep.mubr.f32.mxu0 %v1165
      %2083 = vmatmul.mubr.f32.gmra.mrb[0].mxu0 %v1164
      %v2084 = vpop.f32.mrb[0].mxu0
      %v2085 = vadd.f32 %v1860, %v2084
      %v2086 = vpop.f32.mrb[0].mxu0
      %2087 = vmatprep.mubr.f32.mxu0 %v1174
      %2088 = vmatmul.mubr.f32.gmra.mrb[0].mxu0 %v1173
      %v2089 = vpop.f32.mrb[0].mxu0
      %v2090 = vadd.f32 %v1865, %v2089
      %v2091 = vpop.f32.mrb[0].mxu0
      %2092 = vmatprep.mubr.f32.mxu0 %v1183
      %2093 = vmatmul.mubr.f32.gmra.mrb[0].mxu0 %v1182
      %v2094 = vpop.f32.mrb[0].mxu0
      %v2095 = vadd.f32 %v1870, %v2094
      %v2096 = vpop.f32.mrb[0].mxu0
      %2097 = vmatprep.mubr.f32.mxu0 %v1192
      %2098 = vmatmul.mubr.f32.gmra.mrb[0].mxu0 %v1191
      %v2099 = vpop.f32.mrb[0].mxu0
      %v2100 = vadd.f32 %v1875, %v2099
      %v2101 = vpop.f32.mrb[0].mxu0
      %2102 = vmatprep.mubr.f32.mxu0 %v1201
      %2103 = vmatmul.mubr.f32.gmra.mrb[0].mxu0 %v1200
      %v2104 = vpop.f32.mrb[0].mxu0
      %v2105 = vadd.f32 %v1880, %v2104
      %v2106 = vpop.f32.mrb[0].mxu0
      %2107 = vmatprep.mubr.f32.mxu0 %v1210
      %2108 = vmatmul.mubr.f32.gmra.mrb[0].mxu0 %v1209
      %v2109 = vpop.f32.mrb[0].mxu0
      %v2110 = vadd.f32 %v1885, %v2109
      %v2111 = vpop.f32.mrb[0].mxu0
      %2112 = vmatprep.mubr.f32.mxu0 %v1219
      %2113 = vmatmul.mubr.f32.gmra.mrb[0].mxu0 %v1218
      %v2114 = vpop.f32.mrb[0].mxu0
      %v2115 = vadd.f32 %v1890, %v2114
      %v2116 = vpop.f32.mrb[0].mxu0
      %2117 = vmatprep.mubr.f32.mxu0 %v1228
      %2118 = vmatmul.mubr.f32.gmra.mrb[0].mxu0 %v1227
      %v2119 = vpop.f32.mrb[0].mxu0
      %v2120 = vadd.f32 %v1895, %v2119
      %v2121 = vpop.f32.mrb[0].mxu0
      %2122 = vmatprep.mubr.f32.mxu0 %v1237
      %2123 = vmatmul.mubr.f32.gmra.mrb[0].mxu0 %v1236
      %v2124 = vpop.f32.mrb[0].mxu0
      %v2125 = vadd.f32 %v1900, %v2124
      %v2126 = vpop.f32.mrb[0].mxu0
      %2127 = vmatprep.mubr.f32.mxu0 %v1246
      %2128 = vmatmul.mubr.f32.gmra.mrb[0].mxu0 %v1245
      %v2129 = vpop.f32.mrb[0].mxu0
      %v2130 = vadd.f32 %v1905, %v2129
      %v2131 = vpop.f32.mrb[0].mxu0
      %2132 = vmatprep.mubr.f32.mxu0 %v1255
      %2133 = vmatmul.mubr.f32.gmra.mrb[0].mxu0 %v1254
      %v2134 = vpop.f32.mrb[0].mxu0
      %v2135 = vadd.f32 %v1910, %v2134
      %v2136 = vpop.f32.mrb[0].mxu0
      %2137 = vmatprep.mubr.f32.mxu0 %v1264
      %2138 = vmatmul.mubr.f32.gmra.mrb[0].mxu0 %v1263
      %v2139 = vpop.f32.mrb[0].mxu0
      %v2140 = vadd.f32 %v1915, %v2139
      %v2141 = vpop.f32.mrb[0].mxu0
      %2142 = vmatprep.mubr.f32.mxu0 %v1273
      %2143 = vmatmul.mubr.f32.gmra.mrb[0].mxu0 %v1272
      %v2144 = vpop.f32.mrb[0].mxu0
      %v2145 = vadd.f32 %v1920, %v2144
      %v2146 = vpop.f32.mrb[0].mxu0
      %2147 = vmatprep.mubr.f32.mxu0 %v1282
      %2148 = vmatmul.mubr.f32.gmra.mrb[0].mxu0 %v1281
      %v2149 = vpop.f32.mrb[0].mxu0
      %v2150 = vadd.f32 %v1925, %v2149
      %v2151 = vpop.f32.mrb[0].mxu0
      %2152 = vmatprep.mubr.f32.mxu0 %v1291
      %2153 = vmatmul.mubr.f32.gmra.mrb[0].mxu0 %v1290
      %v2154 = vpop.f32.mrb[0].mxu0
      %v2155 = vadd.f32 %v1930, %v2154
      %v2156 = vpop.f32.mrb[0].mxu0
      %2157 = vmatprep.mubr.f32.mxu0 %v1300
      %2158 = vmatmul.mubr.f32.gmra.mrb[0].mxu0 %v1299
      %v2159 = vpop.f32.mrb[0].mxu0
      %v2160 = vadd.f32 %v1935, %v2159
      %v2161 = vpop.f32.mrb[0].mxu0
      %2162 = vmatprep.mubr.f32.mxu0 %v1309
      %2163 = vmatmul.mubr.f32.gmra.mrb[0].mxu0 %v1308
      %v2164 = vpop.f32.mrb[0].mxu0
      %v2165 = vadd.f32 %v1940, %v2164
      %v2166 = vpop.f32.mrb[0].mxu0
      %2167 = vmatprep.mubr.f32.mxu0 %v1318
      %2168 = vmatmul.mubr.f32.gmra.mrb[0].mxu0 %v1317
      %v2169 = vpop.f32.mrb[0].mxu0
      %v2170 = vadd.f32 %v1945, %v2169
      %v2171 = vpop.f32.mrb[0].mxu0
      %2172 = vmatprep.mubr.f32.mxu0 %v1327
      %2173 = vmatmul.mubr.f32.gmra.mrb[0].mxu0 %v1326
      %v2174 = vpop.f32.mrb[0].mxu0
      %v2175 = vadd.f32 %v1950, %v2174
      %v2176 = vpop.f32.mrb[0].mxu0
      %2177 = vmatprep.mubr.f32.mxu0 %v1336
      %2178 = vmatmul.mubr.f32.gmra.mrb[0].mxu0 %v1335
      %v2179 = vpop.f32.mrb[0].mxu0
      %v2180 = vadd.f32 %v1955, %v2179
      %v2181 = vpop.f32.mrb[0].mxu0
      %2182 = vmatprep.mubr.f32.mxu0 %v1345
      %2183 = vmatmul.mubr.f32.gmra.mrb[0].mxu0 %v1344
      %v2184 = vpop.f32.mrb[0].mxu0
      %v2185 = vadd.f32 %v1960, %v2184
      %v2186 = vpop.f32.mrb[0].mxu0
      %2187 = vmatprep.mubr.f32.mxu0 %v1354
      %2188 = vmatmul.mubr.f32.gmra.mrb[0].mxu0 %v1353
      %v2189 = vpop.f32.mrb[0].mxu0
      %v2190 = vadd.f32 %v1965, %v2189
      %v2191 = vpop.f32.mrb[0].mxu0
      %2192 = vmatprep.mubr.f32.mxu0 %v1363
      %2193 = vmatmul.mubr.f32.gmra.mrb[0].mxu0 %v1362
      %v2194 = vpop.f32.mrb[0].mxu0
      %v2195 = vadd.f32 %v1970, %v2194
      %v2196 = vpop.f32.mrb[0].mxu0
      %2197 = vmatprep.mubr.f32.mxu0 %v1372
      %2198 = vmatmul.mubr.f32.gmra.mrb[0].mxu0 %v1371
      %v2199 = vpop.f32.mrb[0].mxu0
      %v2200 = vadd.f32 %v1975, %v2199
      %v2201 = vpop.f32.mrb[0].mxu0
      %2202 = vmatprep.mubr.f32.mxu0 %v1381
      %2203 = vmatmul.mubr.f32.gmra.mrb[0].mxu0 %v1380
      %v2204 = vpop.f32.mrb[0].mxu0
      %v2205 = vadd.f32 %v1980, %v2204
      %v2206 = vpop.f32.mrb[0].mxu0
      %2207 = vmatprep.mubr.f32.mxu0 %v1390
      %2208 = vmatmul.mubr.f32.gmra.mrb[0].mxu0 %v1389
      %v2209 = vpop.f32.mrb[0].mxu0
      %v2210 = vadd.f32 %v1985, %v2209
      %v2211 = vpop.f32.mrb[0].mxu0
      %2212 = vdwg.mxu0
      %2213 = vmatprep.subr.mxu0 0.0
      %2214 = vmatpush1.msra.mxu0 %v1490
      %2215 = vmatprep.subr.mxu0 0.0
      %2216 = vmatpush1.msra.mxu0 %v1491
      %2217 = vmatprep.subr.mxu0 0.0
      %2218 = vmatpush1.msra.mxu0 %v1492
      %2219 = vmatprep.subr.mxu0 0.0
      %2220 = vmatpush1.msra.mxu0 %v1493
      %2221 = vmatprep.subr.mxu0 0.0
      %2222 = vmatpush1.msra.mxu0 %v1494
      %2223 = vmatprep.subr.mxu0 0.0
      %2224 = vmatpush1.msra.mxu0 %v1495
      %2225 = vmatprep.subr.mxu0 0.0
      %2226 = vmatpush1.msra.mxu0 %v1496
      %2227 = vmatprep.subr.mxu0 0.0
      %2228 = vmatpush1.msra.mxu0 %v1497
      %2229 = vmatprep.subr.mxu0 0.0
      %2230 = vmatpush1.msra.mxu0 %v1498
      %2231 = vmatprep.subr.mxu0 0.0
      %2232 = vmatpush1.msra.mxu0 %v1499
      %2233 = vmatprep.subr.mxu0 0.0
      %2234 = vmatpush1.msra.mxu0 %v1500
      %2235 = vmatprep.subr.mxu0 0.0
      %2236 = vmatpush1.msra.mxu0 %v1501
      %2237 = vmatprep.subr.mxu0 0.0
      %2238 = vmatpush1.msra.mxu0 %v1502
      %2239 = vmatprep.subr.mxu0 0.0
      %2240 = vmatpush1.msra.mxu0 %v1503
      %2241 = vmatprep.subr.mxu0 0.0
      %2242 = vmatpush1.msra.mxu0 %v1504
      %2243 = vmatprep.subr.mxu0 0.0
      %2244 = vmatpush1.msra.mxu0 %v1505
      %2245 = vmatprep.subr.mxu0 0.0
      %2246 = vmatpush1.msra.mxu0 %v1506
      %2247 = vmatprep.subr.mxu0 0.0
      %2248 = vmatpush1.msra.mxu0 %v1507
      %2249 = vmatprep.subr.mxu0 0.0
      %2250 = vmatpush1.msra.mxu0 %v1508
      %2251 = vmatprep.subr.mxu0 0.0
      %2252 = vmatpush1.msra.mxu0 %v1509
      %2253 = vmatprep.subr.mxu0 0.0
      %2254 = vmatpush1.msra.mxu0 %v1510
      %2255 = vmatprep.subr.mxu0 0.0
      %2256 = vmatpush1.msra.mxu0 %v1511
      %2257 = vmatprep.subr.mxu0 0.0
      %2258 = vmatpush1.msra.mxu0 %v1512
      %2259 = vmatprep.subr.mxu0 0.0
      %2260 = vmatpush1.msra.mxu0 %v1513
      %2261 = vmatprep.subr.mxu0 0.0
      %2262 = vmatpush1.msra.mxu0 %v1514
      %2263 = vmatprep.subr.mxu0 0.0
      %2264 = vmatpush1.msra.mxu0 %v1515
      %2265 = vmatprep.subr.mxu0 0.0
      %2266 = vmatpush1.msra.mxu0 %v1516
      %2267 = vmatprep.subr.mxu0 0.0
      %2268 = vmatpush1.msra.mxu0 %v1517
      %2269 = vmatprep.subr.mxu0 0.0
      %2270 = vmatpush1.msra.mxu0 %v1518
      %2271 = vmatprep.subr.mxu0 0.0
      %2272 = vmatpush1.msra.mxu0 %v1519
      %2273 = vmatprep.subr.mxu0 0.0
      %2274 = vmatpush1.msra.mxu0 %v1520
      %2275 = vmatprep.subr.mxu0 0.0
      %2276 = vmatpush1.msra.mxu0 %v1521
      %2277 = vmatprep.mubr.f32.mxu0 %v1113
      %2278 = vmatmul.mubr.f32.gmra.mrb[0].mxu0 %v1112
      %v2279 = vpop.f32.mrb[0].mxu0
      %v2280 = vadd.f32 %v2055, %v2279
      %v2281 = vpop.f32.mrb[0].mxu0
      %2282 = vmatprep.mubr.f32.mxu0 %v1122
      %2283 = vmatmul.mubr.f32.gmra.mrb[0].mxu0 %v1121
      %v2284 = vpop.f32.mrb[0].mxu0
      %v2285 = vadd.f32 %v2060, %v2284
      %v2286 = vpop.f32.mrb[0].mxu0
      %2287 = vmatprep.mubr.f32.mxu0 %v1131
      %2288 = vmatmul.mubr.f32.gmra.mrb[0].mxu0 %v1130
      %v2289 = vpop.f32.mrb[0].mxu0
      %v2290 = vadd.f32 %v2065, %v2289
      %v2291 = vpop.f32.mrb[0].mxu0
      %2292 = vmatprep.mubr.f32.mxu0 %v1140
      %2293 = vmatmul.mubr.f32.gmra.mrb[0].mxu0 %v1139
      %v2294 = vpop.f32.mrb[0].mxu0
      %v2295 = vadd.f32 %v2070, %v2294
      %v2296 = vpop.f32.mrb[0].mxu0
      %2297 = vmatprep.mubr.f32.mxu0 %v1149
      %2298 = vmatmul.mubr.f32.gmra.mrb[0].mxu0 %v1148
      %v2299 = vpop.f32.mrb[0].mxu0
      %v2300 = vadd.f32 %v2075, %v2299
      %v2301 = vpop.f32.mrb[0].mxu0
      %2302 = vmatprep.mubr.f32.mxu0 %v1158
      %2303 = vmatmul.mubr.f32.gmra.mrb[0].mxu0 %v1157
      %v2304 = vpop.f32.mrb[0].mxu0
      %v2305 = vadd.f32 %v2080, %v2304
      %v2306 = vpop.f32.mrb[0].mxu0
      %2307 = vmatprep.mubr.f32.mxu0 %v1167
      %2308 = vmatmul.mubr.f32.gmra.mrb[0].mxu0 %v1166
      %v2309 = vpop.f32.mrb[0].mxu0
      %v2310 = vadd.f32 %v2085, %v2309
      %v2311 = vpop.f32.mrb[0].mxu0
      %2312 = vmatprep.mubr.f32.mxu0 %v1176
      %2313 = vmatmul.mubr.f32.gmra.mrb[0].mxu0 %v1175
      %v2314 = vpop.f32.mrb[0].mxu0
      %v2315 = vadd.f32 %v2090, %v2314
      %v2316 = vpop.f32.mrb[0].mxu0
      %2317 = vmatprep.mubr.f32.mxu0 %v1185
      %2318 = vmatmul.mubr.f32.gmra.mrb[0].mxu0 %v1184
      %v2319 = vpop.f32.mrb[0].mxu0
      %v2320 = vadd.f32 %v2095, %v2319
      %v2321 = vpop.f32.mrb[0].mxu0
      %2322 = vmatprep.mubr.f32.mxu0 %v1194
      %2323 = vmatmul.mubr.f32.gmra.mrb[0].mxu0 %v1193
      %v2324 = vpop.f32.mrb[0].mxu0
      %v2325 = vadd.f32 %v2100, %v2324
      %v2326 = vpop.f32.mrb[0].mxu0
      %2327 = vmatprep.mubr.f32.mxu0 %v1203
      %2328 = vmatmul.mubr.f32.gmra.mrb[0].mxu0 %v1202
      %v2329 = vpop.f32.mrb[0].mxu0
      %v2330 = vadd.f32 %v2105, %v2329
      %v2331 = vpop.f32.mrb[0].mxu0
      %2332 = vmatprep.mubr.f32.mxu0 %v1212
      %2333 = vmatmul.mubr.f32.gmra.mrb[0].mxu0 %v1211
      %v2334 = vpop.f32.mrb[0].mxu0
      %v2335 = vadd.f32 %v2110, %v2334
      %v2336 = vpop.f32.mrb[0].mxu0
      %2337 = vmatprep.mubr.f32.mxu0 %v1221
      %2338 = vmatmul.mubr.f32.gmra.mrb[0].mxu0 %v1220
      %v2339 = vpop.f32.mrb[0].mxu0
      %v2340 = vadd.f32 %v2115, %v2339
      %v2341 = vpop.f32.mrb[0].mxu0
      %2342 = vmatprep.mubr.f32.mxu0 %v1230
      %2343 = vmatmul.mubr.f32.gmra.mrb[0].mxu0 %v1229
      %v2344 = vpop.f32.mrb[0].mxu0
      %v2345 = vadd.f32 %v2120, %v2344
      %v2346 = vpop.f32.mrb[0].mxu0
      %2347 = vmatprep.mubr.f32.mxu0 %v1239
      %2348 = vmatmul.mubr.f32.gmra.mrb[0].mxu0 %v1238
      %v2349 = vpop.f32.mrb[0].mxu0
      %v2350 = vadd.f32 %v2125, %v2349
      %v2351 = vpop.f32.mrb[0].mxu0
      %2352 = vmatprep.mubr.f32.mxu0 %v1248
      %2353 = vmatmul.mubr.f32.gmra.mrb[0].mxu0 %v1247
      %v2354 = vpop.f32.mrb[0].mxu0
      %v2355 = vadd.f32 %v2130, %v2354
      %v2356 = vpop.f32.mrb[0].mxu0
      %2357 = vmatprep.mubr.f32.mxu0 %v1257
      %2358 = vmatmul.mubr.f32.gmra.mrb[0].mxu0 %v1256
      %v2359 = vpop.f32.mrb[0].mxu0
      %v2360 = vadd.f32 %v2135, %v2359
      %v2361 = vpop.f32.mrb[0].mxu0
      %2362 = vmatprep.mubr.f32.mxu0 %v1266
      %2363 = vmatmul.mubr.f32.gmra.mrb[0].mxu0 %v1265
      %v2364 = vpop.f32.mrb[0].mxu0
      %v2365 = vadd.f32 %v2140, %v2364
      %v2366 = vpop.f32.mrb[0].mxu0
      %2367 = vmatprep.mubr.f32.mxu0 %v1275
      %2368 = vmatmul.mubr.f32.gmra.mrb[0].mxu0 %v1274
      %v2369 = vpop.f32.mrb[0].mxu0
      %v2370 = vadd.f32 %v2145, %v2369
      %v2371 = vpop.f32.mrb[0].mxu0
      %2372 = vmatprep.mubr.f32.mxu0 %v1284
      %2373 = vmatmul.mubr.f32.gmra.mrb[0].mxu0 %v1283
      %v2374 = vpop.f32.mrb[0].mxu0
      %v2375 = vadd.f32 %v2150, %v2374
      %v2376 = vpop.f32.mrb[0].mxu0
      %2377 = vmatprep.mubr.f32.mxu0 %v1293
      %2378 = vmatmul.mubr.f32.gmra.mrb[0].mxu0 %v1292
      %v2379 = vpop.f32.mrb[0].mxu0
      %v2380 = vadd.f32 %v2155, %v2379
      %v2381 = vpop.f32.mrb[0].mxu0
      %2382 = vmatprep.mubr.f32.mxu0 %v1302
      %2383 = vmatmul.mubr.f32.gmra.mrb[0].mxu0 %v1301
      %v2384 = vpop.f32.mrb[0].mxu0
      %v2385 = vadd.f32 %v2160, %v2384
      %v2386 = vpop.f32.mrb[0].mxu0
      %2387 = vmatprep.mubr.f32.mxu0 %v1311
      %2388 = vmatmul.mubr.f32.gmra.mrb[0].mxu0 %v1310
      %v2389 = vpop.f32.mrb[0].mxu0
      %v2390 = vadd.f32 %v2165, %v2389
      %v2391 = vpop.f32.mrb[0].mxu0
      %2392 = vmatprep.mubr.f32.mxu0 %v1320
      %2393 = vmatmul.mubr.f32.gmra.mrb[0].mxu0 %v1319
      %v2394 = vpop.f32.mrb[0].mxu0
      %v2395 = vadd.f32 %v2170, %v2394
      %v2396 = vpop.f32.mrb[0].mxu0
      %2397 = vmatprep.mubr.f32.mxu0 %v1329
      %2398 = vmatmul.mubr.f32.gmra.mrb[0].mxu0 %v1328
      %v2399 = vpop.f32.mrb[0].mxu0
      %v2400 = vadd.f32 %v2175, %v2399
      %v2401 = vpop.f32.mrb[0].mxu0
      %2402 = vmatprep.mubr.f32.mxu0 %v1338
      %2403 = vmatmul.mubr.f32.gmra.mrb[0].mxu0 %v1337
      %v2404 = vpop.f32.mrb[0].mxu0
      %v2405 = vadd.f32 %v2180, %v2404
      %v2406 = vpop.f32.mrb[0].mxu0
      %2407 = vmatprep.mubr.f32.mxu0 %v1347
      %2408 = vmatmul.mubr.f32.gmra.mrb[0].mxu0 %v1346
      %v2409 = vpop.f32.mrb[0].mxu0
      %v2410 = vadd.f32 %v2185, %v2409
      %v2411 = vpop.f32.mrb[0].mxu0
      %2412 = vmatprep.mubr.f32.mxu0 %v1356
      %2413 = vmatmul.mubr.f32.gmra.mrb[0].mxu0 %v1355
      %v2414 = vpop.f32.mrb[0].mxu0
      %v2415 = vadd.f32 %v2190, %v2414
      %v2416 = vpop.f32.mrb[0].mxu0
      %2417 = vmatprep.mubr.f32.mxu0 %v1365
      %2418 = vmatmul.mubr.f32.gmra.mrb[0].mxu0 %v1364
      %v2419 = vpop.f32.mrb[0].mxu0
      %v2420 = vadd.f32 %v2195, %v2419
      %v2421 = vpop.f32.mrb[0].mxu0
      %2422 = vmatprep.mubr.f32.mxu0 %v1374
      %2423 = vmatmul.mubr.f32.gmra.mrb[0].mxu0 %v1373
      %v2424 = vpop.f32.mrb[0].mxu0
      %v2425 = vadd.f32 %v2200, %v2424
      %v2426 = vpop.f32.mrb[0].mxu0
      %2427 = vmatprep.mubr.f32.mxu0 %v1383
      %2428 = vmatmul.mubr.f32.gmra.mrb[0].mxu0 %v1382
      %v2429 = vpop.f32.mrb[0].mxu0
      %v2430 = vadd.f32 %v2205, %v2429
      %v2431 = vpop.f32.mrb[0].mxu0
      %2432 = vmatprep.mubr.f32.mxu0 %v1392
      %2433 = vmatmul.mubr.f32.gmra.mrb[0].mxu0 %v1391
      %v2434 = vpop.f32.mrb[0].mxu0
      %v2435 = vadd.f32 %v2210, %v2434
      %v2436 = vpop.f32.mrb[0].mxu0
      %2437 = vdwg.mxu0
      %2438 = vmatprep.subr.mxu0 0.0
      %2439 = vmatpush1.msra.mxu0 %v1522
      %2440 = vmatprep.subr.mxu0 0.0
      %2441 = vmatpush1.msra.mxu0 %v1523
      %2442 = vmatprep.subr.mxu0 0.0
      %2443 = vmatpush1.msra.mxu0 %v1524
      %2444 = vmatprep.subr.mxu0 0.0
      %2445 = vmatpush1.msra.mxu0 %v1525
      %2446 = vmatprep.subr.mxu0 0.0
      %2447 = vmatpush1.msra.mxu0 %v1526
      %2448 = vmatprep.subr.mxu0 0.0
      %2449 = vmatpush1.msra.mxu0 %v1527
      %2450 = vmatprep.subr.mxu0 0.0
      %2451 = vmatpush1.msra.mxu0 %v1528
      %2452 = vmatprep.subr.mxu0 0.0
      %2453 = vmatpush1.msra.mxu0 %v1529
      %2454 = vmatprep.subr.mxu0 0.0
      %2455 = vmatpush1.msra.mxu0 %v1530
      %2456 = vmatprep.subr.mxu0 0.0
      %2457 = vmatpush1.msra.mxu0 %v1531
      %2458 = vmatprep.subr.mxu0 0.0
      %2459 = vmatpush1.msra.mxu0 %v1532
      %2460 = vmatprep.subr.mxu0 0.0
      %2461 = vmatpush1.msra.mxu0 %v1533
      %2462 = vmatprep.subr.mxu0 0.0
      %2463 = vmatpush1.msra.mxu0 %v1534
      %2464 = vmatprep.subr.mxu0 0.0
      %2465 = vmatpush1.msra.mxu0 %v1535
      %2466 = vmatprep.subr.mxu0 0.0
      %2467 = vmatpush1.msra.mxu0 %v1536
      %2468 = vmatprep.subr.mxu0 0.0
      %2469 = vmatpush1.msra.mxu0 %v1537
      %2470 = vmatprep.subr.mxu0 0.0
      %2471 = vmatpush1.msra.mxu0 0.0
      %2472 = vmatprep.subr.mxu0 0.0
      %2473 = vmatpush1.msra.mxu0 0.0
      %2474 = vmatprep.subr.mxu0 0.0
      %2475 = vmatpush1.msra.mxu0 0.0
      %2476 = vmatprep.subr.mxu0 0.0
      %2477 = vmatpush1.msra.mxu0 0.0
      %2478 = vmatprep.subr.mxu0 0.0
      %2479 = vmatpush1.msra.mxu0 0.0
      %2480 = vmatprep.subr.mxu0 0.0
      %2481 = vmatpush1.msra.mxu0 0.0
      %2482 = vmatprep.subr.mxu0 0.0
      %2483 = vmatpush1.msra.mxu0 0.0
      %2484 = vmatprep.subr.mxu0 0.0
      %2485 = vmatpush1.msra.mxu0 0.0
      %2486 = vmatprep.subr.mxu0 0.0
      %2487 = vmatpush1.msra.mxu0 0.0
      %2488 = vmatprep.subr.mxu0 0.0
      %2489 = vmatpush1.msra.mxu0 0.0
      %2490 = vmatprep.subr.mxu0 0.0
      %2491 = vmatpush1.msra.mxu0 0.0
      %2492 = vmatprep.subr.mxu0 0.0
      %2493 = vmatpush1.msra.mxu0 0.0
      %2494 = vmatprep.subr.mxu0 0.0
      %2495 = vmatpush1.msra.mxu0 0.0
      %2496 = vmatprep.subr.mxu0 0.0
      %2497 = vmatpush1.msra.mxu0 0.0
      %2498 = vmatprep.subr.mxu0 0.0
      %2499 = vmatpush1.msra.mxu0 0.0
      %2500 = vmatprep.subr.mxu0 0.0
      %2501 = vmatpush1.msra.mxu0 0.0
      %2502 = vmatprep.mubr.f32.mxu0 0.0
      %2503 = vmatmul.mubr.f32.gmra.mrb[0].mxu0 %v1114
      %v2504 = vpop.f32.mrb[0].mxu0
      %v2505 = vadd.f32 %v2280, %v2504
      %v2506 = vpop.f32.mrb[0].mxu0
      %2507 = vmatprep.mubr.f32.mxu0 0.0
      %2508 = vmatmul.mubr.f32.gmra.mrb[0].mxu0 %v1123
      %v2509 = vpop.f32.mrb[0].mxu0
      %v2510 = vadd.f32 %v2285, %v2509
      %v2511 = vpop.f32.mrb[0].mxu0
      %2512 = vmatprep.mubr.f32.mxu0 0.0
      %2513 = vmatmul.mubr.f32.gmra.mrb[0].mxu0 %v1132
      %v2514 = vpop.f32.mrb[0].mxu0
      %v2515 = vadd.f32 %v2290, %v2514
      %v2516 = vpop.f32.mrb[0].mxu0
      %2517 = vmatprep.mubr.f32.mxu0 0.0
      %2518 = vmatmul.mubr.f32.gmra.mrb[0].mxu0 %v1141
      %v2519 = vpop.f32.mrb[0].mxu0
      %v2520 = vadd.f32 %v2295, %v2519
      %v2521 = vpop.f32.mrb[0].mxu0
      %2522 = vmatprep.mubr.f32.mxu0 0.0
      %2523 = vmatmul.mubr.f32.gmra.mrb[0].mxu0 %v1150
      %v2524 = vpop.f32.mrb[0].mxu0
      %v2525 = vadd.f32 %v2300, %v2524
      %v2526 = vpop.f32.mrb[0].mxu0
      %2527 = vmatprep.mubr.f32.mxu0 0.0
      %2528 = vmatmul.mubr.f32.gmra.mrb[0].mxu0 %v1159
      %v2529 = vpop.f32.mrb[0].mxu0
      %v2530 = vadd.f32 %v2305, %v2529
      %v2531 = vpop.f32.mrb[0].mxu0
      %2532 = vmatprep.mubr.f32.mxu0 0.0
      %2533 = vmatmul.mubr.f32.gmra.mrb[0].mxu0 %v1168
      %v2534 = vpop.f32.mrb[0].mxu0
      %v2535 = vadd.f32 %v2310, %v2534
      %v2536 = vpop.f32.mrb[0].mxu0
      %2537 = vmatprep.mubr.f32.mxu0 0.0
      %2538 = vmatmul.mubr.f32.gmra.mrb[0].mxu0 %v1177
      %v2539 = vpop.f32.mrb[0].mxu0
      %v2540 = vadd.f32 %v2315, %v2539
      %v2541 = vpop.f32.mrb[0].mxu0
      %2542 = vmatprep.mubr.f32.mxu0 0.0
      %2543 = vmatmul.mubr.f32.gmra.mrb[0].mxu0 %v1186
      %v2544 = vpop.f32.mrb[0].mxu0
      %v2545 = vadd.f32 %v2320, %v2544
      %v2546 = vpop.f32.mrb[0].mxu0
      %2547 = vmatprep.mubr.f32.mxu0 0.0
      %2548 = vmatmul.mubr.f32.gmra.mrb[0].mxu0 %v1195
      %v2549 = vpop.f32.mrb[0].mxu0
      %v2550 = vadd.f32 %v2325, %v2549
      %v2551 = vpop.f32.mrb[0].mxu0
      %2552 = vmatprep.mubr.f32.mxu0 0.0
      %2553 = vmatmul.mubr.f32.gmra.mrb[0].mxu0 %v1204
      %v2554 = vpop.f32.mrb[0].mxu0
      %v2555 = vadd.f32 %v2330, %v2554
      %v2556 = vpop.f32.mrb[0].mxu0
      %2557 = vmatprep.mubr.f32.mxu0 0.0
      %2558 = vmatmul.mubr.f32.gmra.mrb[0].mxu0 %v1213
      %v2559 = vpop.f32.mrb[0].mxu0
      %v2560 = vadd.f32 %v2335, %v2559
      %v2561 = vpop.f32.mrb[0].mxu0
      %2562 = vmatprep.mubr.f32.mxu0 0.0
      %2563 = vmatmul.mubr.f32.gmra.mrb[0].mxu0 %v1222
      %v2564 = vpop.f32.mrb[0].mxu0
      %v2565 = vadd.f32 %v2340, %v2564
      %v2566 = vpop.f32.mrb[0].mxu0
      %2567 = vmatprep.mubr.f32.mxu0 0.0
      %2568 = vmatmul.mubr.f32.gmra.mrb[0].mxu0 %v1231
      %v2569 = vpop.f32.mrb[0].mxu0
      %v2570 = vadd.f32 %v2345, %v2569
      %v2571 = vpop.f32.mrb[0].mxu0
      %2572 = vmatprep.mubr.f32.mxu0 0.0
      %2573 = vmatmul.mubr.f32.gmra.mrb[0].mxu0 %v1240
      %v2574 = vpop.f32.mrb[0].mxu0
      %v2575 = vadd.f32 %v2350, %v2574
      %v2576 = vpop.f32.mrb[0].mxu0
      %2577 = vmatprep.mubr.f32.mxu0 0.0
      %2578 = vmatmul.mubr.f32.gmra.mrb[0].mxu0 %v1249
      %v2579 = vpop.f32.mrb[0].mxu0
      %v2580 = vadd.f32 %v2355, %v2579
      %v2581 = vpop.f32.mrb[0].mxu0
      %2582 = vmatprep.mubr.f32.mxu0 0.0
      %2583 = vmatmul.mubr.f32.gmra.mrb[0].mxu0 %v1258
      %v2584 = vpop.f32.mrb[0].mxu0
      %v2585 = vadd.f32 %v2360, %v2584
      %v2586 = vpop.f32.mrb[0].mxu0
      %2587 = vmatprep.mubr.f32.mxu0 0.0
      %2588 = vmatmul.mubr.f32.gmra.mrb[0].mxu0 %v1267
      %v2589 = vpop.f32.mrb[0].mxu0
      %v2590 = vadd.f32 %v2365, %v2589
      %v2591 = vpop.f32.mrb[0].mxu0
      %2592 = vmatprep.mubr.f32.mxu0 0.0
      %2593 = vmatmul.mubr.f32.gmra.mrb[0].mxu0 %v1276
      %v2594 = vpop.f32.mrb[0].mxu0
      %v2595 = vadd.f32 %v2370, %v2594
      %v2596 = vpop.f32.mrb[0].mxu0
      %2597 = vmatprep.mubr.f32.mxu0 0.0
      %2598 = vmatmul.mubr.f32.gmra.mrb[0].mxu0 %v1285
      %v2599 = vpop.f32.mrb[0].mxu0
      %v2600 = vadd.f32 %v2375, %v2599
      %v2601 = vpop.f32.mrb[0].mxu0
      %2602 = vmatprep.mubr.f32.mxu0 0.0
      %2603 = vmatmul.mubr.f32.gmra.mrb[0].mxu0 %v1294
      %v2604 = vpop.f32.mrb[0].mxu0
      %v2605 = vadd.f32 %v2380, %v2604
      %v2606 = vpop.f32.mrb[0].mxu0
      %2607 = vmatprep.mubr.f32.mxu0 0.0
      %2608 = vmatmul.mubr.f32.gmra.mrb[0].mxu0 %v1303
      %v2609 = vpop.f32.mrb[0].mxu0
      %v2610 = vadd.f32 %v2385, %v2609
      %v2611 = vpop.f32.mrb[0].mxu0
      %2612 = vmatprep.mubr.f32.mxu0 0.0
      %2613 = vmatmul.mubr.f32.gmra.mrb[0].mxu0 %v1312
      %v2614 = vpop.f32.mrb[0].mxu0
      %v2615 = vadd.f32 %v2390, %v2614
      %v2616 = vpop.f32.mrb[0].mxu0
      %2617 = vmatprep.mubr.f32.mxu0 0.0
      %2618 = vmatmul.mubr.f32.gmra.mrb[0].mxu0 %v1321
      %v2619 = vpop.f32.mrb[0].mxu0
      %v2620 = vadd.f32 %v2395, %v2619
      %v2621 = vpop.f32.mrb[0].mxu0
      %2622 = vmatprep.mubr.f32.mxu0 0.0
      %2623 = vmatmul.mubr.f32.gmra.mrb[0].mxu0 %v1330
      %v2624 = vpop.f32.mrb[0].mxu0
      %v2625 = vadd.f32 %v2400, %v2624
      %v2626 = vpop.f32.mrb[0].mxu0
      %2627 = vmatprep.mubr.f32.mxu0 0.0
      %2628 = vmatmul.mubr.f32.gmra.mrb[0].mxu0 %v1339
      %v2629 = vpop.f32.mrb[0].mxu0
      %v2630 = vadd.f32 %v2405, %v2629
      %v2631 = vpop.f32.mrb[0].mxu0
      %2632 = vmatprep.mubr.f32.mxu0 0.0
      %2633 = vmatmul.mubr.f32.gmra.mrb[0].mxu0 %v1348
      %v2634 = vpop.f32.mrb[0].mxu0
      %v2635 = vadd.f32 %v2410, %v2634
      %v2636 = vpop.f32.mrb[0].mxu0
      %2637 = vmatprep.mubr.f32.mxu0 0.0
      %2638 = vmatmul.mubr.f32.gmra.mrb[0].mxu0 %v1357
      %v2639 = vpop.f32.mrb[0].mxu0
      %v2640 = vadd.f32 %v2415, %v2639
      %v2641 = vpop.f32.mrb[0].mxu0
      %2642 = vmatprep.mubr.f32.mxu0 0.0
      %2643 = vmatmul.mubr.f32.gmra.mrb[0].mxu0 %v1366
      %v2644 = vpop.f32.mrb[0].mxu0
      %v2645 = vadd.f32 %v2420, %v2644
      %v2646 = vpop.f32.mrb[0].mxu0
      %2647 = vmatprep.mubr.f32.mxu0 0.0
      %2648 = vmatmul.mubr.f32.gmra.mrb[0].mxu0 %v1375
      %v2649 = vpop.f32.mrb[0].mxu0
      %v2650 = vadd.f32 %v2425, %v2649
      %v2651 = vpop.f32.mrb[0].mxu0
      %2652 = vmatprep.mubr.f32.mxu0 0.0
      %2653 = vmatmul.mubr.f32.gmra.mrb[0].mxu0 %v1384
      %v2654 = vpop.f32.mrb[0].mxu0
      %v2655 = vadd.f32 %v2430, %v2654
      %v2656 = vpop.f32.mrb[0].mxu0
      %2657 = vmatprep.mubr.f32.mxu0 0.0
      %2658 = vmatmul.mubr.f32.gmra.mrb[0].mxu0 %v1393
      %v2659 = vpop.f32.mrb[0].mxu0
      %v2660 = vadd.f32 %v2435, %v2659
      %v2661 = vpop.f32.mrb[0].mxu0
      %2662 = vdwg.mxu0
      %2663 = vst [vmem:[%s231] sm:$0xff] %v2505
      %2664 = vst [vmem:[%s231 + $0x8] sm:$0xff] %v2510
      %2665 = vst [vmem:[%s231 + $0x10] sm:$0xff] %v2515
      %2666 = vst [vmem:[%s231 + $0x18] sm:$0xff] %v2520
      %2667 = vst [vmem:[%s231 + $0x20] sm:$0xff] %v2525
      %2668 = vst [vmem:[%s231 + $0x28] sm:$0xff] %v2530
      %2669 = vst [vmem:[%s231 + $0x30] sm:$0xff] %v2535
      %2670 = vst [vmem:[%s231 + $0x38] sm:$0xff] %v2540
      %2671 = vst [vmem:[%s231 + $0x40] sm:$0xff] %v2545
      %2672 = vst [vmem:[%s231 + $0x48] sm:$0xff] %v2550
      %2673 = vst [vmem:[%s231 + $0x50] sm:$0xff] %v2555
      %2674 = vst [vmem:[%s231 + $0x58] sm:$0xff] %v2560
      %2675 = vst [vmem:[%s231 + $0x60] sm:$0xff] %v2565
      %2676 = vst [vmem:[%s231 + $0x68] sm:$0xff] %v2570
      %2677 = vst [vmem:[%s231 + $0x70] sm:$0xff] %v2575
      %2678 = vst [vmem:[%s231 + $0x78] sm:$0xff] %v2580
      %2679 = vst [vmem:[%s231 + $0x80] sm:$0xff] %v2585
      %2680 = vst [vmem:[%s231 + $0x88] sm:$0xff] %v2590
      %2681 = vst [vmem:[%s231 + $0x90] sm:$0xff] %v2595
      %2682 = vst [vmem:[%s231 + $0x98] sm:$0xff] %v2600
      %2683 = vst [vmem:[%s231 + $0xa0] sm:$0xff] %v2605
      %2684 = vst [vmem:[%s231 + $0xa8] sm:$0xff] %v2610
      %2685 = vst [vmem:[%s231 + $0xb0] sm:$0xff] %v2615
      %2686 = vst [vmem:[%s231 + $0xb8] sm:$0xff] %v2620
      %2687 = vst [vmem:[%s231 + $0xc0] sm:$0xff] %v2625
      %2688 = vst [vmem:[%s231 + $0xc8] sm:$0xff] %v2630
      %2689 = vst [vmem:[%s231 + $0xd0] sm:$0xff] %v2635
      %2690 = vst [vmem:[%s231 + $0xd8] sm:$0xff] %v2640
      %2691 = vst [vmem:[%s231 + $0xe0] sm:$0xff] %v2645
      %2692 = vst [vmem:[%s231 + $0xe8] sm:$0xff] %v2650
      %2693 = vst [vmem:[%s231 + $0xf0] sm:$0xff] %v2655
      %2694 = vst [vmem:[%s231 + $0xf8] sm:$0xff] %v2660
      %v2695 = vadd.f32 %v2505, %v2510
      %v2696 = vadd.f32 %v2695, %v2515
      %v2697 = vadd.f32 %v2696, %v2520
      %v2698 = vadd.f32 %v2697, %v2525
      %v2699 = vadd.f32 %v2698, %v2530
      %v2700 = vadd.f32 %v2699, %v2535
      %v2701 = vadd.f32 %v2700, %v2540
      %v2702 = vadd.f32 %v2701, %v2545
      %v2703 = vadd.f32 %v2702, %v2550
      %v2704 = vadd.f32 %v2703, %v2555
      %v2705 = vadd.f32 %v2704, %v2560
      %v2706 = vadd.f32 %v2705, %v2565
      %v2707 = vadd.f32 %v2706, %v2570
      %v2708 = vadd.f32 %v2707, %v2575
      %v2709 = vadd.f32 %v2708, %v2580
      %v2710 = vadd.f32 %v2709, %v2585
      %v2711 = vadd.f32 %v2710, %v2590
      %v2712 = vadd.f32 %v2711, %v2595
      %v2713 = vadd.f32 %v2712, %v2600
      %v2714 = vadd.f32 %v2713, %v2605
      %v2715 = vadd.f32 %v2714, %v2610
      %v2716 = vadd.f32 %v2715, %v2615
      %v2717 = vadd.f32 %v2716, %v2620
      %v2718 = vadd.f32 %v2717, %v2625
      %v2719 = vadd.f32 %v2718, %v2630
      %v2720 = vadd.f32 %v2719, %v2635
      %v2721 = vadd.f32 %v2720, %v2640
      %v2722 = vadd.f32 %v2721, %v2645
      %v2723 = vadd.f32 %v2722, %v2650
      %v2724 = vadd.f32 %v2723, %v2655
      %v2725 = vadd.f32 %v2724, %v2660
      %v2726 = vrot.slane %v2725, 4
      %v2727 = vadd.f32 %v2725, %v2726
      %v2728 = vrot.slane %v2727, 2
      %v2729 = vadd.f32 %v2727, %v2728
      %v2730 = vrot.slane %v2729, 1
      %v2731 = vadd.f32 %v2729, %v2730
      %v2732 = vmul.f32 %v2505, %v2505
      %v2733 = vmul.f32 %v2510, %v2510
      %v2734 = vmul.f32 %v2515, %v2515
      %v2735 = vmul.f32 %v2520, %v2520
      %v2736 = vmul.f32 %v2525, %v2525
      %v2737 = vmul.f32 %v2530, %v2530
      %v2738 = vmul.f32 %v2535, %v2535
      %v2739 = vmul.f32 %v2540, %v2540
      %v2740 = vmul.f32 %v2545, %v2545
      %v2741 = vmul.f32 %v2550, %v2550
      %v2742 = vmul.f32 %v2555, %v2555
      %v2743 = vmul.f32 %v2560, %v2560
      %v2744 = vmul.f32 %v2565, %v2565
      %v2745 = vmul.f32 %v2570, %v2570
      %v2746 = vmul.f32 %v2575, %v2575
      %v2747 = vmul.f32 %v2580, %v2580
      %v2748 = vmul.f32 %v2585, %v2585
      %v2749 = vmul.f32 %v2590, %v2590
      %v2750 = vmul.f32 %v2595, %v2595
      %v2751 = vmul.f32 %v2600, %v2600
      %v2752 = vmul.f32 %v2605, %v2605
      %v2753 = vmul.f32 %v2610, %v2610
      %v2754 = vmul.f32 %v2615, %v2615
      %v2755 = vmul.f32 %v2620, %v2620
      %v2756 = vmul.f32 %v2625, %v2625
      %v2757 = vmul.f32 %v2630, %v2630
      %v2758 = vmul.f32 %v2635, %v2635
      %v2759 = vmul.f32 %v2640, %v2640
      %v2760 = vmul.f32 %v2645, %v2645
      %v2761 = vmul.f32 %v2650, %v2650
      %v2762 = vmul.f32 %v2655, %v2655
      %v2763 = vmul.f32 %v2660, %v2660
      %v2764 = vadd.f32 %v2732, %v2733
      %v2765 = vadd.f32 %v2764, %v2734
      %v2766 = vadd.f32 %v2765, %v2735
      %v2767 = vadd.f32 %v2766, %v2736
      %v2768 = vadd.f32 %v2767, %v2737
      %v2769 = vadd.f32 %v2768, %v2738
      %v2770 = vadd.f32 %v2769, %v2739
      %v2771 = vadd.f32 %v2770, %v2740
      %v2772 = vadd.f32 %v2771, %v2741
      %v2773 = vadd.f32 %v2772, %v2742
      %v2774 = vadd.f32 %v2773, %v2743
      %v2775 = vadd.f32 %v2774, %v2744
      %v2776 = vadd.f32 %v2775, %v2745
      %v2777 = vadd.f32 %v2776, %v2746
      %v2778 = vadd.f32 %v2777, %v2747
      %v2779 = vadd.f32 %v2778, %v2748
      %v2780 = vadd.f32 %v2779, %v2749
      %v2781 = vadd.f32 %v2780, %v2750
      %v2782 = vadd.f32 %v2781, %v2751
      %v2783 = vadd.f32 %v2782, %v2752
      %v2784 = vadd.f32 %v2783, %v2753
      %v2785 = vadd.f32 %v2784, %v2754
      %v2786 = vadd.f32 %v2785, %v2755
      %v2787 = vadd.f32 %v2786, %v2756
      %v2788 = vadd.f32 %v2787, %v2757
      %v2789 = vadd.f32 %v2788, %v2758
      %v2790 = vadd.f32 %v2789, %v2759
      %v2791 = vadd.f32 %v2790, %v2760
      %v2792 = vadd.f32 %v2791, %v2761
      %v2793 = vadd.f32 %v2792, %v2762
      %v2794 = vadd.f32 %v2793, %v2763
      %v2795 = vrot.slane %v2794, 4
      %v2796 = vadd.f32 %v2794, %v2795
      %v2797 = vrot.slane %v2796, 2
      %v2798 = vadd.f32 %v2796, %v2797
      %v2799 = vrot.slane %v2798, 1
      %v2800 = vadd.f32 %v2798, %v2799
      %vm2801 = vcmask 1040384
      %v2802 = vsel %vm2801, %v2731, %v2800
      %2803 = vst [vmem:[%s235] sm:$0x3] %v2802
      %p2804 = scmp.lt.s32.totalorder %s17, 1
      %s2805 = scalar_select %p2804, %s17, 1
      %s2806 = smul.addr %s2805, 32
      %s2807 = smul.addr %s2806, 8
      %s2808 = scalar_lea.vmem %s4, %s2807
      %p2809 = scmp.lt.s32.totalorder %s17, 1
      %s2810 = scalar_select %p2809, %s17, 1
      %s2811 = smul.addr %s2810, 2
      %s2812 = scalar_lea.vmem %s5, %s2811
      // Predicated region
      $region37: #{seg_unet_conv_block.6} parent=35 // pred_check
        %p2813 = pneg %p124
      $region38: #{seg_unet_conv_block.6} parent=35 // pred_check_branch
        %2815 = sbr.rel (%p2813) target = $region40
      $region39: #{seg_unet_conv_block.6} parent=35 // pred_region
        _
      $region40: #{seg_unet_conv_block.6} parent=35 // pred_fallthru
        _
      // Predicated region
      $region41: #{seg_unet_conv_block.6} parent=35 // pred_check
        %p2816 = pneg %p150
      $region42: #{seg_unet_conv_block.6} parent=35 // pred_check_branch
        %2818 = sbr.rel (%p2816) target = $region44
      $region43: #{seg_unet_conv_block.6} parent=35 // pred_region
        _
      $region44: #{seg_unet_conv_block.6} parent=35 // pred_fallthru
        _
    $region36: #{seg_unet_conv_block.6} parent=5 // pred_fallthru
      _
    %p2819 = scmp.le.s32.totalorder 2, %s12
    // Predicated region
    $region45: #{seg_unet_conv_block.6} parent=5 // pred_check
      %p2820 = pneg %p2819
    $region46: #{seg_unet_conv_block.6} parent=5 // pred_check_branch
      %2822 = sbr.rel (%p2820) target = $region48
    $region47: #{seg_unet_conv_block.6} parent=5 // pred_region
      %s2823 = ssub.s32 %s12, 2
      // Predicated region
      $region49: #{seg_unet_conv_block.6} parent=47 // pred_check
        %p2824 = pneg %p130
      $region50: #{seg_unet_conv_block.6} parent=47 // pred_check_branch
        %2826 = sbr.rel (%p2824) target = $region52
      $region51: #{seg_unet_conv_block.6} parent=47 // pred_region
        %p2827 = scmp.lt.s32.totalorder %s18, 1
        %s2828 = scalar_select %p2827, %s18, 1
        %s2829 = smul.addr %s2828, 32
        %s2830 = smul.addr %s2829, 8
        %s2831 = scalar_lea.vmem %s4, %s2830
      $region52: #{seg_unet_conv_block.6} parent=47 // pred_fallthru
        _
      // Predicated region
      $region53: #{seg_unet_conv_block.6} parent=47 // pred_check
        %p2832 = pneg %p156
      $region54: #{seg_unet_conv_block.6} parent=47 // pred_check_branch
        %2834 = sbr.rel (%p2832) target = $region56
      $region55: #{seg_unet_conv_block.6} parent=47 // pred_region
        %p2835 = scmp.lt.s32.totalorder %s18, 1
        %s2836 = scalar_select %p2835, %s18, 1
        %s2837 = smul.addr %s2836, 2
        %s2838 = scalar_lea.vmem %s5, %s2837
      $region56: #{seg_unet_conv_block.6} parent=47 // pred_fallthru
        _
    $region48: #{seg_unet_conv_block.6} parent=5 // pred_fallthru
      _
  $region6: #{seg_unet_conv_block.6} parent=0 // loop_footer
    %s16 = sadd.s32 1, %s12
  $region7: #{seg_unet_conv_block.6} parent=0 // loop_footer_branch
    %11 = sbr.rel target = $region3
  $region8: #{seg_unet_conv_block.6} parent=0 // loop_exit
    _

// kernel: seg_unet_conv_block.5
$region0: #{seg_unet_conv_block.5}
  #allocation0 [shape = 'u32[]', space=smem, size = 0x4, offset = 0x4, fixed_abs, tag = 'smem constant byte address 0x4 - core index']
  #allocation1 [shape = 'u32[144,128]{1,0:T(1,128)}', space=vmem, size = 0x12000, scoped, tag = 'internal scratch']
  #allocation2 [shape = 'f32[18,18,128]{2,1,0:T(8,128)}', space=vmem, size = 0x36000, scoped, tag = 'scratch operand']
  #allocation3 [shape = 'f32[256,1152]{1,0:T(8,128)}', space=vmem, size = 0x120000, scoped, tag = 'scratch operand']
  %s0 = inlined_call_operand.vmem [shape: f32[2,16,16,128], index: 0, kind: input, shape index: {}]
  %s1 = inlined_call_operand.vmem [shape: f32[1,128], index: 1, kind: input, shape index: {}]
  %s2 = inlined_call_operand.vmem [shape: f32[1,128], index: 2, kind: input, shape index: {}]
  %s3 = inlined_call_operand.vmem [shape: f32[1152,128], index: 3, kind: input, shape index: {}]
  %s4 = inlined_call_operand.vmem [shape: f32[2,16,16,128], index: 4, kind: output, shape index: {0}]
  %s5 = inlined_call_operand.vmem [shape: f32[2,2,128], index: 5, kind: output, shape index: {1}]
  %6 = xla_tuple %s4, %s5
  %s7 = sld [smem:[#allocation0]]
  $region57: #{seg_unet_conv_block.5} parent=0
    _
  %s9 = ssub.s32 1, %s7
  %s10 = scalar_select 0, %s9, %s7
  loop: start=0, step=1, limit=4
  $region2: #{seg_unet_conv_block.5} parent=0 // loop_pre_header
    _
  $region3: #{seg_unet_conv_block.5} parent=0 // loop_header
    %s12 = sphi 0, %s16
    %p13 = scmp.ge.s32.totalorder %s12, 4
    %s22 = sphi 0, %s24
    %s25 = sphi 0, %s22
    %s26 = sphi 0, %s25
    %s42 = sphi 0, %s26
    %s46 = sphi 0, %s46
    %s48 = sphi 0, %s46
    %s49 = sphi 0, %s48
    %s63 = sphi 0, %s49
    %s67 = sphi 0, %s67
    %s69 = sphi 0, %s67
    %s70 = sphi 0, %s69
    %s84 = sphi 0, %s70
    %s88 = sphi 0, %s88
    %s90 = sphi 0, %s88
    %s91 = sphi 0, %s90
    %s105 = sphi 0, %s91
    %s111 = sphi 0, %s113
    %s114 = sphi 0, %s111
    %s115 = sphi 0, %s114
    %s131 = sphi 0, %s115
    %s137 = sphi 0, %s139
    %s140 = sphi 0, %s137
    %s141 = sphi 0, %s140
    %s157 = sphi 0, %s141
  $region4: #{seg_unet_conv_block.5} parent=0 // loop_header_branch
    %15 = sbr.rel (%p13) target = $region8
  $region5: #{seg_unet_conv_block.5} parent=0 // loop_body
    %s17 = ssub.s32 %s12, 1
    %s18 = ssub.s32 %s12, 2
    %s19 = sadd.s32 %s12, 1
    %s20 = ssub.s32 %s12, %s19
    %p21 = scmp.eq.s32.totalorder %s20, 0
    %s23 = sadd.s32 %s22, 1
    %s24 = scalar_select %p21, %s22, %s23
    %p27 = pneg %p21
    %p28 = scmp.eq.s32.totalorder %s12, 1
    %p29 = por %p27, %p28
    %p30 = scmp.ne.s32.totalorder %s22, %s25
    %p31 = scmp.eq.s32.totalorder %s12, 0
    %p32 = por %p30, %p31
    %p33 = scmp.ne.s32.totalorder %s22, %s25
    %p34 = scmp.eq.s32.totalorder %s17, 1
    %p35 = por %p33, %p34
    %p36 = scmp.ne.s32.totalorder %s25, %s26
    %p37 = scmp.eq.s32.totalorder %s17, 0
    %p38 = por %p36, %p37
    %p39 = scmp.ne.s32.totalorder %s25, %s26
    %p40 = scmp.eq.s32.totalorder %s18, 1
    %p41 = por %p39, %p40
    %p43 = scmp.ne.s32.totalorder %s26, %s42
    %p44 = scmp.eq.s32.totalorder %s18, 0
    %p45 = por %p43, %p44
    %s47 = sadd.s32 %s46, 1
    %p50 = scmp.eq.s32.totalorder %s12, 1
    %p51 = scmp.ne.s32.totalorder %s46, %s48
    %p52 = scmp.eq.s32.totalorder %s12, 0
    %p53 = por %p51, %p52
    %p54 = scmp.ne.s32.totalorder %s46, %s48
    %p55 = scmp.eq.s32.totalorder %s17, 1
    %p56 = por %p54, %p55
    %p57 = scmp.ne.s32.totalorder %s48, %s49
    %p58 = scmp.eq.s32.totalorder %s17, 0
    %p59 = por %p57, %p58
    %p60 = scmp.ne.s32.totalorder %s48, %s49
    %p61 = scmp.eq.s32.totalorder %s18, 1
    %p62 = por %p60, %p61
    %p64 = scmp.ne.s32.totalorder %s49, %s63
    %p65 = scmp.eq.s32.totalorder %s18, 0
    %p66 = por %p64, %p65
    %s68 = sadd.s32 %s67, 1
    %p71 = scmp.eq.s32.totalorder %s12, 1
    %p72 = scmp.ne.s32.totalorder %s67, %s69
    %p73 = scmp.eq.s32.totalorder %s12, 0
    %p74 = por %p72, %p73
    %p75 = scmp.ne.s32.totalorder %s67, %s69
    %p76 = scmp.eq.s32.totalorder %s17, 1
    %p77 = por %p75, %p76
    %p78 = scmp.ne.s32.totalorder %s69, %s70
    %p79 = scmp.eq.s32.totalorder %s17, 0
    %p80 = por %p78, %p79
    %p81 = scmp.ne.s32.totalorder %s69, %s70
    %p82 = scmp.eq.s32.totalorder %s18, 1
    %p83 = por %p81, %p82
    %p85 = scmp.ne.s32.totalorder %s70, %s84
    %p86 = scmp.eq.s32.totalorder %s18, 0
    %p87 = por %p85, %p86
    %s89 = sadd.s32 %s88, 1
    %p92 = scmp.eq.s32.totalorder %s12, 1
    %p93 = scmp.ne.s32.totalorder %s88, %s90
    %p94 = scmp.eq.s32.totalorder %s12, 0
    %p95 = por %p93, %p94
    %p96 = scmp.ne.s32.totalorder %s88, %s90
    %p97 = scmp.eq.s32.totalorder %s17, 1
    %p98 = por %p96, %p97
    %p99 = scmp.ne.s32.totalorder %s90, %s91
    %p100 = scmp.eq.s32.totalorder %s17, 0
    %p101 = por %p99, %p100
    %p102 = scmp.ne.s32.totalorder %s90, %s91
    %p103 = scmp.eq.s32.totalorder %s18, 1
    %p104 = por %p102, %p103
    %p106 = scmp.ne.s32.totalorder %s91, %s105
    %p107 = scmp.eq.s32.totalorder %s18, 0
    %p108 = por %p106, %p107
    %s109 = ssub.s32 %s12, %s19
    %p110 = scmp.eq.s32.totalorder %s109, 0
    %s112 = sadd.s32 %s111, 1
    %s113 = scalar_select %p110, %s111, %s112
    %p116 = pneg %p110
    %p117 = scmp.eq.s32.totalorder %s12, 1
    %p118 = por %p116, %p117
    %p119 = scmp.ne.s32.totalorder %s111, %s114
    %p120 = scmp.eq.s32.totalorder %s12, 0
    %p121 = por %p119, %p120
    %p122 = scmp.ne.s32.totalorder %s111, %s114
    %p123 = scmp.eq.s32.totalorder %s17, 1
    %p124 = por %p122, %p123
    %p125 = scmp.ne.s32.totalorder %s114, %s115
    %p126 = scmp.eq.s32.totalorder %s17, 0
    %p127 = por %p125, %p126
    %p128 = scmp.ne.s32.totalorder %s114, %s115
    %p129 = scmp.eq.s32.totalorder %s18, 1
    %p130 = por %p128, %p129
    %p132 = scmp.ne.s32.totalorder %s115, %s131
    %p133 = scmp.eq.s32.totalorder %s18, 0
    %p134 = por %p132, %p133
    %s135 = ssub.s32 %s12, %s19
    %p136 = scmp.eq.s32.totalorder %s135, 0
    %s138 = sadd.s32 %s137, 1
    %s139 = scalar_select %p136, %s137, %s138
    %p142 = pneg %p136
    %p143 = scmp.eq.s32.totalorder %s12, 1
    %p144 = por %p142, %p143
    %p145 = scmp.ne.s32.totalorder %s137, %s140
    %p146 = scmp.eq.s32.totalorder %s12, 0
    %p147 = por %p145, %p146
    %p148 = scmp.ne.s32.totalorder %s137, %s140
    %p149 = scmp.eq.s32.totalorder %s17, 1
    %p150 = por %p148, %p149
    %p151 = scmp.ne.s32.totalorder %s140, %s141
    %p152 = scmp.eq.s32.totalorder %s17, 0
    %p153 = por %p151, %p152
    %p154 = scmp.ne.s32.totalorder %s140, %s141
    %p155 = scmp.eq.s32.totalorder %s18, 1
    %p156 = por %p154, %p155
    %p158 = scmp.ne.s32.totalorder %s141, %s157
    %p159 = scmp.eq.s32.totalorder %s18, 0
    %p160 = por %p158, %p159
    %p161 = scmp.le.s32.totalorder 1, %s12
    %p162 = scmp.lt.s32.totalorder %s12, 3
    %p163 = pnand %p161, %p162
    %p164 = pneg %p163
    // Predicated region
    $region9: #{seg_unet_conv_block.5} parent=5 // pred_check
      _
    $region10: #{seg_unet_conv_block.5} parent=5 // pred_check_branch
      %166 = sbr.rel (%p163) target = $region12
    $region11: #{seg_unet_conv_block.5} parent=5 // pred_region
      %s167 = ssub.s32 %s12, 1
      // Predicated region
      $region13: #{seg_unet_conv_block.5} parent=11 // pred_check
        %p168 = pneg %p59
      $region14: #{seg_unet_conv_block.5} parent=11 // pred_check_branch
        %170 = sbr.rel (%p168) target = $region16
      $region15: #{seg_unet_conv_block.5} parent=11 // pred_region
        _
      $region16: #{seg_unet_conv_block.5} parent=11 // pred_fallthru
        _
      // Predicated region
      $region17: #{seg_unet_conv_block.5} parent=11 // pred_check
        %p171 = pneg %p80
      $region18: #{seg_unet_conv_block.5} parent=11 // pred_check_branch
        %173 = sbr.rel (%p171) target = $region20
      $region19: #{seg_unet_conv_block.5} parent=11 // pred_region
        _
      $region20: #{seg_unet_conv_block.5} parent=11 // pred_fallthru
        _
      // Predicated region
      $region21: #{seg_unet_conv_block.5} parent=11 // pred_check
        %p174 = pneg %p101
      $region22: #{seg_unet_conv_block.5} parent=11 // pred_check_branch
        %176 = sbr.rel (%p174) target = $region24
      $region23: #{seg_unet_conv_block.5} parent=11 // pred_region
        _
      $region24: #{seg_unet_conv_block.5} parent=11 // pred_fallthru
        _
    $region12: #{seg_unet_conv_block.5} parent=5 // pred_fallthru
      _
    %p177 = scmp.lt.s32.totalorder %s12, 2
    // Predicated region
    $region25: #{seg_unet_conv_block.5} parent=5 // pred_check
      %p178 = pneg %p177
    $region26: #{seg_unet_conv_block.5} parent=5 // pred_check_branch
      %180 = sbr.rel (%p178) target = $region28
    $region27: #{seg_unet_conv_block.5} parent=5 // pred_region
      // Predicated region
      $region29: #{seg_unet_conv_block.5} parent=27 // pred_check
        %p181 = pneg %p32
      $region30: #{seg_unet_conv_block.5} parent=27 // pred_check_branch
        %183 = sbr.rel (%p181) target = $region32
      $region31: #{seg_unet_conv_block.5} parent=27 // pred_region
        %p184 = scmp.lt.s32.totalorder %s12, 1
        %s185 = scalar_select %p184, %s12, 1
        %s186 = smul.addr %s185, 32
        %s187 = smul.addr %s186, 8
        %s188 = scalar_lea.vmem %s0, %s187
      $region32: #{seg_unet_conv_block.5} parent=27 // pred_fallthru
        _
    $region28: #{seg_unet_conv_block.5} parent=5 // pred_fallthru
      _
    %p189 = scmp.le.s32.totalorder 1, %s12
    %p190 = scmp.lt.s32.totalorder %s12, 3
    %p191 = pnand %p189, %p190
    %p192 = pneg %p191
    // Predicated region
    $region33: #{seg_unet_conv_block.5} parent=5 // pred_check
      _
    $region34: #{seg_unet_conv_block.5} parent=5 // pred_check_branch
      %194 = sbr.rel (%p191) target = $region36
    $region35: #{seg_unet_conv_block.5} parent=5 // pred_region
      %s195 = ssub.s32 %s12, 1
      %p196 = scmp.lt.s32.totalorder %s17, 1
      %s197 = scalar_select %p196, %s17, 1
      %s198 = smul.addr %s197, 32
      %s199 = smul.addr %s198, 8
      %s200 = scalar_lea.vmem %s0, %s199
      %p201 = pneg %p38
      %p202 = pneg %p35
      %p203 = pneg %p59
      %p204 = pneg %p56
      %p205 = pneg %p80
      %p206 = pneg %p77
      %p207 = pneg %p101
      %p208 = pneg %p98
      %p209 = pneg %p127
      %p210 = pneg %p124
      %p211 = scmp.lt.s32.totalorder %s17, 1
      %s212 = scalar_select %p211, %s17, 1
      %s213 = smul.addr %s212, 32
      %s214 = smul.addr %s213, 8
      %s215 = scalar_lea.vmem %s4, %s214
      %p216 = pneg %p153
      %p217 = pneg %p150
      %p218 = scmp.lt.s32.totalorder %s17, 1
      %s219 = scalar_select %p218, %s17, 1
      %s220 = smul.addr %s219, 2
      %s221 = scalar_lea.vmem %s5, %s220
      %p222 = scmp.lt.s32.totalorder %s17, 1
      %s223 = scalar_select %p222, %s17, 1
      %s224 = smul.addr %s223, 32
      %s225 = smul.addr %s224, 8
      %s226 = scalar_lea.vmem %s0, %s225
      %p227 = scmp.lt.s32.totalorder %s17, 1
      %s228 = scalar_select %p227, %s17, 1
      %s229 = smul.addr %s228, 32
      %s230 = smul.addr %s229, 8
      %s231 = scalar_lea.vmem %s4, %s230
      %p232 = scmp.lt.s32.totalorder %s17, 1
      %s233 = scalar_select %p232, %s17, 1
      %s234 = smul.addr %s233, 2
      %s235 = scalar_lea.vmem %s5, %s234
      %v236 = vld [vmem:[%s226] sm:$0xff]
      %v237 = vld [vmem:[%s226 + $0x8] sm:$0xff]
      %v238 = vld [vmem:[%s226 + $0x10] sm:$0xff]
      %v239 = vld [vmem:[%s226 + $0x18] sm:$0xff]
      %v240 = vld [vmem:[%s226 + $0x20] sm:$0xff]
      %v241 = vld [vmem:[%s226 + $0x28] sm:$0xff]
      %v242 = vld [vmem:[%s226 + $0x30] sm:$0xff]
      %v243 = vld [vmem:[%s226 + $0x38] sm:$0xff]
      %v244 = vld [vmem:[%s226 + $0x40] sm:$0xff]
      %v245 = vld [vmem:[%s226 + $0x48] sm:$0xff]
      %v246 = vld [vmem:[%s226 + $0x50] sm:$0xff]
      %v247 = vld [vmem:[%s226 + $0x58] sm:$0xff]
      %v248 = vld [vmem:[%s226 + $0x60] sm:$0xff]
      %v249 = vld [vmem:[%s226 + $0x68] sm:$0xff]
      %v250 = vld [vmem:[%s226 + $0x70] sm:$0xff]
      %v251 = vld [vmem:[%s226 + $0x78] sm:$0xff]
      %v252 = vld [vmem:[%s226 + $0x80] sm:$0xff]
      %v253 = vld [vmem:[%s226 + $0x88] sm:$0xff]
      %v254 = vld [vmem:[%s226 + $0x90] sm:$0xff]
      %v255 = vld [vmem:[%s226 + $0x98] sm:$0xff]
      %v256 = vld [vmem:[%s226 + $0xa0] sm:$0xff]
      %v257 = vld [vmem:[%s226 + $0xa8] sm:$0xff]
      %v258 = vld [vmem:[%s226 + $0xb0] sm:$0xff]
      %v259 = vld [vmem:[%s226 + $0xb8] sm:$0xff]
      %v260 = vld [vmem:[%s226 + $0xc0] sm:$0xff]
      %v261 = vld [vmem:[%s226 + $0xc8] sm:$0xff]
      %v262 = vld [vmem:[%s226 + $0xd0] sm:$0xff]
      %v263 = vld [vmem:[%s226 + $0xd8] sm:$0xff]
      %v264 = vld [vmem:[%s226 + $0xe0] sm:$0xff]
      %v265 = vld [vmem:[%s226 + $0xe8] sm:$0xff]
      %v266 = vld [vmem:[%s226 + $0xf0] sm:$0xff]
      %v267 = vld [vmem:[%s226 + $0xf8] sm:$0xff]
      %268 = vst [vmem:[#allocation2] sm:$0xff] 0.0
      %269 = vst [vmem:[#allocation2 + $0x8] sm:$0xff] 0.0
      %270 = vst [vmem:[#allocation2 + $0x10] sm:$0x3] 0.0
      %271 = vst [vmem:[#allocation2 + $0x18] sm:$0xff] 0.0
      %272 = vst [vmem:[#allocation2 + $0x20] sm:$0xff] 0.0
      %273 = vst [vmem:[#allocation2 + $0x28] sm:$0x3] 0.0
      %274 = vst [vmem:[#allocation2 + $0x30] sm:$0xff] 0.0
      %275 = vst [vmem:[#allocation2 + $0x38] sm:$0xff] 0.0
      %276 = vst [vmem:[#allocation2 + $0x40] sm:$0x3] 0.0
      %277 = vst [vmem:[#allocation2 + $0x48] sm:$0xff] 0.0
      %278 = vst [vmem:[#allocation2 + $0x50] sm:$0xff] 0.0
      %279 = vst [vmem:[#allocation2 + $0x58] sm:$0x3] 0.0
      %280 = vst [vmem:[#allocation2 + $0x60] sm:$0xff] 0.0
      %281 = vst [vmem:[#allocation2 + $0x68] sm:$0xff] 0.0
      %282 = vst [vmem:[#allocation2 + $0x70] sm:$0x3] 0.0
      %283 = vst [vmem:[#allocation2 + $0x78] sm:$0xff] 0.0
      %284 = vst [vmem:[#allocation2 + $0x80] sm:$0xff] 0.0
      %285 = vst [vmem:[#allocation2 + $0x88] sm:$0x3] 0.0
      %286 = vst [vmem:[#allocation2 + $0x90] sm:$0xff] 0.0
      %287 = vst [vmem:[#allocation2 + $0x98] sm:$0xff] 0.0
      %288 = vst [vmem:[#allocation2 + $0xa0] sm:$0x3] 0.0
      %289 = vst [vmem:[#allocation2 + $0xa8] sm:$0xff] 0.0
      %290 = vst [vmem:[#allocation2 + $0xb0] sm:$0xff] 0.0
      %291 = vst [vmem:[#allocation2 + $0xb8] sm:$0x3] 0.0
      %292 = vst [vmem:[#allocation2 + $0xc0] sm:$0xff] 0.0
      %293 = vst [vmem:[#allocation2 + $0xc8] sm:$0xff] 0.0
      %294 = vst [vmem:[#allocation2 + $0xd0] sm:$0x3] 0.0
      %295 = vst [vmem:[#allocation2 + $0xd8] sm:$0xff] 0.0
      %296 = vst [vmem:[#allocation2 + $0xe0] sm:$0xff] 0.0
      %297 = vst [vmem:[#allocation2 + $0xe8] sm:$0x3] 0.0
      %298 = vst [vmem:[#allocation2 + $0xf0] sm:$0xff] 0.0
      %299 = vst [vmem:[#allocation2 + $0xf8] sm:$0xff] 0.0
      %300 = vst [vmem:[#allocation2 + $0x100] sm:$0x3] 0.0
      %301 = vst [vmem:[#allocation2 + $0x108] sm:$0xff] 0.0
      %302 = vst [vmem:[#allocation2 + $0x110] sm:$0xff] 0.0
      %303 = vst [vmem:[#allocation2 + $0x118] sm:$0x3] 0.0
      %304 = vst [vmem:[#allocation2 + $0x120] sm:$0xff] 0.0
      %305 = vst [vmem:[#allocation2 + $0x128] sm:$0xff] 0.0
      %306 = vst [vmem:[#allocation2 + $0x130] sm:$0x3] 0.0
      %307 = vst [vmem:[#allocation2 + $0x138] sm:$0xff] 0.0
      %308 = vst [vmem:[#allocation2 + $0x140] sm:$0xff] 0.0
      %309 = vst [vmem:[#allocation2 + $0x148] sm:$0x3] 0.0
      %310 = vst [vmem:[#allocation2 + $0x150] sm:$0xff] 0.0
      %311 = vst [vmem:[#allocation2 + $0x158] sm:$0xff] 0.0
      %312 = vst [vmem:[#allocation2 + $0x160] sm:$0x3] 0.0
      %313 = vst [vmem:[#allocation2 + $0x168] sm:$0xff] 0.0
      %314 = vst [vmem:[#allocation2 + $0x170] sm:$0xff] 0.0
      %315 = vst [vmem:[#allocation2 + $0x178] sm:$0x3] 0.0
      %316 = vst [vmem:[#allocation2 + $0x180] sm:$0xff] 0.0
      %317 = vst [vmem:[#allocation2 + $0x188] sm:$0xff] 0.0
      %318 = vst [vmem:[#allocation2 + $0x190] sm:$0x3] 0.0
      %319 = vst [vmem:[#allocation2 + $0x198] sm:$0xff] 0.0
      %320 = vst [vmem:[#allocation2 + $0x1a0] sm:$0xff] 0.0
      %321 = vst [vmem:[#allocation2 + $0x1a8] sm:$0x3] 0.0
      %s322 = scalar_lea.vmem [#allocation2], 24
      %323 = vst [vmem:[%s322 + $0x1] sm:$0xff] %v236
      %324 = vst [vmem:[%s322 + $0x9] sm:$0xff] %v237
      %325 = vst [vmem:[%s322 + $0x19] sm:$0xff] %v238
      %326 = vst [vmem:[%s322 + $0x21] sm:$0xff] %v239
      %327 = vst [vmem:[%s322 + $0x31] sm:$0xff] %v240
      %328 = vst [vmem:[%s322 + $0x39] sm:$0xff] %v241
      %329 = vst [vmem:[%s322 + $0x49] sm:$0xff] %v242
      %330 = vst [vmem:[%s322 + $0x51] sm:$0xff] %v243
      %331 = vst [vmem:[%s322 + $0x61] sm:$0xff] %v244
      %332 = vst [vmem:[%s322 + $0x69] sm:$0xff] %v245
      %333 = vst [vmem:[%s322 + $0x79] sm:$0xff] %v246
      %334 = vst [vmem:[%s322 + $0x81] sm:$0xff] %v247
      %335 = vst [vmem:[%s322 + $0x91] sm:$0xff] %v248
      %336 = vst [vmem:[%s322 + $0x99] sm:$0xff] %v249
      %337 = vst [vmem:[%s322 + $0xa9] sm:$0xff] %v250
      %338 = vst [vmem:[%s322 + $0xb1] sm:$0xff] %v251
      %339 = vst [vmem:[%s322 + $0xc1] sm:$0xff] %v252
      %340 = vst [vmem:[%s322 + $0xc9] sm:$0xff] %v253
      %341 = vst [vmem:[%s322 + $0xd9] sm:$0xff] %v254
      %342 = vst [vmem:[%s322 + $0xe1] sm:$0xff] %v255
      %343 = vst [vmem:[%s322 + $0xf1] sm:$0xff] %v256
      %344 = vst [vmem:[%s322 + $0xf9] sm:$0xff] %v257
      %345 = vst [vmem:[%s322 + $0x109] sm:$0xff] %v258
      %346 = vst [vmem:[%s322 + $0x111] sm:$0xff] %v259
      %347 = vst [vmem:[%s322 + $0x121] sm:$0xff] %v260
      %348 = vst [vmem:[%s322 + $0x129] sm:$0xff] %v261
      %349 = vst [vmem:[%s322 + $0x139] sm:$0xff] %v262
      %350 = vst [vmem:[%s322 + $0x141] sm:$0xff] %v263
      %351 = vst [vmem:[%s322 + $0x151] sm:$0xff] %v264
      %352 = vst [vmem:[%s322 + $0x159] sm:$0xff] %v265
      %353 = vst [vmem:[%s322 + $0x169] sm:$0xff] %v266
      %354 = vst [vmem:[%s322 + $0x171] sm:$0xff] %v267
      %v355 = vld [vmem:[#allocation2] sm:$0xff]
      %v356 = vld [vmem:[#allocation2 + $0x8] sm:$0xff]
      %v357 = vld [vmem:[#allocation2 + $0x18] sm:$0xff]
      %v358 = vld [vmem:[#allocation2 + $0x20] sm:$0xff]
      %v359 = vld [vmem:[#allocation2 + $0x30] sm:$0xff]
      %v360 = vld [vmem:[#allocation2 + $0x38] sm:$0xff]
      %v361 = vld [vmem:[#allocation2 + $0x48] sm:$0xff]
      %v362 = vld [vmem:[#allocation2 + $0x50] sm:$0xff]
      %v363 = vld [vmem:[#allocation2 + $0x60] sm:$0xff]
      %v364 = vld [vmem:[#allocation2 + $0x68] sm:$0xff]
      %v365 = vld [vmem:[#allocation2 + $0x78] sm:$0xff]
      %v366 = vld [vmem:[#allocation2 + $0x80] sm:$0xff]
      %v367 = vld [vmem:[#allocation2 + $0x90] sm:$0xff]
      %v368 = vld [vmem:[#allocation2 + $0x98] sm:$0xff]
      %v369 = vld [vmem:[#allocation2 + $0xa8] sm:$0xff]
      %v370 = vld [vmem:[#allocation2 + $0xb0] sm:$0xff]
      %v371 = vld [vmem:[#allocation2 + $0xc0] sm:$0xff]
      %v372 = vld [vmem:[#allocation2 + $0xc8] sm:$0xff]
      %v373 = vld [vmem:[#allocation2 + $0xd8] sm:$0xff]
      %v374 = vld [vmem:[#allocation2 + $0xe0] sm:$0xff]
      %v375 = vld [vmem:[#allocation2 + $0xf0] sm:$0xff]
      %v376 = vld [vmem:[#allocation2 + $0xf8] sm:$0xff]
      %v377 = vld [vmem:[#allocation2 + $0x108] sm:$0xff]
      %v378 = vld [vmem:[#allocation2 + $0x110] sm:$0xff]
      %v379 = vld [vmem:[#allocation2 + $0x120] sm:$0xff]
      %v380 = vld [vmem:[#allocation2 + $0x128] sm:$0xff]
      %v381 = vld [vmem:[#allocation2 + $0x138] sm:$0xff]
      %v382 = vld [vmem:[#allocation2 + $0x140] sm:$0xff]
      %v383 = vld [vmem:[#allocation2 + $0x150] sm:$0xff]
      %v384 = vld [vmem:[#allocation2 + $0x158] sm:$0xff]
      %v385 = vld [vmem:[#allocation2 + $0x168] sm:$0xff]
      %v386 = vld [vmem:[#allocation2 + $0x170] sm:$0xff]
      %387 = vst [vmem:[#allocation3] sm:$0xff] %v355
      %388 = vst [vmem:[#allocation3 + $0x48] sm:$0xff] %v356
      %389 = vst [vmem:[#allocation3 + $0x90] sm:$0xff] %v357
      %390 = vst [vmem:[#allocation3 + $0xd8] sm:$0xff] %v358
      %391 = vst [vmem:[#allocation3 + $0x120] sm:$0xff] %v359
      %392 = vst [vmem:[#allocation3 + $0x168] sm:$0xff] %v360
      %393 = vst [vmem:[#allocation3 + $0x1b0] sm:$0xff] %v361
      %394 = vst [vmem:[#allocation3 + $0x1f8] sm:$0xff] %v362
      %395 = vst [vmem:[#allocation3 + $0x240] sm:$0xff] %v363
      %396 = vst [vmem:[#allocation3 + $0x288] sm:$0xff] %v364
      %397 = vst [vmem:[#allocation3 + $0x2d0] sm:$0xff] %v365
      %398 = vst [vmem:[#allocation3 + $0x318] sm:$0xff] %v366
      %399 = vst [vmem:[#allocation3 + $0x360] sm:$0xff] %v367
      %400 = vst [vmem:[#allocation3 + $0x3a8] sm:$0xff] %v368
      %401 = vst [vmem:[#allocation3 + $0x3f0] sm:$0xff] %v369
      %402 = vst [vmem:[#allocation3 + $0x438] sm:$0xff] %v370
      %403 = vst [vmem:[#allocation3 + $0x480] sm:$0xff] %v371
      %404 = vst [vmem:[#allocation3 + $0x4c8] sm:$0xff] %v372
      %405 = vst [vmem:[#allocation3 + $0x510] sm:$0xff] %v373
      %406 = vst [vmem:[#allocation3 + $0x558] sm:$0xff] %v374
      %407 = vst [vmem:[#allocation3 + $0x5a0] sm:$0xff] %v375
      %408 = vst [vmem:[#allocation3 + $0x5e8] sm:$0xff] %v376
      %409 = vst [vmem:[#allocation3 + $0x630] sm:$0xff] %v377
      %410 = vst [vmem:[#allocation3 + $0x678] sm:$0xff] %v378
      %411 = vst [vmem:[#allocation3 + $0x6c0] sm:$0xff] %v379
      %412 = vst [vmem:[#allocation3 + $0x708] sm:$0xff] %v380
      %413 = vst [vmem:[#allocation3 + $0x750] sm:$0xff] %v381
      %414 = vst [vmem:[#allocation3 + $0x798] sm:$0xff] %v382
      %415 = vst [vmem:[#allocation3 + $0x7e0] sm:$0xff] %v383
      %416 = vst [vmem:[#allocation3 + $0x828] sm:$0xff] %v384
      %417 = vst [vmem:[#allocation3 + $0x870] sm:$0xff] %v385
      %418 = vst [vmem:[#allocation3 + $0x8b8] sm:$0xff] %v386
      %v419 = vld [vmem:[#allocation2 + $0x1] sm:$0xff]
      %v420 = vld [vmem:[#allocation2 + $0x9] sm:$0xff]
      %v421 = vld [vmem:[#allocation2 + $0x19] sm:$0xff]
      %v422 = vld [vmem:[#allocation2 + $0x21] sm:$0xff]
      %v423 = vld [vmem:[#allocation2 + $0x31] sm:$0xff]
      %v424 = vld [vmem:[#allocation2 + $0x39] sm:$0xff]
      %v425 = vld [vmem:[#allocation2 + $0x49] sm:$0xff]
      %v426 = vld [vmem:[#allocation2 + $0x51] sm:$0xff]
      %v427 = vld [vmem:[#allocation2 + $0x61] sm:$0xff]
      %v428 = vld [vmem:[#allocation2 + $0x69] sm:$0xff]
      %v429 = vld [vmem:[#allocation2 + $0x79] sm:$0xff]
      %v430 = vld [vmem:[#allocation2 + $0x81] sm:$0xff]
      %v431 = vld [vmem:[#allocation2 + $0x91] sm:$0xff]
      %v432 = vld [vmem:[#allocation2 + $0x99] sm:$0xff]
      %v433 = vld [vmem:[#allocation2 + $0xa9] sm:$0xff]
      %v434 = vld [vmem:[#allocation2 + $0xb1] sm:$0xff]
      %v435 = vld [vmem:[#allocation2 + $0xc1] sm:$0xff]
      %v436 = vld [vmem:[#allocation2 + $0xc9] sm:$0xff]
      %v437 = vld [vmem:[#allocation2 + $0xd9] sm:$0xff]
      %v438 = vld [vmem:[#allocation2 + $0xe1] sm:$0xff]
      %v439 = vld [vmem:[#allocation2 + $0xf1] sm:$0xff]
      %v440 = vld [vmem:[#allocation2 + $0xf9] sm:$0xff]
      %v441 = vld [vmem:[#allocation2 + $0x109] sm:$0xff]
      %v442 = vld [vmem:[#allocation2 + $0x111] sm:$0xff]
      %v443 = vld [vmem:[#allocation2 + $0x121] sm:$0xff]
      %v444 = vld [vmem:[#allocation2 + $0x129] sm:$0xff]
      %v445 = vld [vmem:[#allocation2 + $0x139] sm:$0xff]
      %v446 = vld [vmem:[#allocation2 + $0x141] sm:$0xff]
      %v447 = vld [vmem:[#allocation2 + $0x151] sm:$0xff]
      %v448 = vld [vmem:[#allocation2 + $0x159] sm:$0xff]
      %v449 = vld [vmem:[#allocation2 + $0x169] sm:$0xff]
      %v450 = vld [vmem:[#allocation2 + $0x171] sm:$0xff]
      %451 = vst [vmem:[#allocation3 + $0x8] sm:$0xff] %v419
      %452 = vst [vmem:[#allocation3 + $0x50] sm:$0xff] %v420
      %453 = vst [vmem:[#allocation3 + $0x98] sm:$0xff] %v421
      %454 = vst [vmem:[#allocation3 + $0xe0] sm:$0xff] %v422
      %455 = vst [vmem:[#allocation3 + $0x128] sm:$0xff] %v423
      %456 = vst [vmem:[#allocation3 + $0x170] sm:$0xff] %v424
      %457 = vst [vmem:[#allocation3 + $0x1b8] sm:$0xff] %v425
      %458 = vst [vmem:[#allocation3 + $0x200] sm:$0xff] %v426
      %459 = vst [vmem:[#allocation3 + $0x248] sm:$0xff] %v427
      %460 = vst [vmem:[#allocation3 + $0x290] sm:$0xff] %v428
      %461 = vst [vmem:[#allocation3 + $0x2d8] sm:$0xff] %v429
      %462 = vst [vmem:[#allocation3 + $0x320] sm:$0xff] %v430
      %463 = vst [vmem:[#allocation3 + $0x368] sm:$0xff] %v431
      %464 = vst [vmem:[#allocation3 + $0x3b0] sm:$0xff] %v432
      %465 = vst [vmem:[#allocation3 + $0x3f8] sm:$0xff] %v433
      %466 = vst [vmem:[#allocation3 + $0x440] sm:$0xff] %v434
      %467 = vst [vmem:[#allocation3 + $0x488] sm:$0xff] %v435
      %468 = vst [vmem:[#allocation3 + $0x4d0] sm:$0xff] %v436
      %469 = vst [vmem:[#allocation3 + $0x518] sm:$0xff] %v437
      %470 = vst [vmem:[#allocation3 + $0x560] sm:$0xff] %v438
      %471 = vst [vmem:[#allocation3 + $0x5a8] sm:$0xff] %v439
      %472 = vst [vmem:[#allocation3 + $0x5f0] sm:$0xff] %v440
      %473 = vst [vmem:[#allocation3 + $0x638] sm:$0xff] %v441
      %474 = vst [vmem:[#allocation3 + $0x680] sm:$0xff] %v442
      %475 = vst [vmem:[#allocation3 + $0x6c8] sm:$0xff] %v443
      %476 = vst [vmem:[#allocation3 + $0x710] sm:$0xff] %v444
      %477 = vst [vmem:[#allocation3 + $0x758] sm:$0xff] %v445
      %478 = vst [vmem:[#allocation3 + $0x7a0] sm:$0xff] %v446
      %479 = vst [vmem:[#allocation3 + $0x7e8] sm:$0xff] %v447
      %480 = vst [vmem:[#allocation3 + $0x830] sm:$0xff] %v448
      %481 = vst [vmem:[#allocation3 + $0x878] sm:$0xff] %v449
      %482 = vst [vmem:[#allocation3 + $0x8c0] sm:$0xff] %v450
      %v483 = vld [vmem:[#allocation2 + $0x2] sm:$0xff]
      %v484 = vld [vmem:[#allocation2 + $0xa] sm:$0xff]
      %v485 = vld [vmem:[#allocation2 + $0x1a] sm:$0xff]
      %v486 = vld [vmem:[#allocation2 + $0x22] sm:$0xff]
      %v487 = vld [vmem:[#allocation2 + $0x32] sm:$0xff]
      %v488 = vld [vmem:[#allocation2 + $0x3a] sm:$0xff]
      %v489 = vld [vmem:[#allocation2 + $0x4a] sm:$0xff]
      %v490 = vld [vmem:[#allocation2 + $0x52] sm:$0xff]
      %v491 = vld [vmem:[#allocation2 + $0x62] sm:$0xff]
      %v492 = vld [vmem:[#allocation2 + $0x6a] sm:$0xff]
      %v493 = vld [vmem:[#allocation2 + $0x7a] sm:$0xff]
      %v494 = vld [vmem:[#allocation2 + $0x82] sm:$0xff]
      %v495 = vld [vmem:[#allocation2 + $0x92] sm:$0xff]
      %v496 = vld [vmem:[#allocation2 + $0x9a] sm:$0xff]
      %v497 = vld [vmem:[#allocation2 + $0xaa] sm:$0xff]
      %v498 = vld [vmem:[#allocation2 + $0xb2] sm:$0xff]
      %v499 = vld [vmem:[#allocation2 + $0xc2] sm:$0xff]
      %v500 = vld [vmem:[#allocation2 + $0xca] sm:$0xff]
      %v501 = vld [vmem:[#allocation2 + $0xda] sm:$0xff]
      %v502 = vld [vmem:[#allocation2 + $0xe2] sm:$0xff]
      %v503 = vld [vmem:[#allocation2 + $0xf2] sm:$0xff]
      %v504 = vld [vmem:[#allocation2 + $0xfa] sm:$0xff]
      %v505 = vld [vmem:[#allocation2 + $0x10a] sm:$0xff]
      %v506 = vld [vmem:[#allocation2 + $0x112] sm:$0xff]
      %v507 = vld [vmem:[#allocation2 + $0x122] sm:$0xff]
      %v508 = vld [vmem:[#allocation2 + $0x12a] sm:$0xff]
      %v509 = vld [vmem:[#allocation2 + $0x13a] sm:$0xff]
      %v510 = vld [vmem:[#allocation2 + $0x142] sm:$0xff]
      %v511 = vld [vmem:[#allocation2 + $0x152] sm:$0xff]
      %v512 = vld [vmem:[#allocation2 + $0x15a] sm:$0xff]
      %v513 = vld [vmem:[#allocation2 + $0x16a] sm:$0xff]
      %v514 = vld [vmem:[#allocation2 + $0x172] sm:$0xff]
      %515 = vst [vmem:[#allocation3 + $0x10] sm:$0xff] %v483
      %516 = vst [vmem:[#allocation3 + $0x58] sm:$0xff] %v484
      %517 = vst [vmem:[#allocation3 + $0xa0] sm:$0xff] %v485
      %518 = vst [vmem:[#allocation3 + $0xe8] sm:$0xff] %v486
      %519 = vst [vmem:[#allocation3 + $0x130] sm:$0xff] %v487
      %520 = vst [vmem:[#allocation3 + $0x178] sm:$0xff] %v488
      %521 = vst [vmem:[#allocation3 + $0x1c0] sm:$0xff] %v489
      %522 = vst [vmem:[#allocation3 + $0x208] sm:$0xff] %v490
      %523 = vst [vmem:[#allocation3 + $0x250] sm:$0xff] %v491
      %524 = vst [vmem:[#allocation3 + $0x298] sm:$0xff] %v492
      %525 = vst [vmem:[#allocation3 + $0x2e0] sm:$0xff] %v493
      %526 = vst [vmem:[#allocation3 + $0x328] sm:$0xff] %v494
      %527 = vst [vmem:[#allocation3 + $0x370] sm:$0xff] %v495
      %528 = vst [vmem:[#allocation3 + $0x3b8] sm:$0xff] %v496
      %529 = vst [vmem:[#allocation3 + $0x400] sm:$0xff] %v497
      %530 = vst [vmem:[#allocation3 + $0x448] sm:$0xff] %v498
      %531 = vst [vmem:[#allocation3 + $0x490] sm:$0xff] %v499
      %532 = vst [vmem:[#allocation3 + $0x4d8] sm:$0xff] %v500
      %533 = vst [vmem:[#allocation3 + $0x520] sm:$0xff] %v501
      %534 = vst [vmem:[#allocation3 + $0x568] sm:$0xff] %v502
      %535 = vst [vmem:[#allocation3 + $0x5b0] sm:$0xff] %v503
      %536 = vst [vmem:[#allocation3 + $0x5f8] sm:$0xff] %v504
      %537 = vst [vmem:[#allocation3 + $0x640] sm:$0xff] %v505
      %538 = vst [vmem:[#allocation3 + $0x688] sm:$0xff] %v506
      %539 = vst [vmem:[#allocation3 + $0x6d0] sm:$0xff] %v507
      %540 = vst [vmem:[#allocation3 + $0x718] sm:$0xff] %v508
      %541 = vst [vmem:[#allocation3 + $0x760] sm:$0xff] %v509
      %542 = vst [vmem:[#allocation3 + $0x7a8] sm:$0xff] %v510
      %543 = vst [vmem:[#allocation3 + $0x7f0] sm:$0xff] %v511
      %544 = vst [vmem:[#allocation3 + $0x838] sm:$0xff] %v512
      %545 = vst [vmem:[#allocation3 + $0x880] sm:$0xff] %v513
      %546 = vst [vmem:[#allocation3 + $0x8c8] sm:$0xff] %v514
      %v547 = vld [vmem:[%s322] sm:$0xff]
      %v548 = vld [vmem:[%s322 + $0x8] sm:$0xff]
      %v549 = vld [vmem:[%s322 + $0x18] sm:$0xff]
      %v550 = vld [vmem:[%s322 + $0x20] sm:$0xff]
      %v551 = vld [vmem:[%s322 + $0x30] sm:$0xff]
      %v552 = vld [vmem:[%s322 + $0x38] sm:$0xff]
      %v553 = vld [vmem:[%s322 + $0x48] sm:$0xff]
      %v554 = vld [vmem:[%s322 + $0x50] sm:$0xff]
      %v555 = vld [vmem:[%s322 + $0x60] sm:$0xff]
      %v556 = vld [vmem:[%s322 + $0x68] sm:$0xff]
      %v557 = vld [vmem:[%s322 + $0x78] sm:$0xff]
      %v558 = vld [vmem:[%s322 + $0x80] sm:$0xff]
      %v559 = vld [vmem:[%s322 + $0x90] sm:$0xff]
      %v560 = vld [vmem:[%s322 + $0x98] sm:$0xff]
      %v561 = vld [vmem:[%s322 + $0xa8] sm:$0xff]
      %v562 = vld [vmem:[%s322 + $0xb0] sm:$0xff]
      %v563 = vld [vmem:[%s322 + $0xc0] sm:$0xff]
      %v564 = vld [vmem:[%s322 + $0xc8] sm:$0xff]
      %v565 = vld [vmem:[%s322 + $0xd8] sm:$0xff]
      %v566 = vld [vmem:[%s322 + $0xe0] sm:$0xff]
      %v567 = vld [vmem:[%s322 + $0xf0] sm:$0xff]
      %v568 = vld [vmem:[%s322 + $0xf8] sm:$0xff]
      %v569 = vld [vmem:[%s322 + $0x108] sm:$0xff]
      %v570 = vld [vmem:[%s322 + $0x110] sm:$0xff]
      %v571 = vld [vmem:[%s322 + $0x120] sm:$0xff]
      %v572 = vld [vmem:[%s322 + $0x128] sm:$0xff]
      %v573 = vld [vmem:[%s322 + $0x138] sm:$0xff]
      %v574 = vld [vmem:[%s322 + $0x140] sm:$0xff]
      %v575 = vld [vmem:[%s322 + $0x150] sm:$0xff]
      %v576 = vld [vmem:[%s322 + $0x158] sm:$0xff]
      %v577 = vld [vmem:[%s322 + $0x168] sm:$0xff]
      %v578 = vld [vmem:[%s322 + $0x170] sm:$0xff]
      %579 = vst [vmem:[#allocation3 + $0x18] sm:$0xff] %v547
      %580 = vst [vmem:[#allocation3 + $0x60] sm:$0xff] %v548
      %581 = vst [vmem:[#allocation3 + $0xa8] sm:$0xff] %v549
      %582 = vst [vmem:[#allocation3 + $0xf0] sm:$0xff] %v550
      %583 = vst [vmem:[#allocation3 + $0x138] sm:$0xff] %v551
      %584 = vst [vmem:[#allocation3 + $0x180] sm:$0xff] %v552
      %585 = vst [vmem:[#allocation3 + $0x1c8] sm:$0xff] %v553
      %586 = vst [vmem:[#allocation3 + $0x210] sm:$0xff] %v554
      %587 = vst [vmem:[#allocation3 + $0x258] sm:$0xff] %v555
      %588 = vst [vmem:[#allocation3 + $0x2a0] sm:$0xff] %v556
      %589 = vst [vmem:[#allocation3 + $0x2e8] sm:$0xff] %v557
      %590 = vst [vmem:[#allocation3 + $0x330] sm:$0xff] %v558
      %591 = vst [vmem:[#allocation3 + $0x378] sm:$0xff] %v559
      %592 = vst [vmem:[#allocation3 + $0x3c0] sm:$0xff] %v560
      %593 = vst [vmem:[#allocation3 + $0x408] sm:$0xff] %v561
      %594 = vst [vmem:[#allocation3 + $0x450] sm:$0xff] %v562
      %595 = vst [vmem:[#allocation3 + $0x498] sm:$0xff] %v563
      %596 = vst [vmem:[#allocation3 + $0x4e0] sm:$0xff] %v564
      %597 = vst [vmem:[#allocation3 + $0x528] sm:$0xff] %v565
      %598 = vst [vmem:[#allocation3 + $0x570] sm:$0xff] %v566
      %599 = vst [vmem:[#allocation3 + $0x5b8] sm:$0xff] %v567
      %600 = vst [vmem:[#allocation3 + $0x600] sm:$0xff] %v568
      %601 = vst [vmem:[#allocation3 + $0x648] sm:$0xff] %v569
      %602 = vst [vmem:[#allocation3 + $0x690] sm:$0xff] %v570
      %603 = vst [vmem:[#allocation3 + $0x6d8] sm:$0xff] %v571
      %604 = vst [vmem:[#allocation3 + $0x720] sm:$0xff] %v572
      %605 = vst [vmem:[#allocation3 + $0x768] sm:$0xff] %v573
      %606 = vst [vmem:[#allocation3 + $0x7b0] sm:$0xff] %v574
      %607 = vst [vmem:[#allocation3 + $0x7f8] sm:$0xff] %v575
      %608 = vst [vmem:[#allocation3 + $0x840] sm:$0xff] %v576
      %609 = vst [vmem:[#allocation3 + $0x888] sm:$0xff] %v577
      %610 = vst [vmem:[#allocation3 + $0x8d0] sm:$0xff] %v578
      %v611 = vld [vmem:[%s322 + $0x1] sm:$0xff]
      %v612 = vld [vmem:[%s322 + $0x9] sm:$0xff]
      %v613 = vld [vmem:[%s322 + $0x19] sm:$0xff]
      %v614 = vld [vmem:[%s322 + $0x21] sm:$0xff]
      %v615 = vld [vmem:[%s322 + $0x31] sm:$0xff]
      %v616 = vld [vmem:[%s322 + $0x39] sm:$0xff]
      %v617 = vld [vmem:[%s322 + $0x49] sm:$0xff]
      %v618 = vld [vmem:[%s322 + $0x51] sm:$0xff]
      %v619 = vld [vmem:[%s322 + $0x61] sm:$0xff]
      %v620 = vld [vmem:[%s322 + $0x69] sm:$0xff]
      %v621 = vld [vmem:[%s322 + $0x79] sm:$0xff]
      %v622 = vld [vmem:[%s322 + $0x81] sm:$0xff]
      %v623 = vld [vmem:[%s322 + $0x91] sm:$0xff]
      %v624 = vld [vmem:[%s322 + $0x99] sm:$0xff]
      %v625 = vld [vmem:[%s322 + $0xa9] sm:$0xff]
      %v626 = vld [vmem:[%s322 + $0xb1] sm:$0xff]
      %v627 = vld [vmem:[%s322 + $0xc1] sm:$0xff]
      %v628 = vld [vmem:[%s322 + $0xc9] sm:$0xff]
      %v629 = vld [vmem:[%s322 + $0xd9] sm:$0xff]
      %v630 = vld [vmem:[%s322 + $0xe1] sm:$0xff]
      %v631 = vld [vmem:[%s322 + $0xf1] sm:$0xff]
      %v632 = vld [vmem:[%s322 + $0xf9] sm:$0xff]
      %v633 = vld [vmem:[%s322 + $0x109] sm:$0xff]
      %v634 = vld [vmem:[%s322 + $0x111] sm:$0xff]
      %v635 = vld [vmem:[%s322 + $0x121] sm:$0xff]
      %v636 = vld [vmem:[%s322 + $0x129] sm:$0xff]
      %v637 = vld [vmem:[%s322 + $0x139] sm:$0xff]
      %v638 = vld [vmem:[%s322 + $0x141] sm:$0xff]
      %v639 = vld [vmem:[%s322 + $0x151] sm:$0xff]
      %v640 = vld [vmem:[%s322 + $0x159] sm:$0xff]
      %v641 = vld [vmem:[%s322 + $0x169] sm:$0xff]
      %v642 = vld [vmem:[%s322 + $0x171] sm:$0xff]
      %643 = vst [vmem:[#allocation3 + $0x20] sm:$0xff] %v611
      %644 = vst [vmem:[#allocation3 + $0x68] sm:$0xff] %v612
      %645 = vst [vmem:[#allocation3 + $0xb0] sm:$0xff] %v613
      %646 = vst [vmem:[#allocation3 + $0xf8] sm:$0xff] %v614
      %647 = vst [vmem:[#allocation3 + $0x140] sm:$0xff] %v615
      %648 = vst [vmem:[#allocation3 + $0x188] sm:$0xff] %v616
      %649 = vst [vmem:[#allocation3 + $0x1d0] sm:$0xff] %v617
      %650 = vst [vmem:[#allocation3 + $0x218] sm:$0xff] %v618
      %651 = vst [vmem:[#allocation3 + $0x260] sm:$0xff] %v619
      %652 = vst [vmem:[#allocation3 + $0x2a8] sm:$0xff] %v620
      %653 = vst [vmem:[#allocation3 + $0x2f0] sm:$0xff] %v621
      %654 = vst [vmem:[#allocation3 + $0x338] sm:$0xff] %v622
      %655 = vst [vmem:[#allocation3 + $0x380] sm:$0xff] %v623
      %656 = vst [vmem:[#allocation3 + $0x3c8] sm:$0xff] %v624
      %657 = vst [vmem:[#allocation3 + $0x410] sm:$0xff] %v625
      %658 = vst [vmem:[#allocation3 + $0x458] sm:$0xff] %v626
      %659 = vst [vmem:[#allocation3 + $0x4a0] sm:$0xff] %v627
      %660 = vst [vmem:[#allocation3 + $0x4e8] sm:$0xff] %v628
      %661 = vst [vmem:[#allocation3 + $0x530] sm:$0xff] %v629
      %662 = vst [vmem:[#allocation3 + $0x578] sm:$0xff] %v630
      %663 = vst [vmem:[#allocation3 + $0x5c0] sm:$0xff] %v631
      %664 = vst [vmem:[#allocation3 + $0x608] sm:$0xff] %v632
      %665 = vst [vmem:[#allocation3 + $0x650] sm:$0xff] %v633
      %666 = vst [vmem:[#allocation3 + $0x698] sm:$0xff] %v634
      %667 = vst [vmem:[#allocation3 + $0x6e0] sm:$0xff] %v635
      %668 = vst [vmem:[#allocation3 + $0x728] sm:$0xff] %v636
      %669 = vst [vmem:[#allocation3 + $0x770] sm:$0xff] %v637
      %670 = vst [vmem:[#allocation3 + $0x7b8] sm:$0xff] %v638
      %671 = vst [vmem:[#allocation3 + $0x800] sm:$0xff] %v639
      %672 = vst [vmem:[#allocation3 + $0x848] sm:$0xff] %v640
      %673 = vst [vmem:[#allocation3 + $0x890] sm:$0xff] %v641
      %674 = vst [vmem:[#allocation3 + $0x8d8] sm:$0xff] %v642
      %v675 = vld [vmem:[%s322 + $0x2] sm:$0xff]
      %v676 = vld [vmem:[%s322 + $0xa] sm:$0xff]
      %v677 = vld [vmem:[%s322 + $0x1a] sm:$0xff]
      %v678 = vld [vmem:[%s322 + $0x22] sm:$0xff]
      %v679 = vld [vmem:[%s322 + $0x32] sm:$0xff]
      %v680 = vld [vmem:[%s322 + $0x3a] sm:$0xff]
      %v681 = vld [vmem:[%s322 + $0x4a] sm:$0xff]
      %v682 = vld [vmem:[%s322 + $0x52] sm:$0xff]
      %v683 = vld [vmem:[%s322 + $0x62] sm:$0xff]
      %v684 = vld [vmem:[%s322 + $0x6a] sm:$0xff]
      %v685 = vld [vmem:[%s322 + $0x7a] sm:$0xff]
      %v686 = vld [vmem:[%s322 + $0x82] sm:$0xff]
      %v687 = vld [vmem:[%s322 + $0x92] sm:$0xff]
      %v688 = vld [vmem:[%s322 + $0x9a] sm:$0xff]
      %v689 = vld [vmem:[%s322 + $0xaa] sm:$0xff]
      %v690 = vld [vmem:[%s322 + $0xb2] sm:$0xff]
      %v691 = vld [vmem:[%s322 + $0xc2] sm:$0xff]
      %v692 = vld [vmem:[%s322 + $0xca] sm:$0xff]
      %v693 = vld [vmem:[%s322 + $0xda] sm:$0xff]
      %v694 = vld [vmem:[%s322 + $0xe2] sm:$0xff]
      %v695 = vld [vmem:[%s322 + $0xf2] sm:$0xff]
      %v696 = vld [vmem:[%s322 + $0xfa] sm:$0xff]
      %v697 = vld [vmem:[%s322 + $0x10a] sm:$0xff]
      %v698 = vld [vmem:[%s322 + $0x112] sm:$0xff]
      %v699 = vld [vmem:[%s322 + $0x122] sm:$0xff]
      %v700 = vld [vmem:[%s322 + $0x12a] sm:$0xff]
      %v701 = vld [vmem:[%s322 + $0x13a] sm:$0xff]
      %v702 = vld [vmem:[%s322 + $0x142] sm:$0xff]
      %v703 = vld [vmem:[%s322 + $0x152] sm:$0xff]
      %v704 = vld [vmem:[%s322 + $0x15a] sm:$0xff]
      %v705 = vld [vmem:[%s322 + $0x16a] sm:$0xff]
      %v706 = vld [vmem:[%s322 + $0x172] sm:$0xff]
      %707 = vst [vmem:[#allocation3 + $0x28] sm:$0xff] %v675
      %708 = vst [vmem:[#allocation3 + $0x70] sm:$0xff] %v676
      %709 = vst [vmem:[#allocation3 + $0xb8] sm:$0xff] %v677
      %710 = vst [vmem:[#allocation3 + $0x100] sm:$0xff] %v678
      %711 = vst [vmem:[#allocation3 + $0x148] sm:$0xff] %v679
      %712 = vst [vmem:[#allocation3 + $0x190] sm:$0xff] %v680
      %713 = vst [vmem:[#allocation3 + $0x1d8] sm:$0xff] %v681
      %714 = vst [vmem:[#allocation3 + $0x220] sm:$0xff] %v682
      %715 = vst [vmem:[#allocation3 + $0x268] sm:$0xff] %v683
      %716 = vst [vmem:[#allocation3 + $0x2b0] sm:$0xff] %v684
      %717 = vst [vmem:[#allocation3 + $0x2f8] sm:$0xff] %v685
      %718 = vst [vmem:[#allocation3 + $0x340] sm:$0xff] %v686
      %719 = vst [vmem:[#allocation3 + $0x388] sm:$0xff] %v687
      %720 = vst [vmem:[#allocation3 + $0x3d0] sm:$0xff] %v688
      %721 = vst [vmem:[#allocation3 + $0x418] sm:$0xff] %v689
      %722 = vst [vmem:[#allocation3 + $0x460] sm:$0xff] %v690
      %723 = vst [vmem:[#allocation3 + $0x4a8] sm:$0xff] %v691
      %724 = vst [vmem:[#allocation3 + $0x4f0] sm:$0xff] %v692
      %725 = vst [vmem:[#allocation3 + $0x538] sm:$0xff] %v693
      %726 = vst [vmem:[#allocation3 + $0x580] sm:$0xff] %v694
      %727 = vst [vmem:[#allocation3 + $0x5c8] sm:$0xff] %v695
      %728 = vst [vmem:[#allocation3 + $0x610] sm:$0xff] %v696
      %729 = vst [vmem:[#allocation3 + $0x658] sm:$0xff] %v697
      %730 = vst [vmem:[#allocation3 + $0x6a0] sm:$0xff] %v698
      %731 = vst [vmem:[#allocation3 + $0x6e8] sm:$0xff] %v699
      %732 = vst [vmem:[#allocation3 + $0x730] sm:$0xff] %v700
      %733 = vst [vmem:[#allocation3 + $0x778] sm:$0xff] %v701
      %734 = vst [vmem:[#allocation3 + $0x7c0] sm:$0xff] %v702
      %735 = vst [vmem:[#allocation3 + $0x808] sm:$0xff] %v703
      %736 = vst [vmem:[#allocation3 + $0x850] sm:$0xff] %v704
      %737 = vst [vmem:[#allocation3 + $0x898] sm:$0xff] %v705
      %738 = vst [vmem:[#allocation3 + $0x8e0] sm:$0xff] %v706
      %s739 = scalar_lea.vmem [#allocation2], 48
      %v740 = vld [vmem:[%s739] sm:$0xff]
      %v741 = vld [vmem:[%s739 + $0x8] sm:$0xff]
      %v742 = vld [vmem:[%s739 + $0x18] sm:$0xff]
      %v743 = vld [vmem:[%s739 + $0x20] sm:$0xff]
      %v744 = vld [vmem:[%s739 + $0x30] sm:$0xff]
      %v745 = vld [vmem:[%s739 + $0x38] sm:$0xff]
      %v746 = vld [vmem:[%s739 + $0x48] sm:$0xff]
      %v747 = vld [vmem:[%s739 + $0x50] sm:$0xff]
      %v748 = vld [vmem:[%s739 + $0x60] sm:$0xff]
      %v749 = vld [vmem:[%s739 + $0x68] sm:$0xff]
      %v750 = vld [vmem:[%s739 + $0x78] sm:$0xff]
      %v751 = vld [vmem:[%s739 + $0x80] sm:$0xff]
      %v752 = vld [vmem:[%s739 + $0x90] sm:$0xff]
      %v753 = vld [vmem:[%s739 + $0x98] sm:$0xff]
      %v754 = vld [vmem:[%s739 + $0xa8] sm:$0xff]
      %v755 = vld [vmem:[%s739 + $0xb0] sm:$0xff]
      %v756 = vld [vmem:[%s739 + $0xc0] sm:$0xff]
      %v757 = vld [vmem:[%s739 + $0xc8] sm:$0xff]
      %v758 = vld [vmem:[%s739 + $0xd8] sm:$0xff]
      %v759 = vld [vmem:[%s739 + $0xe0] sm:$0xff]
      %v760 = vld [vmem:[%s739 + $0xf0] sm:$0xff]
      %v761 = vld [vmem:[%s739 + $0xf8] sm:$0xff]
      %v762 = vld [vmem:[%s739 + $0x108] sm:$0xff]
      %v763 = vld [vmem:[%s739 + $0x110] sm:$0xff]
      %v764 = vld [vmem:[%s739 + $0x120] sm:$0xff]
      %v765 = vld [vmem:[%s739 + $0x128] sm:$0xff]
      %v766 = vld [vmem:[%s739 + $0x138] sm:$0xff]
      %v767 = vld [vmem:[%s739 + $0x140] sm:$0xff]
      %v768 = vld [vmem:[%s739 + $0x150] sm:$0xff]
      %v769 = vld [vmem:[%s739 + $0x158] sm:$0xff]
      %v770 = vld [vmem:[%s739 + $0x168] sm:$0xff]
      %v771 = vld [vmem:[%s739 + $0x170] sm:$0xff]
      %772 = vst [vmem:[#allocation3 + $0x30] sm:$0xff] %v740
      %773 = vst [vmem:[#allocation3 + $0x78] sm:$0xff] %v741
      %774 = vst [vmem:[#allocation3 + $0xc0] sm:$0xff] %v742
      %775 = vst [vmem:[#allocation3 + $0x108] sm:$0xff] %v743
      %776 = vst [vmem:[#allocation3 + $0x150] sm:$0xff] %v744
      %777 = vst [vmem:[#allocation3 + $0x198] sm:$0xff] %v745
      %778 = vst [vmem:[#allocation3 + $0x1e0] sm:$0xff] %v746
      %779 = vst [vmem:[#allocation3 + $0x228] sm:$0xff] %v747
      %780 = vst [vmem:[#allocation3 + $0x270] sm:$0xff] %v748
      %781 = vst [vmem:[#allocation3 + $0x2b8] sm:$0xff] %v749
      %782 = vst [vmem:[#allocation3 + $0x300] sm:$0xff] %v750
      %783 = vst [vmem:[#allocation3 + $0x348] sm:$0xff] %v751
      %784 = vst [vmem:[#allocation3 + $0x390] sm:$0xff] %v752
      %785 = vst [vmem:[#allocation3 + $0x3d8] sm:$0xff] %v753
      %786 = vst [vmem:[#allocation3 + $0x420] sm:$0xff] %v754
      %787 = vst [vmem:[#allocation3 + $0x468] sm:$0xff] %v755
      %788 = vst [vmem:[#allocation3 + $0x4b0] sm:$0xff] %v756
      %789 = vst [vmem:[#allocation3 + $0x4f8] sm:$0xff] %v757
      %790 = vst [vmem:[#allocation3 + $0x540] sm:$0xff] %v758
      %791 = vst [vmem:[#allocation3 + $0x588] sm:$0xff] %v759
      %792 = vst [vmem:[#allocation3 + $0x5d0] sm:$0xff] %v760
      %793 = vst [vmem:[#allocation3 + $0x618] sm:$0xff] %v761
      %794 = vst [vmem:[#allocation3 + $0x660] sm:$0xff] %v762
      %795 = vst [vmem:[#allocation3 + $0x6a8] sm:$0xff] %v763
      %796 = vst [vmem:[#allocation3 + $0x6f0] sm:$0xff] %v764
      %797 = vst [vmem:[#allocation3 + $0x738] sm:$0xff] %v765
      %798 = vst [vmem:[#allocation3 + $0x780] sm:$0xff] %v766
      %799 = vst [vmem:[#allocation3 + $0x7c8] sm:$0xff] %v767
      %800 = vst [vmem:[#allocation3 + $0x810] sm:$0xff] %v768
      %801 = vst [vmem:[#allocation3 + $0x858] sm:$0xff] %v769
      %802 = vst [vmem:[#allocation3 + $0x8a0] sm:$0xff] %v770
      %803 = vst [vmem:[#allocation3 + $0x8e8] sm:$0xff] %v771
      %v804 = vld [vmem:[%s739 + $0x1] sm:$0xff]
      %v805 = vld [vmem:[%s739 + $0x9] sm:$0xff]
      %v806 = vld [vmem:[%s739 + $0x19] sm:$0xff]
      %v807 = vld [vmem:[%s739 + $0x21] sm:$0xff]
      %v808 = vld [vmem:[%s739 + $0x31] sm:$0xff]
      %v809 = vld [vmem:[%s739 + $0x39] sm:$0xff]
      %v810 = vld [vmem:[%s739 + $0x49] sm:$0xff]
      %v811 = vld [vmem:[%s739 + $0x51] sm:$0xff]
      %v812 = vld [vmem:[%s739 + $0x61] sm:$0xff]
      %v813 = vld [vmem:[%s739 + $0x69] sm:$0xff]
      %v814 = vld [vmem:[%s739 + $0x79] sm:$0xff]
      %v815 = vld [vmem:[%s739 + $0x81] sm:$0xff]
      %v816 = vld [vmem:[%s739 + $0x91] sm:$0xff]
      %v817 = vld [vmem:[%s739 + $0x99] sm:$0xff]
      %v818 = vld [vmem:[%s739 + $0xa9] sm:$0xff]
      %v819 = vld [vmem:[%s739 + $0xb1] sm:$0xff]
      %v820 = vld [vmem:[%s739 + $0xc1] sm:$0xff]
      %v821 = vld [vmem:[%s739 + $0xc9] sm:$0xff]
      %v822 = vld [vmem:[%s739 + $0xd9] sm:$0xff]
      %v823 = vld [vmem:[%s739 + $0xe1] sm:$0xff]
      %v824 = vld [vmem:[%s739 + $0xf1] sm:$0xff]
      %v825 = vld [vmem:[%s739 + $0xf9] sm:$0xff]
      %v826 = vld [vmem:[%s739 + $0x109] sm:$0xff]
      %v827 = vld [vmem:[%s739 + $0x111] sm:$0xff]
      %v828 = vld [vmem:[%s739 + $0x121] sm:$0xff]
      %v829 = vld [vmem:[%s739 + $0x129] sm:$0xff]
      %v830 = vld [vmem:[%s739 + $0x139] sm:$0xff]
      %v831 = vld [vmem:[%s739 + $0x141] sm:$0xff]
      %v832 = vld [vmem:[%s739 + $0x151] sm:$0xff]
      %v833 = vld [vmem:[%s739 + $0x159] sm:$0xff]
      %v834 = vld [vmem:[%s739 + $0x169] sm:$0xff]
      %v835 = vld [vmem:[%s739 + $0x171] sm:$0xff]
      %836 = vst [vmem:[#allocation3 + $0x38] sm:$0xff] %v804
      %837 = vst [vmem:[#allocation3 + $0x80] sm:$0xff] %v805
      %838 = vst [vmem:[#allocation3 + $0xc8] sm:$0xff] %v806
      %839 = vst [vmem:[#allocation3 + $0x110] sm:$0xff] %v807
      %840 = vst [vmem:[#allocation3 + $0x158] sm:$0xff] %v808
      %841 = vst [vmem:[#allocation3 + $0x1a0] sm:$0xff] %v809
      %842 = vst [vmem:[#allocation3 + $0x1e8] sm:$0xff] %v810
      %843 = vst [vmem:[#allocation3 + $0x230] sm:$0xff] %v811
      %844 = vst [vmem:[#allocation3 + $0x278] sm:$0xff] %v812
      %845 = vst [vmem:[#allocation3 + $0x2c0] sm:$0xff] %v813
      %846 = vst [vmem:[#allocation3 + $0x308] sm:$0xff] %v814
      %847 = vst [vmem:[#allocation3 + $0x350] sm:$0xff] %v815
      %848 = vst [vmem:[#allocation3 + $0x398] sm:$0xff] %v816
      %849 = vst [vmem:[#allocation3 + $0x3e0] sm:$0xff] %v817
      %850 = vst [vmem:[#allocation3 + $0x428] sm:$0xff] %v818
      %851 = vst [vmem:[#allocation3 + $0x470] sm:$0xff] %v819
      %852 = vst [vmem:[#allocation3 + $0x4b8] sm:$0xff] %v820
      %853 = vst [vmem:[#allocation3 + $0x500] sm:$0xff] %v821
      %854 = vst [vmem:[#allocation3 + $0x548] sm:$0xff] %v822
      %855 = vst [vmem:[#allocation3 + $0x590] sm:$0xff] %v823
      %856 = vst [vmem:[#allocation3 + $0x5d8] sm:$0xff] %v824
      %857 = vst [vmem:[#allocation3 + $0x620] sm:$0xff] %v825
      %858 = vst [vmem:[#allocation3 + $0x668] sm:$0xff] %v826
      %859 = vst [vmem:[#allocation3 + $0x6b0] sm:$0xff] %v827
      %860 = vst [vmem:[#allocation3 + $0x6f8] sm:$0xff] %v828
      %861 = vst [vmem:[#allocation3 + $0x740] sm:$0xff] %v829
      %862 = vst [vmem:[#allocation3 + $0x788] sm:$0xff] %v830
      %863 = vst [vmem:[#allocation3 + $0x7d0] sm:$0xff] %v831
      %864 = vst [vmem:[#allocation3 + $0x818] sm:$0xff] %v832
      %865 = vst [vmem:[#allocation3 + $0x860] sm:$0xff] %v833
      %866 = vst [vmem:[#allocation3 + $0x8a8] sm:$0xff] %v834
      %867 = vst [vmem:[#allocation3 + $0x8f0] sm:$0xff] %v835
      %v868 = vld [vmem:[%s739 + $0x2] sm:$0xff]
      %v869 = vld [vmem:[%s739 + $0xa] sm:$0xff]
      %v870 = vld [vmem:[%s739 + $0x1a] sm:$0xff]
      %v871 = vld [vmem:[%s739 + $0x22] sm:$0xff]
      %v872 = vld [vmem:[%s739 + $0x32] sm:$0xff]
      %v873 = vld [vmem:[%s739 + $0x3a] sm:$0xff]
      %v874 = vld [vmem:[%s739 + $0x4a] sm:$0xff]
      %v875 = vld [vmem:[%s739 + $0x52] sm:$0xff]
      %v876 = vld [vmem:[%s739 + $0x62] sm:$0xff]
      %v877 = vld [vmem:[%s739 + $0x6a] sm:$0xff]
      %v878 = vld [vmem:[%s739 + $0x7a] sm:$0xff]
      %v879 = vld [vmem:[%s739 + $0x82] sm:$0xff]
      %v880 = vld [vmem:[%s739 + $0x92] sm:$0xff]
      %v881 = vld [vmem:[%s739 + $0x9a] sm:$0xff]
      %v882 = vld [vmem:[%s739 + $0xaa] sm:$0xff]
      %v883 = vld [vmem:[%s739 + $0xb2] sm:$0xff]
      %v884 = vld [vmem:[%s739 + $0xc2] sm:$0xff]
      %v885 = vld [vmem:[%s739 + $0xca] sm:$0xff]
      %v886 = vld [vmem:[%s739 + $0xda] sm:$0xff]
      %v887 = vld [vmem:[%s739 + $0xe2] sm:$0xff]
      %v888 = vld [vmem:[%s739 + $0xf2] sm:$0xff]
      %v889 = vld [vmem:[%s739 + $0xfa] sm:$0xff]
      %v890 = vld [vmem:[%s739 + $0x10a] sm:$0xff]
      %v891 = vld [vmem:[%s739 + $0x112] sm:$0xff]
      %v892 = vld [vmem:[%s739 + $0x122] sm:$0xff]
      %v893 = vld [vmem:[%s739 + $0x12a] sm:$0xff]
      %v894 = vld [vmem:[%s739 + $0x13a] sm:$0xff]
      %v895 = vld [vmem:[%s739 + $0x142] sm:$0xff]
      %v896 = vld [vmem:[%s739 + $0x152] sm:$0xff]
      %v897 = vld [vmem:[%s739 + $0x15a] sm:$0xff]
      %v898 = vld [vmem:[%s739 + $0x16a] sm:$0xff]
      %v899 = vld [vmem:[%s739 + $0x172] sm:$0xff]
      %900 = vst [vmem:[#allocation3 + $0x40] sm:$0xff] %v868
      %901 = vst [vmem:[#allocation3 + $0x88] sm:$0xff] %v869
      %902 = vst [vmem:[#allocation3 + $0xd0] sm:$0xff] %v870
      %903 = vst [vmem:[#allocation3 + $0x118] sm:$0xff] %v871
      %904 = vst [vmem:[#allocation3 + $0x160] sm:$0xff] %v872
      %905 = vst [vmem:[#allocation3 + $0x1a8] sm:$0xff] %v873
      %906 = vst [vmem:[#allocation3 + $0x1f0] sm:$0xff] %v874
      %907 = vst [vmem:[#allocation3 + $0x238] sm:$0xff] %v875
      %908 = vst [vmem:[#allocation3 + $0x280] sm:$0xff] %v876
      %909 = vst [vmem:[#allocation3 + $0x2c8] sm:$0xff] %v877
      %910 = vst [vmem:[#allocation3 + $0x310] sm:$0xff] %v878
      %911 = vst [vmem:[#allocation3 + $0x358] sm:$0xff] %v879
      %912 = vst [vmem:[#allocation3 + $0x3a0] sm:$0xff] %v880
      %913 = vst [vmem:[#allocation3 + $0x3e8] sm:$0xff] %v881
      %914 = vst [vmem:[#allocation3 + $0x430] sm:$0xff] %v882
      %915 = vst [vmem:[#allocation3 + $0x478] sm:$0xff] %v883
      %916 = vst [vmem:[#allocation3 + $0x4c0] sm:$0xff] %v884
      %917 = vst [vmem:[#allocation3 + $0x508] sm:$0xff] %v885
      %918 = vst [vmem:[#allocation3 + $0x550] sm:$0xff] %v886
      %919 = vst [vmem:[#allocation3 + $0x598] sm:$0xff] %v887
      %920 = vst [vmem:[#allocation3 + $0x5e0] sm:$0xff] %v888
      %921 = vst [vmem:[#allocation3 + $0x628] sm:$0xff] %v889
      %922 = vst [vmem:[#allocation3 + $0x670] sm:$0xff] %v890
      %923 = vst [vmem:[#allocation3 + $0x6b8] sm:$0xff] %v891
      %924 = vst [vmem:[#allocation3 + $0x700] sm:$0xff] %v892
      %925 = vst [vmem:[#allocation3 + $0x748] sm:$0xff] %v893
      %926 = vst [vmem:[#allocation3 + $0x790] sm:$0xff] %v894
      %927 = vst [vmem:[#allocation3 + $0x7d8] sm:$0xff] %v895
      %928 = vst [vmem:[#allocation3 + $0x820] sm:$0xff] %v896
      %929 = vst [vmem:[#allocation3 + $0x868] sm:$0xff] %v897
      %930 = vst [vmem:[#allocation3 + $0x8b0] sm:$0xff] %v898
      %931 = vst [vmem:[#allocation3 + $0x8f8] sm:$0xff] %v899
      %v932 = vld [vmem:[#allocation3] sm:$0xff]
      %v933 = vld [vmem:[#allocation3 + $0x8] sm:$0xff]
      %v934 = vld [vmem:[#allocation3 + $0x10] sm:$0xff]
      %v935 = vld [vmem:[#allocation3 + $0x18] sm:$0xff]
      %v936 = vld [vmem:[#allocation3 + $0x20] sm:$0xff]
      %v937 = vld [vmem:[#allocation3 + $0x28] sm:$0xff]
      %v938 = vld [vmem:[#allocation3 + $0x30] sm:$0xff]
      %v939 = vld [vmem:[#allocation3 + $0x38] sm:$0xff]
      %v940 = vld [vmem:[#allocation3 + $0x40] sm:$0xff]
      %v941 = vld [vmem:[#allocation3 + $0x48] sm:$0xff]
      %v942 = vld [vmem:[#allocation3 + $0x50] sm:$0xff]
      %v943 = vld [vmem:[#allocation3 + $0x58] sm:$0xff]
      %v944 = vld [vmem:[#allocation3 + $0x60] sm:$0xff]
      %v945 = vld [vmem:[#allocation3 + $0x68] sm:$0xff]
      %v946 = vld [vmem:[#allocation3 + $0x70] sm:$0xff]
      %v947 = vld [vmem:[#allocation3 + $0x78] sm:$0xff]
      %v948 = vld [vmem:[#allocation3 + $0x80] sm:$0xff]
      %v949 = vld [vmem:[#allocation3 + $0x88] sm:$0xff]
      %v950 = vld [vmem:[#allocation3 + $0x90] sm:$0xff]
      %v951 = vld [vmem:[#allocation3 + $0x98] sm:$0xff]
      %v952 = vld [vmem:[#allocation3 + $0xa0] sm:$0xff]
      %v953 = vld [vmem:[#allocation3 + $0xa8] sm:$0xff]
      %v954 = vld [vmem:[#allocation3 + $0xb0] sm:$0xff]
      %v955 = vld [vmem:[#allocation3 + $0xb8] sm:$0xff]
      %v956 = vld [vmem:[#allocation3 + $0xc0] sm:$0xff]
      %v957 = vld [vmem:[#allocation3 + $0xc8] sm:$0xff]
      %v958 = vld [vmem:[#allocation3 + $0xd0] sm:$0xff]
      %v959 = vld [vmem:[#allocation3 + $0xd8] sm:$0xff]
      %v960 = vld [vmem:[#allocation3 + $0xe0] sm:$0xff]
      %v961 = vld [vmem:[#allocation3 + $0xe8] sm:$0xff]
      %v962 = vld [vmem:[#allocation3 + $0xf0] sm:$0xff]
      %v963 = vld [vmem:[#allocation3 + $0xf8] sm:$0xff]
      %v964 = vld [vmem:[#allocation3 + $0x100] sm:$0xff]
      %v965 = vld [vmem:[#allocation3 + $0x108] sm:$0xff]
      %v966 = vld [vmem:[#allocation3 + $0x110] sm:$0xff]
      %v967 = vld [vmem:[#allocation3 + $0x118] sm:$0xff]
      %v968 = vld [vmem:[#allocation3 + $0x120] sm:$0xff]
      %v969 = vld [vmem:[#allocation3 + $0x128] sm:$0xff]
      %v970 = vld [vmem:[#allocation3 + $0x130] sm:$0xff]
      %v971 = vld [vmem:[#allocation3 + $0x138] sm:$0xff]
      %v972 = vld [vmem:[#allocation3 + $0x140] sm:$0xff]
      %v973 = vld [vmem:[#allocation3 + $0x148] sm:$0xff]
      %v974 = vld [vmem:[#allocation3 + $0x150] sm:$0xff]
      %v975 = vld [vmem:[#allocation3 + $0x158] sm:$0xff]
      %v976 = vld [vmem:[#allocation3 + $0x160] sm:$0xff]
      %v977 = vld [vmem:[#allocation3 + $0x168] sm:$0xff]
      %v978 = vld [vmem:[#allocation3 + $0x170] sm:$0xff]
      %v979 = vld [vmem:[#allocation3 + $0x178] sm:$0xff]
      %v980 = vld [vmem:[#allocation3 + $0x180] sm:$0xff]
      %v981 = vld [vmem:[#allocation3 + $0x188] sm:$0xff]
      %v982 = vld [vmem:[#allocation3 + $0x190] sm:$0xff]
      %v983 = vld [vmem:[#allocation3 + $0x198] sm:$0xff]
      %v984 = vld [vmem:[#allocation3 + $0x1a0] sm:$0xff]
      %v985 = vld [vmem:[#allocation3 + $0x1a8] sm:$0xff]
      %v986 = vld [vmem:[#allocation3 + $0x1b0] sm:$0xff]
      %v987 = vld [vmem:[#allocation3 + $0x1b8] sm:$0xff]
      %v988 = vld [vmem:[#allocation3 + $0x1c0] sm:$0xff]
      %v989 = vld [vmem:[#allocation3 + $0x1c8] sm:$0xff]
      %v990 = vld [vmem:[#allocation3 + $0x1d0] sm:$0xff]
      %v991 = vld [vmem:[#allocation3 + $0x1d8] sm:$0xff]
      %v992 = vld [vmem:[#allocation3 + $0x1e0] sm:$0xff]
      %v993 = vld [vmem:[#allocation3 + $0x1e8] sm:$0xff]
      %v994 = vld [vmem:[#allocation3 + $0x1f0] sm:$0xff]
      %v995 = vld [vmem:[#allocation3 + $0x1f8] sm:$0xff]
      %v996 = vld [vmem:[#allocation3 + $0x200] sm:$0xff]
      %v997 = vld [vmem:[#allocation3 + $0x208] sm:$0xff]
      %v998 = vld [vmem:[#allocation3 + $0x210] sm:$0xff]
      %v999 = vld [vmem:[#allocation3 + $0x218] sm:$0xff]
      %v1000 = vld [vmem:[#allocation3 + $0x220] sm:$0xff]
      %v1001 = vld [vmem:[#allocation3 + $0x228] sm:$0xff]
      %v1002 = vld [vmem:[#allocation3 + $0x230] sm:$0xff]
      %v1003 = vld [vmem:[#allocation3 + $0x238] sm:$0xff]
      %v1004 = vld [vmem:[#allocation3 + $0x240] sm:$0xff]
      %v1005 = vld [vmem:[#allocation3 + $0x248] sm:$0xff]
      %v1006 = vld [vmem:[#allocation3 + $0x250] sm:$0xff]
      %v1007 = vld [vmem:[#allocation3 + $0x258] sm:$0xff]
      %v1008 = vld [vmem:[#allocation3 + $0x260] sm:$0xff]
      %v1009 = vld [vmem:[#allocation3 + $0x268] sm:$0xff]
      %v1010 = vld [vmem:[#allocation3 + $0x270] sm:$0xff]
      %v1011 = vld [vmem:[#allocation3 + $0x278] sm:$0xff]
      %v1012 = vld [vmem:[#allocation3 + $0x280] sm:$0xff]
      %v1013 = vld [vmem:[#allocation3 + $0x288] sm:$0xff]
      %v1014 = vld [vmem:[#allocation3 + $0x290] sm:$0xff]
      %v1015 = vld [vmem:[#allocation3 + $0x298] sm:$0xff]
      %v1016 = vld [vmem:[#allocation3 + $0x2a0] sm:$0xff]
      %v1017 = vld [vmem:[#allocation3 + $0x2a8] sm:$0xff]
      %v1018 = vld [vmem:[#allocation3 + $0x2b0] sm:$0xff]
      %v1019 = vld [vmem:[#allocation3 + $0x2b8] sm:$0xff]
      %v1020 = vld [vmem:[#allocation3 + $0x2c0] sm:$0xff]
      %v1021 = vld [vmem:[#allocation3 + $0x2c8] sm:$0xff]
      %v1022 = vld [vmem:[#allocation3 + $0x2d0] sm:$0xff]
      %v1023 = vld [vmem:[#allocation3 + $0x2d8] sm:$0xff]
      %v1024 = vld [vmem:[#allocation3 + $0x2e0] sm:$0xff]
      %v1025 = vld [vmem:[#allocation3 + $0x2e8] sm:$0xff]
      %v1026 = vld [vmem:[#allocation3 + $0x2f0] sm:$0xff]
      %v1027 = vld [vmem:[#allocation3 + $0x2f8] sm:$0xff]
      %v1028 = vld [vmem:[#allocation3 + $0x300] sm:$0xff]
      %v1029 = vld [vmem:[#allocation3 + $0x308] sm:$0xff]
      %v1030 = vld [vmem:[#allocation3 + $0x310] sm:$0xff]
      %v1031 = vld [vmem:[#allocation3 + $0x318] sm:$0xff]
      %v1032 = vld [vmem:[#allocation3 + $0x320] sm:$0xff]
      %v1033 = vld [vmem:[#allocation3 + $0x328] sm:$0xff]
      %v1034 = vld [vmem:[#allocation3 + $0x330] sm:$0xff]
      %v1035 = vld [vmem:[#allocation3 + $0x338] sm:$0xff]
      %v1036 = vld [vmem:[#allocation3 + $0x340] sm:$0xff]
      %v1037 = vld [vmem:[#allocation3 + $0x348] sm:$0xff]
      %v1038 = vld [vmem:[#allocation3 + $0x350] sm:$0xff]
      %v1039 = vld [vmem:[#allocation3 + $0x358] sm:$0xff]
      %v1040 = vld [vmem:[#allocation3 + $0x360] sm:$0xff]
      %v1041 = vld [vmem:[#allocation3 + $0x368] sm:$0xff]
      %v1042 = vld [vmem:[#allocation3 + $0x370] sm:$0xff]
      %v1043 = vld [vmem:[#allocation3 + $0x378] sm:$0xff]
      %v1044 = vld [vmem:[#allocation3 + $0x380] sm:$0xff]
      %v1045 = vld [vmem:[#allocation3 + $0x388] sm:$0xff]
      %v1046 = vld [vmem:[#allocation3 + $0x390] sm:$0xff]
      %v1047 = vld [vmem:[#allocation3 + $0x398] sm:$0xff]
      %v1048 = vld [vmem:[#allocation3 + $0x3a0] sm:$0xff]
      %v1049 = vld [vmem:[#allocation3 + $0x3a8] sm:$0xff]
      %v1050 = vld [vmem:[#allocation3 + $0x3b0] sm:$0xff]
      %v1051 = vld [vmem:[#allocation3 + $0x3b8] sm:$0xff]
      %v1052 = vld [vmem:[#allocation3 + $0x3c0] sm:$0xff]
      %v1053 = vld [vmem:[#allocation3 + $0x3c8] sm:$0xff]
      %v1054 = vld [vmem:[#allocation3 + $0x3d0] sm:$0xff]
      %v1055 = vld [vmem:[#allocation3 + $0x3d8] sm:$0xff]
      %v1056 = vld [vmem:[#allocation3 + $0x3e0] sm:$0xff]
      %v1057 = vld [vmem:[#allocation3 + $0x3e8] sm:$0xff]
      %v1058 = vld [vmem:[#allocation3 + $0x3f0] sm:$0xff]
      %v1059 = vld [vmem:[#allocation3 + $0x3f8] sm:$0xff]
      %v1060 = vld [vmem:[#allocation3 + $0x400] sm:$0xff]
      %v1061 = vld [vmem:[#allocation3 + $0x408] sm:$0xff]
      %v1062 = vld [vmem:[#allocation3 + $0x410] sm:$0xff]
      %v1063 = vld [vmem:[#allocation3 + $0x418] sm:$0xff]
      %v1064 = vld [vmem:[#allocation3 + $0x420] sm:$0xff]
      %v1065 = vld [vmem:[#allocation3 + $0x428] sm:$0xff]
      %v1066 = vld [vmem:[#allocation3 + $0x430] sm:$0xff]
      %v1067 = vld [vmem:[#allocation3 + $0x438] sm:$0xff]
      %v1068 = vld [vmem:[#allocation3 + $0x440] sm:$0xff]
      %v1069 = vld [vmem:[#allocation3 + $0x448] sm:$0xff]
      %v1070 = vld [vmem:[#allocation3 + $0x450] sm:$0xff]
      %v1071 = vld [vmem:[#allocation3 + $0x458] sm:$0xff]
      %v1072 = vld [vmem:[#allocation3 + $0x460] sm:$0xff]
      %v1073 = vld [vmem:[#allocation3 + $0x468] sm:$0xff]
      %v1074 = vld [vmem:[#allocation3 + $0x470] sm:$0xff]
      %v1075 = vld [vmem:[#allocation3 + $0x478] sm:$0xff]
      %v1076 = vld [vmem:[#allocation3 + $0x480] sm:$0xff]
      %v1077 = vld [vmem:[#allocation3 + $0x488] sm:$0xff]
      %v1078 = vld [vmem:[#allocation3 + $0x490] sm:$0xff]
      %v1079 = vld [vmem:[#allocation3 + $0x498] sm:$0xff]
      %v1080 = vld [vmem:[#allocation3 + $0x4a0] sm:$0xff]
      %v1081 = vld [vmem:[#allocation3 + $0x4a8] sm:$0xff]
      %v1082 = vld [vmem:[#allocation3 + $0x4b0] sm:$0xff]
      %v1083 = vld [vmem:[#allocation3 + $0x4b8] sm:$0xff]
      %v1084 = vld [vmem:[#allocation3 + $0x4c0] sm:$0xff]
      %v1085 = vld [vmem:[#allocation3 + $0x4c8] sm:$0xff]
      %v1086 = vld [vmem:[#allocation3 + $0x4d0] sm:$0xff]
      %v1087 = vld [vmem:[#allocation3 + $0x4d8] sm:$0xff]
      %v1088 = vld [vmem:[#allocation3 + $0x4e0] sm:$0xff]
      %v1089 = vld [vmem:[#allocation3 + $0x4e8] sm:$0xff]
      %v1090 = vld [vmem:[#allocation3 + $0x4f0] sm:$0xff]
      %v1091 = vld [vmem:[#allocation3 + $0x4f8] sm:$0xff]
      %v1092 = vld [vmem:[#allocation3 + $0x500] sm:$0xff]
      %v1093 = vld [vmem:[#allocation3 + $0x508] sm:$0xff]
      %v1094 = vld [vmem:[#allocation3 + $0x510] sm:$0xff]
      %v1095 = vld [vmem:[#allocation3 + $0x518] sm:$0xff]
      %v1096 = vld [vmem:[#allocation3 + $0x520] sm:$0xff]
      %v1097 = vld [vmem:[#allocation3 + $0x528] sm:$0xff]
      %v1098 = vld [vmem:[#allocation3 + $0x530] sm:$0xff]
      %v1099 = vld [vmem:[#allocation3 + $0x538] sm:$0xff]
      %v1100 = vld [vmem:[#allocation3 + $0x540] sm:$0xff]
      %v1101 = vld [vmem:[#allocation3 + $0x548] sm:$0xff]
      %v1102 = vld [vmem:[#allocation3 + $0x550] sm:$0xff]
      %v1103 = vld [vmem:[#allocation3 + $0x558] sm:$0xff]
      %v1104 = vld [vmem:[#allocation3 + $0x560] sm:$0xff]
      %v1105 = vld [vmem:[#allocation3 + $0x568] sm:$0xff]
      %v1106 = vld [vmem:[#allocation3 + $0x570] sm:$0xff]
      %v1107 = vld [vmem:[#allocation3 + $0x578] sm:$0xff]
      %v1108 = vld [vmem:[#allocation3 + $0x580] sm:$0xff]
      %v1109 = vld [vmem:[#allocation3 + $0x588] sm:$0xff]
      %v1110 = vld [vmem:[#allocation3 + $0x590] sm:$0xff]
      %v1111 = vld [vmem:[#allocation3 + $0x598] sm:$0xff]
      %v1112 = vld [vmem:[#allocation3 + $0x5a0] sm:$0xff]
      %v1113 = vld [vmem:[#allocation3 + $0x5a8] sm:$0xff]
      %v1114 = vld [vmem:[#allocation3 + $0x5b0] sm:$0xff]
      %v1115 = vld [vmem:[#allocation3 + $0x5b8] sm:$0xff]
      %v1116 = vld [vmem:[#allocation3 + $0x5c0] sm:$0xff]
      %v1117 = vld [vmem:[#allocation3 + $0x5c8] sm:$0xff]
      %v1118 = vld [vmem:[#allocation3 + $0x5d0] sm:$0xff]
      %v1119 = vld [vmem:[#allocation3 + $0x5d8] sm:$0xff]
      %v1120 = vld [vmem:[#allocation3 + $0x5e0] sm:$0xff]
      %v1121 = vld [vmem:[#allocation3 + $0x5e8] sm:$0xff]
      %v1122 = vld [vmem:[#allocation3 + $0x5f0] sm:$0xff]
      %v1123 = vld [vmem:[#allocation3 + $0x5f8] sm:$0xff]
      %v1124 = vld [vmem:[#allocation3 + $0x600] sm:$0xff]
      %v1125 = vld [vmem:[#allocation3 + $0x608] sm:$0xff]
      %v1126 = vld [vmem:[#allocation3 + $0x610] sm:$0xff]
      %v1127 = vld [vmem:[#allocation3 + $0x618] sm:$0xff]
      %v1128 = vld [vmem:[#allocation3 + $0x620] sm:$0xff]
      %v1129 = vld [vmem:[#allocation3 + $0x628] sm:$0xff]
      %v1130 = vld [vmem:[#allocation3 + $0x630] sm:$0xff]
      %v1131 = vld [vmem:[#allocation3 + $0x638] sm:$0xff]
      %v1132 = vld [vmem:[#allocation3 + $0x640] sm:$0xff]
      %v1133 = vld [vmem:[#allocation3 + $0x648] sm:$0xff]
      %v1134 = vld [vmem:[#allocation3 + $0x650] sm:$0xff]
      %v1135 = vld [vmem:[#allocation3 + $0x658] sm:$0xff]
      %v1136 = vld [vmem:[#allocation3 + $0x660] sm:$0xff]
      %v1137 = vld [vmem:[#allocation3 + $0x668] sm:$0xff]
      %v1138 = vld [vmem:[#allocation3 + $0x670] sm:$0xff]
      %v1139 = vld [vmem:[#allocation3 + $0x678] sm:$0xff]
      %v1140 = vld [vmem:[#allocation3 + $0x680] sm:$0xff]
      %v1141 = vld [vmem:[#allocation3 + $0x688] sm:$0xff]
      %v1142 = vld [vmem:[#allocation3 + $0x690] sm:$0xff]
      %v1143 = vld [vmem:[#allocation3 + $0x698] sm:$0xff]
      %v1144 = vld [vmem:[#allocation3 + $0x6a0] sm:$0xff]
      %v1145 = vld [vmem:[#allocation3 + $0x6a8] sm:$0xff]
      %v1146 = vld [vmem:[#allocation3 + $0x6b0] sm:$0xff]
      %v1147 = vld [vmem:[#allocation3 + $0x6b8] sm:$0xff]
      %v1148 = vld [vmem:[#allocation3 + $0x6c0] sm:$0xff]
      %v1149 = vld [vmem:[#allocation3 + $0x6c8] sm:$0xff]
      %v1150 = vld [vmem:[#allocation3 + $0x6d0] sm:$0xff]
      %v1151 = vld [vmem:[#allocation3 + $0x6d8] sm:$0xff]
      %v1152 = vld [vmem:[#allocation3 + $0x6e0] sm:$0xff]
      %v1153 = vld [vmem:[#allocation3 + $0x6e8] sm:$0xff]
      %v1154 = vld [vmem:[#allocation3 + $0x6f0] sm:$0xff]
      %v1155 = vld [vmem:[#allocation3 + $0x6f8] sm:$0xff]
      %v1156 = vld [vmem:[#allocation3 + $0x700] sm:$0xff]
      %v1157 = vld [vmem:[#allocation3 + $0x708] sm:$0xff]
      %v1158 = vld [vmem:[#allocation3 + $0x710] sm:$0xff]
      %v1159 = vld [vmem:[#allocation3 + $0x718] sm:$0xff]
      %v1160 = vld [vmem:[#allocation3 + $0x720] sm:$0xff]
      %v1161 = vld [vmem:[#allocation3 + $0x728] sm:$0xff]
      %v1162 = vld [vmem:[#allocation3 + $0x730] sm:$0xff]
      %v1163 = vld [vmem:[#allocation3 + $0x738] sm:$0xff]
      %v1164 = vld [vmem:[#allocation3 + $0x740] sm:$0xff]
      %v1165 = vld [vmem:[#allocation3 + $0x748] sm:$0xff]
      %v1166 = vld [vmem:[#allocation3 + $0x750] sm:$0xff]
      %v1167 = vld [vmem:[#allocation3 + $0x758] sm:$0xff]
      %v1168 = vld [vmem:[#allocation3 + $0x760] sm:$0xff]
      %v1169 = vld [vmem:[#allocation3 + $0x768] sm:$0xff]
      %v1170 = vld [vmem:[#allocation3 + $0x770] sm:$0xff]
      %v1171 = vld [vmem:[#allocation3 + $0x778] sm:$0xff]
      %v1172 = vld [vmem:[#allocation3 + $0x780] sm:$0xff]
      %v1173 = vld [vmem:[#allocation3 + $0x788] sm:$0xff]
      %v1174 = vld [vmem:[#allocation3 + $0x790] sm:$0xff]
      %v1175 = vld [vmem:[#allocation3 + $0x798] sm:$0xff]
      %v1176 = vld [vmem:[#allocation3 + $0x7a0] sm:$0xff]
      %v1177 = vld [vmem:[#allocation3 + $0x7a8] sm:$0xff]
      %v1178 = vld [vmem:[#allocation3 + $0x7b0] sm:$0xff]
      %v1179 = vld [vmem:[#allocation3 + $0x7b8] sm:$0xff]
      %v1180 = vld [vmem:[#allocation3 + $0x7c0] sm:$0xff]
      %v1181 = vld [vmem:[#allocation3 + $0x7c8] sm:$0xff]
      %v1182 = vld [vmem:[#allocation3 + $0x7d0] sm:$0xff]
      %v1183 = vld [vmem:[#allocation3 + $0x7d8] sm:$0xff]
      %v1184 = vld [vmem:[#allocation3 + $0x7e0] sm:$0xff]
      %v1185 = vld [vmem:[#allocation3 + $0x7e8] sm:$0xff]
      %v1186 = vld [vmem:[#allocation3 + $0x7f0] sm:$0xff]
      %v1187 = vld [vmem:[#allocation3 + $0x7f8] sm:$0xff]
      %v1188 = vld [vmem:[#allocation3 + $0x800] sm:$0xff]
      %v1189 = vld [vmem:[#allocation3 + $0x808] sm:$0xff]
      %v1190 = vld [vmem:[#allocation3 + $0x810] sm:$0xff]
      %v1191 = vld [vmem:[#allocation3 + $0x818] sm:$0xff]
      %v1192 = vld [vmem:[#allocation3 + $0x820] sm:$0xff]
      %v1193 = vld [vmem:[#allocation3 + $0x828] sm:$0xff]
      %v1194 = vld [vmem:[#allocation3 + $0x830] sm:$0xff]
      %v1195 = vld [vmem:[#allocation3 + $0x838] sm:$0xff]
      %v1196 = vld [vmem:[#allocation3 + $0x840] sm:$0xff]
      %v1197 = vld [vmem:[#allocation3 + $0x848] sm:$0xff]
      %v1198 = vld [vmem:[#allocation3 + $0x850] sm:$0xff]
      %v1199 = vld [vmem:[#allocation3 + $0x858] sm:$0xff]
      %v1200 = vld [vmem:[#allocation3 + $0x860] sm:$0xff]
      %v1201 = vld [vmem:[#allocation3 + $0x868] sm:$0xff]
      %v1202 = vld [vmem:[#allocation3 + $0x870] sm:$0xff]
      %v1203 = vld [vmem:[#allocation3 + $0x878] sm:$0xff]
      %v1204 = vld [vmem:[#allocation3 + $0x880] sm:$0xff]
      %v1205 = vld [vmem:[#allocation3 + $0x888] sm:$0xff]
      %v1206 = vld [vmem:[#allocation3 + $0x890] sm:$0xff]
      %v1207 = vld [vmem:[#allocation3 + $0x898] sm:$0xff]
      %v1208 = vld [vmem:[#allocation3 + $0x8a0] sm:$0xff]
      %v1209 = vld [vmem:[#allocation3 + $0x8a8] sm:$0xff]
      %v1210 = vld [vmem:[#allocation3 + $0x8b0] sm:$0xff]
      %v1211 = vld [vmem:[#allocation3 + $0x8b8] sm:$0xff]
      %v1212 = vld [vmem:[#allocation3 + $0x8c0] sm:$0xff]
      %v1213 = vld [vmem:[#allocation3 + $0x8c8] sm:$0xff]
      %v1214 = vld [vmem:[#allocation3 + $0x8d0] sm:$0xff]
      %v1215 = vld [vmem:[#allocation3 + $0x8d8] sm:$0xff]
      %v1216 = vld [vmem:[#allocation3 + $0x8e0] sm:$0xff]
      %v1217 = vld [vmem:[#allocation3 + $0x8e8] sm:$0xff]
      %v1218 = vld [vmem:[#allocation3 + $0x8f0] sm:$0xff]
      %v1219 = vld [vmem:[#allocation3 + $0x8f8] sm:$0xff]
      %v1220 = vld [vmem:[%s3] sm:$0xff]
      %v1221 = vld [vmem:[%s3 + $0x8] sm:$0xff]
      %v1222 = vld [vmem:[%s3 + $0x10] sm:$0xff]
      %v1223 = vld [vmem:[%s3 + $0x18] sm:$0xff]
      %v1224 = vld [vmem:[%s3 + $0x20] sm:$0xff]
      %v1225 = vld [vmem:[%s3 + $0x28] sm:$0xff]
      %v1226 = vld [vmem:[%s3 + $0x30] sm:$0xff]
      %v1227 = vld [vmem:[%s3 + $0x38] sm:$0xff]
      %v1228 = vld [vmem:[%s3 + $0x40] sm:$0xff]
      %v1229 = vld [vmem:[%s3 + $0x48] sm:$0xff]
      %v1230 = vld [vmem:[%s3 + $0x50] sm:$0xff]
      %v1231 = vld [vmem:[%s3 + $0x58] sm:$0xff]
      %v1232 = vld [vmem:[%s3 + $0x60] sm:$0xff]
      %v1233 = vld [vmem:[%s3 + $0x68] sm:$0xff]
      %v1234 = vld [vmem:[%s3 + $0x70] sm:$0xff]
      %v1235 = vld [vmem:[%s3 + $0x78] sm:$0xff]
      %v1236 = vld [vmem:[%s3 + $0x80] sm:$0xff]
      %v1237 = vld [vmem:[%s3 + $0x88] sm:$0xff]
      %v1238 = vld [vmem:[%s3 + $0x90] sm:$0xff]
      %v1239 = vld [vmem:[%s3 + $0x98] sm:$0xff]
      %v1240 = vld [vmem:[%s3 + $0xa0] sm:$0xff]
      %v1241 = vld [vmem:[%s3 + $0xa8] sm:$0xff]
      %v1242 = vld [vmem:[%s3 + $0xb0] sm:$0xff]
      %v1243 = vld [vmem:[%s3 + $0xb8] sm:$0xff]
      %v1244 = vld [vmem:[%s3 + $0xc0] sm:$0xff]
      %v1245 = vld [vmem:[%s3 + $0xc8] sm:$0xff]
      %v1246 = vld [vmem:[%s3 + $0xd0] sm:$0xff]
      %v1247 = vld [vmem:[%s3 + $0xd8] sm:$0xff]
      %v1248 = vld [vmem:[%s3 + $0xe0] sm:$0xff]
      %v1249 = vld [vmem:[%s3 + $0xe8] sm:$0xff]
      %v1250 = vld [vmem:[%s3 + $0xf0] sm:$0xff]
      %v1251 = vld [vmem:[%s3 + $0xf8] sm:$0xff]
      %v1252 = vld [vmem:[%s3 + $0x100] sm:$0xff]
      %v1253 = vld [vmem:[%s3 + $0x108] sm:$0xff]
      %v1254 = vld [vmem:[%s3 + $0x110] sm:$0xff]
      %v1255 = vld [vmem:[%s3 + $0x118] sm:$0xff]
      %v1256 = vld [vmem:[%s3 + $0x120] sm:$0xff]
      %v1257 = vld [vmem:[%s3 + $0x128] sm:$0xff]
      %v1258 = vld [vmem:[%s3 + $0x130] sm:$0xff]
      %v1259 = vld [vmem:[%s3 + $0x138] sm:$0xff]
      %v1260 = vld [vmem:[%s3 + $0x140] sm:$0xff]
      %v1261 = vld [vmem:[%s3 + $0x148] sm:$0xff]
      %v1262 = vld [vmem:[%s3 + $0x150] sm:$0xff]
      %v1263 = vld [vmem:[%s3 + $0x158] sm:$0xff]
      %v1264 = vld [vmem:[%s3 + $0x160] sm:$0xff]
      %v1265 = vld [vmem:[%s3 + $0x168] sm:$0xff]
      %v1266 = vld [vmem:[%s3 + $0x170] sm:$0xff]
      %v1267 = vld [vmem:[%s3 + $0x178] sm:$0xff]
      %v1268 = vld [vmem:[%s3 + $0x180] sm:$0xff]
      %v1269 = vld [vmem:[%s3 + $0x188] sm:$0xff]
      %v1270 = vld [vmem:[%s3 + $0x190] sm:$0xff]
      %v1271 = vld [vmem:[%s3 + $0x198] sm:$0xff]
      %v1272 = vld [vmem:[%s3 + $0x1a0] sm:$0xff]
      %v1273 = vld [vmem:[%s3 + $0x1a8] sm:$0xff]
      %v1274 = vld [vmem:[%s3 + $0x1b0] sm:$0xff]
      %v1275 = vld [vmem:[%s3 + $0x1b8] sm:$0xff]
      %v1276 = vld [vmem:[%s3 + $0x1c0] sm:$0xff]
      %v1277 = vld [vmem:[%s3 + $0x1c8] sm:$0xff]
      %v1278 = vld [vmem:[%s3 + $0x1d0] sm:$0xff]
      %v1279 = vld [vmem:[%s3 + $0x1d8] sm:$0xff]
      %v1280 = vld [vmem:[%s3 + $0x1e0] sm:$0xff]
      %v1281 = vld [vmem:[%s3 + $0x1e8] sm:$0xff]
      %v1282 = vld [vmem:[%s3 + $0x1f0] sm:$0xff]
      %v1283 = vld [vmem:[%s3 + $0x1f8] sm:$0xff]
      %v1284 = vld [vmem:[%s3 + $0x200] sm:$0xff]
      %v1285 = vld [vmem:[%s3 + $0x208] sm:$0xff]
      %v1286 = vld [vmem:[%s3 + $0x210] sm:$0xff]
      %v1287 = vld [vmem:[%s3 + $0x218] sm:$0xff]
      %v1288 = vld [vmem:[%s3 + $0x220] sm:$0xff]
      %v1289 = vld [vmem:[%s3 + $0x228] sm:$0xff]
      %v1290 = vld [vmem:[%s3 + $0x230] sm:$0xff]
      %v1291 = vld [vmem:[%s3 + $0x238] sm:$0xff]
      %v1292 = vld [vmem:[%s3 + $0x240] sm:$0xff]
      %v1293 = vld [vmem:[%s3 + $0x248] sm:$0xff]
      %v1294 = vld [vmem:[%s3 + $0x250] sm:$0xff]
      %v1295 = vld [vmem:[%s3 + $0x258] sm:$0xff]
      %v1296 = vld [vmem:[%s3 + $0x260] sm:$0xff]
      %v1297 = vld [vmem:[%s3 + $0x268] sm:$0xff]
      %v1298 = vld [vmem:[%s3 + $0x270] sm:$0xff]
      %v1299 = vld [vmem:[%s3 + $0x278] sm:$0xff]
      %v1300 = vld [vmem:[%s3 + $0x280] sm:$0xff]
      %v1301 = vld [vmem:[%s3 + $0x288] sm:$0xff]
      %v1302 = vld [vmem:[%s3 + $0x290] sm:$0xff]
      %v1303 = vld [vmem:[%s3 + $0x298] sm:$0xff]
      %v1304 = vld [vmem:[%s3 + $0x2a0] sm:$0xff]
      %v1305 = vld [vmem:[%s3 + $0x2a8] sm:$0xff]
      %v1306 = vld [vmem:[%s3 + $0x2b0] sm:$0xff]
      %v1307 = vld [vmem:[%s3 + $0x2b8] sm:$0xff]
      %v1308 = vld [vmem:[%s3 + $0x2c0] sm:$0xff]
      %v1309 = vld [vmem:[%s3 + $0x2c8] sm:$0xff]
      %v1310 = vld [vmem:[%s3 + $0x2d0] sm:$0xff]
      %v1311 = vld [vmem:[%s3 + $0x2d8] sm:$0xff]
      %v1312 = vld [vmem:[%s3 + $0x2e0] sm:$0xff]
      %v1313 = vld [vmem:[%s3 + $0x2e8] sm:$0xff]
      %v1314 = vld [vmem:[%s3 + $0x2f0] sm:$0xff]
      %v1315 = vld [vmem:[%s3 + $0x2f8] sm:$0xff]
      %v1316 = vld [vmem:[%s3 + $0x300] sm:$0xff]
      %v1317 = vld [vmem:[%s3 + $0x308] sm:$0xff]
      %v1318 = vld [vmem:[%s3 + $0x310] sm:$0xff]
      %v1319 = vld [vmem:[%s3 + $0x318] sm:$0xff]
      %v1320 = vld [vmem:[%s3 + $0x320] sm:$0xff]
      %v1321 = vld [vmem:[%s3 + $0x328] sm:$0xff]
      %v1322 = vld [vmem:[%s3 + $0x330] sm:$0xff]
      %v1323 = vld [vmem:[%s3 + $0x338] sm:$0xff]
      %v1324 = vld [vmem:[%s3 + $0x340] sm:$0xff]
      %v1325 = vld [vmem:[%s3 + $0x348] sm:$0xff]
      %v1326 = vld [vmem:[%s3 + $0x350] sm:$0xff]
      %v1327 = vld [vmem:[%s3 + $0x358] sm:$0xff]
      %v1328 = vld [vmem:[%s3 + $0x360] sm:$0xff]
      %v1329 = vld [vmem:[%s3 + $0x368] sm:$0xff]
      %v1330 = vld [vmem:[%s3 + $0x370] sm:$0xff]
      %v1331 = vld [vmem:[%s3 + $0x378] sm:$0xff]
      %v1332 = vld [vmem:[%s3 + $0x380] sm:$0xff]
      %v1333 = vld [vmem:[%s3 + $0x388] sm:$0xff]
      %v1334 = vld [vmem:[%s3 + $0x390] sm:$0xff]
      %v1335 = vld [vmem:[%s3 + $0x398] sm:$0xff]
      %v1336 = vld [vmem:[%s3 + $0x3a0] sm:$0xff]
      %v1337 = vld [vmem:[%s3 + $0x3a8] sm:$0xff]
      %v1338 = vld [vmem:[%s3 + $0x3b0] sm:$0xff]
      %v1339 = vld [vmem:[%s3 + $0x3b8] sm:$0xff]
      %v1340 = vld [vmem:[%s3 + $0x3c0] sm:$0xff]
      %v1341 = vld [vmem:[%s3 + $0x3c8] sm:$0xff]
      %v1342 = vld [vmem:[%s3 + $0x3d0] sm:$0xff]
      %v1343 = vld [vmem:[%s3 + $0x3d8] sm:$0xff]
      %v1344 = vld [vmem:[%s3 + $0x3e0] sm:$0xff]
      %v1345 = vld [vmem:[%s3 + $0x3e8] sm:$0xff]
      %v1346 = vld [vmem:[%s3 + $0x3f0] sm:$0xff]
      %v1347 = vld [vmem:[%s3 + $0x3f8] sm:$0xff]
      %v1348 = vld [vmem:[%s3 + $0x400] sm:$0xff]
      %v1349 = vld [vmem:[%s3 + $0x408] sm:$0xff]
      %v1350 = vld [vmem:[%s3 + $0x410] sm:$0xff]
      %v1351 = vld [vmem:[%s3 + $0x418] sm:$0xff]
      %v1352 = vld [vmem:[%s3 + $0x420] sm:$0xff]
      %v1353 = vld [vmem:[%s3 + $0x428] sm:$0xff]
      %v1354 = vld [vmem:[%s3 + $0x430] sm:$0xff]
      %v1355 = vld [vmem:[%s3 + $0x438] sm:$0xff]
      %v1356 = vld [vmem:[%s3 + $0x440] sm:$0xff]
      %v1357 = vld [vmem:[%s3 + $0x448] sm:$0xff]
      %v1358 = vld [vmem:[%s3 + $0x450] sm:$0xff]
      %v1359 = vld [vmem:[%s3 + $0x458] sm:$0xff]
      %v1360 = vld [vmem:[%s3 + $0x460] sm:$0xff]
      %v1361 = vld [vmem:[%s3 + $0x468] sm:$0xff]
      %v1362 = vld [vmem:[%s3 + $0x470] sm:$0xff]
      %v1363 = vld [vmem:[%s3 + $0x478] sm:$0xff]
      %1364 = vmatprep.subr.mxu0 0.0
      %1365 = vmatpush1.msra.mxu0 %v1220
      %1366 = vmatprep.subr.mxu0 0.0
      %1367 = vmatpush1.msra.mxu0 %v1221
      %1368 = vmatprep.subr.mxu0 0.0
      %1369 = vmatpush1.msra.mxu0 %v1222
      %1370 = vmatprep.subr.mxu0 0.0
      %1371 = vmatpush1.msra.mxu0 %v1223
      %1372 = vmatprep.subr.mxu0 0.0
      %1373 = vmatpush1.msra.mxu0 %v1224
      %1374 = vmatprep.subr.mxu0 0.0
      %1375 = vmatpush1.msra.mxu0 %v1225
      %1376 = vmatprep.subr.mxu0 0.0
      %1377 = vmatpush1.msra.mxu0 %v1226
      %1378 = vmatprep.subr.mxu0 0.0
      %1379 = vmatpush1.msra.mxu0 %v1227
      %1380 = vmatprep.subr.mxu0 0.0
      %1381 = vmatpush1.msra.mxu0 %v1228
      %1382 = vmatprep.subr.mxu0 0.0
      %1383 = vmatpush1.msra.mxu0 %v1229
      %1384 = vmatprep.subr.mxu0 0.0
      %1385 = vmatpush1.msra.mxu0 %v1230
      %1386 = vmatprep.subr.mxu0 0.0
      %1387 = vmatpush1.msra.mxu0 %v1231
      %1388 = vmatprep.subr.mxu0 0.0
      %1389 = vmatpush1.msra.mxu0 %v1232
      %1390 = vmatprep.subr.mxu0 0.0
      %1391 = vmatpush1.msra.mxu0 %v1233
      %1392 = vmatprep.subr.mxu0 0.0
      %1393 = vmatpush1.msra.mxu0 %v1234
      %1394 = vmatprep.subr.mxu0 0.0
      %1395 = vmatpush1.msra.mxu0 %v1235
      %1396 = vmatprep.subr.mxu0 0.0
      %1397 = vmatpush1.msra.mxu0 %v1236
      %1398 = vmatprep.subr.mxu0 0.0
      %1399 = vmatpush1.msra.mxu0 %v1237
      %1400 = vmatprep.subr.mxu0 0.0
      %1401 = vmatpush1.msra.mxu0 %v1238
      %1402 = vmatprep.subr.mxu0 0.0
      %1403 = vmatpush1.msra.mxu0 %v1239
      %1404 = vmatprep.subr.mxu0 0.0
      %1405 = vmatpush1.msra.mxu0 %v1240
      %1406 = vmatprep.subr.mxu0 0.0
      %1407 = vmatpush1.msra.mxu0 %v1241
      %1408 = vmatprep.subr.mxu0 0.0
      %1409 = vmatpush1.msra.mxu0 %v1242
      %1410 = vmatprep.subr.mxu0 0.0
      %1411 = vmatpush1.msra.mxu0 %v1243
      %1412 = vmatprep.subr.mxu0 0.0
      %1413 = vmatpush1.msra.mxu0 %v1244
      %1414 = vmatprep.subr.mxu0 0.0
      %1415 = vmatpush1.msra.mxu0 %v1245
      %1416 = vmatprep.subr.mxu0 0.0
      %1417 = vmatpush1.msra.mxu0 %v1246
      %1418 = vmatprep.subr.mxu0 0.0
      %1419 = vmatpush1.msra.mxu0 %v1247
      %1420 = vmatprep.subr.mxu0 0.0
      %1421 = vmatpush1.msra.mxu0 %v1248
      %1422 = vmatprep.subr.mxu0 0.0
      %1423 = vmatpush1.msra.mxu0 %v1249
      %1424 = vmatprep.subr.mxu0 0.0
      %1425 = vmatpush1.msra.mxu0 %v1250
      %1426 = vmatprep.subr.mxu0 0.0
      %1427 = vmatpush1.msra.mxu0 %v1251
      %1428 = vmatprep.mubr.f32.mxu0 %v933
      %1429 = vmatmul.mubr.f32.gmra.mrb[0].mxu0 %v932
      %v1430 = vpop.f32.mrb[0].mxu0
      %v1431 = vadd.f32 0.0, %v1430
      %v1432 = vpop.f32.mrb[0].mxu0
      %1433 = vmatprep.mubr.f32.mxu0 %v942
      %1434 = vmatmul.mubr.f32.gmra.mrb[0].mxu0 %v941
      %v1435 = vpop.f32.mrb[0].mxu0
      %v1436 = vadd.f32 0.0, %v1435
      %v1437 = vpop.f32.mrb[0].mxu0
      %1438 = vmatprep.mubr.f32.mxu0 %v951
      %1439 = vmatmul.mubr.f32.gmra.mrb[0].mxu0 %v950
      %v1440 = vpop.f32.mrb[0].mxu0
      %v1441 = vadd.f32 0.0, %v1440
      %v1442 = vpop.f32.mrb[0].mxu0
      %1443 = vmatprep.mubr.f32.mxu0 %v960
      %1444 = vmatmul.mubr.f32.gmra.mrb[0].mxu0 %v959
      %v1445 = vpop.f32.mrb[0].mxu0
      %v1446 = vadd.f32 0.0, %v1445
      %v1447 = vpop.f32.mrb[0].mxu0
      %1448 = vmatprep.mubr.f32.mxu0 %v969
      %1449 = vmatmul.mubr.f32.gmra.mrb[0].mxu0 %v968
      %v1450 = vpop.f32.mrb[0].mxu0
      %v1451 = vadd.f32 0.0, %v1450
      %v1452 = vpop.f32.mrb[0].mxu0
      %1453 = vmatprep.mubr.f32.mxu0 %v978
      %1454 = vmatmul.mubr.f32.gmra.mrb[0].mxu0 %v977
      %v1455 = vpop.f32.mrb[0].mxu0
      %v1456 = vadd.f32 0.0, %v1455
      %v1457 = vpop.f32.mrb[0].mxu0
      %1458 = vmatprep.mubr.f32.mxu0 %v987
      %1459 = vmatmul.mubr.f32.gmra.mrb[0].mxu0 %v986
      %v1460 = vpop.f32.mrb[0].mxu0
      %v1461 = vadd.f32 0.0, %v1460
      %v1462 = vpop.f32.mrb[0].mxu0
      %1463 = vmatprep.mubr.f32.mxu0 %v996
      %1464 = vmatmul.mubr.f32.gmra.mrb[0].mxu0 %v995
      %v1465 = vpop.f32.mrb[0].mxu0
      %v1466 = vadd.f32 0.0, %v1465
      %v1467 = vpop.f32.mrb[0].mxu0
      %1468 = vmatprep.mubr.f32.mxu0 %v1005
      %1469 = vmatmul.mubr.f32.gmra.mrb[0].mxu0 %v1004
      %v1470 = vpop.f32.mrb[0].mxu0
      %v1471 = vadd.f32 0.0, %v1470
      %v1472 = vpop.f32.mrb[0].mxu0
      %1473 = vmatprep.mubr.f32.mxu0 %v1014
      %1474 = vmatmul.mubr.f32.gmra.mrb[0].mxu0 %v1013
      %v1475 = vpop.f32.mrb[0].mxu0
      %v1476 = vadd.f32 0.0, %v1475
      %v1477 = vpop.f32.mrb[0].mxu0
      %1478 = vmatprep.mubr.f32.mxu0 %v1023
      %1479 = vmatmul.mubr.f32.gmra.mrb[0].mxu0 %v1022
      %v1480 = vpop.f32.mrb[0].mxu0
      %v1481 = vadd.f32 0.0, %v1480
      %v1482 = vpop.f32.mrb[0].mxu0
      %1483 = vmatprep.mubr.f32.mxu0 %v1032
      %1484 = vmatmul.mubr.f32.gmra.mrb[0].mxu0 %v1031
      %v1485 = vpop.f32.mrb[0].mxu0
      %v1486 = vadd.f32 0.0, %v1485
      %v1487 = vpop.f32.mrb[0].mxu0
      %1488 = vmatprep.mubr.f32.mxu0 %v1041
      %1489 = vmatmul.mubr.f32.gmra.mrb[0].mxu0 %v1040
      %v1490 = vpop.f32.mrb[0].mxu0
      %v1491 = vadd.f32 0.0, %v1490
      %v1492 = vpop.f32.mrb[0].mxu0
      %1493 = vmatprep.mubr.f32.mxu0 %v1050
      %1494 = vmatmul.mubr.f32.gmra.mrb[0].mxu0 %v1049
      %v1495 = vpop.f32.mrb[0].mxu0
      %v1496 = vadd.f32 0.0, %v1495
      %v1497 = vpop.f32.mrb[0].mxu0
      %1498 = vmatprep.mubr.f32.mxu0 %v1059
      %1499 = vmatmul.mubr.f32.gmra.mrb[0].mxu0 %v1058
      %v1500 = vpop.f32.mrb[0].mxu0
      %v1501 = vadd.f32 0.0, %v1500
      %v1502 = vpop.f32.mrb[0].mxu0
      %1503 = vmatprep.mubr.f32.mxu0 %v1068
      %1504 = vmatmul.mubr.f32.gmra.mrb[0].mxu0 %v1067
      %v1505 = vpop.f32.mrb[0].mxu0
      %v1506 = vadd.f32 0.0, %v1505
      %v1507 = vpop.f32.mrb[0].mxu0
      %1508 = vmatprep.mubr.f32.mxu0 %v1077
      %1509 = vmatmul.mubr.f32.gmra.mrb[0].mxu0 %v1076
      %v1510 = vpop.f32.mrb[0].mxu0
      %v1511 = vadd.f32 0.0, %v1510
      %v1512 = vpop.f32.mrb[0].mxu0
      %1513 = vmatprep.mubr.f32.mxu0 %v1086
      %1514 = vmatmul.mubr.f32.gmra.mrb[0].mxu0 %v1085
      %v1515 = vpop.f32.mrb[0].mxu0
      %v1516 = vadd.f32 0.0, %v1515
      %v1517 = vpop.f32.mrb[0].mxu0
      %1518 = vmatprep.mubr.f32.mxu0 %v1095
      %1519 = vmatmul.mubr.f32.gmra.mrb[0].mxu0 %v1094
      %v1520 = vpop.f32.mrb[0].mxu0
      %v1521 = vadd.f32 0.0, %v1520
      %v1522 = vpop.f32.mrb[0].mxu0
      %1523 = vmatprep.mubr.f32.mxu0 %v1104
      %1524 = vmatmul.mubr.f32.gmra.mrb[0].mxu0 %v1103
      %v1525 = vpop.f32.mrb[0].mxu0
      %v1526 = vadd.f32 0.0, %v1525
      %v1527 = vpop.f32.mrb[0].mxu0
      %1528 = vmatprep.mubr.f32.mxu0 %v1113
      %1529 = vmatmul.mubr.f32.gmra.mrb[0].mxu0 %v1112
      %v1530 = vpop.f32.mrb[0].mxu0
      %v1531 = vadd.f32 0.0, %v1530
      %v1532 = vpop.f32.mrb[0].mxu0
      %1533 = vmatprep.mubr.f32.mxu0 %v1122
      %1534 = vmatmul.mubr.f32.gmra.mrb[0].mxu0 %v1121
      %v1535 = vpop.f32.mrb[0].mxu0
      %v1536 = vadd.f32 0.0, %v1535
      %v1537 = vpop.f32.mrb[0].mxu0
      %1538 = vmatprep.mubr.f32.mxu0 %v1131
      %1539 = vmatmul.mubr.f32.gmra.mrb[0].mxu0 %v1130
      %v1540 = vpop.f32.mrb[0].mxu0
      %v1541 = vadd.f32 0.0, %v1540
      %v1542 = vpop.f32.mrb[0].mxu0
      %1543 = vmatprep.mubr.f32.mxu0 %v1140
      %1544 = vmatmul.mubr.f32.gmra.mrb[0].mxu0 %v1139
      %v1545 = vpop.f32.mrb[0].mxu0
      %v1546 = vadd.f32 0.0, %v1545
      %v1547 = vpop.f32.mrb[0].mxu0
      %1548 = vmatprep.mubr.f32.mxu0 %v1149
      %1549 = vmatmul.mubr.f32.gmra.mrb[0].mxu0 %v1148
      %v1550 = vpop.f32.mrb[0].mxu0
      %v1551 = vadd.f32 0.0, %v1550
      %v1552 = vpop.f32.mrb[0].mxu0
      %1553 = vmatprep.mubr.f32.mxu0 %v1158
      %1554 = vmatmul.mubr.f32.gmra.mrb[0].mxu0 %v1157
      %v1555 = vpop.f32.mrb[0].mxu0
      %v1556 = vadd.f32 0.0, %v1555
      %v1557 = vpop.f32.mrb[0].mxu0
      %1558 = vmatprep.mubr.f32.mxu0 %v1167
      %1559 = vmatmul.mubr.f32.gmra.mrb[0].mxu0 %v1166
      %v1560 = vpop.f32.mrb[0].mxu0
      %v1561 = vadd.f32 0.0, %v1560
      %v1562 = vpop.f32.mrb[0].mxu0
      %1563 = vmatprep.mubr.f32.mxu0 %v1176
      %1564 = vmatmul.mubr.f32.gmra.mrb[0].mxu0 %v1175
      %v1565 = vpop.f32.mrb[0].mxu0
      %v1566 = vadd.f32 0.0, %v1565
      %v1567 = vpop.f32.mrb[0].mxu0
      %1568 = vmatprep.mubr.f32.mxu0 %v1185
      %1569 = vmatmul.mubr.f32.gmra.mrb[0].mxu0 %v1184
      %v1570 = vpop.f32.mrb[0].mxu0
      %v1571 = vadd.f32 0.0, %v1570
      %v1572 = vpop.f32.mrb[0].mxu0
      %1573 = vmatprep.mubr.f32.mxu0 %v1194
      %1574 = vmatmul.mubr.f32.gmra.mrb[0].mxu0 %v1193
      %v1575 = vpop.f32.mrb[0].mxu0
      %v1576 = vadd.f32 0.0, %v1575
      %v1577 = vpop.f32.mrb[0].mxu0
      %1578 = vmatprep.mubr.f32.mxu0 %v1203
      %1579 = vmatmul.mubr.f32.gmra.mrb[0].mxu0 %v1202
      %v1580 = vpop.f32.mrb[0].mxu0
      %v1581 = vadd.f32 0.0, %v1580
      %v1582 = vpop.f32.mrb[0].mxu0
      %1583 = vmatprep.mubr.f32.mxu0 %v1212
      %1584 = vmatmul.mubr.f32.gmra.mrb[0].mxu0 %v1211
      %v1585 = vpop.f32.mrb[0].mxu0
      %v1586 = vadd.f32 0.0, %v1585
      %v1587 = vpop.f32.mrb[0].mxu0
      %1588 = vdwg.mxu0
      %1589 = vmatprep.subr.mxu0 0.0
      %1590 = vmatpush1.msra.mxu0 %v1252
      %1591 = vmatprep.subr.mxu0 0.0
      %1592 = vmatpush1.msra.mxu0 %v1253
      %1593 = vmatprep.subr.mxu0 0.0
      %1594 = vmatpush1.msra.mxu0 %v1254
      %1595 = vmatprep.subr.mxu0 0.0
      %1596 = vmatpush1.msra.mxu0 %v1255
      %1597 = vmatprep.subr.mxu0 0.0
      %1598 = vmatpush1.msra.mxu0 %v1256
      %1599 = vmatprep.subr.mxu0 0.0
      %1600 = vmatpush1.msra.mxu0 %v1257
      %1601 = vmatprep.subr.mxu0 0.0
      %1602 = vmatpush1.msra.mxu0 %v1258
      %1603 = vmatprep.subr.mxu0 0.0
      %1604 = vmatpush1.msra.mxu0 %v1259
      %1605 = vmatprep.subr.mxu0 0.0
      %1606 = vmatpush1.msra.mxu0 %v1260
      %1607 = vmatprep.subr.mxu0 0.0
      %1608 = vmatpush1.msra.mxu0 %v1261
      %1609 = vmatprep.subr.mxu0 0.0
      %1610 = vmatpush1.msra.mxu0 %v1262
      %1611 = vmatprep.subr.mxu0 0.0
      %1612 = vmatpush1.msra.mxu0 %v1263
      %1613 = vmatprep.subr.mxu0 0.0
      %1614 = vmatpush1.msra.mxu0 %v1264
      %1615 = vmatprep.subr.mxu0 0.0
      %1616 = vmatpush1.msra.mxu0 %v1265
      %1617 = vmatprep.subr.mxu0 0.0
      %1618 = vmatpush1.msra.mxu0 %v1266
      %1619 = vmatprep.subr.mxu0 0.0
      %1620 = vmatpush1.msra.mxu0 %v1267
      %1621 = vmatprep.subr.mxu0 0.0
      %1622 = vmatpush1.msra.mxu0 %v1268
      %1623 = vmatprep.subr.mxu0 0.0
      %1624 = vmatpush1.msra.mxu0 %v1269
      %1625 = vmatprep.subr.mxu0 0.0
      %1626 = vmatpush1.msra.mxu0 %v1270
      %1627 = vmatprep.subr.mxu0 0.0
      %1628 = vmatpush1.msra.mxu0 %v1271
      %1629 = vmatprep.subr.mxu0 0.0
      %1630 = vmatpush1.msra.mxu0 %v1272
      %1631 = vmatprep.subr.mxu0 0.0
      %1632 = vmatpush1.msra.mxu0 %v1273
      %1633 = vmatprep.subr.mxu0 0.0
      %1634 = vmatpush1.msra.mxu0 %v1274
      %1635 = vmatprep.subr.mxu0 0.0
      %1636 = vmatpush1.msra.mxu0 %v1275
      %1637 = vmatprep.subr.mxu0 0.0
      %1638 = vmatpush1.msra.mxu0 %v1276
      %1639 = vmatprep.subr.mxu0 0.0
      %1640 = vmatpush1.msra.mxu0 %v1277
      %1641 = vmatprep.subr.mxu0 0.0
      %1642 = vmatpush1.msra.mxu0 %v1278
      %1643 = vmatprep.subr.mxu0 0.0
      %1644 = vmatpush1.msra.mxu0 %v1279
      %1645 = vmatprep.subr.mxu0 0.0
      %1646 = vmatpush1.msra.mxu0 %v1280
      %1647 = vmatprep.subr.mxu0 0.0
      %1648 = vmatpush1.msra.mxu0 %v1281
      %1649 = vmatprep.subr.mxu0 0.0
      %1650 = vmatpush1.msra.mxu0 %v1282
      %1651 = vmatprep.subr.mxu0 0.0
      %1652 = vmatpush1.msra.mxu0 %v1283
      %1653 = vmatprep.mubr.f32.mxu0 %v935
      %1654 = vmatmul.mubr.f32.gmra.mrb[0].mxu0 %v934
      %v1655 = vpop.f32.mrb[0].mxu0
      %v1656 = vadd.f32 %v1431, %v1655
      %v1657 = vpop.f32.mrb[0].mxu0
      %1658 = vmatprep.mubr.f32.mxu0 %v944
      %1659 = vmatmul.mubr.f32.gmra.mrb[0].mxu0 %v943
      %v1660 = vpop.f32.mrb[0].mxu0
      %v1661 = vadd.f32 %v1436, %v1660
      %v1662 = vpop.f32.mrb[0].mxu0
      %1663 = vmatprep.mubr.f32.mxu0 %v953
      %1664 = vmatmul.mubr.f32.gmra.mrb[0].mxu0 %v952
      %v1665 = vpop.f32.mrb[0].mxu0
      %v1666 = vadd.f32 %v1441, %v1665
      %v1667 = vpop.f32.mrb[0].mxu0
      %1668 = vmatprep.mubr.f32.mxu0 %v962
      %1669 = vmatmul.mubr.f32.gmra.mrb[0].mxu0 %v961
      %v1670 = vpop.f32.mrb[0].mxu0
      %v1671 = vadd.f32 %v1446, %v1670
      %v1672 = vpop.f32.mrb[0].mxu0
      %1673 = vmatprep.mubr.f32.mxu0 %v971
      %1674 = vmatmul.mubr.f32.gmra.mrb[0].mxu0 %v970
      %v1675 = vpop.f32.mrb[0].mxu0
      %v1676 = vadd.f32 %v1451, %v1675
      %v1677 = vpop.f32.mrb[0].mxu0
      %1678 = vmatprep.mubr.f32.mxu0 %v980
      %1679 = vmatmul.mubr.f32.gmra.mrb[0].mxu0 %v979
      %v1680 = vpop.f32.mrb[0].mxu0
      %v1681 = vadd.f32 %v1456, %v1680
      %v1682 = vpop.f32.mrb[0].mxu0
      %1683 = vmatprep.mubr.f32.mxu0 %v989
      %1684 = vmatmul.mubr.f32.gmra.mrb[0].mxu0 %v988
      %v1685 = vpop.f32.mrb[0].mxu0
      %v1686 = vadd.f32 %v1461, %v1685
      %v1687 = vpop.f32.mrb[0].mxu0
      %1688 = vmatprep.mubr.f32.mxu0 %v998
      %1689 = vmatmul.mubr.f32.gmra.mrb[0].mxu0 %v997
      %v1690 = vpop.f32.mrb[0].mxu0
      %v1691 = vadd.f32 %v1466, %v1690
      %v1692 = vpop.f32.mrb[0].mxu0
      %1693 = vmatprep.mubr.f32.mxu0 %v1007
      %1694 = vmatmul.mubr.f32.gmra.mrb[0].mxu0 %v1006
      %v1695 = vpop.f32.mrb[0].mxu0
      %v1696 = vadd.f32 %v1471, %v1695
      %v1697 = vpop.f32.mrb[0].mxu0
      %1698 = vmatprep.mubr.f32.mxu0 %v1016
      %1699 = vmatmul.mubr.f32.gmra.mrb[0].mxu0 %v1015
      %v1700 = vpop.f32.mrb[0].mxu0
      %v1701 = vadd.f32 %v1476, %v1700
      %v1702 = vpop.f32.mrb[0].mxu0
      %1703 = vmatprep.mubr.f32.mxu0 %v1025
      %1704 = vmatmul.mubr.f32.gmra.mrb[0].mxu0 %v1024
      %v1705 = vpop.f32.mrb[0].mxu0
      %v1706 = vadd.f32 %v1481, %v1705
      %v1707 = vpop.f32.mrb[0].mxu0
      %1708 = vmatprep.mubr.f32.mxu0 %v1034
      %1709 = vmatmul.mubr.f32.gmra.mrb[0].mxu0 %v1033
      %v1710 = vpop.f32.mrb[0].mxu0
      %v1711 = vadd.f32 %v1486, %v1710
      %v1712 = vpop.f32.mrb[0].mxu0
      %1713 = vmatprep.mubr.f32.mxu0 %v1043
      %1714 = vmatmul.mubr.f32.gmra.mrb[0].mxu0 %v1042
      %v1715 = vpop.f32.mrb[0].mxu0
      %v1716 = vadd.f32 %v1491, %v1715
      %v1717 = vpop.f32.mrb[0].mxu0
      %1718 = vmatprep.mubr.f32.mxu0 %v1052
      %1719 = vmatmul.mubr.f32.gmra.mrb[0].mxu0 %v1051
      %v1720 = vpop.f32.mrb[0].mxu0
      %v1721 = vadd.f32 %v1496, %v1720
      %v1722 = vpop.f32.mrb[0].mxu0
      %1723 = vmatprep.mubr.f32.mxu0 %v1061
      %1724 = vmatmul.mubr.f32.gmra.mrb[0].mxu0 %v1060
      %v1725 = vpop.f32.mrb[0].mxu0
      %v1726 = vadd.f32 %v1501, %v1725
      %v1727 = vpop.f32.mrb[0].mxu0
      %1728 = vmatprep.mubr.f32.mxu0 %v1070
      %1729 = vmatmul.mubr.f32.gmra.mrb[0].mxu0 %v1069
      %v1730 = vpop.f32.mrb[0].mxu0
      %v1731 = vadd.f32 %v1506, %v1730
      %v1732 = vpop.f32.mrb[0].mxu0
      %1733 = vmatprep.mubr.f32.mxu0 %v1079
      %1734 = vmatmul.mubr.f32.gmra.mrb[0].mxu0 %v1078
      %v1735 = vpop.f32.mrb[0].mxu0
      %v1736 = vadd.f32 %v1511, %v1735
      %v1737 = vpop.f32.mrb[0].mxu0
      %1738 = vmatprep.mubr.f32.mxu0 %v1088
      %1739 = vmatmul.mubr.f32.gmra.mrb[0].mxu0 %v1087
      %v1740 = vpop.f32.mrb[0].mxu0
      %v1741 = vadd.f32 %v1516, %v1740
      %v1742 = vpop.f32.mrb[0].mxu0
      %1743 = vmatprep.mubr.f32.mxu0 %v1097
      %1744 = vmatmul.mubr.f32.gmra.mrb[0].mxu0 %v1096
      %v1745 = vpop.f32.mrb[0].mxu0
      %v1746 = vadd.f32 %v1521, %v1745
      %v1747 = vpop.f32.mrb[0].mxu0
      %1748 = vmatprep.mubr.f32.mxu0 %v1106
      %1749 = vmatmul.mubr.f32.gmra.mrb[0].mxu0 %v1105
      %v1750 = vpop.f32.mrb[0].mxu0
      %v1751 = vadd.f32 %v1526, %v1750
      %v1752 = vpop.f32.mrb[0].mxu0
      %1753 = vmatprep.mubr.f32.mxu0 %v1115
      %1754 = vmatmul.mubr.f32.gmra.mrb[0].mxu0 %v1114
      %v1755 = vpop.f32.mrb[0].mxu0
      %v1756 = vadd.f32 %v1531, %v1755
      %v1757 = vpop.f32.mrb[0].mxu0
      %1758 = vmatprep.mubr.f32.mxu0 %v1124
      %1759 = vmatmul.mubr.f32.gmra.mrb[0].mxu0 %v1123
      %v1760 = vpop.f32.mrb[0].mxu0
      %v1761 = vadd.f32 %v1536, %v1760
      %v1762 = vpop.f32.mrb[0].mxu0
      %1763 = vmatprep.mubr.f32.mxu0 %v1133
      %1764 = vmatmul.mubr.f32.gmra.mrb[0].mxu0 %v1132
      %v1765 = vpop.f32.mrb[0].mxu0
      %v1766 = vadd.f32 %v1541, %v1765
      %v1767 = vpop.f32.mrb[0].mxu0
      %1768 = vmatprep.mubr.f32.mxu0 %v1142
      %1769 = vmatmul.mubr.f32.gmra.mrb[0].mxu0 %v1141
      %v1770 = vpop.f32.mrb[0].mxu0
      %v1771 = vadd.f32 %v1546, %v1770
      %v1772 = vpop.f32.mrb[0].mxu0
      %1773 = vmatprep.mubr.f32.mxu0 %v1151
      %1774 = vmatmul.mubr.f32.gmra.mrb[0].mxu0 %v1150
      %v1775 = vpop.f32.mrb[0].mxu0
      %v1776 = vadd.f32 %v1551, %v1775
      %v1777 = vpop.f32.mrb[0].mxu0
      %1778 = vmatprep.mubr.f32.mxu0 %v1160
      %1779 = vmatmul.mubr.f32.gmra.mrb[0].mxu0 %v1159
      %v1780 = vpop.f32.mrb[0].mxu0
      %v1781 = vadd.f32 %v1556, %v1780
      %v1782 = vpop.f32.mrb[0].mxu0
      %1783 = vmatprep.mubr.f32.mxu0 %v1169
      %1784 = vmatmul.mubr.f32.gmra.mrb[0].mxu0 %v1168
      %v1785 = vpop.f32.mrb[0].mxu0
      %v1786 = vadd.f32 %v1561, %v1785
      %v1787 = vpop.f32.mrb[0].mxu0
      %1788 = vmatprep.mubr.f32.mxu0 %v1178
      %1789 = vmatmul.mubr.f32.gmra.mrb[0].mxu0 %v1177
      %v1790 = vpop.f32.mrb[0].mxu0
      %v1791 = vadd.f32 %v1566, %v1790
      %v1792 = vpop.f32.mrb[0].mxu0
      %1793 = vmatprep.mubr.f32.mxu0 %v1187
      %1794 = vmatmul.mubr.f32.gmra.mrb[0].mxu0 %v1186
      %v1795 = vpop.f32.mrb[0].mxu0
      %v1796 = vadd.f32 %v1571, %v1795
      %v1797 = vpop.f32.mrb[0].mxu0
      %1798 = vmatprep.mubr.f32.mxu0 %v1196
      %1799 = vmatmul.mubr.f32.gmra.mrb[0].mxu0 %v1195
      %v1800 = vpop.f32.mrb[0].mxu0
      %v1801 = vadd.f32 %v1576, %v1800
      %v1802 = vpop.f32.mrb[0].mxu0
      %1803 = vmatprep.mubr.f32.mxu0 %v1205
      %1804 = vmatmul.mubr.f32.gmra.mrb[0].mxu0 %v1204
      %v1805 = vpop.f32.mrb[0].mxu0
      %v1806 = vadd.f32 %v1581, %v1805
      %v1807 = vpop.f32.mrb[0].mxu0
      %1808 = vmatprep.mubr.f32.mxu0 %v1214
      %1809 = vmatmul.mubr.f32.gmra.mrb[0].mxu0 %v1213
      %v1810 = vpop.f32.mrb[0].mxu0
      %v1811 = vadd.f32 %v1586, %v1810
      %v1812 = vpop.f32.mrb[0].mxu0
      %1813 = vdwg.mxu0
      %1814 = vmatprep.subr.mxu0 0.0
      %1815 = vmatpush1.msra.mxu0 %v1284
      %1816 = vmatprep.subr.mxu0 0.0
      %1817 = vmatpush1.msra.mxu0 %v1285
      %1818 = vmatprep.subr.mxu0 0.0
      %1819 = vmatpush1.msra.mxu0 %v1286
      %1820 = vmatprep.subr.mxu0 0.0
      %1821 = vmatpush1.msra.mxu0 %v1287
      %1822 = vmatprep.subr.mxu0 0.0
      %1823 = vmatpush1.msra.mxu0 %v1288
      %1824 = vmatprep.subr.mxu0 0.0
      %1825 = vmatpush1.msra.mxu0 %v1289
      %1826 = vmatprep.subr.mxu0 0.0
      %1827 = vmatpush1.msra.mxu0 %v1290
      %1828 = vmatprep.subr.mxu0 0.0
      %1829 = vmatpush1.msra.mxu0 %v1291
      %1830 = vmatprep.subr.mxu0 0.0
      %1831 = vmatpush1.msra.mxu0 %v1292
      %1832 = vmatprep.subr.mxu0 0.0
      %1833 = vmatpush1.msra.mxu0 %v1293
      %1834 = vmatprep.subr.mxu0 0.0
      %1835 = vmatpush1.msra.mxu0 %v1294
      %1836 = vmatprep.subr.mxu0 0.0
      %1837 = vmatpush1.msra.mxu0 %v1295
      %1838 = vmatprep.subr.mxu0 0.0
      %1839 = vmatpush1.msra.mxu0 %v1296
      %1840 = vmatprep.subr.mxu0 0.0
      %1841 = vmatpush1.msra.mxu0 %v1297
      %1842 = vmatprep.subr.mxu0 0.0
      %1843 = vmatpush1.msra.mxu0 %v1298
      %1844 = vmatprep.subr.mxu0 0.0
      %1845 = vmatpush1.msra.mxu0 %v1299
      %1846 = vmatprep.subr.mxu0 0.0
      %1847 = vmatpush1.msra.mxu0 %v1300
      %1848 = vmatprep.subr.mxu0 0.0
      %1849 = vmatpush1.msra.mxu0 %v1301
      %1850 = vmatprep.subr.mxu0 0.0
      %1851 = vmatpush1.msra.mxu0 %v1302
      %1852 = vmatprep.subr.mxu0 0.0
      %1853 = vmatpush1.msra.mxu0 %v1303
      %1854 = vmatprep.subr.mxu0 0.0
      %1855 = vmatpush1.msra.mxu0 %v1304
      %1856 = vmatprep.subr.mxu0 0.0
      %1857 = vmatpush1.msra.mxu0 %v1305
      %1858 = vmatprep.subr.mxu0 0.0
      %1859 = vmatpush1.msra.mxu0 %v1306
      %1860 = vmatprep.subr.mxu0 0.0
      %1861 = vmatpush1.msra.mxu0 %v1307
      %1862 = vmatprep.subr.mxu0 0.0
      %1863 = vmatpush1.msra.mxu0 %v1308
      %1864 = vmatprep.subr.mxu0 0.0
      %1865 = vmatpush1.msra.mxu0 %v1309
      %1866 = vmatprep.subr.mxu0 0.0
      %1867 = vmatpush1.msra.mxu0 %v1310
      %1868 = vmatprep.subr.mxu0 0.0
      %1869 = vmatpush1.msra.mxu0 %v1311
      %1870 = vmatprep.subr.mxu0 0.0
      %1871 = vmatpush1.msra.mxu0 %v1312
      %1872 = vmatprep.subr.mxu0 0.0
      %1873 = vmatpush1.msra.mxu0 %v1313
      %1874 = vmatprep.subr.mxu0 0.0
      %1875 = vmatpush1.msra.mxu0 %v1314
      %1876 = vmatprep.subr.mxu0 0.0
      %1877 = vmatpush1.msra.mxu0 %v1315
      %1878 = vmatprep.mubr.f32.mxu0 %v937
      %1879 = vmatmul.mubr.f32.gmra.mrb[0].mxu0 %v936
      %v1880 = vpop.f32.mrb[0].mxu0
      %v1881 = vadd.f32 %v1656, %v1880
      %v1882 = vpop.f32.mrb[0].mxu0
      %1883 = vmatprep.mubr.f32.mxu0 %v946
      %1884 = vmatmul.mubr.f32.gmra.mrb[0].mxu0 %v945
      %v1885 = vpop.f32.mrb[0].mxu0
      %v1886 = vadd.f32 %v1661, %v1885
      %v1887 = vpop.f32.mrb[0].mxu0
      %1888 = vmatprep.mubr.f32.mxu0 %v955
      %1889 = vmatmul.mubr.f32.gmra.mrb[0].mxu0 %v954
      %v1890 = vpop.f32.mrb[0].mxu0
      %v1891 = vadd.f32 %v1666, %v1890
      %v1892 = vpop.f32.mrb[0].mxu0
      %1893 = vmatprep.mubr.f32.mxu0 %v964
      %1894 = vmatmul.mubr.f32.gmra.mrb[0].mxu0 %v963
      %v1895 = vpop.f32.mrb[0].mxu0
      %v1896 = vadd.f32 %v1671, %v1895
      %v1897 = vpop.f32.mrb[0].mxu0
      %1898 = vmatprep.mubr.f32.mxu0 %v973
      %1899 = vmatmul.mubr.f32.gmra.mrb[0].mxu0 %v972
      %v1900 = vpop.f32.mrb[0].mxu0
      %v1901 = vadd.f32 %v1676, %v1900
      %v1902 = vpop.f32.mrb[0].mxu0
      %1903 = vmatprep.mubr.f32.mxu0 %v982
      %1904 = vmatmul.mubr.f32.gmra.mrb[0].mxu0 %v981
      %v1905 = vpop.f32.mrb[0].mxu0
      %v1906 = vadd.f32 %v1681, %v1905
      %v1907 = vpop.f32.mrb[0].mxu0
      %1908 = vmatprep.mubr.f32.mxu0 %v991
      %1909 = vmatmul.mubr.f32.gmra.mrb[0].mxu0 %v990
      %v1910 = vpop.f32.mrb[0].mxu0
      %v1911 = vadd.f32 %v1686, %v1910
      %v1912 = vpop.f32.mrb[0].mxu0
      %1913 = vmatprep.mubr.f32.mxu0 %v1000
      %1914 = vmatmul.mubr.f32.gmra.mrb[0].mxu0 %v999
      %v1915 = vpop.f32.mrb[0].mxu0
      %v1916 = vadd.f32 %v1691, %v1915
      %v1917 = vpop.f32.mrb[0].mxu0
      %1918 = vmatprep.mubr.f32.mxu0 %v1009
      %1919 = vmatmul.mubr.f32.gmra.mrb[0].mxu0 %v1008
      %v1920 = vpop.f32.mrb[0].mxu0
      %v1921 = vadd.f32 %v1696, %v1920
      %v1922 = vpop.f32.mrb[0].mxu0
      %1923 = vmatprep.mubr.f32.mxu0 %v1018
      %1924 = vmatmul.mubr.f32.gmra.mrb[0].mxu0 %v1017
      %v1925 = vpop.f32.mrb[0].mxu0
      %v1926 = vadd.f32 %v1701, %v1925
      %v1927 = vpop.f32.mrb[0].mxu0
      %1928 = vmatprep.mubr.f32.mxu0 %v1027
      %1929 = vmatmul.mubr.f32.gmra.mrb[0].mxu0 %v1026
      %v1930 = vpop.f32.mrb[0].mxu0
      %v1931 = vadd.f32 %v1706, %v1930
      %v1932 = vpop.f32.mrb[0].mxu0
      %1933 = vmatprep.mubr.f32.mxu0 %v1036
      %1934 = vmatmul.mubr.f32.gmra.mrb[0].mxu0 %v1035
      %v1935 = vpop.f32.mrb[0].mxu0
      %v1936 = vadd.f32 %v1711, %v1935
      %v1937 = vpop.f32.mrb[0].mxu0
      %1938 = vmatprep.mubr.f32.mxu0 %v1045
      %1939 = vmatmul.mubr.f32.gmra.mrb[0].mxu0 %v1044
      %v1940 = vpop.f32.mrb[0].mxu0
      %v1941 = vadd.f32 %v1716, %v1940
      %v1942 = vpop.f32.mrb[0].mxu0
      %1943 = vmatprep.mubr.f32.mxu0 %v1054
      %1944 = vmatmul.mubr.f32.gmra.mrb[0].mxu0 %v1053
      %v1945 = vpop.f32.mrb[0].mxu0
      %v1946 = vadd.f32 %v1721, %v1945
      %v1947 = vpop.f32.mrb[0].mxu0
      %1948 = vmatprep.mubr.f32.mxu0 %v1063
      %1949 = vmatmul.mubr.f32.gmra.mrb[0].mxu0 %v1062
      %v1950 = vpop.f32.mrb[0].mxu0
      %v1951 = vadd.f32 %v1726, %v1950
      %v1952 = vpop.f32.mrb[0].mxu0
      %1953 = vmatprep.mubr.f32.mxu0 %v1072
      %1954 = vmatmul.mubr.f32.gmra.mrb[0].mxu0 %v1071
      %v1955 = vpop.f32.mrb[0].mxu0
      %v1956 = vadd.f32 %v1731, %v1955
      %v1957 = vpop.f32.mrb[0].mxu0
      %1958 = vmatprep.mubr.f32.mxu0 %v1081
      %1959 = vmatmul.mubr.f32.gmra.mrb[0].mxu0 %v1080
      %v1960 = vpop.f32.mrb[0].mxu0
      %v1961 = vadd.f32 %v1736, %v1960
      %v1962 = vpop.f32.mrb[0].mxu0
      %1963 = vmatprep.mubr.f32.mxu0 %v1090
      %1964 = vmatmul.mubr.f32.gmra.mrb[0].mxu0 %v1089
      %v1965 = vpop.f32.mrb[0].mxu0
      %v1966 = vadd.f32 %v1741, %v1965
      %v1967 = vpop.f32.mrb[0].mxu0
      %1968 = vmatprep.mubr.f32.mxu0 %v1099
      %1969 = vmatmul.mubr.f32.gmra.mrb[0].mxu0 %v1098
      %v1970 = vpop.f32.mrb[0].mxu0
      %v1971 = vadd.f32 %v1746, %v1970
      %v1972 = vpop.f32.mrb[0].mxu0
      %1973 = vmatprep.mubr.f32.mxu0 %v1108
      %1974 = vmatmul.mubr.f32.gmra.mrb[0].mxu0 %v1107
      %v1975 = vpop.f32.mrb[0].mxu0
      %v1976 = vadd.f32 %v1751, %v1975
      %v1977 = vpop.f32.mrb[0].mxu0
      %1978 = vmatprep.mubr.f32.mxu0 %v1117
      %1979 = vmatmul.mubr.f32.gmra.mrb[0].mxu0 %v1116
      %v1980 = vpop.f32.mrb[0].mxu0
      %v1981 = vadd.f32 %v1756, %v1980
      %v1982 = vpop.f32.mrb[0].mxu0
      %1983 = vmatprep.mubr.f32.mxu0 %v1126
      %1984 = vmatmul.mubr.f32.gmra.mrb[0].mxu0 %v1125
      %v1985 = vpop.f32.mrb[0].mxu0
      %v1986 = vadd.f32 %v1761, %v1985
      %v1987 = vpop.f32.mrb[0].mxu0
      %1988 = vmatprep.mubr.f32.mxu0 %v1135
      %1989 = vmatmul.mubr.f32.gmra.mrb[0].mxu0 %v1134
      %v1990 = vpop.f32.mrb[0].mxu0
      %v1991 = vadd.f32 %v1766, %v1990
      %v1992 = vpop.f32.mrb[0].mxu0
      %1993 = vmatprep.mubr.f32.mxu0 %v1144
      %1994 = vmatmul.mubr.f32.gmra.mrb[0].mxu0 %v1143
      %v1995 = vpop.f32.mrb[0].mxu0
      %v1996 = vadd.f32 %v1771, %v1995
      %v1997 = vpop.f32.mrb[0].mxu0
      %1998 = vmatprep.mubr.f32.mxu0 %v1153
      %1999 = vmatmul.mubr.f32.gmra.mrb[0].mxu0 %v1152
      %v2000 = vpop.f32.mrb[0].mxu0
      %v2001 = vadd.f32 %v1776, %v2000
      %v2002 = vpop.f32.mrb[0].mxu0
      %2003 = vmatprep.mubr.f32.mxu0 %v1162
      %2004 = vmatmul.mubr.f32.gmra.mrb[0].mxu0 %v1161
      %v2005 = vpop.f32.mrb[0].mxu0
      %v2006 = vadd.f32 %v1781, %v2005
      %v2007 = vpop.f32.mrb[0].mxu0
      %2008 = vmatprep.mubr.f32.mxu0 %v1171
      %2009 = vmatmul.mubr.f32.gmra.mrb[0].mxu0 %v1170
      %v2010 = vpop.f32.mrb[0].mxu0
      %v2011 = vadd.f32 %v1786, %v2010
      %v2012 = vpop.f32.mrb[0].mxu0
      %2013 = vmatprep.mubr.f32.mxu0 %v1180
      %2014 = vmatmul.mubr.f32.gmra.mrb[0].mxu0 %v1179
      %v2015 = vpop.f32.mrb[0].mxu0
      %v2016 = vadd.f32 %v1791, %v2015
      %v2017 = vpop.f32.mrb[0].mxu0
      %2018 = vmatprep.mubr.f32.mxu0 %v1189
      %2019 = vmatmul.mubr.f32.gmra.mrb[0].mxu0 %v1188
      %v2020 = vpop.f32.mrb[0].mxu0
      %v2021 = vadd.f32 %v1796, %v2020
      %v2022 = vpop.f32.mrb[0].mxu0
      %2023 = vmatprep.mubr.f32.mxu0 %v1198
      %2024 = vmatmul.mubr.f32.gmra.mrb[0].mxu0 %v1197
      %v2025 = vpop.f32.mrb[0].mxu0
      %v2026 = vadd.f32 %v1801, %v2025
      %v2027 = vpop.f32.mrb[0].mxu0
      %2028 = vmatprep.mubr.f32.mxu0 %v1207
      %2029 = vmatmul.mubr.f32.gmra.mrb[0].mxu0 %v1206
      %v2030 = vpop.f32.mrb[0].mxu0
      %v2031 = vadd.f32 %v1806, %v2030
      %v2032 = vpop.f32.mrb[0].mxu0
      %2033 = vmatprep.mubr.f32.mxu0 %v1216
      %2034 = vmatmul.mubr.f32.gmra.mrb[0].mxu0 %v1215
      %v2035 = vpop.f32.mrb[0].mxu0
      %v2036 = vadd.f32 %v1811, %v2035
      %v2037 = vpop.f32.mrb[0].mxu0
      %2038 = vdwg.mxu0
      %2039 = vmatprep.subr.mxu0 0.0
      %2040 = vmatpush1.msra.mxu0 %v1316
      %2041 = vmatprep.subr.mxu0 0.0
      %2042 = vmatpush1.msra.mxu0 %v1317
      %2043 = vmatprep.subr.mxu0 0.0
      %2044 = vmatpush1.msra.mxu0 %v1318
      %2045 = vmatprep.subr.mxu0 0.0
      %2046 = vmatpush1.msra.mxu0 %v1319
      %2047 = vmatprep.subr.mxu0 0.0
      %2048 = vmatpush1.msra.mxu0 %v1320
      %2049 = vmatprep.subr.mxu0 0.0
      %2050 = vmatpush1.msra.mxu0 %v1321
      %2051 = vmatprep.subr.mxu0 0.0
      %2052 = vmatpush1.msra.mxu0 %v1322
      %2053 = vmatprep.subr.mxu0 0.0
      %2054 = vmatpush1.msra.mxu0 %v1323
      %2055 = vmatprep.subr.mxu0 0.0
      %2056 = vmatpush1.msra.mxu0 %v1324
      %2057 = vmatprep.subr.mxu0 0.0
      %2058 = vmatpush1.msra.mxu0 %v1325
      %2059 = vmatprep.subr.mxu0 0.0
      %2060 = vmatpush1.msra.mxu0 %v1326
      %2061 = vmatprep.subr.mxu0 0.0
      %2062 = vmatpush1.msra.mxu0 %v1327
      %2063 = vmatprep.subr.mxu0 0.0
      %2064 = vmatpush1.msra.mxu0 %v1328
      %2065 = vmatprep.subr.mxu0 0.0
      %2066 = vmatpush1.msra.mxu0 %v1329
      %2067 = vmatprep.subr.mxu0 0.0
      %2068 = vmatpush1.msra.mxu0 %v1330
      %2069 = vmatprep.subr.mxu0 0.0
      %2070 = vmatpush1.msra.mxu0 %v1331
      %2071 = vmatprep.subr.mxu0 0.0
      %2072 = vmatpush1.msra.mxu0 %v1332
      %2073 = vmatprep.subr.mxu0 0.0
      %2074 = vmatpush1.msra.mxu0 %v1333
      %2075 = vmatprep.subr.mxu0 0.0
      %2076 = vmatpush1.msra.mxu0 %v1334
      %2077 = vmatprep.subr.mxu0 0.0
      %2078 = vmatpush1.msra.mxu0 %v1335
      %2079 = vmatprep.subr.mxu0 0.0
      %2080 = vmatpush1.msra.mxu0 %v1336
      %2081 = vmatprep.subr.mxu0 0.0
      %2082 = vmatpush1.msra.mxu0 %v1337
      %2083 = vmatprep.subr.mxu0 0.0
      %2084 = vmatpush1.msra.mxu0 %v1338
      %2085 = vmatprep.subr.mxu0 0.0
      %2086 = vmatpush1.msra.mxu0 %v1339
      %2087 = vmatprep.subr.mxu0 0.0
      %2088 = vmatpush1.msra.mxu0 %v1340
      %2089 = vmatprep.subr.mxu0 0.0
      %2090 = vmatpush1.msra.mxu0 %v1341
      %2091 = vmatprep.subr.mxu0 0.0
      %2092 = vmatpush1.msra.mxu0 %v1342
      %2093 = vmatprep.subr.mxu0 0.0
      %2094 = vmatpush1.msra.mxu0 %v1343
      %2095 = vmatprep.subr.mxu0 0.0
      %2096 = vmatpush1.msra.mxu0 %v1344
      %2097 = vmatprep.subr.mxu0 0.0
      %2098 = vmatpush1.msra.mxu0 %v1345
      %2099 = vmatprep.subr.mxu0 0.0
      %2100 = vmatpush1.msra.mxu0 %v1346
      %2101 = vmatprep.subr.mxu0 0.0
      %2102 = vmatpush1.msra.mxu0 %v1347
      %2103 = vmatprep.mubr.f32.mxu0 %v939
      %2104 = vmatmul.mubr.f32.gmra.mrb[0].mxu0 %v938
      %v2105 = vpop.f32.mrb[0].mxu0
      %v2106 = vadd.f32 %v1881, %v2105
      %v2107 = vpop.f32.mrb[0].mxu0
      %2108 = vmatprep.mubr.f32.mxu0 %v948
      %2109 = vmatmul.mubr.f32.gmra.mrb[0].mxu0 %v947
      %v2110 = vpop.f32.mrb[0].mxu0
      %v2111 = vadd.f32 %v1886, %v2110
      %v2112 = vpop.f32.mrb[0].mxu0
      %2113 = vmatprep.mubr.f32.mxu0 %v957
      %2114 = vmatmul.mubr.f32.gmra.mrb[0].mxu0 %v956
      %v2115 = vpop.f32.mrb[0].mxu0
      %v2116 = vadd.f32 %v1891, %v2115
      %v2117 = vpop.f32.mrb[0].mxu0
      %2118 = vmatprep.mubr.f32.mxu0 %v966
      %2119 = vmatmul.mubr.f32.gmra.mrb[0].mxu0 %v965
      %v2120 = vpop.f32.mrb[0].mxu0
      %v2121 = vadd.f32 %v1896, %v2120
      %v2122 = vpop.f32.mrb[0].mxu0
      %2123 = vmatprep.mubr.f32.mxu0 %v975
      %2124 = vmatmul.mubr.f32.gmra.mrb[0].mxu0 %v974
      %v2125 = vpop.f32.mrb[0].mxu0
      %v2126 = vadd.f32 %v1901, %v2125
      %v2127 = vpop.f32.mrb[0].mxu0
      %2128 = vmatprep.mubr.f32.mxu0 %v984
      %2129 = vmatmul.mubr.f32.gmra.mrb[0].mxu0 %v983
      %v2130 = vpop.f32.mrb[0].mxu0
      %v2131 = vadd.f32 %v1906, %v2130
      %v2132 = vpop.f32.mrb[0].mxu0
      %2133 = vmatprep.mubr.f32.mxu0 %v993
      %2134 = vmatmul.mubr.f32.gmra.mrb[0].mxu0 %v992
      %v2135 = vpop.f32.mrb[0].mxu0
      %v2136 = vadd.f32 %v1911, %v2135
      %v2137 = vpop.f32.mrb[0].mxu0
      %2138 = vmatprep.mubr.f32.mxu0 %v1002
      %2139 = vmatmul.mubr.f32.gmra.mrb[0].mxu0 %v1001
      %v2140 = vpop.f32.mrb[0].mxu0
      %v2141 = vadd.f32 %v1916, %v2140
      %v2142 = vpop.f32.mrb[0].mxu0
      %2143 = vmatprep.mubr.f32.mxu0 %v1011
      %2144 = vmatmul.mubr.f32.gmra.mrb[0].mxu0 %v1010
      %v2145 = vpop.f32.mrb[0].mxu0
      %v2146 = vadd.f32 %v1921, %v2145
      %v2147 = vpop.f32.mrb[0].mxu0
      %2148 = vmatprep.mubr.f32.mxu0 %v1020
      %2149 = vmatmul.mubr.f32.gmra.mrb[0].mxu0 %v1019
      %v2150 = vpop.f32.mrb[0].mxu0
      %v2151 = vadd.f32 %v1926, %v2150
      %v2152 = vpop.f32.mrb[0].mxu0
      %2153 = vmatprep.mubr.f32.mxu0 %v1029
      %2154 = vmatmul.mubr.f32.gmra.mrb[0].mxu0 %v1028
      %v2155 = vpop.f32.mrb[0].mxu0
      %v2156 = vadd.f32 %v1931, %v2155
      %v2157 = vpop.f32.mrb[0].mxu0
      %2158 = vmatprep.mubr.f32.mxu0 %v1038
      %2159 = vmatmul.mubr.f32.gmra.mrb[0].mxu0 %v1037
      %v2160 = vpop.f32.mrb[0].mxu0
      %v2161 = vadd.f32 %v1936, %v2160
      %v2162 = vpop.f32.mrb[0].mxu0
      %2163 = vmatprep.mubr.f32.mxu0 %v1047
      %2164 = vmatmul.mubr.f32.gmra.mrb[0].mxu0 %v1046
      %v2165 = vpop.f32.mrb[0].mxu0
      %v2166 = vadd.f32 %v1941, %v2165
      %v2167 = vpop.f32.mrb[0].mxu0
      %2168 = vmatprep.mubr.f32.mxu0 %v1056
      %2169 = vmatmul.mubr.f32.gmra.mrb[0].mxu0 %v1055
      %v2170 = vpop.f32.mrb[0].mxu0
      %v2171 = vadd.f32 %v1946, %v2170
      %v2172 = vpop.f32.mrb[0].mxu0
      %2173 = vmatprep.mubr.f32.mxu0 %v1065
      %2174 = vmatmul.mubr.f32.gmra.mrb[0].mxu0 %v1064
      %v2175 = vpop.f32.mrb[0].mxu0
      %v2176 = vadd.f32 %v1951, %v2175
      %v2177 = vpop.f32.mrb[0].mxu0
      %2178 = vmatprep.mubr.f32.mxu0 %v1074
      %2179 = vmatmul.mubr.f32.gmra.mrb[0].mxu0 %v1073
      %v2180 = vpop.f32.mrb[0].mxu0
      %v2181 = vadd.f32 %v1956, %v2180
      %v2182 = vpop.f32.mrb[0].mxu0
      %2183 = vmatprep.mubr.f32.mxu0 %v1083
      %2184 = vmatmul.mubr.f32.gmra.mrb[0].mxu0 %v1082
      %v2185 = vpop.f32.mrb[0].mxu0
      %v2186 = vadd.f32 %v1961, %v2185
      %v2187 = vpop.f32.mrb[0].mxu0
      %2188 = vmatprep.mubr.f32.mxu0 %v1092
      %2189 = vmatmul.mubr.f32.gmra.mrb[0].mxu0 %v1091
      %v2190 = vpop.f32.mrb[0].mxu0
      %v2191 = vadd.f32 %v1966, %v2190
      %v2192 = vpop.f32.mrb[0].mxu0
      %2193 = vmatprep.mubr.f32.mxu0 %v1101
      %2194 = vmatmul.mubr.f32.gmra.mrb[0].mxu0 %v1100
      %v2195 = vpop.f32.mrb[0].mxu0
      %v2196 = vadd.f32 %v1971, %v2195
      %v2197 = vpop.f32.mrb[0].mxu0
      %2198 = vmatprep.mubr.f32.mxu0 %v1110
      %2199 = vmatmul.mubr.f32.gmra.mrb[0].mxu0 %v1109
      %v2200 = vpop.f32.mrb[0].mxu0
      %v2201 = vadd.f32 %v1976, %v2200
      %v2202 = vpop.f32.mrb[0].mxu0
      %2203 = vmatprep.mubr.f32.mxu0 %v1119
      %2204 = vmatmul.mubr.f32.gmra.mrb[0].mxu0 %v1118
      %v2205 = vpop.f32.mrb[0].mxu0
      %v2206 = vadd.f32 %v1981, %v2205
      %v2207 = vpop.f32.mrb[0].mxu0
      %2208 = vmatprep.mubr.f32.mxu0 %v1128
      %2209 = vmatmul.mubr.f32.gmra.mrb[0].mxu0 %v1127
      %v2210 = vpop.f32.mrb[0].mxu0
      %v2211 = vadd.f32 %v1986, %v2210
      %v2212 = vpop.f32.mrb[0].mxu0
      %2213 = vmatprep.mubr.f32.mxu0 %v1137
      %2214 = vmatmul.mubr.f32.gmra.mrb[0].mxu0 %v1136
      %v2215 = vpop.f32.mrb[0].mxu0
      %v2216 = vadd.f32 %v1991, %v2215
      %v2217 = vpop.f32.mrb[0].mxu0
      %2218 = vmatprep.mubr.f32.mxu0 %v1146
      %2219 = vmatmul.mubr.f32.gmra.mrb[0].mxu0 %v1145
      %v2220 = vpop.f32.mrb[0].mxu0
      %v2221 = vadd.f32 %v1996, %v2220
      %v2222 = vpop.f32.mrb[0].mxu0
      %2223 = vmatprep.mubr.f32.mxu0 %v1155
      %2224 = vmatmul.mubr.f32.gmra.mrb[0].mxu0 %v1154
      %v2225 = vpop.f32.mrb[0].mxu0
      %v2226 = vadd.f32 %v2001, %v2225
      %v2227 = vpop.f32.mrb[0].mxu0
      %2228 = vmatprep.mubr.f32.mxu0 %v1164
      %2229 = vmatmul.mubr.f32.gmra.mrb[0].mxu0 %v1163
      %v2230 = vpop.f32.mrb[0].mxu0
      %v2231 = vadd.f32 %v2006, %v2230
      %v2232 = vpop.f32.mrb[0].mxu0
      %2233 = vmatprep.mubr.f32.mxu0 %v1173
      %2234 = vmatmul.mubr.f32.gmra.mrb[0].mxu0 %v1172
      %v2235 = vpop.f32.mrb[0].mxu0
      %v2236 = vadd.f32 %v2011, %v2235
      %v2237 = vpop.f32.mrb[0].mxu0
      %2238 = vmatprep.mubr.f32.mxu0 %v1182
      %2239 = vmatmul.mubr.f32.gmra.mrb[0].mxu0 %v1181
      %v2240 = vpop.f32.mrb[0].mxu0
      %v2241 = vadd.f32 %v2016, %v2240
      %v2242 = vpop.f32.mrb[0].mxu0
      %2243 = vmatprep.mubr.f32.mxu0 %v1191
      %2244 = vmatmul.mubr.f32.gmra.mrb[0].mxu0 %v1190
      %v2245 = vpop.f32.mrb[0].mxu0
      %v2246 = vadd.f32 %v2021, %v2245
      %v2247 = vpop.f32.mrb[0].mxu0
      %2248 = vmatprep.mubr.f32.mxu0 %v1200
      %2249 = vmatmul.mubr.f32.gmra.mrb[0].mxu0 %v1199
      %v2250 = vpop.f32.mrb[0].mxu0
      %v2251 = vadd.f32 %v2026, %v2250
      %v2252 = vpop.f32.mrb[0].mxu0
      %2253 = vmatprep.mubr.f32.mxu0 %v1209
      %2254 = vmatmul.mubr.f32.gmra.mrb[0].mxu0 %v1208
      %v2255 = vpop.f32.mrb[0].mxu0
      %v2256 = vadd.f32 %v2031, %v2255
      %v2257 = vpop.f32.mrb[0].mxu0
      %2258 = vmatprep.mubr.f32.mxu0 %v1218
      %2259 = vmatmul.mubr.f32.gmra.mrb[0].mxu0 %v1217
      %v2260 = vpop.f32.mrb[0].mxu0
      %v2261 = vadd.f32 %v2036, %v2260
      %v2262 = vpop.f32.mrb[0].mxu0
      %2263 = vdwg.mxu0
      %2264 = vmatprep.subr.mxu0 0.0
      %2265 = vmatpush1.msra.mxu0 %v1348
      %2266 = vmatprep.subr.mxu0 0.0
      %2267 = vmatpush1.msra.mxu0 %v1349
      %2268 = vmatprep.subr.mxu0 0.0
      %2269 = vmatpush1.msra.mxu0 %v1350
      %2270 = vmatprep.subr.mxu0 0.0
      %2271 = vmatpush1.msra.mxu0 %v1351
      %2272 = vmatprep.subr.mxu0 0.0
      %2273 = vmatpush1.msra.mxu0 %v1352
      %2274 = vmatprep.subr.mxu0 0.0
      %2275 = vmatpush1.msra.mxu0 %v1353
      %2276 = vmatprep.subr.mxu0 0.0
      %2277 = vmatpush1.msra.mxu0 %v1354
      %2278 = vmatprep.subr.mxu0 0.0
      %2279 = vmatpush1.msra.mxu0 %v1355
      %2280 = vmatprep.subr.mxu0 0.0
      %2281 = vmatpush1.msra.mxu0 %v1356
      %2282 = vmatprep.subr.mxu0 0.0
      %2283 = vmatpush1.msra.mxu0 %v1357
      %2284 = vmatprep.subr.mxu0 0.0
      %2285 = vmatpush1.msra.mxu0 %v1358
      %2286 = vmatprep.subr.mxu0 0.0
      %2287 = vmatpush1.msra.mxu0 %v1359
      %2288 = vmatprep.subr.mxu0 0.0
      %2289 = vmatpush1.msra.mxu0 %v1360
      %2290 = vmatprep.subr.mxu0 0.0
      %2291 = vmatpush1.msra.mxu0 %v1361
      %2292 = vmatprep.subr.mxu0 0.0
      %2293 = vmatpush1.msra.mxu0 %v1362
      %2294 = vmatprep.subr.mxu0 0.0
      %2295 = vmatpush1.msra.mxu0 %v1363
      %2296 = vmatprep.subr.mxu0 0.0
      %2297 = vmatpush1.msra.mxu0 0.0
      %2298 = vmatprep.subr.mxu0 0.0
      %2299 = vmatpush1.msra.mxu0 0.0
      %2300 = vmatprep.subr.mxu0 0.0
      %2301 = vmatpush1.msra.mxu0 0.0
      %2302 = vmatprep.subr.mxu0 0.0
      %2303 = vmatpush1.msra.mxu0 0.0
      %2304 = vmatprep.subr.mxu0 0.0
      %2305 = vmatpush1.msra.mxu0 0.0
      %2306 = vmatprep.subr.mxu0 0.0
      %2307 = vmatpush1.msra.mxu0 0.0
      %2308 = vmatprep.subr.mxu0 0.0
      %2309 = vmatpush1.msra.mxu0 0.0
      %2310 = vmatprep.subr.mxu0 0.0
      %2311 = vmatpush1.msra.mxu0 0.0
      %2312 = vmatprep.subr.mxu0 0.0
      %2313 = vmatpush1.msra.mxu0 0.0
      %2314 = vmatprep.subr.mxu0 0.0
      %2315 = vmatpush1.msra.mxu0 0.0
      %2316 = vmatprep.subr.mxu0 0.0
      %2317 = vmatpush1.msra.mxu0 0.0
      %2318 = vmatprep.subr.mxu0 0.0
      %2319 = vmatpush1.msra.mxu0 0.0
      %2320 = vmatprep.subr.mxu0 0.0
      %2321 = vmatpush1.msra.mxu0 0.0
      %2322 = vmatprep.subr.mxu0 0.0
      %2323 = vmatpush1.msra.mxu0 0.0
      %2324 = vmatprep.subr.mxu0 0.0
      %2325 = vmatpush1.msra.mxu0 0.0
      %2326 = vmatprep.subr.mxu0 0.0
      %2327 = vmatpush1.msra.mxu0 0.0
      %2328 = vmatprep.mubr.f32.mxu0 0.0
      %2329 = vmatmul.mubr.f32.gmra.mrb[0].mxu0 %v940
      %v2330 = vpop.f32.mrb[0].mxu0
      %v2331 = vadd.f32 %v2106, %v2330
      %v2332 = vpop.f32.mrb[0].mxu0
      %2333 = vmatprep.mubr.f32.mxu0 0.0
      %2334 = vmatmul.mubr.f32.gmra.mrb[0].mxu0 %v949
      %v2335 = vpop.f32.mrb[0].mxu0
      %v2336 = vadd.f32 %v2111, %v2335
      %v2337 = vpop.f32.mrb[0].mxu0
      %2338 = vmatprep.mubr.f32.mxu0 0.0
      %2339 = vmatmul.mubr.f32.gmra.mrb[0].mxu0 %v958
      %v2340 = vpop.f32.mrb[0].mxu0
      %v2341 = vadd.f32 %v2116, %v2340
      %v2342 = vpop.f32.mrb[0].mxu0
      %2343 = vmatprep.mubr.f32.mxu0 0.0
      %2344 = vmatmul.mubr.f32.gmra.mrb[0].mxu0 %v967
      %v2345 = vpop.f32.mrb[0].mxu0
      %v2346 = vadd.f32 %v2121, %v2345
      %v2347 = vpop.f32.mrb[0].mxu0
      %2348 = vmatprep.mubr.f32.mxu0 0.0
      %2349 = vmatmul.mubr.f32.gmra.mrb[0].mxu0 %v976
      %v2350 = vpop.f32.mrb[0].mxu0
      %v2351 = vadd.f32 %v2126, %v2350
      %v2352 = vpop.f32.mrb[0].mxu0
      %2353 = vmatprep.mubr.f32.mxu0 0.0
      %2354 = vmatmul.mubr.f32.gmra.mrb[0].mxu0 %v985
      %v2355 = vpop.f32.mrb[0].mxu0
      %v2356 = vadd.f32 %v2131, %v2355
      %v2357 = vpop.f32.mrb[0].mxu0
      %2358 = vmatprep.mubr.f32.mxu0 0.0
      %2359 = vmatmul.mubr.f32.gmra.mrb[0].mxu0 %v994
      %v2360 = vpop.f32.mrb[0].mxu0
      %v2361 = vadd.f32 %v2136, %v2360
      %v2362 = vpop.f32.mrb[0].mxu0
      %2363 = vmatprep.mubr.f32.mxu0 0.0
      %2364 = vmatmul.mubr.f32.gmra.mrb[0].mxu0 %v1003
      %v2365 = vpop.f32.mrb[0].mxu0
      %v2366 = vadd.f32 %v2141, %v2365
      %v2367 = vpop.f32.mrb[0].mxu0
      %2368 = vmatprep.mubr.f32.mxu0 0.0
      %2369 = vmatmul.mubr.f32.gmra.mrb[0].mxu0 %v1012
      %v2370 = vpop.f32.mrb[0].mxu0
      %v2371 = vadd.f32 %v2146, %v2370
      %v2372 = vpop.f32.mrb[0].mxu0
      %2373 = vmatprep.mubr.f32.mxu0 0.0
      %2374 = vmatmul.mubr.f32.gmra.mrb[0].mxu0 %v1021
      %v2375 = vpop.f32.mrb[0].mxu0
      %v2376 = vadd.f32 %v2151, %v2375
      %v2377 = vpop.f32.mrb[0].mxu0
      %2378 = vmatprep.mubr.f32.mxu0 0.0
      %2379 = vmatmul.mubr.f32.gmra.mrb[0].mxu0 %v1030
      %v2380 = vpop.f32.mrb[0].mxu0
      %v2381 = vadd.f32 %v2156, %v2380
      %v2382 = vpop.f32.mrb[0].mxu0
      %2383 = vmatprep.mubr.f32.mxu0 0.0
      %2384 = vmatmul.mubr.f32.gmra.mrb[0].mxu0 %v1039
      %v2385 = vpop.f32.mrb[0].mxu0
      %v2386 = vadd.f32 %v2161, %v2385
      %v2387 = vpop.f32.mrb[0].mxu0
      %2388 = vmatprep.mubr.f32.mxu0 0.0
      %2389 = vmatmul.mubr.f32.gmra.mrb[0].mxu0 %v1048
      %v2390 = vpop.f32.mrb[0].mxu0
      %v2391 = vadd.f32 %v2166, %v2390
      %v2392 = vpop.f32.mrb[0].mxu0
      %2393 = vmatprep.mubr.f32.mxu0 0.0
      %2394 = vmatmul.mubr.f32.gmra.mrb[0].mxu0 %v1057
      %v2395 = vpop.f32.mrb[0].mxu0
      %v2396 = vadd.f32 %v2171, %v2395
      %v2397 = vpop.f32.mrb[0].mxu0
      %2398 = vmatprep.mubr.f32.mxu0 0.0
      %2399 = vmatmul.mubr.f32.gmra.mrb[0].mxu0 %v1066
      %v2400 = vpop.f32.mrb[0].mxu0
      %v2401 = vadd.f32 %v2176, %v2400
      %v2402 = vpop.f32.mrb[0].mxu0
      %2403 = vmatprep.mubr.f32.mxu0 0.0
      %2404 = vmatmul.mubr.f32.gmra.mrb[0].mxu0 %v1075
      %v2405 = vpop.f32.mrb[0].mxu0
      %v2406 = vadd.f32 %v2181, %v2405
      %v2407 = vpop.f32.mrb[0].mxu0
      %2408 = vmatprep.mubr.f32.mxu0 0.0
      %2409 = vmatmul.mubr.f32.gmra.mrb[0].mxu0 %v1084
      %v2410 = vpop.f32.mrb[0].mxu0
      %v2411 = vadd.f32 %v2186, %v2410
      %v2412 = vpop.f32.mrb[0].mxu0
      %2413 = vmatprep.mubr.f32.mxu0 0.0
      %2414 = vmatmul.mubr.f32.gmra.mrb[0].mxu0 %v1093
      %v2415 = vpop.f32.mrb[0].mxu0
      %v2416 = vadd.f32 %v2191, %v2415
      %v2417 = vpop.f32.mrb[0].mxu0
      %2418 = vmatprep.mubr.f32.mxu0 0.0
      %2419 = vmatmul.mubr.f32.gmra.mrb[0].mxu0 %v1102
      %v2420 = vpop.f32.mrb[0].mxu0
      %v2421 = vadd.f32 %v2196, %v2420
      %v2422 = vpop.f32.mrb[0].mxu0
      %2423 = vmatprep.mubr.f32.mxu0 0.0
      %2424 = vmatmul.mubr.f32.gmra.mrb[0].mxu0 %v1111
      %v2425 = vpop.f32.mrb[0].mxu0
      %v2426 = vadd.f32 %v2201, %v2425
      %v2427 = vpop.f32.mrb[0].mxu0
      %2428 = vmatprep.mubr.f32.mxu0 0.0
      %2429 = vmatmul.mubr.f32.gmra.mrb[0].mxu0 %v1120
      %v2430 = vpop.f32.mrb[0].mxu0
      %v2431 = vadd.f32 %v2206, %v2430
      %v2432 = vpop.f32.mrb[0].mxu0
      %2433 = vmatprep.mubr.f32.mxu0 0.0
      %2434 = vmatmul.mubr.f32.gmra.mrb[0].mxu0 %v1129
      %v2435 = vpop.f32.mrb[0].mxu0
      %v2436 = vadd.f32 %v2211, %v2435
      %v2437 = vpop.f32.mrb[0].mxu0
      %2438 = vmatprep.mubr.f32.mxu0 0.0
      %2439 = vmatmul.mubr.f32.gmra.mrb[0].mxu0 %v1138
      %v2440 = vpop.f32.mrb[0].mxu0
      %v2441 = vadd.f32 %v2216, %v2440
      %v2442 = vpop.f32.mrb[0].mxu0
      %2443 = vmatprep.mubr.f32.mxu0 0.0
      %2444 = vmatmul.mubr.f32.gmra.mrb[0].mxu0 %v1147
      %v2445 = vpop.f32.mrb[0].mxu0
      %v2446 = vadd.f32 %v2221, %v2445
      %v2447 = vpop.f32.mrb[0].mxu0
      %2448 = vmatprep.mubr.f32.mxu0 0.0
      %2449 = vmatmul.mubr.f32.gmra.mrb[0].mxu0 %v1156
      %v2450 = vpop.f32.mrb[0].mxu0
      %v2451 = vadd.f32 %v2226, %v2450
      %v2452 = vpop.f32.mrb[0].mxu0
      %2453 = vmatprep.mubr.f32.mxu0 0.0
      %2454 = vmatmul.mubr.f32.gmra.mrb[0].mxu0 %v1165
      %v2455 = vpop.f32.mrb[0].mxu0
      %v2456 = vadd.f32 %v2231, %v2455
      %v2457 = vpop.f32.mrb[0].mxu0
      %2458 = vmatprep.mubr.f32.mxu0 0.0
      %2459 = vmatmul.mubr.f32.gmra.mrb[0].mxu0 %v1174
      %v2460 = vpop.f32.mrb[0].mxu0
      %v2461 = vadd.f32 %v2236, %v2460
      %v2462 = vpop.f32.mrb[0].mxu0
      %2463 = vmatprep.mubr.f32.mxu0 0.0
      %2464 = vmatmul.mubr.f32.gmra.mrb[0].mxu0 %v1183
      %v2465 = vpop.f32.mrb[0].mxu0
      %v2466 = vadd.f32 %v2241, %v2465
      %v2467 = vpop.f32.mrb[0].mxu0
      %2468 = vmatprep.mubr.f32.mxu0 0.0
      %2469 = vmatmul.mubr.f32.gmra.mrb[0].mxu0 %v1192
      %v2470 = vpop.f32.mrb[0].mxu0
      %v2471 = vadd.f32 %v2246, %v2470
      %v2472 = vpop.f32.mrb[0].mxu0
      %2473 = vmatprep.mubr.f32.mxu0 0.0
      %2474 = vmatmul.mubr.f32.gmra.mrb[0].mxu0 %v1201
      %v2475 = vpop.f32.mrb[0].mxu0
      %v2476 = vadd.f32 %v2251, %v2475
      %v2477 = vpop.f32.mrb[0].mxu0
      %2478 = vmatprep.mubr.f32.mxu0 0.0
      %2479 = vmatmul.mubr.f32.gmra.mrb[0].mxu0 %v1210
      %v2480 = vpop.f32.mrb[0].mxu0
      %v2481 = vadd.f32 %v2256, %v2480
      %v2482 = vpop.f32.mrb[0].mxu0
      %2483 = vmatprep.mubr.f32.mxu0 0.0
      %2484 = vmatmul.mubr.f32.gmra.mrb[0].mxu0 %v1219
      %v2485 = vpop.f32.mrb[0].mxu0
      %v2486 = vadd.f32 %v2261, %v2485
      %v2487 = vpop.f32.mrb[0].mxu0
      %2488 = vdwg.mxu0
      %2489 = vst [vmem:[%s231] sm:$0xff] %v2331
      %2490 = vst [vmem:[%s231 + $0x8] sm:$0xff] %v2336
      %2491 = vst [vmem:[%s231 + $0x10] sm:$0xff] %v2341
      %2492 = vst [vmem:[%s231 + $0x18] sm:$0xff] %v2346
      %2493 = vst [vmem:[%s231 + $0x20] sm:$0xff] %v2351
      %2494 = vst [vmem:[%s231 + $0x28] sm:$0xff] %v2356
      %2495 = vst [vmem:[%s231 + $0x30] sm:$0xff] %v2361
      %2496 = vst [vmem:[%s231 + $0x38] sm:$0xff] %v2366
      %2497 = vst [vmem:[%s231 + $0x40] sm:$0xff] %v2371
      %2498 = vst [vmem:[%s231 + $0x48] sm:$0xff] %v2376
      %2499 = vst [vmem:[%s231 + $0x50] sm:$0xff] %v2381
      %2500 = vst [vmem:[%s231 + $0x58] sm:$0xff] %v2386
      %2501 = vst [vmem:[%s231 + $0x60] sm:$0xff] %v2391
      %2502 = vst [vmem:[%s231 + $0x68] sm:$0xff] %v2396
      %2503 = vst [vmem:[%s231 + $0x70] sm:$0xff] %v2401
      %2504 = vst [vmem:[%s231 + $0x78] sm:$0xff] %v2406
      %2505 = vst [vmem:[%s231 + $0x80] sm:$0xff] %v2411
      %2506 = vst [vmem:[%s231 + $0x88] sm:$0xff] %v2416
      %2507 = vst [vmem:[%s231 + $0x90] sm:$0xff] %v2421
      %2508 = vst [vmem:[%s231 + $0x98] sm:$0xff] %v2426
      %2509 = vst [vmem:[%s231 + $0xa0] sm:$0xff] %v2431
      %2510 = vst [vmem:[%s231 + $0xa8] sm:$0xff] %v2436
      %2511 = vst [vmem:[%s231 + $0xb0] sm:$0xff] %v2441
      %2512 = vst [vmem:[%s231 + $0xb8] sm:$0xff] %v2446
      %2513 = vst [vmem:[%s231 + $0xc0] sm:$0xff] %v2451
      %2514 = vst [vmem:[%s231 + $0xc8] sm:$0xff] %v2456
      %2515 = vst [vmem:[%s231 + $0xd0] sm:$0xff] %v2461
      %2516 = vst [vmem:[%s231 + $0xd8] sm:$0xff] %v2466
      %2517 = vst [vmem:[%s231 + $0xe0] sm:$0xff] %v2471
      %2518 = vst [vmem:[%s231 + $0xe8] sm:$0xff] %v2476
      %2519 = vst [vmem:[%s231 + $0xf0] sm:$0xff] %v2481
      %2520 = vst [vmem:[%s231 + $0xf8] sm:$0xff] %v2486
      %v2521 = vadd.f32 %v2331, %v2336
      %v2522 = vadd.f32 %v2521, %v2341
      %v2523 = vadd.f32 %v2522, %v2346
      %v2524 = vadd.f32 %v2523, %v2351
      %v2525 = vadd.f32 %v2524, %v2356
      %v2526 = vadd.f32 %v2525, %v2361
      %v2527 = vadd.f32 %v2526, %v2366
      %v2528 = vadd.f32 %v2527, %v2371
      %v2529 = vadd.f32 %v2528, %v2376
      %v2530 = vadd.f32 %v2529, %v2381
      %v2531 = vadd.f32 %v2530, %v2386
      %v2532 = vadd.f32 %v2531, %v2391
      %v2533 = vadd.f32 %v2532, %v2396
      %v2534 = vadd.f32 %v2533, %v2401
      %v2535 = vadd.f32 %v2534, %v2406
      %v2536 = vadd.f32 %v2535, %v2411
      %v2537 = vadd.f32 %v2536, %v2416
      %v2538 = vadd.f32 %v2537, %v2421
      %v2539 = vadd.f32 %v2538, %v2426
      %v2540 = vadd.f32 %v2539, %v2431
      %v2541 = vadd.f32 %v2540, %v2436
      %v2542 = vadd.f32 %v2541, %v2441
      %v2543 = vadd.f32 %v2542, %v2446
      %v2544 = vadd.f32 %v2543, %v2451
      %v2545 = vadd.f32 %v2544, %v2456
      %v2546 = vadd.f32 %v2545, %v2461
      %v2547 = vadd.f32 %v2546, %v2466
      %v2548 = vadd.f32 %v2547, %v2471
      %v2549 = vadd.f32 %v2548, %v2476
      %v2550 = vadd.f32 %v2549, %v2481
      %v2551 = vadd.f32 %v2550, %v2486
      %v2552 = vrot.slane %v2551, 4
      %v2553 = vadd.f32 %v2551, %v2552
      %v2554 = vrot.slane %v2553, 2
      %v2555 = vadd.f32 %v2553, %v2554
      %v2556 = vrot.slane %v2555, 1
      %v2557 = vadd.f32 %v2555, %v2556
      %v2558 = vmul.f32 %v2331, %v2331
      %v2559 = vmul.f32 %v2336, %v2336
      %v2560 = vmul.f32 %v2341, %v2341
      %v2561 = vmul.f32 %v2346, %v2346
      %v2562 = vmul.f32 %v2351, %v2351
      %v2563 = vmul.f32 %v2356, %v2356
      %v2564 = vmul.f32 %v2361, %v2361
      %v2565 = vmul.f32 %v2366, %v2366
      %v2566 = vmul.f32 %v2371, %v2371
      %v2567 = vmul.f32 %v2376, %v2376
      %v2568 = vmul.f32 %v2381, %v2381
      %v2569 = vmul.f32 %v2386, %v2386
      %v2570 = vmul.f32 %v2391, %v2391
      %v2571 = vmul.f32 %v2396, %v2396
      %v2572 = vmul.f32 %v2401, %v2401
      %v2573 = vmul.f32 %v2406, %v2406
      %v2574 = vmul.f32 %v2411, %v2411
      %v2575 = vmul.f32 %v2416, %v2416
      %v2576 = vmul.f32 %v2421, %v2421
      %v2577 = vmul.f32 %v2426, %v2426
      %v2578 = vmul.f32 %v2431, %v2431
      %v2579 = vmul.f32 %v2436, %v2436
      %v2580 = vmul.f32 %v2441, %v2441
      %v2581 = vmul.f32 %v2446, %v2446
      %v2582 = vmul.f32 %v2451, %v2451
      %v2583 = vmul.f32 %v2456, %v2456
      %v2584 = vmul.f32 %v2461, %v2461
      %v2585 = vmul.f32 %v2466, %v2466
      %v2586 = vmul.f32 %v2471, %v2471
      %v2587 = vmul.f32 %v2476, %v2476
      %v2588 = vmul.f32 %v2481, %v2481
      %v2589 = vmul.f32 %v2486, %v2486
      %v2590 = vadd.f32 %v2558, %v2559
      %v2591 = vadd.f32 %v2590, %v2560
      %v2592 = vadd.f32 %v2591, %v2561
      %v2593 = vadd.f32 %v2592, %v2562
      %v2594 = vadd.f32 %v2593, %v2563
      %v2595 = vadd.f32 %v2594, %v2564
      %v2596 = vadd.f32 %v2595, %v2565
      %v2597 = vadd.f32 %v2596, %v2566
      %v2598 = vadd.f32 %v2597, %v2567
      %v2599 = vadd.f32 %v2598, %v2568
      %v2600 = vadd.f32 %v2599, %v2569
      %v2601 = vadd.f32 %v2600, %v2570
      %v2602 = vadd.f32 %v2601, %v2571
      %v2603 = vadd.f32 %v2602, %v2572
      %v2604 = vadd.f32 %v2603, %v2573
      %v2605 = vadd.f32 %v2604, %v2574
      %v2606 = vadd.f32 %v2605, %v2575
      %v2607 = vadd.f32 %v2606, %v2576
      %v2608 = vadd.f32 %v2607, %v2577
      %v2609 = vadd.f32 %v2608, %v2578
      %v2610 = vadd.f32 %v2609, %v2579
      %v2611 = vadd.f32 %v2610, %v2580
      %v2612 = vadd.f32 %v2611, %v2581
      %v2613 = vadd.f32 %v2612, %v2582
      %v2614 = vadd.f32 %v2613, %v2583
      %v2615 = vadd.f32 %v2614, %v2584
      %v2616 = vadd.f32 %v2615, %v2585
      %v2617 = vadd.f32 %v2616, %v2586
      %v2618 = vadd.f32 %v2617, %v2587
      %v2619 = vadd.f32 %v2618, %v2588
      %v2620 = vadd.f32 %v2619, %v2589
      %v2621 = vrot.slane %v2620, 4
      %v2622 = vadd.f32 %v2620, %v2621
      %v2623 = vrot.slane %v2622, 2
      %v2624 = vadd.f32 %v2622, %v2623
      %v2625 = vrot.slane %v2624, 1
      %v2626 = vadd.f32 %v2624, %v2625
      %vm2627 = vcmask 1040384
      %v2628 = vsel %vm2627, %v2557, %v2626
      %2629 = vst [vmem:[%s235] sm:$0x3] %v2628
      %p2630 = scmp.lt.s32.totalorder %s17, 1
      %s2631 = scalar_select %p2630, %s17, 1
      %s2632 = smul.addr %s2631, 32
      %s2633 = smul.addr %s2632, 8
      %s2634 = scalar_lea.vmem %s4, %s2633
      %p2635 = scmp.lt.s32.totalorder %s17, 1
      %s2636 = scalar_select %p2635, %s17, 1
      %s2637 = smul.addr %s2636, 2
      %s2638 = scalar_lea.vmem %s5, %s2637
      // Predicated region
      $region37: #{seg_unet_conv_block.5} parent=35 // pred_check
        %p2639 = pneg %p124
      $region38: #{seg_unet_conv_block.5} parent=35 // pred_check_branch
        %2641 = sbr.rel (%p2639) target = $region40
      $region39: #{seg_unet_conv_block.5} parent=35 // pred_region
        _
      $region40: #{seg_unet_conv_block.5} parent=35 // pred_fallthru
        _
      // Predicated region
      $region41: #{seg_unet_conv_block.5} parent=35 // pred_check
        %p2642 = pneg %p150
      $region42: #{seg_unet_conv_block.5} parent=35 // pred_check_branch
        %2644 = sbr.rel (%p2642) target = $region44
      $region43: #{seg_unet_conv_block.5} parent=35 // pred_region
        _
      $region44: #{seg_unet_conv_block.5} parent=35 // pred_fallthru
        _
    $region36: #{seg_unet_conv_block.5} parent=5 // pred_fallthru
      _
    %p2645 = scmp.le.s32.totalorder 2, %s12
    // Predicated region
    $region45: #{seg_unet_conv_block.5} parent=5 // pred_check
      %p2646 = pneg %p2645
    $region46: #{seg_unet_conv_block.5} parent=5 // pred_check_branch
      %2648 = sbr.rel (%p2646) target = $region48
    $region47: #{seg_unet_conv_block.5} parent=5 // pred_region
      %s2649 = ssub.s32 %s12, 2
      // Predicated region
      $region49: #{seg_unet_conv_block.5} parent=47 // pred_check
        %p2650 = pneg %p130
      $region50: #{seg_unet_conv_block.5} parent=47 // pred_check_branch
        %2652 = sbr.rel (%p2650) target = $region52
      $region51: #{seg_unet_conv_block.5} parent=47 // pred_region
        %p2653 = scmp.lt.s32.totalorder %s18, 1
        %s2654 = scalar_select %p2653, %s18, 1
        %s2655 = smul.addr %s2654, 32
        %s2656 = smul.addr %s2655, 8
        %s2657 = scalar_lea.vmem %s4, %s2656
      $region52: #{seg_unet_conv_block.5} parent=47 // pred_fallthru
        _
      // Predicated region
      $region53: #{seg_unet_conv_block.5} parent=47 // pred_check
        %p2658 = pneg %p156
      $region54: #{seg_unet_conv_block.5} parent=47 // pred_check_branch
        %2660 = sbr.rel (%p2658) target = $region56
      $region55: #{seg_unet_conv_block.5} parent=47 // pred_region
        %p2661 = scmp.lt.s32.totalorder %s18, 1
        %s2662 = scalar_select %p2661, %s18, 1
        %s2663 = smul.addr %s2662, 2
        %s2664 = scalar_lea.vmem %s5, %s2663
      $region56: #{seg_unet_conv_block.5} parent=47 // pred_fallthru
        _
    $region48: #{seg_unet_conv_block.5} parent=5 // pred_fallthru
      _
  $region6: #{seg_unet_conv_block.5} parent=0 // loop_footer
    %s16 = sadd.s32 1, %s12
  $region7: #{seg_unet_conv_block.5} parent=0 // loop_footer_branch
    %11 = sbr.rel target = $region3
  $region8: #{seg_unet_conv_block.5} parent=0 // loop_exit
    _

</llo_original>
